<compile_context>
chip_gen: v6e
topology: v6e:2x2x1
jax: 0.10.0
libtpu: 0.0.40
codegen_flags: <defaults>
</compile_context>

<pallas_src>
import jax
import jax.numpy as jnp
from jax import lax
from jax.experimental import pallas as pl
from jax.experimental.pallas import tpu as pltpu

C_IN = 512
C_MID = 256
BN_EPS = 1e-5


def _round_up(x, m):
    return (x + m - 1) // m * m


# ----------------------------------------------------------------------------
# Pallas kernel
# ----------------------------------------------------------------------------
def spatial_attention_kernel(x_ref, w1_ref, b1_ref, wcf_ref, bc_ref, o_ref,
                             ypf_ref, col_ref, acc_ref):
    """One grid step processes B_BLK batch elements.

    x_ref  : (B, H, W, C_IN)   f32   input block (NHWC)
    w1_ref : (C_IN, C_MID)     bf16  fused 1x1 conv + BN weight
    b1_ref : (1, C_MID)        f32   fused 1x1 conv + BN bias
    wcf_ref: (9*C_MID, C_IN)   bf16  fused (3x3+1x3+3x1)+BN weight, tap-major
    bc_ref : (1, C_IN)         f32   fused conv bias
    o_ref  : (B, H, W, C_IN)   f32   output block
    ypf_ref: (ROWS, C_MID)     bf16  flat zero-padded 1x1-conv output
    col_ref: (M, 9*C_MID)      bf16  im2col buffer (one 256-lane block per tap)
    acc_ref: (M, C_IN)         f32   conv output in padded flat coordinates
    """
    B, H, W, Cin = x_ref.shape
    Cmid = w1_ref.shape[1]
    Hp, Wp = H + 2, W + 2
    M1 = B * H * W                       # matmul rows of the 1x1 conv
    M = acc_ref.shape[0]                 # matmul rows of the fused 3x3 conv

    # --- 1x1 conv + BN (folded): single bf16 matmul, f32 accumulation --------
    xf = x_ref[...].reshape(M1, Cin).astype(jnp.bfloat16)
    y = jnp.dot(xf, w1_ref[...], preferred_element_type=jnp.float32)
    y = (y + b1_ref[...]).astype(jnp.bfloat16)                    # (M1, Cmid)

    # --- scatter y into the flat zero-padded scratch ---------------------------
    # flat row of padded pixel (b, hp, wp) = b*Hp*Wp + hp*Wp + wp.
    # The zero fill provides the conv padding (borders / inter-image gaps) and
    # the window slop rows; it is bf16 and re-done every step (megacore-safe).
    ypf_ref[...] = jnp.zeros(ypf_ref.shape, ypf_ref.dtype)
    for b in range(B):
        for h in range(H):
            row = (b * H + h) * W
            ypf_ref[pl.ds(b * Hp * Wp + (h + 1) * Wp + 1, W), :] = \
                y[row:row + W, :]

    # --- im2col: tap (kh, kw) is a *contiguous* row window at kh*Wp + kw ------
    for kh in range(3):
        for kw in range(3):
            t = kh * 3 + kw
            col_ref[:, pl.ds(t * Cmid, Cmid)] = \
                ypf_ref[pl.ds(kh * Wp + kw, M), :]

    # --- fused 3x3 conv (+1x3 +3x1, BN folded): ONE long-K bf16 matmul --------
    acc_ref[...] = jnp.dot(col_ref[...], wcf_ref[...],
                           preferred_element_type=jnp.float32)

    # --- bias, ReLU, channel sum (all f32) -------------------------------------
    z = jnp.maximum(acc_ref[...] + bc_ref[...], 0.0)               # (M, Cout)
    s = jnp.sum(z, axis=-1, keepdims=True)                         # (M, 1)

    # --- out = x * s ; acc row of output pixel (b, h, w) = b*Hp*Wp + h*Wp + w --
    for b in range(B):
        for h in range(H):
            m0 = b * Hp * Wp + h * Wp
            o_ref[b, h, :, :] = (x_ref[b, h, :, :] *
                                 s[m0:m0 + W, :]).astype(o_ref.dtype)


# ----------------------------------------------------------------------------
# Parameter fusion (Conv + inference-mode BN; 3 parallel convs -> one 3x3)
# ----------------------------------------------------------------------------
def fuse_conv_bn(w, b, bn):
    """Fold inference-mode BatchNorm into conv. w is HWIO."""
    gamma, beta, mean, var = bn
    scale = gamma / jnp.sqrt(var + BN_EPS)        # (cout,)
    return w * scale, (b - mean) * scale + beta


def build_kernel_params(params):
    w1_f, b1_f = fuse_conv_bn(params["conv1x1"]["w"], params["conv1x1"]["b"],
                              params["conv1x1"]["bn"])
    w33_f, b33_f = fuse_conv_bn(params["conv3x3"]["w"], params["conv3x3"]["b"],
                                params["conv3x3"]["bn"])
    w13_f, b13_f = fuse_conv_bn(params["conv1x3"]["w"], params["conv1x3"]["b"],
                                params["conv1x3"]["bn"])
    w31_f, b31_f = fuse_conv_bn(params["conv3x1"]["w"], params["conv3x1"]["b"],
                                params["conv3x1"]["bn"])

    # fuse the three parallel branch convs into one 3x3 kernel (HWIO)
    wc = w33_f
    wc = wc.at[1].add(w13_f[0])                   # 1x3, pad (0,1) -> middle row
    wc = wc.at[:, 1].add(w31_f[:, 0])             # 3x1, pad (1,0) -> middle col
    bc = b33_f + b13_f + b31_f

    # bf16 matmul operands (accumulation stays f32 in-kernel); f32 biases.
    w1 = w1_f.reshape(C_IN, C_MID).astype(jnp.bfloat16)
    b1 = b1_f.reshape(1, C_MID).astype(jnp.float32)
    wcf = wc.reshape(9 * C_MID, C_IN).astype(jnp.bfloat16)   # tap-major rows
    bc = bc.reshape(1, C_IN).astype(jnp.float32)
    return w1, b1, wcf, bc


def _pick_batch_block(n, h, w):
    """Largest divisor of n that grows matmul M while keeping VMEM modest."""
    best = 1
    for b in range(1, n + 1):
        if n % b:
            continue
        m_pad = b * (h + 2) * (w + 2)
        if (m_pad * 9 * C_MID * 2 > (8 << 20)             # im2col buffer
                or b * h * w * C_IN * 4 > (4 << 20)):     # x / out block
            break
        best = b
        if b * h * w >= 512:                              # M is large enough
            break
    return best


def spatial_attention(x_nchw, params, *, b_blk=None):
    """Forward pass matching SpatialAttention (inference-mode BN)."""
    w1, b1, wcf, bc = build_kernel_params(params)

    # TODO(synk): drop these transposes if the surrounding model is NHWC; they
    # are full HBM read+write passes outside the kernel.
    x = jnp.transpose(x_nchw, (0, 2, 3, 1))       # NCHW -> NHWC
    N, H, W, Cin = x.shape
    assert Cin == C_IN

    if b_blk is None:
        b_blk = _pick_batch_block(N, H, W)
    assert N % b_blk == 0
    Hp, Wp = H + 2, W + 2
    m_rows = _round_up(b_blk * Hp * Wp, 8)          # conv matmul rows
    pad_rows = _round_up(m_rows + 2 * Wp + 2, 8)    # flat padded scratch rows

    # explicit VMEM budget: double-buffered x/out blocks + weights + scratch.
    block_bytes = b_blk * H * W * C_IN * 4
    weight_bytes = (C_IN * C_MID + 9 * C_MID * C_IN) * 2 + (C_MID + C_IN) * 4
    scratch_bytes = (pad_rows * C_MID * 2 + m_rows * 9 * C_MID * 2
                     + m_rows * C_IN * 4)
    est = 4 * block_bytes + 2 * weight_bytes + scratch_bytes
    vmem_limit = int(min(max(2 * est, 32 << 20), 48 << 20))

    out = pl.pallas_call(
        spatial_attention_kernel,
        out_shape=jax.ShapeDtypeStruct((N, H, W, Cin), x.dtype),
        grid_spec=pltpu.PrefetchScalarGridSpec(
            num_scalar_prefetch=0,
            grid=(N // b_blk,),
            in_specs=[
                pl.BlockSpec((b_blk, H, W, C_IN), lambda n: (n, 0, 0, 0)),
                pl.BlockSpec((C_IN, C_MID), lambda n: (0, 0)),
                pl.BlockSpec((1, C_MID), lambda n: (0, 0)),
                pl.BlockSpec((9 * C_MID, C_IN), lambda n: (0, 0)),
                pl.BlockSpec((1, C_IN), lambda n: (0, 0)),
            ],
            out_specs=pl.BlockSpec((b_blk, H, W, C_IN), lambda n: (n, 0, 0, 0)),
            scratch_shapes=[
                pltpu.VMEM((pad_rows, C_MID), jnp.bfloat16),       # padded y
                pltpu.VMEM((m_rows, 9 * C_MID), jnp.bfloat16),     # im2col
                pltpu.VMEM((m_rows, C_IN), jnp.float32),           # conv acc
            ],
        ),
        compiler_params=pltpu.CompilerParams(
            dimension_semantics=("parallel",),
            vmem_limit_bytes=vmem_limit,
        ),
    )(x, w1, b1, wcf, bc)

    return jnp.transpose(out, (0, 3, 1, 2))       # NHWC -> NCHW


# ----------------------------------------------------------------------------
# Deterministic parameter init (shapes from SpatialAttention.__init__)
# ----------------------------------------------------------------------------
def init_params(key):
    def conv_w(k, kh, kw, cin, cout, scale=0.05):
        return scale * jax.random.normal(k, (kh, kw, cin, cout), jnp.float32)

    def conv_b(k, cout, scale=0.02):
        return scale * jax.random.normal(k, (cout,), jnp.float32)

    def bn(k, c):
        k1, k2, k3, k4 = jax.random.split(k, 4)
        gamma = 1.0 + 0.1 * jax.random.normal(k1, (c,), jnp.float32)
        beta = 0.1 * jax.random.normal(k2, (c,), jnp.float32)
        mean = 0.1 * jax.random.normal(k3, (c,), jnp.float32)
        var = jax.random.uniform(k4, (c,), jnp.float32, 0.5, 1.5)
        return (gamma, beta, mean, var)

    ks = jax.random.split(key, 12)
    return {
        "conv1x1": {"w": conv_w(ks[0], 1, 1, C_IN, C_MID),
                    "b": conv_b(ks[1], C_MID), "bn": bn(ks[2], C_MID)},
        "conv3x3": {"w": conv_w(ks[3], 3, 3, C_MID, C_IN),
                    "b": conv_b(ks[4], C_IN), "bn": bn(ks[5], C_IN)},
        "conv1x3": {"w": conv_w(ks[6], 1, 3, C_MID, C_IN),
                    "b": conv_b(ks[7], C_IN), "bn": bn(ks[8], C_IN)},
        "conv3x1": {"w": conv_w(ks[9], 3, 1, C_MID, C_IN),
                    "b": conv_b(ks[10], C_IN), "bn": bn(ks[11], C_IN)},
    }


# ----------------------------------------------------------------------------
# Pure-JAX reference (per-branch, unfused) for correctness checking
# ----------------------------------------------------------------------------
def reference(x_nchw, params):
    x = jnp.transpose(x_nchw, (0, 2, 3, 1))       # NHWC
    dn = ("NHWC", "HWIO", "NHWC")

    def conv_bn(inp, p, padding):
        y = lax.conv_general_dilated(inp, p["w"], (1, 1), padding,
                                     dimension_numbers=dn) + p["b"]
        gamma, beta, mean, var = p["bn"]
        return gamma * (y - mean) / jnp.sqrt(var + BN_EPS) + beta

    y = conv_bn(x, params["conv1x1"], "VALID")
    a = conv_bn(y, params["conv3x3"], [(1, 1), (1, 1)])
    b = conv_bn(y, params["conv1x3"], [(0, 0), (1, 1)])
    c = conv_bn(y, params["conv3x1"], [(1, 1), (0, 0)])
    z = jax.nn.relu(a + b + c)
    s = jnp.sum(z, axis=-1, keepdims=True)
    out = x * s
    return jnp.transpose(out, (0, 3, 1, 2))


if __name__ == "__main__":
    key = jax.random.PRNGKey(0)
    k_x, k_p = jax.random.split(key)

    N, H, W = 2, 8, 8                             # small spatial; channels fixed by module
    x = jax.random.normal(k_x, (N, C_IN, H, W), jnp.float32)
    params = init_params(k_p)

    out = spatial_attention(x, params)
    out = jax.block_until_ready(out)

    ref = reference(x, params)
    err = jnp.max(jnp.abs(out - ref))
    scale = jnp.max(jnp.abs(ref)) + 1.0
    assert out.shape == (N, C_IN, H, W)
    assert (err / scale) < 2e-2, f"mismatch: max err {err}, scale {scale}"

    print("KERNEL_OK")
</pallas_src>

<mosaic_0001>
module attributes {stable_mosaic.version = 11 : i64} {
  func.func @spatial_attention_kernel(%arg0: i32, %arg1: memref<2x8x8x512xf32, #tpu.memory_space<vmem>>, %arg2: memref<512x256xbf16, #tpu.memory_space<vmem>>, %arg3: memref<1x256xf32, #tpu.memory_space<vmem>>, %arg4: memref<2304x512xbf16, #tpu.memory_space<vmem>>, %arg5: memref<1x512xf32, #tpu.memory_space<vmem>>, %arg6: memref<2x8x8x512xf32, #tpu.memory_space<vmem>>, %arg7: memref<224x256xbf16, #tpu.memory_space<vmem>>, %arg8: memref<200x2304xbf16, #tpu.memory_space<vmem>>, %arg9: memref<200x512xf32, #tpu.memory_space<vmem>>) attributes {dimension_semantics = [#tpu.dimension_semantics<parallel>], iteration_bounds = array<i64: 1>, scalar_prefetch = 0 : i64, scratch_operands = 3 : i64, tpu.core_type = #tpu.core_type<tc>, window_params = [{transform_indices = @transform_0, window_bounds = array<i64: 2, 8, 8, 512>}, {pipeline_mode = #tpu.pipeline_mode<synchronous>, transform_indices = @transform_1, window_bounds = array<i64: 512, 256>}, {pipeline_mode = #tpu.pipeline_mode<synchronous>, transform_indices = @transform_2, window_bounds = array<i64: 1, 256>}, {pipeline_mode = #tpu.pipeline_mode<synchronous>, transform_indices = @transform_3, window_bounds = array<i64: 2304, 512>}, {pipeline_mode = #tpu.pipeline_mode<synchronous>, transform_indices = @transform_4, window_bounds = array<i64: 1, 512>}, {transform_indices = @transform_5, window_bounds = array<i64: 2, 8, 8, 512>}]} {
    %c0 = arith.constant 0 : index
    %c0_0 = arith.constant 0 : index
    %c0_1 = arith.constant 0 : index
    %c0_2 = arith.constant 0 : index
    %0 = vector.load %arg1[%c0, %c0_0, %c0_1, %c0_2] : memref<2x8x8x512xf32, #tpu.memory_space<vmem>>, vector<2x8x8x512xf32>
    %1 = vector.shape_cast %0 : vector<2x8x8x512xf32> to vector<128x512xf32>
    %2 = arith.truncf %1 : vector<128x512xf32> to vector<128x512xbf16>
    %c0_3 = arith.constant 0 : index
    %c0_4 = arith.constant 0 : index
    %3 = vector.load %arg2[%c0_3, %c0_4] : memref<512x256xbf16, #tpu.memory_space<vmem>>, vector<512x256xbf16>
    %cst = arith.constant dense<0.000000e+00> : vector<128x256xf32>
    %4 = tpu.matmul %2, %3, %cst {dimension_numbers = #tpu.dot_dimension_numbers<[1], [0], [0], [1], [0, 0, 1, 1], [], []>} : vector<128x512xbf16>, vector<512x256xbf16>, vector<128x256xf32> -> vector<128x256xf32>
    %c0_5 = arith.constant 0 : index
    %c0_6 = arith.constant 0 : index
    %5 = vector.load %arg3[%c0_5, %c0_6] : memref<1x256xf32, #tpu.memory_space<vmem>>, vector<1x256xf32>
    %6 = vector.broadcast %5 : vector<1x256xf32> to vector<128x256xf32>
    %7 = arith.addf %4, %6 : vector<128x256xf32>
    %8 = arith.truncf %7 : vector<128x256xf32> to vector<128x256xbf16>
    %cst_7 = arith.constant 0.000000e+00 : bf16
    %9 = vector.broadcast %cst_7 : bf16 to vector<224x256xbf16>
    %c0_8 = arith.constant 0 : index
    %c0_9 = arith.constant 0 : index
    %10 = vector.load %arg7[%c0_8, %c0_9] : memref<224x256xbf16, #tpu.memory_space<vmem>>, vector<224x256xbf16>
    tpu.vector_store %arg7[%c0_8, %c0_9], %9 {strides = array<i32>} : memref<224x256xbf16, #tpu.memory_space<vmem>>, vector<224x256xbf16>,
    %11 = vector.extract_strided_slice %8 {offsets = [0, 0], sizes = [8, 256], strides = [1, 1]} : vector<128x256xbf16> to vector<8x256xbf16>
    %c11 = arith.constant 11 : index
    %c0_10 = arith.constant 0 : index
    %12 = vector.load %arg7[%c11, %c0_10] : memref<224x256xbf16, #tpu.memory_space<vmem>>, vector<8x256xbf16>
    tpu.vector_store %arg7[%c11, %c0_10], %11 {strides = array<i32>} : memref<224x256xbf16, #tpu.memory_space<vmem>>, vector<8x256xbf16>,
    %13 = vector.extract_strided_slice %8 {offsets = [8, 0], sizes = [8, 256], strides = [1, 1]} : vector<128x256xbf16> to vector<8x256xbf16>
    %c21 = arith.constant 21 : index
    %c0_11 = arith.constant 0 : index
    %14 = vector.load %arg7[%c21, %c0_11] : memref<224x256xbf16, #tpu.memory_space<vmem>>, vector<8x256xbf16>
    tpu.vector_store %arg7[%c21, %c0_11], %13 {strides = array<i32>} : memref<224x256xbf16, #tpu.memory_space<vmem>>, vector<8x256xbf16>,
    %15 = vector.extract_strided_slice %8 {offsets = [16, 0], sizes = [8, 256], strides = [1, 1]} : vector<128x256xbf16> to vector<8x256xbf16>
    %c31 = arith.constant 31 : index
    %c0_12 = arith.constant 0 : index
    %16 = vector.load %arg7[%c31, %c0_12] : memref<224x256xbf16, #tpu.memory_space<vmem>>, vector<8x256xbf16>
    tpu.vector_store %arg7[%c31, %c0_12], %15 {strides = array<i32>} : memref<224x256xbf16, #tpu.memory_space<vmem>>, vector<8x256xbf16>,
    %17 = vector.extract_strided_slice %8 {offsets = [24, 0], sizes = [8, 256], strides = [1, 1]} : vector<128x256xbf16> to vector<8x256xbf16>
    %c41 = arith.constant 41 : index
    %c0_13 = arith.constant 0 : index
    %18 = vector.load %arg7[%c41, %c0_13] : memref<224x256xbf16, #tpu.memory_space<vmem>>, vector<8x256xbf16>
    tpu.vector_store %arg7[%c41, %c0_13], %17 {strides = array<i32>} : memref<224x256xbf16, #tpu.memory_space<vmem>>, vector<8x256xbf16>,
    %19 = vector.extract_strided_slice %8 {offsets = [32, 0], sizes = [8, 256], strides = [1, 1]} : vector<128x256xbf16> to vector<8x256xbf16>
    %c51 = arith.constant 51 : index
    %c0_14 = arith.constant 0 : index
    %20 = vector.load %arg7[%c51, %c0_14] : memref<224x256xbf16, #tpu.memory_space<vmem>>, vector<8x256xbf16>
    tpu.vector_store %arg7[%c51, %c0_14], %19 {strides = array<i32>} : memref<224x256xbf16, #tpu.memory_space<vmem>>, vector<8x256xbf16>,
    %21 = vector.extract_strided_slice %8 {offsets = [40, 0], sizes = [8, 256], strides = [1, 1]} : vector<128x256xbf16> to vector<8x256xbf16>
    %c61 = arith.constant 61 : index
    %c0_15 = arith.constant 0 : index
    %22 = vector.load %arg7[%c61, %c0_15] : memref<224x256xbf16, #tpu.memory_space<vmem>>, vector<8x256xbf16>
    tpu.vector_store %arg7[%c61, %c0_15], %21 {strides = array<i32>} : memref<224x256xbf16, #tpu.memory_space<vmem>>, vector<8x256xbf16>,
    %23 = vector.extract_strided_slice %8 {offsets = [48, 0], sizes = [8, 256], strides = [1, 1]} : vector<128x256xbf16> to vector<8x256xbf16>
    %c71 = arith.constant 71 : index
    %c0_16 = arith.constant 0 : index
    %24 = vector.load %arg7[%c71, %c0_16] : memref<224x256xbf16, #tpu.memory_space<vmem>>, vector<8x256xbf16>
    tpu.vector_store %arg7[%c71, %c0_16], %23 {strides = array<i32>} : memref<224x256xbf16, #tpu.memory_space<vmem>>, vector<8x256xbf16>,
    %25 = vector.extract_strided_slice %8 {offsets = [56, 0], sizes = [8, 256], strides = [1, 1]} : vector<128x256xbf16> to vector<8x256xbf16>
    %c81 = arith.constant 81 : index
    %c0_17 = arith.constant 0 : index
    %26 = vector.load %arg7[%c81, %c0_17] : memref<224x256xbf16, #tpu.memory_space<vmem>>, vector<8x256xbf16>
    tpu.vector_store %arg7[%c81, %c0_17], %25 {strides = array<i32>} : memref<224x256xbf16, #tpu.memory_space<vmem>>, vector<8x256xbf16>,
    %27 = vector.extract_strided_slice %8 {offsets = [64, 0], sizes = [8, 256], strides = [1, 1]} : vector<128x256xbf16> to vector<8x256xbf16>
    %c111 = arith.constant 111 : index
    %c0_18 = arith.constant 0 : index
    %28 = vector.load %arg7[%c111, %c0_18] : memref<224x256xbf16, #tpu.memory_space<vmem>>, vector<8x256xbf16>
    tpu.vector_store %arg7[%c111, %c0_18], %27 {strides = array<i32>} : memref<224x256xbf16, #tpu.memory_space<vmem>>, vector<8x256xbf16>,
    %29 = vector.extract_strided_slice %8 {offsets = [72, 0], sizes = [8, 256], strides = [1, 1]} : vector<128x256xbf16> to vector<8x256xbf16>
    %c121 = arith.constant 121 : index
    %c0_19 = arith.constant 0 : index
    %30 = vector.load %arg7[%c121, %c0_19] : memref<224x256xbf16, #tpu.memory_space<vmem>>, vector<8x256xbf16>
    tpu.vector_store %arg7[%c121, %c0_19], %29 {strides = array<i32>} : memref<224x256xbf16, #tpu.memory_space<vmem>>, vector<8x256xbf16>,
    %31 = vector.extract_strided_slice %8 {offsets = [80, 0], sizes = [8, 256], strides = [1, 1]} : vector<128x256xbf16> to vector<8x256xbf16>
    %c131 = arith.constant 131 : index
    %c0_20 = arith.constant 0 : index
    %32 = vector.load %arg7[%c131, %c0_20] : memref<224x256xbf16, #tpu.memory_space<vmem>>, vector<8x256xbf16>
    tpu.vector_store %arg7[%c131, %c0_20], %31 {strides = array<i32>} : memref<224x256xbf16, #tpu.memory_space<vmem>>, vector<8x256xbf16>,
    %33 = vector.extract_strided_slice %8 {offsets = [88, 0], sizes = [8, 256], strides = [1, 1]} : vector<128x256xbf16> to vector<8x256xbf16>
    %c141 = arith.constant 141 : index
    %c0_21 = arith.constant 0 : index
    %34 = vector.load %arg7[%c141, %c0_21] : memref<224x256xbf16, #tpu.memory_space<vmem>>, vector<8x256xbf16>
    tpu.vector_store %arg7[%c141, %c0_21], %33 {strides = array<i32>} : memref<224x256xbf16, #tpu.memory_space<vmem>>, vector<8x256xbf16>,
    %35 = vector.extract_strided_slice %8 {offsets = [96, 0], sizes = [8, 256], strides = [1, 1]} : vector<128x256xbf16> to vector<8x256xbf16>
    %c151 = arith.constant 151 : index
    %c0_22 = arith.constant 0 : index
    %36 = vector.load %arg7[%c151, %c0_22] : memref<224x256xbf16, #tpu.memory_space<vmem>>, vector<8x256xbf16>
    tpu.vector_store %arg7[%c151, %c0_22], %35 {strides = array<i32>} : memref<224x256xbf16, #tpu.memory_space<vmem>>, vector<8x256xbf16>,
    %37 = vector.extract_strided_slice %8 {offsets = [104, 0], sizes = [8, 256], strides = [1, 1]} : vector<128x256xbf16> to vector<8x256xbf16>
    %c161 = arith.constant 161 : index
    %c0_23 = arith.constant 0 : index
    %38 = vector.load %arg7[%c161, %c0_23] : memref<224x256xbf16, #tpu.memory_space<vmem>>, vector<8x256xbf16>
    tpu.vector_store %arg7[%c161, %c0_23], %37 {strides = array<i32>} : memref<224x256xbf16, #tpu.memory_space<vmem>>, vector<8x256xbf16>,
    %39 = vector.extract_strided_slice %8 {offsets = [112, 0], sizes = [8, 256], strides = [1, 1]} : vector<128x256xbf16> to vector<8x256xbf16>
    %c171 = arith.constant 171 : index
    %c0_24 = arith.constant 0 : index
    %40 = vector.load %arg7[%c171, %c0_24] : memref<224x256xbf16, #tpu.memory_space<vmem>>, vector<8x256xbf16>
    tpu.vector_store %arg7[%c171, %c0_24], %39 {strides = array<i32>} : memref<224x256xbf16, #tpu.memory_space<vmem>>, vector<8x256xbf16>,
    %41 = vector.extract_strided_slice %8 {offsets = [120, 0], sizes = [8, 256], strides = [1, 1]} : vector<128x256xbf16> to vector<8x256xbf16>
    %c181 = arith.constant 181 : index
    %c0_25 = arith.constant 0 : index
    %42 = vector.load %arg7[%c181, %c0_25] : memref<224x256xbf16, #tpu.memory_space<vmem>>, vector<8x256xbf16>
    tpu.vector_store %arg7[%c181, %c0_25], %41 {strides = array<i32>} : memref<224x256xbf16, #tpu.memory_space<vmem>>, vector<8x256xbf16>,
    %c0_26 = arith.constant 0 : index
    %c0_27 = arith.constant 0 : index
    %43 = vector.load %arg7[%c0_26, %c0_27] : memref<224x256xbf16, #tpu.memory_space<vmem>>, vector<200x256xbf16>
    %c0_28 = arith.constant 0 : index
    %c0_29 = arith.constant 0 : index
    %44 = vector.load %arg8[%c0_28, %c0_29] : memref<200x2304xbf16, #tpu.memory_space<vmem>>, vector<200x256xbf16>
    tpu.vector_store %arg8[%c0_28, %c0_29], %43 {strides = array<i32>} : memref<200x2304xbf16, #tpu.memory_space<vmem>>, vector<200x256xbf16>,
    %c1 = arith.constant 1 : index
    %c0_30 = arith.constant 0 : index
    %45 = vector.load %arg7[%c1, %c0_30] : memref<224x256xbf16, #tpu.memory_space<vmem>>, vector<200x256xbf16>
    %c0_31 = arith.constant 0 : index
    %c256 = arith.constant 256 : index
    %46 = vector.load %arg8[%c0_31, %c256] : memref<200x2304xbf16, #tpu.memory_space<vmem>>, vector<200x256xbf16>
    tpu.vector_store %arg8[%c0_31, %c256], %45 {strides = array<i32>} : memref<200x2304xbf16, #tpu.memory_space<vmem>>, vector<200x256xbf16>,
    %c2 = arith.constant 2 : index
    %c0_32 = arith.constant 0 : index
    %47 = vector.load %arg7[%c2, %c0_32] : memref<224x256xbf16, #tpu.memory_space<vmem>>, vector<200x256xbf16>
    %c0_33 = arith.constant 0 : index
    %c512 = arith.constant 512 : index
    %48 = vector.load %arg8[%c0_33, %c512] : memref<200x2304xbf16, #tpu.memory_space<vmem>>, vector<200x256xbf16>
    tpu.vector_store %arg8[%c0_33, %c512], %47 {strides = array<i32>} : memref<200x2304xbf16, #tpu.memory_space<vmem>>, vector<200x256xbf16>,
    %c10 = arith.constant 10 : index
    %c0_34 = arith.constant 0 : index
    %49 = vector.load %arg7[%c10, %c0_34] : memref<224x256xbf16, #tpu.memory_space<vmem>>, vector<200x256xbf16>
    %c0_35 = arith.constant 0 : index
    %c768 = arith.constant 768 : index
    %50 = vector.load %arg8[%c0_35, %c768] : memref<200x2304xbf16, #tpu.memory_space<vmem>>, vector<200x256xbf16>
    tpu.vector_store %arg8[%c0_35, %c768], %49 {strides = array<i32>} : memref<200x2304xbf16, #tpu.memory_space<vmem>>, vector<200x256xbf16>,
    %c11_36 = arith.constant 11 : index
    %c0_37 = arith.constant 0 : index
    %51 = vector.load %arg7[%c11_36, %c0_37] : memref<224x256xbf16, #tpu.memory_space<vmem>>, vector<200x256xbf16>
    %c0_38 = arith.constant 0 : index
    %c1024 = arith.constant 1024 : index
    %52 = vector.load %arg8[%c0_38, %c1024] : memref<200x2304xbf16, #tpu.memory_space<vmem>>, vector<200x256xbf16>
    tpu.vector_store %arg8[%c0_38, %c1024], %51 {strides = array<i32>} : memref<200x2304xbf16, #tpu.memory_space<vmem>>, vector<200x256xbf16>,
    %c12 = arith.constant 12 : index
    %c0_39 = arith.constant 0 : index
    %53 = vector.load %arg7[%c12, %c0_39] : memref<224x256xbf16, #tpu.memory_space<vmem>>, vector<200x256xbf16>
    %c0_40 = arith.constant 0 : index
    %c1280 = arith.constant 1280 : index
    %54 = vector.load %arg8[%c0_40, %c1280] : memref<200x2304xbf16, #tpu.memory_space<vmem>>, vector<200x256xbf16>
    tpu.vector_store %arg8[%c0_40, %c1280], %53 {strides = array<i32>} : memref<200x2304xbf16, #tpu.memory_space<vmem>>, vector<200x256xbf16>,
    %c20 = arith.constant 20 : index
    %c0_41 = arith.constant 0 : index
    %55 = vector.load %arg7[%c20, %c0_41] : memref<224x256xbf16, #tpu.memory_space<vmem>>, vector<200x256xbf16>
    %c0_42 = arith.constant 0 : index
    %c1536 = arith.constant 1536 : index
    %56 = vector.load %arg8[%c0_42, %c1536] : memref<200x2304xbf16, #tpu.memory_space<vmem>>, vector<200x256xbf16>
    tpu.vector_store %arg8[%c0_42, %c1536], %55 {strides = array<i32>} : memref<200x2304xbf16, #tpu.memory_space<vmem>>, vector<200x256xbf16>,
    %c21_43 = arith.constant 21 : index
    %c0_44 = arith.constant 0 : index
    %57 = vector.load %arg7[%c21_43, %c0_44] : memref<224x256xbf16, #tpu.memory_space<vmem>>, vector<200x256xbf16>
    %c0_45 = arith.constant 0 : index
    %c1792 = arith.constant 1792 : index
    %58 = vector.load %arg8[%c0_45, %c1792] : memref<200x2304xbf16, #tpu.memory_space<vmem>>, vector<200x256xbf16>
    tpu.vector_store %arg8[%c0_45, %c1792], %57 {strides = array<i32>} : memref<200x2304xbf16, #tpu.memory_space<vmem>>, vector<200x256xbf16>,
    %c22 = arith.constant 22 : index
    %c0_46 = arith.constant 0 : index
    %59 = vector.load %arg7[%c22, %c0_46] : memref<224x256xbf16, #tpu.memory_space<vmem>>, vector<200x256xbf16>
    %c0_47 = arith.constant 0 : index
    %c2048 = arith.constant 2048 : index
    %60 = vector.load %arg8[%c0_47, %c2048] : memref<200x2304xbf16, #tpu.memory_space<vmem>>, vector<200x256xbf16>
    tpu.vector_store %arg8[%c0_47, %c2048], %59 {strides = array<i32>} : memref<200x2304xbf16, #tpu.memory_space<vmem>>, vector<200x256xbf16>,
    %c0_48 = arith.constant 0 : index
    %c0_49 = arith.constant 0 : index
    %61 = vector.load %arg8[%c0_48, %c0_49] : memref<200x2304xbf16, #tpu.memory_space<vmem>>, vector<200x2304xbf16>
    %c0_50 = arith.constant 0 : index
    %c0_51 = arith.constant 0 : index
    %62 = vector.load %arg4[%c0_50, %c0_51] : memref<2304x512xbf16, #tpu.memory_space<vmem>>, vector<2304x512xbf16>
    %cst_52 = arith.constant dense<0.000000e+00> : vector<200x512xf32>
    %63 = tpu.matmul %61, %62, %cst_52 {dimension_numbers = #tpu.dot_dimension_numbers<[1], [0], [0], [1], [0, 0, 1, 1], [], []>} : vector<200x2304xbf16>, vector<2304x512xbf16>, vector<200x512xf32> -> vector<200x512xf32>
    %c0_53 = arith.constant 0 : index
    %c0_54 = arith.constant 0 : index
    %64 = vector.load %arg9[%c0_53, %c0_54] : memref<200x512xf32, #tpu.memory_space<vmem>>, vector<200x512xf32>
    tpu.vector_store %arg9[%c0_53, %c0_54], %63 {strides = array<i32>} : memref<200x512xf32, #tpu.memory_space<vmem>>, vector<200x512xf32>,
    %c0_55 = arith.constant 0 : index
    %c0_56 = arith.constant 0 : index
    %65 = vector.load %arg9[%c0_55, %c0_56] : memref<200x512xf32, #tpu.memory_space<vmem>>, vector<200x512xf32>
    %c0_57 = arith.constant 0 : index
    %c0_58 = arith.constant 0 : index
    %66 = vector.load %arg5[%c0_57, %c0_58] : memref<1x512xf32, #tpu.memory_space<vmem>>, vector<1x512xf32>
    %67 = vector.broadcast %66 : vector<1x512xf32> to vector<200x512xf32>
    %68 = arith.addf %65, %67 : vector<200x512xf32>
    %cst_59 = arith.constant 0.000000e+00 : f32
    %69 = vector.broadcast %cst_59 : f32 to vector<200x512xf32>
    %70 = arith.maximumf %68, %69 : vector<200x512xf32>
    %cst_60 = arith.constant dense<0.000000e+00> : vector<200xf32>
    %71 = vector.multi_reduction <add>, %70, %cst_60 [1] : vector<200x512xf32> to vector<200xf32>
    %72 = vector.shape_cast %71 : vector<200xf32> to vector<200x1xf32>
    %c0_61 = arith.constant 0 : index
    %c0_62 = arith.constant 0 : index
    %c0_63 = arith.constant 0 : index
    %c0_64 = arith.constant 0 : index
    %73 = vector.load %arg1[%c0_61, %c0_62, %c0_63, %c0_64] : memref<2x8x8x512xf32, #tpu.memory_space<vmem>>, vector<1x1x8x512xf32>
    %74 = vector.shape_cast %73 : vector<1x1x8x512xf32> to vector<8x512xf32>
    %75 = vector.extract_strided_slice %72 {offsets = [0, 0], sizes = [8, 1], strides = [1, 1]} : vector<200x1xf32> to vector<8x1xf32>
    %76 = vector.broadcast %75 : vector<8x1xf32> to vector<8x512xf32>
    %77 = arith.mulf %74, %76 : vector<8x512xf32>
    %c0_65 = arith.constant 0 : index
    %c0_66 = arith.constant 0 : index
    %c0_67 = arith.constant 0 : index
    %c0_68 = arith.constant 0 : index
    %78 = vector.load %arg6[%c0_65, %c0_66, %c0_67, %c0_68] : memref<2x8x8x512xf32, #tpu.memory_space<vmem>>, vector<1x1x8x512xf32>
    %79 = vector.shape_cast %78 : vector<1x1x8x512xf32> to vector<8x512xf32>
    %80 = vector.shape_cast %77 : vector<8x512xf32> to vector<1x1x8x512xf32>
    tpu.vector_store %arg6[%c0_65, %c0_66, %c0_67, %c0_68], %80 {strides = array<i32>} : memref<2x8x8x512xf32, #tpu.memory_space<vmem>>, vector<1x1x8x512xf32>,
    %c0_69 = arith.constant 0 : index
    %c1_70 = arith.constant 1 : index
    %c0_71 = arith.constant 0 : index
    %c0_72 = arith.constant 0 : index
    %81 = vector.load %arg1[%c0_69, %c1_70, %c0_71, %c0_72] : memref<2x8x8x512xf32, #tpu.memory_space<vmem>>, vector<1x1x8x512xf32>
    %82 = vector.shape_cast %81 : vector<1x1x8x512xf32> to vector<8x512xf32>
    %83 = vector.extract_strided_slice %72 {offsets = [10, 0], sizes = [8, 1], strides = [1, 1]} : vector<200x1xf32> to vector<8x1xf32>
    %84 = vector.broadcast %83 : vector<8x1xf32> to vector<8x512xf32>
    %85 = arith.mulf %82, %84 : vector<8x512xf32>
    %c0_73 = arith.constant 0 : index
    %c1_74 = arith.constant 1 : index
    %c0_75 = arith.constant 0 : index
    %c0_76 = arith.constant 0 : index
    %86 = vector.load %arg6[%c0_73, %c1_74, %c0_75, %c0_76] : memref<2x8x8x512xf32, #tpu.memory_space<vmem>>, vector<1x1x8x512xf32>
    %87 = vector.shape_cast %86 : vector<1x1x8x512xf32> to vector<8x512xf32>
    %88 = vector.shape_cast %85 : vector<8x512xf32> to vector<1x1x8x512xf32>
    tpu.vector_store %arg6[%c0_73, %c1_74, %c0_75, %c0_76], %88 {strides = array<i32>} : memref<2x8x8x512xf32, #tpu.memory_space<vmem>>, vector<1x1x8x512xf32>,
    %c0_77 = arith.constant 0 : index
    %c2_78 = arith.constant 2 : index
    %c0_79 = arith.constant 0 : index
    %c0_80 = arith.constant 0 : index
    %89 = vector.load %arg1[%c0_77, %c2_78, %c0_79, %c0_80] : memref<2x8x8x512xf32, #tpu.memory_space<vmem>>, vector<1x1x8x512xf32>
    %90 = vector.shape_cast %89 : vector<1x1x8x512xf32> to vector<8x512xf32>
    %91 = vector.extract_strided_slice %72 {offsets = [20, 0], sizes = [8, 1], strides = [1, 1]} : vector<200x1xf32> to vector<8x1xf32>
    %92 = vector.broadcast %91 : vector<8x1xf32> to vector<8x512xf32>
    %93 = arith.mulf %90, %92 : vector<8x512xf32>
    %c0_81 = arith.constant 0 : index
    %c2_82 = arith.constant 2 : index
    %c0_83 = arith.constant 0 : index
    %c0_84 = arith.constant 0 : index
    %94 = vector.load %arg6[%c0_81, %c2_82, %c0_83, %c0_84] : memref<2x8x8x512xf32, #tpu.memory_space<vmem>>, vector<1x1x8x512xf32>
    %95 = vector.shape_cast %94 : vector<1x1x8x512xf32> to vector<8x512xf32>
    %96 = vector.shape_cast %93 : vector<8x512xf32> to vector<1x1x8x512xf32>
    tpu.vector_store %arg6[%c0_81, %c2_82, %c0_83, %c0_84], %96 {strides = array<i32>} : memref<2x8x8x512xf32, #tpu.memory_space<vmem>>, vector<1x1x8x512xf32>,
    %c0_85 = arith.constant 0 : index
    %c3 = arith.constant 3 : index
    %c0_86 = arith.constant 0 : index
    %c0_87 = arith.constant 0 : index
    %97 = vector.load %arg1[%c0_85, %c3, %c0_86, %c0_87] : memref<2x8x8x512xf32, #tpu.memory_space<vmem>>, vector<1x1x8x512xf32>
    %98 = vector.shape_cast %97 : vector<1x1x8x512xf32> to vector<8x512xf32>
    %99 = vector.extract_strided_slice %72 {offsets = [30, 0], sizes = [8, 1], strides = [1, 1]} : vector<200x1xf32> to vector<8x1xf32>
    %100 = vector.broadcast %99 : vector<8x1xf32> to vector<8x512xf32>
    %101 = arith.mulf %98, %100 : vector<8x512xf32>
    %c0_88 = arith.constant 0 : index
    %c3_89 = arith.constant 3 : index
    %c0_90 = arith.constant 0 : index
    %c0_91 = arith.constant 0 : index
    %102 = vector.load %arg6[%c0_88, %c3_89, %c0_90, %c0_91] : memref<2x8x8x512xf32, #tpu.memory_space<vmem>>, vector<1x1x8x512xf32>
    %103 = vector.shape_cast %102 : vector<1x1x8x512xf32> to vector<8x512xf32>
    %104 = vector.shape_cast %101 : vector<8x512xf32> to vector<1x1x8x512xf32>
    tpu.vector_store %arg6[%c0_88, %c3_89, %c0_90, %c0_91], %104 {strides = array<i32>} : memref<2x8x8x512xf32, #tpu.memory_space<vmem>>, vector<1x1x8x512xf32>,
    %c0_92 = arith.constant 0 : index
    %c4 = arith.constant 4 : index
    %c0_93 = arith.constant 0 : index
    %c0_94 = arith.constant 0 : index
    %105 = vector.load %arg1[%c0_92, %c4, %c0_93, %c0_94] : memref<2x8x8x512xf32, #tpu.memory_space<vmem>>, vector<1x1x8x512xf32>
    %106 = vector.shape_cast %105 : vector<1x1x8x512xf32> to vector<8x512xf32>
    %107 = vector.extract_strided_slice %72 {offsets = [40, 0], sizes = [8, 1], strides = [1, 1]} : vector<200x1xf32> to vector<8x1xf32>
    %108 = vector.broadcast %107 : vector<8x1xf32> to vector<8x512xf32>
    %109 = arith.mulf %106, %108 : vector<8x512xf32>
    %c0_95 = arith.constant 0 : index
    %c4_96 = arith.constant 4 : index
    %c0_97 = arith.constant 0 : index
    %c0_98 = arith.constant 0 : index
    %110 = vector.load %arg6[%c0_95, %c4_96, %c0_97, %c0_98] : memref<2x8x8x512xf32, #tpu.memory_space<vmem>>, vector<1x1x8x512xf32>
    %111 = vector.shape_cast %110 : vector<1x1x8x512xf32> to vector<8x512xf32>
    %112 = vector.shape_cast %109 : vector<8x512xf32> to vector<1x1x8x512xf32>
    tpu.vector_store %arg6[%c0_95, %c4_96, %c0_97, %c0_98], %112 {strides = array<i32>} : memref<2x8x8x512xf32, #tpu.memory_space<vmem>>, vector<1x1x8x512xf32>,
    %c0_99 = arith.constant 0 : index
    %c5 = arith.constant 5 : index
    %c0_100 = arith.constant 0 : index
    %c0_101 = arith.constant 0 : index
    %113 = vector.load %arg1[%c0_99, %c5, %c0_100, %c0_101] : memref<2x8x8x512xf32, #tpu.memory_space<vmem>>, vector<1x1x8x512xf32>
    %114 = vector.shape_cast %113 : vector<1x1x8x512xf32> to vector<8x512xf32>
    %115 = vector.extract_strided_slice %72 {offsets = [50, 0], sizes = [8, 1], strides = [1, 1]} : vector<200x1xf32> to vector<8x1xf32>
    %116 = vector.broadcast %115 : vector<8x1xf32> to vector<8x512xf32>
    %117 = arith.mulf %114, %116 : vector<8x512xf32>
    %c0_102 = arith.constant 0 : index
    %c5_103 = arith.constant 5 : index
    %c0_104 = arith.constant 0 : index
    %c0_105 = arith.constant 0 : index
    %118 = vector.load %arg6[%c0_102, %c5_103, %c0_104, %c0_105] : memref<2x8x8x512xf32, #tpu.memory_space<vmem>>, vector<1x1x8x512xf32>
    %119 = vector.shape_cast %118 : vector<1x1x8x512xf32> to vector<8x512xf32>
    %120 = vector.shape_cast %117 : vector<8x512xf32> to vector<1x1x8x512xf32>
    tpu.vector_store %arg6[%c0_102, %c5_103, %c0_104, %c0_105], %120 {strides = array<i32>} : memref<2x8x8x512xf32, #tpu.memory_space<vmem>>, vector<1x1x8x512xf32>,
    %c0_106 = arith.constant 0 : index
    %c6 = arith.constant 6 : index
    %c0_107 = arith.constant 0 : index
    %c0_108 = arith.constant 0 : index
    %121 = vector.load %arg1[%c0_106, %c6, %c0_107, %c0_108] : memref<2x8x8x512xf32, #tpu.memory_space<vmem>>, vector<1x1x8x512xf32>
    %122 = vector.shape_cast %121 : vector<1x1x8x512xf32> to vector<8x512xf32>
    %123 = vector.extract_strided_slice %72 {offsets = [60, 0], sizes = [8, 1], strides = [1, 1]} : vector<200x1xf32> to vector<8x1xf32>
    %124 = vector.broadcast %123 : vector<8x1xf32> to vector<8x512xf32>
    %125 = arith.mulf %122, %124 : vector<8x512xf32>
    %c0_109 = arith.constant 0 : index
    %c6_110 = arith.constant 6 : index
    %c0_111 = arith.constant 0 : index
    %c0_112 = arith.constant 0 : index
    %126 = vector.load %arg6[%c0_109, %c6_110, %c0_111, %c0_112] : memref<2x8x8x512xf32, #tpu.memory_space<vmem>>, vector<1x1x8x512xf32>
    %127 = vector.shape_cast %126 : vector<1x1x8x512xf32> to vector<8x512xf32>
    %128 = vector.shape_cast %125 : vector<8x512xf32> to vector<1x1x8x512xf32>
    tpu.vector_store %arg6[%c0_109, %c6_110, %c0_111, %c0_112], %128 {strides = array<i32>} : memref<2x8x8x512xf32, #tpu.memory_space<vmem>>, vector<1x1x8x512xf32>,
    %c0_113 = arith.constant 0 : index
    %c7 = arith.constant 7 : index
    %c0_114 = arith.constant 0 : index
    %c0_115 = arith.constant 0 : index
    %129 = vector.load %arg1[%c0_113, %c7, %c0_114, %c0_115] : memref<2x8x8x512xf32, #tpu.memory_space<vmem>>, vector<1x1x8x512xf32>
    %130 = vector.shape_cast %129 : vector<1x1x8x512xf32> to vector<8x512xf32>
    %131 = vector.extract_strided_slice %72 {offsets = [70, 0], sizes = [8, 1], strides = [1, 1]} : vector<200x1xf32> to vector<8x1xf32>
    %132 = vector.broadcast %131 : vector<8x1xf32> to vector<8x512xf32>
    %133 = arith.mulf %130, %132 : vector<8x512xf32>
    %c0_116 = arith.constant 0 : index
    %c7_117 = arith.constant 7 : index
    %c0_118 = arith.constant 0 : index
    %c0_119 = arith.constant 0 : index
    %134 = vector.load %arg6[%c0_116, %c7_117, %c0_118, %c0_119] : memref<2x8x8x512xf32, #tpu.memory_space<vmem>>, vector<1x1x8x512xf32>
    %135 = vector.shape_cast %134 : vector<1x1x8x512xf32> to vector<8x512xf32>
    %136 = vector.shape_cast %133 : vector<8x512xf32> to vector<1x1x8x512xf32>
    tpu.vector_store %arg6[%c0_116, %c7_117, %c0_118, %c0_119], %136 {strides = array<i32>} : memref<2x8x8x512xf32, #tpu.memory_space<vmem>>, vector<1x1x8x512xf32>,
    %c1_120 = arith.constant 1 : index
    %c0_121 = arith.constant 0 : index
    %c0_122 = arith.constant 0 : index
    %c0_123 = arith.constant 0 : index
    %137 = vector.load %arg1[%c1_120, %c0_121, %c0_122, %c0_123] : memref<2x8x8x512xf32, #tpu.memory_space<vmem>>, vector<1x1x8x512xf32>
    %138 = vector.shape_cast %137 : vector<1x1x8x512xf32> to vector<8x512xf32>
    %139 = vector.extract_strided_slice %72 {offsets = [100, 0], sizes = [8, 1], strides = [1, 1]} : vector<200x1xf32> to vector<8x1xf32>
    %140 = vector.broadcast %139 : vector<8x1xf32> to vector<8x512xf32>
    %141 = arith.mulf %138, %140 : vector<8x512xf32>
    %c1_124 = arith.constant 1 : index
    %c0_125 = arith.constant 0 : index
    %c0_126 = arith.constant 0 : index
    %c0_127 = arith.constant 0 : index
    %142 = vector.load %arg6[%c1_124, %c0_125, %c0_126, %c0_127] : memref<2x8x8x512xf32, #tpu.memory_space<vmem>>, vector<1x1x8x512xf32>
    %143 = vector.shape_cast %142 : vector<1x1x8x512xf32> to vector<8x512xf32>
    %144 = vector.shape_cast %141 : vector<8x512xf32> to vector<1x1x8x512xf32>
    tpu.vector_store %arg6[%c1_124, %c0_125, %c0_126, %c0_127], %144 {strides = array<i32>} : memref<2x8x8x512xf32, #tpu.memory_space<vmem>>, vector<1x1x8x512xf32>,
    %c1_128 = arith.constant 1 : index
    %c1_129 = arith.constant 1 : index
    %c0_130 = arith.constant 0 : index
    %c0_131 = arith.constant 0 : index
    %145 = vector.load %arg1[%c1_128, %c1_129, %c0_130, %c0_131] : memref<2x8x8x512xf32, #tpu.memory_space<vmem>>, vector<1x1x8x512xf32>
    %146 = vector.shape_cast %145 : vector<1x1x8x512xf32> to vector<8x512xf32>
    %147 = vector.extract_strided_slice %72 {offsets = [110, 0], sizes = [8, 1], strides = [1, 1]} : vector<200x1xf32> to vector<8x1xf32>
    %148 = vector.broadcast %147 : vector<8x1xf32> to vector<8x512xf32>
    %149 = arith.mulf %146, %148 : vector<8x512xf32>
    %c1_132 = arith.constant 1 : index
    %c1_133 = arith.constant 1 : index
    %c0_134 = arith.constant 0 : index
    %c0_135 = arith.constant 0 : index
    %150 = vector.load %arg6[%c1_132, %c1_133, %c0_134, %c0_135] : memref<2x8x8x512xf32, #tpu.memory_space<vmem>>, vector<1x1x8x512xf32>
    %151 = vector.shape_cast %150 : vector<1x1x8x512xf32> to vector<8x512xf32>
    %152 = vector.shape_cast %149 : vector<8x512xf32> to vector<1x1x8x512xf32>
    tpu.vector_store %arg6[%c1_132, %c1_133, %c0_134, %c0_135], %152 {strides = array<i32>} : memref<2x8x8x512xf32, #tpu.memory_space<vmem>>, vector<1x1x8x512xf32>,
    %c1_136 = arith.constant 1 : index
    %c2_137 = arith.constant 2 : index
    %c0_138 = arith.constant 0 : index
    %c0_139 = arith.constant 0 : index
    %153 = vector.load %arg1[%c1_136, %c2_137, %c0_138, %c0_139] : memref<2x8x8x512xf32, #tpu.memory_space<vmem>>, vector<1x1x8x512xf32>
    %154 = vector.shape_cast %153 : vector<1x1x8x512xf32> to vector<8x512xf32>
    %155 = vector.extract_strided_slice %72 {offsets = [120, 0], sizes = [8, 1], strides = [1, 1]} : vector<200x1xf32> to vector<8x1xf32>
    %156 = vector.broadcast %155 : vector<8x1xf32> to vector<8x512xf32>
    %157 = arith.mulf %154, %156 : vector<8x512xf32>
    %c1_140 = arith.constant 1 : index
    %c2_141 = arith.constant 2 : index
    %c0_142 = arith.constant 0 : index
    %c0_143 = arith.constant 0 : index
    %158 = vector.load %arg6[%c1_140, %c2_141, %c0_142, %c0_143] : memref<2x8x8x512xf32, #tpu.memory_space<vmem>>, vector<1x1x8x512xf32>
    %159 = vector.shape_cast %158 : vector<1x1x8x512xf32> to vector<8x512xf32>
    %160 = vector.shape_cast %157 : vector<8x512xf32> to vector<1x1x8x512xf32>
    tpu.vector_store %arg6[%c1_140, %c2_141, %c0_142, %c0_143], %160 {strides = array<i32>} : memref<2x8x8x512xf32, #tpu.memory_space<vmem>>, vector<1x1x8x512xf32>,
    %c1_144 = arith.constant 1 : index
    %c3_145 = arith.constant 3 : index
    %c0_146 = arith.constant 0 : index
    %c0_147 = arith.constant 0 : index
    %161 = vector.load %arg1[%c1_144, %c3_145, %c0_146, %c0_147] : memref<2x8x8x512xf32, #tpu.memory_space<vmem>>, vector<1x1x8x512xf32>
    %162 = vector.shape_cast %161 : vector<1x1x8x512xf32> to vector<8x512xf32>
    %163 = vector.extract_strided_slice %72 {offsets = [130, 0], sizes = [8, 1], strides = [1, 1]} : vector<200x1xf32> to vector<8x1xf32>
    %164 = vector.broadcast %163 : vector<8x1xf32> to vector<8x512xf32>
    %165 = arith.mulf %162, %164 : vector<8x512xf32>
    %c1_148 = arith.constant 1 : index
    %c3_149 = arith.constant 3 : index
    %c0_150 = arith.constant 0 : index
    %c0_151 = arith.constant 0 : index
    %166 = vector.load %arg6[%c1_148, %c3_149, %c0_150, %c0_151] : memref<2x8x8x512xf32, #tpu.memory_space<vmem>>, vector<1x1x8x512xf32>
    %167 = vector.shape_cast %166 : vector<1x1x8x512xf32> to vector<8x512xf32>
    %168 = vector.shape_cast %165 : vector<8x512xf32> to vector<1x1x8x512xf32>
    tpu.vector_store %arg6[%c1_148, %c3_149, %c0_150, %c0_151], %168 {strides = array<i32>} : memref<2x8x8x512xf32, #tpu.memory_space<vmem>>, vector<1x1x8x512xf32>,
    %c1_152 = arith.constant 1 : index
    %c4_153 = arith.constant 4 : index
    %c0_154 = arith.constant 0 : index
    %c0_155 = arith.constant 0 : index
    %169 = vector.load %arg1[%c1_152, %c4_153, %c0_154, %c0_155] : memref<2x8x8x512xf32, #tpu.memory_space<vmem>>, vector<1x1x8x512xf32>
    %170 = vector.shape_cast %169 : vector<1x1x8x512xf32> to vector<8x512xf32>
    %171 = vector.extract_strided_slice %72 {offsets = [140, 0], sizes = [8, 1], strides = [1, 1]} : vector<200x1xf32> to vector<8x1xf32>
    %172 = vector.broadcast %171 : vector<8x1xf32> to vector<8x512xf32>
    %173 = arith.mulf %170, %172 : vector<8x512xf32>
    %c1_156 = arith.constant 1 : index
    %c4_157 = arith.constant 4 : index
    %c0_158 = arith.constant 0 : index
    %c0_159 = arith.constant 0 : index
    %174 = vector.load %arg6[%c1_156, %c4_157, %c0_158, %c0_159] : memref<2x8x8x512xf32, #tpu.memory_space<vmem>>, vector<1x1x8x512xf32>
    %175 = vector.shape_cast %174 : vector<1x1x8x512xf32> to vector<8x512xf32>
    %176 = vector.shape_cast %173 : vector<8x512xf32> to vector<1x1x8x512xf32>
    tpu.vector_store %arg6[%c1_156, %c4_157, %c0_158, %c0_159], %176 {strides = array<i32>} : memref<2x8x8x512xf32, #tpu.memory_space<vmem>>, vector<1x1x8x512xf32>,
    %c1_160 = arith.constant 1 : index
    %c5_161 = arith.constant 5 : index
    %c0_162 = arith.constant 0 : index
    %c0_163 = arith.constant 0 : index
    %177 = vector.load %arg1[%c1_160, %c5_161, %c0_162, %c0_163] : memref<2x8x8x512xf32, #tpu.memory_space<vmem>>, vector<1x1x8x512xf32>
    %178 = vector.shape_cast %177 : vector<1x1x8x512xf32> to vector<8x512xf32>
    %179 = vector.extract_strided_slice %72 {offsets = [150, 0], sizes = [8, 1], strides = [1, 1]} : vector<200x1xf32> to vector<8x1xf32>
    %180 = vector.broadcast %179 : vector<8x1xf32> to vector<8x512xf32>
    %181 = arith.mulf %178, %180 : vector<8x512xf32>
    %c1_164 = arith.constant 1 : index
    %c5_165 = arith.constant 5 : index
    %c0_166 = arith.constant 0 : index
    %c0_167 = arith.constant 0 : index
    %182 = vector.load %arg6[%c1_164, %c5_165, %c0_166, %c0_167] : memref<2x8x8x512xf32, #tpu.memory_space<vmem>>, vector<1x1x8x512xf32>
    %183 = vector.shape_cast %182 : vector<1x1x8x512xf32> to vector<8x512xf32>
    %184 = vector.shape_cast %181 : vector<8x512xf32> to vector<1x1x8x512xf32>
    tpu.vector_store %arg6[%c1_164, %c5_165, %c0_166, %c0_167], %184 {strides = array<i32>} : memref<2x8x8x512xf32, #tpu.memory_space<vmem>>, vector<1x1x8x512xf32>,
    %c1_168 = arith.constant 1 : index
    %c6_169 = arith.constant 6 : index
    %c0_170 = arith.constant 0 : index
    %c0_171 = arith.constant 0 : index
    %185 = vector.load %arg1[%c1_168, %c6_169, %c0_170, %c0_171] : memref<2x8x8x512xf32, #tpu.memory_space<vmem>>, vector<1x1x8x512xf32>
    %186 = vector.shape_cast %185 : vector<1x1x8x512xf32> to vector<8x512xf32>
    %187 = vector.extract_strided_slice %72 {offsets = [160, 0], sizes = [8, 1], strides = [1, 1]} : vector<200x1xf32> to vector<8x1xf32>
    %188 = vector.broadcast %187 : vector<8x1xf32> to vector<8x512xf32>
    %189 = arith.mulf %186, %188 : vector<8x512xf32>
    %c1_172 = arith.constant 1 : index
    %c6_173 = arith.constant 6 : index
    %c0_174 = arith.constant 0 : index
    %c0_175 = arith.constant 0 : index
    %190 = vector.load %arg6[%c1_172, %c6_173, %c0_174, %c0_175] : memref<2x8x8x512xf32, #tpu.memory_space<vmem>>, vector<1x1x8x512xf32>
    %191 = vector.shape_cast %190 : vector<1x1x8x512xf32> to vector<8x512xf32>
    %192 = vector.shape_cast %189 : vector<8x512xf32> to vector<1x1x8x512xf32>
    tpu.vector_store %arg6[%c1_172, %c6_173, %c0_174, %c0_175], %192 {strides = array<i32>} : memref<2x8x8x512xf32, #tpu.memory_space<vmem>>, vector<1x1x8x512xf32>,
    %c1_176 = arith.constant 1 : index
    %c7_177 = arith.constant 7 : index
    %c0_178 = arith.constant 0 : index
    %c0_179 = arith.constant 0 : index
    %193 = vector.load %arg1[%c1_176, %c7_177, %c0_178, %c0_179] : memref<2x8x8x512xf32, #tpu.memory_space<vmem>>, vector<1x1x8x512xf32>
    %194 = vector.shape_cast %193 : vector<1x1x8x512xf32> to vector<8x512xf32>
    %195 = vector.extract_strided_slice %72 {offsets = [170, 0], sizes = [8, 1], strides = [1, 1]} : vector<200x1xf32> to vector<8x1xf32>
    %196 = vector.broadcast %195 : vector<8x1xf32> to vector<8x512xf32>
    %197 = arith.mulf %194, %196 : vector<8x512xf32>
    %c1_180 = arith.constant 1 : index
    %c7_181 = arith.constant 7 : index
    %c0_182 = arith.constant 0 : index
    %c0_183 = arith.constant 0 : index
    %198 = vector.load %arg6[%c1_180, %c7_181, %c0_182, %c0_183] : memref<2x8x8x512xf32, #tpu.memory_space<vmem>>, vector<1x1x8x512xf32>
    %199 = vector.shape_cast %198 : vector<1x1x8x512xf32> to vector<8x512xf32>
    %200 = vector.shape_cast %197 : vector<8x512xf32> to vector<1x1x8x512xf32>
    tpu.vector_store %arg6[%c1_180, %c7_181, %c0_182, %c0_183], %200 {strides = array<i32>} : memref<2x8x8x512xf32, #tpu.memory_space<vmem>>, vector<1x1x8x512xf32>,
    return
  }
  func.func @transform_0(%arg0: i32) -> (i32, i32, i32, i32) {
    %c0_i32 = arith.constant 0 : i32
    %c0_i32_0 = arith.constant 0 : i32
    %c0_i32_1 = arith.constant 0 : i32
    %c0_i32_2 = arith.constant 0 : i32
    return %arg0, %c0_i32, %c0_i32_0, %c0_i32_1 : i32, i32, i32, i32
  }
  func.func @transform_1(%arg0: i32) -> (i32, i32) {
    %c0_i32 = arith.constant 0 : i32
    %c0_i32_0 = arith.constant 0 : i32
    %c0_i32_1 = arith.constant 0 : i32
    return %c0_i32, %c0_i32_0 : i32, i32
  }
  func.func @transform_2(%arg0: i32) -> (i32, i32) {
    %c0_i32 = arith.constant 0 : i32
    %c0_i32_0 = arith.constant 0 : i32
    %c0_i32_1 = arith.constant 0 : i32
    return %c0_i32, %c0_i32_0 : i32, i32
  }
  func.func @transform_3(%arg0: i32) -> (i32, i32) {
    %c0_i32 = arith.constant 0 : i32
    %c0_i32_0 = arith.constant 0 : i32
    %c0_i32_1 = arith.constant 0 : i32
    return %c0_i32, %c0_i32_0 : i32, i32
  }
  func.func @transform_4(%arg0: i32) -> (i32, i32) {
    %c0_i32 = arith.constant 0 : i32
    %c0_i32_0 = arith.constant 0 : i32
    %c0_i32_1 = arith.constant 0 : i32
    return %c0_i32, %c0_i32_0 : i32, i32
  }
  func.func @transform_5(%arg0: i32) -> (i32, i32, i32, i32) {
    %c0_i32 = arith.constant 0 : i32
    %c0_i32_0 = arith.constant 0 : i32
    %c0_i32_1 = arith.constant 0 : i32
    %c0_i32_2 = arith.constant 0 : i32
    return %arg0, %c0_i32, %c0_i32_0, %c0_i32_1 : i32, i32, i32, i32
  }
}

</mosaic_0001>

<llo_original>
// kernel: tpu_custom_call.1
$region0: #{tpu_custom_call.1}
  #allocation0 [shape = 'u32[]', space=smem, size = 0x4, offset = 0x4, fixed_abs, tag = 'smem constant byte address 0x4 - core index']
  #allocation1 [shape = 'u32[144,128]{1,0:T(1,128)}', space=vmem, size = 0x12000, scoped, tag = 'internal scratch']
  #allocation2 [shape = 'bf16[224,256]{1,0:T(8,128)(2,1)}', space=vmem, size = 0x1c000, scoped, tag = 'scratch operand']
  #allocation3 [shape = 'bf16[200,2304]{1,0:T(8,128)(2,1)}', space=vmem, size = 0xe1000, scoped, tag = 'scratch operand']
  #allocation4 [shape = 'f32[200,512]{1,0:T(8,128)}', space=vmem, size = 0x64000, scoped, tag = 'scratch operand']
  %s0 = inlined_call_operand.hbm [shape: f32[2,8,8,512], index: 0, kind: input, shape index: {}]
  %s1 = inlined_call_operand.hbm [shape: bf16[512,256], index: 1, kind: input, shape index: {}]
  %s2 = inlined_call_operand.hbm [shape: f32[1,256], index: 2, kind: input, shape index: {}]
  %s3 = inlined_call_operand.hbm [shape: bf16[2304,512], index: 3, kind: input, shape index: {}]
  %s4 = inlined_call_operand.hbm [shape: f32[1,512], index: 4, kind: input, shape index: {}]
  %s5 = inlined_call_operand.hbm [shape: f32[2,8,8,512], index: 5, kind: output, shape index: {}]
  %s6 = sld [smem:[#allocation0]]
  $region50: #{tpu_custom_call.1} parent=0
    _
  %s8 = ssub.s32 1, %s6
  %s9 = scalar_select 0, %s8, %s6
  $region1: #{tpu_custom_call.1} parent=0
    #allocation5 [shape = 'u8[262144]{0}', space=vmem, size = 0x40000, scoped, tag = 'input window, operand 0, single buffered']
    #allocation6 [shape = 's32[1]{0}', space=sflag, size = 0x4, scoped, tag = 'scoped memory for tpu_custom_call.1']
    #allocation7 [shape = 's32[1]{0}', space=sflag, size = 0x4, scoped, tag = 'scoped memory for tpu_custom_call.1']
    #allocation8 [shape = 'u8[262144]{0}', space=vmem, size = 0x40000, scoped, tag = 'input window, operand 1, single buffered']
    #allocation9 [shape = 's32[1]{0}', space=sflag, size = 0x4, scoped, tag = 'scoped memory for tpu_custom_call.1']
    #allocation10 [shape = 'u8[1024]{0}', space=vmem, size = 0x400, scoped, tag = 'input window, operand 2, single buffered']
    #allocation11 [shape = 'u8[2359296]{0}', space=vmem, size = 0x240000, scoped, tag = 'input window, operand 3, single buffered']
    #allocation12 [shape = 's32[1]{0}', space=sflag, size = 0x4, scoped, tag = 'scoped memory for tpu_custom_call.1']
    #allocation13 [shape = 'u8[2048]{0}', space=vmem, size = 0x800, scoped, tag = 'input window, operand 4, single buffered']
    #allocation14 [shape = 'u8[262144]{0}', space=vmem, size = 0x40000, scoped, tag = 'output window, operand 0, single buffered']
    %10 = vsyncpa [#allocation6], 0
    %11 = vsyncpa [#allocation9], 0
    %12 = vsyncpa [#allocation12], 0
    %13 = vsyncpa [#allocation7], 0
    // Predicated region
    $region2: #{tpu_custom_call.1} parent=1 // pred_check
      _
    $region3: #{tpu_custom_call.1} parent=1 // pred_check_branch
      %15 = sbr.rel (0) target = $region5
    $region4: #{tpu_custom_call.1} parent=1 // pred_region
      %s17 = ssub.s32 8192, 8192
      %18 = vsyncadd [#allocation6], %s17
      %s19 = sshll.u32 [#allocation5], 4
      %s20 = int_to_ptr.vmem [resolvable:$true] %s19
      %25 = dma.hbm_to_vmem [thread:$0]  %s0, 8192, %s20, [#allocation6], 512, 512, 32
    $region5: #{tpu_custom_call.1} parent=1 // pred_fallthru
      _
    // Predicated region
    $region6: #{tpu_custom_call.1} parent=1 // pred_check
      _
    $region7: #{tpu_custom_call.1} parent=1 // pred_check_branch
      %27 = sbr.rel (0) target = $region9
    $region8: #{tpu_custom_call.1} parent=1 // pred_region
      %s29 = ssub.s32 8192, 8192
      %30 = vsyncadd [#allocation9], %s29
      %s31 = sshll.u32 [#allocation8], 4
      %s32 = int_to_ptr.vmem [resolvable:$true] %s31
      %37 = dma.hbm_to_vmem [thread:$0]  %s1, 8192, %s32, [#allocation9], 128, 128, 8
    $region9: #{tpu_custom_call.1} parent=1 // pred_fallthru
      _
    // Predicated region
    $region10: #{tpu_custom_call.1} parent=1 // pred_check
      _
    $region11: #{tpu_custom_call.1} parent=1 // pred_check_branch
      %39 = sbr.rel (0) target = $region13
    $region12: #{tpu_custom_call.1} parent=1 // pred_region
      %s41 = ssub.s32 32, 32
      %42 = vsyncadd [#allocation9], %s41
      %s44 = sshll.u32 [#allocation10], 4
      %s45 = int_to_ptr.vmem [resolvable:$true] %s44
      %47 = dma.hbm_to_vmem [thread:$0]  %s2, 32, %s45, [#allocation9]
    $region13: #{tpu_custom_call.1} parent=1 // pred_fallthru
      _
    // Predicated region
    $region14: #{tpu_custom_call.1} parent=1 // pred_check
      _
    $region15: #{tpu_custom_call.1} parent=1 // pred_check_branch
      %49 = sbr.rel (0) target = $region17
    $region16: #{tpu_custom_call.1} parent=1 // pred_region
      %s51 = ssub.s32 73728, 73728
      %52 = vsyncadd [#allocation12], %s51
      %s53 = sshll.u32 [#allocation11], 4
      %s54 = int_to_ptr.vmem [resolvable:$true] %s53
      %59 = dma.hbm_to_vmem [thread:$0]  %s3, 73728, %s54, [#allocation12], 256, 256, 16
    $region17: #{tpu_custom_call.1} parent=1 // pred_fallthru
      _
    // Predicated region
    $region18: #{tpu_custom_call.1} parent=1 // pred_check
      _
    $region19: #{tpu_custom_call.1} parent=1 // pred_check_branch
      %61 = sbr.rel (0) target = $region21
    $region20: #{tpu_custom_call.1} parent=1 // pred_region
      %s63 = ssub.s32 64, 64
      %64 = vsyncadd [#allocation12], %s63
      %s66 = sshll.u32 [#allocation13], 4
      %s67 = int_to_ptr.vmem [resolvable:$true] %s66
      %69 = dma.hbm_to_vmem [thread:$0]  %s4, 64, %s67, [#allocation12]
    $region21: #{tpu_custom_call.1} parent=1 // pred_fallthru
      _
    // Predicated region
    $region22: #{tpu_custom_call.1} parent=1 // pred_check
      _
    $region23: #{tpu_custom_call.1} parent=1 // pred_check_branch
      %71 = sbr.rel (0) target = $region25
    $region24: #{tpu_custom_call.1} parent=1 // pred_region
      %72 = dma.done [#allocation6], 8192
    $region25: #{tpu_custom_call.1} parent=1 // pred_fallthru
      _
    // Predicated region
    $region26: #{tpu_custom_call.1} parent=1 // pred_check
      _
    $region27: #{tpu_custom_call.1} parent=1 // pred_check_branch
      %74 = sbr.rel (0) target = $region29
    $region28: #{tpu_custom_call.1} parent=1 // pred_region
      %75 = dma.done [#allocation9], 8192
    $region29: #{tpu_custom_call.1} parent=1 // pred_fallthru
      _
    // Predicated region
    $region30: #{tpu_custom_call.1} parent=1 // pred_check
      _
    $region31: #{tpu_custom_call.1} parent=1 // pred_check_branch
      %77 = sbr.rel (0) target = $region33
    $region32: #{tpu_custom_call.1} parent=1 // pred_region
      %78 = dma.done [#allocation9], 32
    $region33: #{tpu_custom_call.1} parent=1 // pred_fallthru
      _
    // Predicated region
    $region34: #{tpu_custom_call.1} parent=1 // pred_check
      _
    $region35: #{tpu_custom_call.1} parent=1 // pred_check_branch
      %80 = sbr.rel (0) target = $region37
    $region36: #{tpu_custom_call.1} parent=1 // pred_region
      %81 = dma.done [#allocation12], 73728
    $region37: #{tpu_custom_call.1} parent=1 // pred_fallthru
      _
    // Predicated region
    $region38: #{tpu_custom_call.1} parent=1 // pred_check
      _
    $region39: #{tpu_custom_call.1} parent=1 // pred_check_branch
      %83 = sbr.rel (0) target = $region41
    $region40: #{tpu_custom_call.1} parent=1 // pred_region
      %84 = dma.done [#allocation12], 64
    $region41: #{tpu_custom_call.1} parent=1 // pred_fallthru
      _
    %v86 = vld [vmem:[#allocation5] sm:$0xff]
    %v87 = vld [vmem:[#allocation5 + $0x8] sm:$0xff]
    %v88 = vld [vmem:[#allocation5 + $0x10] sm:$0xff]
    %v89 = vld [vmem:[#allocation5 + $0x18] sm:$0xff]
    %v90 = vld [vmem:[#allocation5 + $0x20] sm:$0xff]
    %v91 = vld [vmem:[#allocation5 + $0x28] sm:$0xff]
    %v92 = vld [vmem:[#allocation5 + $0x30] sm:$0xff]
    %v93 = vld [vmem:[#allocation5 + $0x38] sm:$0xff]
    %v94 = vld [vmem:[#allocation5 + $0x40] sm:$0xff]
    %v95 = vld [vmem:[#allocation5 + $0x48] sm:$0xff]
    %v96 = vld [vmem:[#allocation5 + $0x50] sm:$0xff]
    %v97 = vld [vmem:[#allocation5 + $0x58] sm:$0xff]
    %v98 = vld [vmem:[#allocation5 + $0x60] sm:$0xff]
    %v99 = vld [vmem:[#allocation5 + $0x68] sm:$0xff]
    %v100 = vld [vmem:[#allocation5 + $0x70] sm:$0xff]
    %v101 = vld [vmem:[#allocation5 + $0x78] sm:$0xff]
    %v102 = vld [vmem:[#allocation5 + $0x80] sm:$0xff]
    %v103 = vld [vmem:[#allocation5 + $0x88] sm:$0xff]
    %v104 = vld [vmem:[#allocation5 + $0x90] sm:$0xff]
    %v105 = vld [vmem:[#allocation5 + $0x98] sm:$0xff]
    %v106 = vld [vmem:[#allocation5 + $0xa0] sm:$0xff]
    %v107 = vld [vmem:[#allocation5 + $0xa8] sm:$0xff]
    %v108 = vld [vmem:[#allocation5 + $0xb0] sm:$0xff]
    %v109 = vld [vmem:[#allocation5 + $0xb8] sm:$0xff]
    %v110 = vld [vmem:[#allocation5 + $0xc0] sm:$0xff]
    %v111 = vld [vmem:[#allocation5 + $0xc8] sm:$0xff]
    %v112 = vld [vmem:[#allocation5 + $0xd0] sm:$0xff]
    %v113 = vld [vmem:[#allocation5 + $0xd8] sm:$0xff]
    %v114 = vld [vmem:[#allocation5 + $0xe0] sm:$0xff]
    %v115 = vld [vmem:[#allocation5 + $0xe8] sm:$0xff]
    %v116 = vld [vmem:[#allocation5 + $0xf0] sm:$0xff]
    %v117 = vld [vmem:[#allocation5 + $0xf8] sm:$0xff]
    %v118 = vld [vmem:[#allocation5 + $0x100] sm:$0xff]
    %v119 = vld [vmem:[#allocation5 + $0x108] sm:$0xff]
    %v120 = vld [vmem:[#allocation5 + $0x110] sm:$0xff]
    %v121 = vld [vmem:[#allocation5 + $0x118] sm:$0xff]
    %v122 = vld [vmem:[#allocation5 + $0x120] sm:$0xff]
    %v123 = vld [vmem:[#allocation5 + $0x128] sm:$0xff]
    %v124 = vld [vmem:[#allocation5 + $0x130] sm:$0xff]
    %v125 = vld [vmem:[#allocation5 + $0x138] sm:$0xff]
    %v126 = vld [vmem:[#allocation5 + $0x140] sm:$0xff]
    %v127 = vld [vmem:[#allocation5 + $0x148] sm:$0xff]
    %v128 = vld [vmem:[#allocation5 + $0x150] sm:$0xff]
    %v129 = vld [vmem:[#allocation5 + $0x158] sm:$0xff]
    %v130 = vld [vmem:[#allocation5 + $0x160] sm:$0xff]
    %v131 = vld [vmem:[#allocation5 + $0x168] sm:$0xff]
    %v132 = vld [vmem:[#allocation5 + $0x170] sm:$0xff]
    %v133 = vld [vmem:[#allocation5 + $0x178] sm:$0xff]
    %v134 = vld [vmem:[#allocation5 + $0x180] sm:$0xff]
    %v135 = vld [vmem:[#allocation5 + $0x188] sm:$0xff]
    %v136 = vld [vmem:[#allocation5 + $0x190] sm:$0xff]
    %v137 = vld [vmem:[#allocation5 + $0x198] sm:$0xff]
    %v138 = vld [vmem:[#allocation5 + $0x1a0] sm:$0xff]
    %v139 = vld [vmem:[#allocation5 + $0x1a8] sm:$0xff]
    %v140 = vld [vmem:[#allocation5 + $0x1b0] sm:$0xff]
    %v141 = vld [vmem:[#allocation5 + $0x1b8] sm:$0xff]
    %v142 = vld [vmem:[#allocation5 + $0x1c0] sm:$0xff]
    %v143 = vld [vmem:[#allocation5 + $0x1c8] sm:$0xff]
    %v144 = vld [vmem:[#allocation5 + $0x1d0] sm:$0xff]
    %v145 = vld [vmem:[#allocation5 + $0x1d8] sm:$0xff]
    %v146 = vld [vmem:[#allocation5 + $0x1e0] sm:$0xff]
    %v147 = vld [vmem:[#allocation5 + $0x1e8] sm:$0xff]
    %v148 = vld [vmem:[#allocation5 + $0x1f0] sm:$0xff]
    %v149 = vld [vmem:[#allocation5 + $0x1f8] sm:$0xff]
    %v150 = vpack.c.bf16 %v90, %v86
    %v151 = vpack.c.bf16 %v91, %v87
    %v152 = vpack.c.bf16 %v92, %v88
    %v153 = vpack.c.bf16 %v93, %v89
    %v154 = vpack.c.bf16 %v98, %v94
    %v155 = vpack.c.bf16 %v99, %v95
    %v156 = vpack.c.bf16 %v100, %v96
    %v157 = vpack.c.bf16 %v101, %v97
    %v158 = vpack.c.bf16 %v106, %v102
    %v159 = vpack.c.bf16 %v107, %v103
    %v160 = vpack.c.bf16 %v108, %v104
    %v161 = vpack.c.bf16 %v109, %v105
    %v162 = vpack.c.bf16 %v114, %v110
    %v163 = vpack.c.bf16 %v115, %v111
    %v164 = vpack.c.bf16 %v116, %v112
    %v165 = vpack.c.bf16 %v117, %v113
    %v166 = vpack.c.bf16 %v122, %v118
    %v167 = vpack.c.bf16 %v123, %v119
    %v168 = vpack.c.bf16 %v124, %v120
    %v169 = vpack.c.bf16 %v125, %v121
    %v170 = vpack.c.bf16 %v130, %v126
    %v171 = vpack.c.bf16 %v131, %v127
    %v172 = vpack.c.bf16 %v132, %v128
    %v173 = vpack.c.bf16 %v133, %v129
    %v174 = vpack.c.bf16 %v138, %v134
    %v175 = vpack.c.bf16 %v139, %v135
    %v176 = vpack.c.bf16 %v140, %v136
    %v177 = vpack.c.bf16 %v141, %v137
    %v178 = vpack.c.bf16 %v146, %v142
    %v179 = vpack.c.bf16 %v147, %v143
    %v180 = vpack.c.bf16 %v148, %v144
    %v181 = vpack.c.bf16 %v149, %v145
    %v182 = vld [vmem:[#allocation8] sm:$0xff]
    %v183 = vld [vmem:[#allocation8 + $0x8] sm:$0xff]
    %v184 = vld [vmem:[#allocation8 + $0x10] sm:$0xff]
    %v185 = vld [vmem:[#allocation8 + $0x18] sm:$0xff]
    %v186 = vld [vmem:[#allocation8 + $0x20] sm:$0xff]
    %v187 = vld [vmem:[#allocation8 + $0x28] sm:$0xff]
    %v188 = vld [vmem:[#allocation8 + $0x30] sm:$0xff]
    %v189 = vld [vmem:[#allocation8 + $0x38] sm:$0xff]
    %v190 = vld [vmem:[#allocation8 + $0x40] sm:$0xff]
    %v191 = vld [vmem:[#allocation8 + $0x48] sm:$0xff]
    %v192 = vld [vmem:[#allocation8 + $0x50] sm:$0xff]
    %v193 = vld [vmem:[#allocation8 + $0x58] sm:$0xff]
    %v194 = vld [vmem:[#allocation8 + $0x60] sm:$0xff]
    %v195 = vld [vmem:[#allocation8 + $0x68] sm:$0xff]
    %v196 = vld [vmem:[#allocation8 + $0x70] sm:$0xff]
    %v197 = vld [vmem:[#allocation8 + $0x78] sm:$0xff]
    %v198 = vld [vmem:[#allocation8 + $0x80] sm:$0xff]
    %v199 = vld [vmem:[#allocation8 + $0x88] sm:$0xff]
    %v200 = vld [vmem:[#allocation8 + $0x90] sm:$0xff]
    %v201 = vld [vmem:[#allocation8 + $0x98] sm:$0xff]
    %v202 = vld [vmem:[#allocation8 + $0xa0] sm:$0xff]
    %v203 = vld [vmem:[#allocation8 + $0xa8] sm:$0xff]
    %v204 = vld [vmem:[#allocation8 + $0xb0] sm:$0xff]
    %v205 = vld [vmem:[#allocation8 + $0xb8] sm:$0xff]
    %v206 = vld [vmem:[#allocation8 + $0xc0] sm:$0xff]
    %v207 = vld [vmem:[#allocation8 + $0xc8] sm:$0xff]
    %v208 = vld [vmem:[#allocation8 + $0xd0] sm:$0xff]
    %v209 = vld [vmem:[#allocation8 + $0xd8] sm:$0xff]
    %v210 = vld [vmem:[#allocation8 + $0xe0] sm:$0xff]
    %v211 = vld [vmem:[#allocation8 + $0xe8] sm:$0xff]
    %v212 = vld [vmem:[#allocation8 + $0xf0] sm:$0xff]
    %v213 = vld [vmem:[#allocation8 + $0xf8] sm:$0xff]
    %v214 = vld [vmem:[#allocation8 + $0x100] sm:$0xff]
    %v215 = vld [vmem:[#allocation8 + $0x108] sm:$0xff]
    %v216 = vld [vmem:[#allocation8 + $0x110] sm:$0xff]
    %v217 = vld [vmem:[#allocation8 + $0x118] sm:$0xff]
    %v218 = vld [vmem:[#allocation8 + $0x120] sm:$0xff]
    %v219 = vld [vmem:[#allocation8 + $0x128] sm:$0xff]
    %v220 = vld [vmem:[#allocation8 + $0x130] sm:$0xff]
    %v221 = vld [vmem:[#allocation8 + $0x138] sm:$0xff]
    %v222 = vld [vmem:[#allocation8 + $0x140] sm:$0xff]
    %v223 = vld [vmem:[#allocation8 + $0x148] sm:$0xff]
    %v224 = vld [vmem:[#allocation8 + $0x150] sm:$0xff]
    %v225 = vld [vmem:[#allocation8 + $0x158] sm:$0xff]
    %v226 = vld [vmem:[#allocation8 + $0x160] sm:$0xff]
    %v227 = vld [vmem:[#allocation8 + $0x168] sm:$0xff]
    %v228 = vld [vmem:[#allocation8 + $0x170] sm:$0xff]
    %v229 = vld [vmem:[#allocation8 + $0x178] sm:$0xff]
    %v230 = vld [vmem:[#allocation8 + $0x180] sm:$0xff]
    %v231 = vld [vmem:[#allocation8 + $0x188] sm:$0xff]
    %v232 = vld [vmem:[#allocation8 + $0x190] sm:$0xff]
    %v233 = vld [vmem:[#allocation8 + $0x198] sm:$0xff]
    %v234 = vld [vmem:[#allocation8 + $0x1a0] sm:$0xff]
    %v235 = vld [vmem:[#allocation8 + $0x1a8] sm:$0xff]
    %v236 = vld [vmem:[#allocation8 + $0x1b0] sm:$0xff]
    %v237 = vld [vmem:[#allocation8 + $0x1b8] sm:$0xff]
    %v238 = vld [vmem:[#allocation8 + $0x1c0] sm:$0xff]
    %v239 = vld [vmem:[#allocation8 + $0x1c8] sm:$0xff]
    %v240 = vld [vmem:[#allocation8 + $0x1d0] sm:$0xff]
    %v241 = vld [vmem:[#allocation8 + $0x1d8] sm:$0xff]
    %v242 = vld [vmem:[#allocation8 + $0x1e0] sm:$0xff]
    %v243 = vld [vmem:[#allocation8 + $0x1e8] sm:$0xff]
    %v244 = vld [vmem:[#allocation8 + $0x1f0] sm:$0xff]
    %v245 = vld [vmem:[#allocation8 + $0x1f8] sm:$0xff]
    %v246 = vld [vmem:[#allocation10] sm:$0x3]
    %v248 = vlaneseq
    %v249 = vshrl.u32 %v248, 7
    %v250 = vsub.s32 0, %v249
    %v251 = vrot.slane %v246, %v250
    %v252 = vlaneseq
    %v253 = vshrl.u32 %v252, 7
    %v254 = vsub.s32 1, %v253
    %v255 = vrot.slane %v246, %v254
    %v322 = vunpack.c.l.b16 %v182
    %v323 = vunpack.c.h.b16 %v182
    %v324 = vunpack.c.l.b16 %v183
    %v325 = vunpack.c.h.b16 %v183
    %v326 = vunpack.c.l.b16 %v184
    %v327 = vunpack.c.h.b16 %v184
    %v328 = vunpack.c.l.b16 %v185
    %v329 = vunpack.c.h.b16 %v185
    %v330 = vunpack.c.l.b16 %v186
    %v331 = vunpack.c.h.b16 %v186
    %v332 = vunpack.c.l.b16 %v187
    %v333 = vunpack.c.h.b16 %v187
    %v334 = vunpack.c.l.b16 %v188
    %v335 = vunpack.c.h.b16 %v188
    %v336 = vunpack.c.l.b16 %v189
    %v337 = vunpack.c.h.b16 %v189
    %v338 = vunpack.c.l.b16 %v190
    %v339 = vunpack.c.h.b16 %v190
    %v340 = vunpack.c.l.b16 %v191
    %v341 = vunpack.c.h.b16 %v191
    %v342 = vunpack.c.l.b16 %v192
    %v343 = vunpack.c.h.b16 %v192
    %v344 = vunpack.c.l.b16 %v193
    %v345 = vunpack.c.h.b16 %v193
    %v346 = vunpack.c.l.b16 %v194
    %v347 = vunpack.c.h.b16 %v194
    %v348 = vunpack.c.l.b16 %v195
    %v349 = vunpack.c.h.b16 %v195
    %v350 = vunpack.c.l.b16 %v196
    %v351 = vunpack.c.h.b16 %v196
    %v352 = vunpack.c.l.b16 %v197
    %v353 = vunpack.c.h.b16 %v197
    %v354 = vunpack.c.l.b16 %v198
    %v355 = vunpack.c.h.b16 %v198
    %v356 = vunpack.c.l.b16 %v199
    %v357 = vunpack.c.h.b16 %v199
    %v358 = vunpack.c.l.b16 %v200
    %v359 = vunpack.c.h.b16 %v200
    %v360 = vunpack.c.l.b16 %v201
    %v361 = vunpack.c.h.b16 %v201
    %v362 = vunpack.c.l.b16 %v202
    %v363 = vunpack.c.h.b16 %v202
    %v364 = vunpack.c.l.b16 %v203
    %v365 = vunpack.c.h.b16 %v203
    %v366 = vunpack.c.l.b16 %v204
    %v367 = vunpack.c.h.b16 %v204
    %v368 = vunpack.c.l.b16 %v205
    %v369 = vunpack.c.h.b16 %v205
    %v370 = vunpack.c.l.b16 %v206
    %v371 = vunpack.c.h.b16 %v206
    %v372 = vunpack.c.l.b16 %v207
    %v373 = vunpack.c.h.b16 %v207
    %v374 = vunpack.c.l.b16 %v208
    %v375 = vunpack.c.h.b16 %v208
    %v376 = vunpack.c.l.b16 %v209
    %v377 = vunpack.c.h.b16 %v209
    %v378 = vunpack.c.l.b16 %v210
    %v379 = vunpack.c.h.b16 %v210
    %v380 = vunpack.c.l.b16 %v211
    %v381 = vunpack.c.h.b16 %v211
    %v382 = vunpack.c.l.b16 %v212
    %v383 = vunpack.c.h.b16 %v212
    %v384 = vunpack.c.l.b16 %v213
    %v385 = vunpack.c.h.b16 %v213
    %v386 = vunpack.c.l.b16 %v214
    %v387 = vunpack.c.h.b16 %v214
    %v388 = vunpack.c.l.b16 %v215
    %v389 = vunpack.c.h.b16 %v215
    %v390 = vunpack.c.l.b16 %v216
    %v391 = vunpack.c.h.b16 %v216
    %v392 = vunpack.c.l.b16 %v217
    %v393 = vunpack.c.h.b16 %v217
    %v394 = vunpack.c.l.b16 %v218
    %v395 = vunpack.c.h.b16 %v218
    %v396 = vunpack.c.l.b16 %v219
    %v397 = vunpack.c.h.b16 %v219
    %v398 = vunpack.c.l.b16 %v220
    %v399 = vunpack.c.h.b16 %v220
    %v400 = vunpack.c.l.b16 %v221
    %v401 = vunpack.c.h.b16 %v221
    %v402 = vunpack.c.l.b16 %v222
    %v403 = vunpack.c.h.b16 %v222
    %v404 = vunpack.c.l.b16 %v223
    %v405 = vunpack.c.h.b16 %v223
    %v406 = vunpack.c.l.b16 %v224
    %v407 = vunpack.c.h.b16 %v224
    %v408 = vunpack.c.l.b16 %v225
    %v409 = vunpack.c.h.b16 %v225
    %v410 = vunpack.c.l.b16 %v226
    %v411 = vunpack.c.h.b16 %v226
    %v412 = vunpack.c.l.b16 %v227
    %v413 = vunpack.c.h.b16 %v227
    %v414 = vunpack.c.l.b16 %v228
    %v415 = vunpack.c.h.b16 %v228
    %v416 = vunpack.c.l.b16 %v229
    %v417 = vunpack.c.h.b16 %v229
    %v418 = vunpack.c.l.b16 %v230
    %v419 = vunpack.c.h.b16 %v230
    %v420 = vunpack.c.l.b16 %v231
    %v421 = vunpack.c.h.b16 %v231
    %v422 = vunpack.c.l.b16 %v232
    %v423 = vunpack.c.h.b16 %v232
    %v424 = vunpack.c.l.b16 %v233
    %v425 = vunpack.c.h.b16 %v233
    %v426 = vunpack.c.l.b16 %v234
    %v427 = vunpack.c.h.b16 %v234
    %v428 = vunpack.c.l.b16 %v235
    %v429 = vunpack.c.h.b16 %v235
    %v430 = vunpack.c.l.b16 %v236
    %v431 = vunpack.c.h.b16 %v236
    %v432 = vunpack.c.l.b16 %v237
    %v433 = vunpack.c.h.b16 %v237
    %v434 = vunpack.c.l.b16 %v238
    %v435 = vunpack.c.h.b16 %v238
    %v436 = vunpack.c.l.b16 %v239
    %v437 = vunpack.c.h.b16 %v239
    %v438 = vunpack.c.l.b16 %v240
    %v439 = vunpack.c.h.b16 %v240
    %v440 = vunpack.c.l.b16 %v241
    %v441 = vunpack.c.h.b16 %v241
    %v442 = vunpack.c.l.b16 %v242
    %v443 = vunpack.c.h.b16 %v242
    %v444 = vunpack.c.l.b16 %v243
    %v445 = vunpack.c.h.b16 %v243
    %v446 = vunpack.c.l.b16 %v244
    %v447 = vunpack.c.h.b16 %v244
    %v448 = vunpack.c.l.b16 %v245
    %v449 = vunpack.c.h.b16 %v245
    %v450 = vpack.c.b16 %v324, %v322
    %v451 = vpack.c.b16 %v325, %v323
    %v452 = vpack.c.b16 %v328, %v326
    %v453 = vpack.c.b16 %v329, %v327
    %v454 = vpack.c.b16 %v332, %v330
    %v455 = vpack.c.b16 %v333, %v331
    %v456 = vpack.c.b16 %v336, %v334
    %v457 = vpack.c.b16 %v337, %v335
    %v458 = vpack.c.b16 %v340, %v338
    %v459 = vpack.c.b16 %v341, %v339
    %v460 = vpack.c.b16 %v344, %v342
    %v461 = vpack.c.b16 %v345, %v343
    %v462 = vpack.c.b16 %v348, %v346
    %v463 = vpack.c.b16 %v349, %v347
    %v464 = vpack.c.b16 %v352, %v350
    %v465 = vpack.c.b16 %v353, %v351
    %v466 = vpack.c.b16 %v356, %v354
    %v467 = vpack.c.b16 %v357, %v355
    %v468 = vpack.c.b16 %v360, %v358
    %v469 = vpack.c.b16 %v361, %v359
    %v470 = vpack.c.b16 %v364, %v362
    %v471 = vpack.c.b16 %v365, %v363
    %v472 = vpack.c.b16 %v368, %v366
    %v473 = vpack.c.b16 %v369, %v367
    %v474 = vpack.c.b16 %v372, %v370
    %v475 = vpack.c.b16 %v373, %v371
    %v476 = vpack.c.b16 %v376, %v374
    %v477 = vpack.c.b16 %v377, %v375
    %v478 = vpack.c.b16 %v380, %v378
    %v479 = vpack.c.b16 %v381, %v379
    %v480 = vpack.c.b16 %v384, %v382
    %v481 = vpack.c.b16 %v385, %v383
    %v482 = vpack.c.b16 %v388, %v386
    %v483 = vpack.c.b16 %v389, %v387
    %v484 = vpack.c.b16 %v392, %v390
    %v485 = vpack.c.b16 %v393, %v391
    %v486 = vpack.c.b16 %v396, %v394
    %v487 = vpack.c.b16 %v397, %v395
    %v488 = vpack.c.b16 %v400, %v398
    %v489 = vpack.c.b16 %v401, %v399
    %v490 = vpack.c.b16 %v404, %v402
    %v491 = vpack.c.b16 %v405, %v403
    %v492 = vpack.c.b16 %v408, %v406
    %v493 = vpack.c.b16 %v409, %v407
    %v494 = vpack.c.b16 %v412, %v410
    %v495 = vpack.c.b16 %v413, %v411
    %v496 = vpack.c.b16 %v416, %v414
    %v497 = vpack.c.b16 %v417, %v415
    %v498 = vpack.c.b16 %v420, %v418
    %v499 = vpack.c.b16 %v421, %v419
    %v500 = vpack.c.b16 %v424, %v422
    %v501 = vpack.c.b16 %v425, %v423
    %v502 = vpack.c.b16 %v428, %v426
    %v503 = vpack.c.b16 %v429, %v427
    %v504 = vpack.c.b16 %v432, %v430
    %v505 = vpack.c.b16 %v433, %v431
    %v506 = vpack.c.b16 %v436, %v434
    %v507 = vpack.c.b16 %v437, %v435
    %v508 = vpack.c.b16 %v440, %v438
    %v509 = vpack.c.b16 %v441, %v439
    %v510 = vpack.c.b16 %v444, %v442
    %v511 = vpack.c.b16 %v445, %v443
    %v512 = vpack.c.b16 %v448, %v446
    %v513 = vpack.c.b16 %v449, %v447
    %578 = vmatprep.subr.bf16.mxu0 %v465
    %579 = vmatpush1.bf16.msra.mxu0 %v464
    %580 = vmatprep.subr.bf16.mxu0 %v463
    %581 = vmatpush1.bf16.msra.mxu0 %v462
    %582 = vmatprep.subr.bf16.mxu0 %v461
    %583 = vmatpush1.bf16.msra.mxu0 %v460
    %584 = vmatprep.subr.bf16.mxu0 %v459
    %585 = vmatpush1.bf16.msra.mxu0 %v458
    %586 = vmatprep.subr.bf16.mxu0 %v457
    %587 = vmatpush1.bf16.msra.mxu0 %v456
    %588 = vmatprep.subr.bf16.mxu0 %v455
    %589 = vmatpush1.bf16.msra.mxu0 %v454
    %590 = vmatprep.subr.bf16.mxu0 %v453
    %591 = vmatpush1.bf16.msra.mxu0 %v452
    %592 = vmatprep.subr.bf16.mxu0 %v451
    %593 = vmatpush1.bf16.msra.mxu0 %v450
    %594 = vmatprep.subr.bf16.mxu0 %v481
    %595 = vmatpush2.bf16.msra.mxu0 %v480
    %596 = vmatprep.subr.bf16.mxu0 %v479
    %597 = vmatpush2.bf16.msra.mxu0 %v478
    %598 = vmatprep.subr.bf16.mxu0 %v477
    %599 = vmatpush2.bf16.msra.mxu0 %v476
    %600 = vmatprep.subr.bf16.mxu0 %v475
    %601 = vmatpush2.bf16.msra.mxu0 %v474
    %602 = vmatprep.subr.bf16.mxu0 %v473
    %603 = vmatpush2.bf16.msra.mxu0 %v472
    %604 = vmatprep.subr.bf16.mxu0 %v471
    %605 = vmatpush2.bf16.msra.mxu0 %v470
    %606 = vmatprep.subr.bf16.mxu0 %v469
    %607 = vmatpush2.bf16.msra.mxu0 %v468
    %608 = vmatprep.subr.bf16.mxu0 %v467
    %609 = vmatpush2.bf16.msra.mxu0 %v466
    %610 = vmatprep.mubr.bf16.mxu0 %v151
    %611 = vmatmul.mubr.bf16.gmra.mxu0 %v150
    %v612 = vpop.f32.mrf.mxu0
    %v613 = vadd.f32 %v251, %v612
    %v614 = vpop.f32.mrf.mxu0
    %v615 = vadd.f32 %v255, %v614
    %v616 = vpop.f32.mrf.mxu0
    %v617 = vadd.f32 %v251, %v616
    %v618 = vpop.f32.mrf.mxu0
    %v619 = vadd.f32 %v255, %v618
    %620 = vmatprep.mubr.bf16.mxu0 %v155
    %621 = vmatmul.mubr.bf16.gmra.mxu0 %v154
    %v622 = vpop.f32.mrf.mxu0
    %v623 = vadd.f32 %v251, %v622
    %v624 = vpop.f32.mrf.mxu0
    %v625 = vadd.f32 %v255, %v624
    %v626 = vpop.f32.mrf.mxu0
    %v627 = vadd.f32 %v251, %v626
    %v628 = vpop.f32.mrf.mxu0
    %v629 = vadd.f32 %v255, %v628
    %630 = vmatprep.mubr.bf16.mxu0 %v159
    %631 = vmatmul.mubr.bf16.gmra.mxu0 %v158
    %v632 = vpop.f32.mrf.mxu0
    %v633 = vadd.f32 %v251, %v632
    %v634 = vpop.f32.mrf.mxu0
    %v635 = vadd.f32 %v255, %v634
    %v636 = vpop.f32.mrf.mxu0
    %v637 = vadd.f32 %v251, %v636
    %v638 = vpop.f32.mrf.mxu0
    %v639 = vadd.f32 %v255, %v638
    %640 = vmatprep.mubr.bf16.mxu0 %v163
    %641 = vmatmul.mubr.bf16.gmra.mxu0 %v162
    %v642 = vpop.f32.mrf.mxu0
    %v643 = vadd.f32 %v251, %v642
    %v644 = vpop.f32.mrf.mxu0
    %v645 = vadd.f32 %v255, %v644
    %v646 = vpop.f32.mrf.mxu0
    %v647 = vadd.f32 %v251, %v646
    %v648 = vpop.f32.mrf.mxu0
    %v649 = vadd.f32 %v255, %v648
    %650 = vmatprep.mubr.bf16.mxu0 %v167
    %651 = vmatmul.mubr.bf16.gmra.mxu0 %v166
    %v652 = vpop.f32.mrf.mxu0
    %v653 = vadd.f32 %v251, %v652
    %v654 = vpop.f32.mrf.mxu0
    %v655 = vadd.f32 %v255, %v654
    %v656 = vpop.f32.mrf.mxu0
    %v657 = vadd.f32 %v251, %v656
    %v658 = vpop.f32.mrf.mxu0
    %v659 = vadd.f32 %v255, %v658
    %660 = vmatprep.mubr.bf16.mxu0 %v171
    %661 = vmatmul.mubr.bf16.gmra.mxu0 %v170
    %v662 = vpop.f32.mrf.mxu0
    %v663 = vadd.f32 %v251, %v662
    %v664 = vpop.f32.mrf.mxu0
    %v665 = vadd.f32 %v255, %v664
    %v666 = vpop.f32.mrf.mxu0
    %v667 = vadd.f32 %v251, %v666
    %v668 = vpop.f32.mrf.mxu0
    %v669 = vadd.f32 %v255, %v668
    %670 = vmatprep.mubr.bf16.mxu0 %v175
    %671 = vmatmul.mubr.bf16.gmra.mxu0 %v174
    %v672 = vpop.f32.mrf.mxu0
    %v673 = vadd.f32 %v251, %v672
    %v674 = vpop.f32.mrf.mxu0
    %v675 = vadd.f32 %v255, %v674
    %v676 = vpop.f32.mrf.mxu0
    %v677 = vadd.f32 %v251, %v676
    %v678 = vpop.f32.mrf.mxu0
    %v679 = vadd.f32 %v255, %v678
    %680 = vmatprep.mubr.bf16.mxu0 %v179
    %681 = vmatmul.mubr.bf16.gmra.mxu0 %v178
    %v682 = vpop.f32.mrf.mxu0
    %v683 = vadd.f32 %v251, %v682
    %v684 = vpop.f32.mrf.mxu0
    %v685 = vadd.f32 %v255, %v684
    %v686 = vpop.f32.mrf.mxu0
    %v687 = vadd.f32 %v251, %v686
    %v688 = vpop.f32.mrf.mxu0
    %v689 = vadd.f32 %v255, %v688
    %690 = vdwg.mxu0
    %691 = vmatprep.subr.bf16.mxu0 %v497
    %692 = vmatpush1.bf16.msra.mxu0 %v496
    %693 = vmatprep.subr.bf16.mxu0 %v495
    %694 = vmatpush1.bf16.msra.mxu0 %v494
    %695 = vmatprep.subr.bf16.mxu0 %v493
    %696 = vmatpush1.bf16.msra.mxu0 %v492
    %697 = vmatprep.subr.bf16.mxu0 %v491
    %698 = vmatpush1.bf16.msra.mxu0 %v490
    %699 = vmatprep.subr.bf16.mxu0 %v489
    %700 = vmatpush1.bf16.msra.mxu0 %v488
    %701 = vmatprep.subr.bf16.mxu0 %v487
    %702 = vmatpush1.bf16.msra.mxu0 %v486
    %703 = vmatprep.subr.bf16.mxu0 %v485
    %704 = vmatpush1.bf16.msra.mxu0 %v484
    %705 = vmatprep.subr.bf16.mxu0 %v483
    %706 = vmatpush1.bf16.msra.mxu0 %v482
    %707 = vmatprep.subr.bf16.mxu0 %v513
    %708 = vmatpush2.bf16.msra.mxu0 %v512
    %709 = vmatprep.subr.bf16.mxu0 %v511
    %710 = vmatpush2.bf16.msra.mxu0 %v510
    %711 = vmatprep.subr.bf16.mxu0 %v509
    %712 = vmatpush2.bf16.msra.mxu0 %v508
    %713 = vmatprep.subr.bf16.mxu0 %v507
    %714 = vmatpush2.bf16.msra.mxu0 %v506
    %715 = vmatprep.subr.bf16.mxu0 %v505
    %716 = vmatpush2.bf16.msra.mxu0 %v504
    %717 = vmatprep.subr.bf16.mxu0 %v503
    %718 = vmatpush2.bf16.msra.mxu0 %v502
    %719 = vmatprep.subr.bf16.mxu0 %v501
    %720 = vmatpush2.bf16.msra.mxu0 %v500
    %721 = vmatprep.subr.bf16.mxu0 %v499
    %722 = vmatpush2.bf16.msra.mxu0 %v498
    %723 = vmatprep.mubr.bf16.mxu0 %v153
    %724 = vmatmul.mubr.bf16.gmra.mxu0 %v152
    %v725 = vpop.f32.mrf.mxu0
    %v726 = vadd.f32 %v613, %v725
    %v727 = vpop.f32.mrf.mxu0
    %v728 = vadd.f32 %v615, %v727
    %v729 = vpop.f32.mrf.mxu0
    %v730 = vadd.f32 %v617, %v729
    %v731 = vpop.f32.mrf.mxu0
    %v732 = vadd.f32 %v619, %v731
    %733 = vmatprep.mubr.bf16.mxu0 %v157
    %734 = vmatmul.mubr.bf16.gmra.mxu0 %v156
    %v735 = vpop.f32.mrf.mxu0
    %v736 = vadd.f32 %v623, %v735
    %v737 = vpop.f32.mrf.mxu0
    %v738 = vadd.f32 %v625, %v737
    %v739 = vpop.f32.mrf.mxu0
    %v740 = vadd.f32 %v627, %v739
    %v741 = vpop.f32.mrf.mxu0
    %v742 = vadd.f32 %v629, %v741
    %743 = vmatprep.mubr.bf16.mxu0 %v161
    %744 = vmatmul.mubr.bf16.gmra.mxu0 %v160
    %v745 = vpop.f32.mrf.mxu0
    %v746 = vadd.f32 %v633, %v745
    %v747 = vpop.f32.mrf.mxu0
    %v748 = vadd.f32 %v635, %v747
    %v749 = vpop.f32.mrf.mxu0
    %v750 = vadd.f32 %v637, %v749
    %v751 = vpop.f32.mrf.mxu0
    %v752 = vadd.f32 %v639, %v751
    %753 = vmatprep.mubr.bf16.mxu0 %v165
    %754 = vmatmul.mubr.bf16.gmra.mxu0 %v164
    %v755 = vpop.f32.mrf.mxu0
    %v756 = vadd.f32 %v643, %v755
    %v757 = vpop.f32.mrf.mxu0
    %v758 = vadd.f32 %v645, %v757
    %v759 = vpop.f32.mrf.mxu0
    %v760 = vadd.f32 %v647, %v759
    %v761 = vpop.f32.mrf.mxu0
    %v762 = vadd.f32 %v649, %v761
    %763 = vmatprep.mubr.bf16.mxu0 %v169
    %764 = vmatmul.mubr.bf16.gmra.mxu0 %v168
    %v765 = vpop.f32.mrf.mxu0
    %v766 = vadd.f32 %v653, %v765
    %v767 = vpop.f32.mrf.mxu0
    %v768 = vadd.f32 %v655, %v767
    %v769 = vpop.f32.mrf.mxu0
    %v770 = vadd.f32 %v657, %v769
    %v771 = vpop.f32.mrf.mxu0
    %v772 = vadd.f32 %v659, %v771
    %773 = vmatprep.mubr.bf16.mxu0 %v173
    %774 = vmatmul.mubr.bf16.gmra.mxu0 %v172
    %v775 = vpop.f32.mrf.mxu0
    %v776 = vadd.f32 %v663, %v775
    %v777 = vpop.f32.mrf.mxu0
    %v778 = vadd.f32 %v665, %v777
    %v779 = vpop.f32.mrf.mxu0
    %v780 = vadd.f32 %v667, %v779
    %v781 = vpop.f32.mrf.mxu0
    %v782 = vadd.f32 %v669, %v781
    %783 = vmatprep.mubr.bf16.mxu0 %v177
    %784 = vmatmul.mubr.bf16.gmra.mxu0 %v176
    %v785 = vpop.f32.mrf.mxu0
    %v786 = vadd.f32 %v673, %v785
    %v787 = vpop.f32.mrf.mxu0
    %v788 = vadd.f32 %v675, %v787
    %v789 = vpop.f32.mrf.mxu0
    %v790 = vadd.f32 %v677, %v789
    %v791 = vpop.f32.mrf.mxu0
    %v792 = vadd.f32 %v679, %v791
    %793 = vmatprep.mubr.bf16.mxu0 %v181
    %794 = vmatmul.mubr.bf16.gmra.mxu0 %v180
    %v795 = vpop.f32.mrf.mxu0
    %v796 = vadd.f32 %v683, %v795
    %v797 = vpop.f32.mrf.mxu0
    %v798 = vadd.f32 %v685, %v797
    %v799 = vpop.f32.mrf.mxu0
    %v800 = vadd.f32 %v687, %v799
    %v801 = vpop.f32.mrf.mxu0
    %v802 = vadd.f32 %v689, %v801
    %803 = vdwg.mxu0
    %v804 = vpack.c.bf16 %v730, %v726
    %v805 = vpack.c.bf16 %v732, %v728
    %v806 = vpack.c.bf16 %v740, %v736
    %v807 = vpack.c.bf16 %v742, %v738
    %v808 = vpack.c.bf16 %v750, %v746
    %v809 = vpack.c.bf16 %v752, %v748
    %v810 = vpack.c.bf16 %v760, %v756
    %v811 = vpack.c.bf16 %v762, %v758
    %v812 = vpack.c.bf16 %v770, %v766
    %v813 = vpack.c.bf16 %v772, %v768
    %v814 = vpack.c.bf16 %v780, %v776
    %v815 = vpack.c.bf16 %v782, %v778
    %v816 = vpack.c.bf16 %v790, %v786
    %v817 = vpack.c.bf16 %v792, %v788
    %v818 = vpack.c.bf16 %v800, %v796
    %v819 = vpack.c.bf16 %v802, %v798
    %820 = vst [vmem:[#allocation2] sm:$0xff] 0
    %821 = vst [vmem:[#allocation2 + $0x8] sm:$0xff] 0
    %822 = vst [vmem:[#allocation2 + $0x10] sm:$0xff] 0
    %823 = vst [vmem:[#allocation2 + $0x18] sm:$0xff] 0
    %824 = vst [vmem:[#allocation2 + $0x20] sm:$0xff] 0
    %825 = vst [vmem:[#allocation2 + $0x28] sm:$0xff] 0
    %826 = vst [vmem:[#allocation2 + $0x30] sm:$0xff] 0
    %827 = vst [vmem:[#allocation2 + $0x38] sm:$0xff] 0
    %828 = vst [vmem:[#allocation2 + $0x40] sm:$0xff] 0
    %829 = vst [vmem:[#allocation2 + $0x48] sm:$0xff] 0
    %830 = vst [vmem:[#allocation2 + $0x50] sm:$0xff] 0
    %831 = vst [vmem:[#allocation2 + $0x58] sm:$0xff] 0
    %832 = vst [vmem:[#allocation2 + $0x60] sm:$0xff] 0
    %833 = vst [vmem:[#allocation2 + $0x68] sm:$0xff] 0
    %834 = vst [vmem:[#allocation2 + $0x70] sm:$0xff] 0
    %835 = vst [vmem:[#allocation2 + $0x78] sm:$0xff] 0
    %836 = vst [vmem:[#allocation2 + $0x80] sm:$0xff] 0
    %837 = vst [vmem:[#allocation2 + $0x88] sm:$0xff] 0
    %838 = vst [vmem:[#allocation2 + $0x90] sm:$0xff] 0
    %839 = vst [vmem:[#allocation2 + $0x98] sm:$0xff] 0
    %840 = vst [vmem:[#allocation2 + $0xa0] sm:$0xff] 0
    %841 = vst [vmem:[#allocation2 + $0xa8] sm:$0xff] 0
    %842 = vst [vmem:[#allocation2 + $0xb0] sm:$0xff] 0
    %843 = vst [vmem:[#allocation2 + $0xb8] sm:$0xff] 0
    %844 = vst [vmem:[#allocation2 + $0xc0] sm:$0xff] 0
    %845 = vst [vmem:[#allocation2 + $0xc8] sm:$0xff] 0
    %846 = vst [vmem:[#allocation2 + $0xd0] sm:$0xff] 0
    %847 = vst [vmem:[#allocation2 + $0xd8] sm:$0xff] 0
    %v850 = vunpack.c.l.b16 %v804
    %v851 = vunpack.c.l.b16 %v805
    %v852 = vpack.c.b16 %v851, %v850
    %v854 = vshrl.u32 %v852, 16
    %v856 = vrot.slane %v854, 6
    %v857 = vshll.u32 %v852, 16
    %v859 = vrot.slane %v857, 7
    %v860 = vor.u32 %v856, %v859
    %v861 = vrot.slane %v860, 4
    %vm864 = vcmask 1043457
    %vm865 = vsmask.f32 7942
    %vm866 = vmand %vm864, %vm865
    %vm867 = vcmask 1047557
    %vm868 = vsmask.f32 7958
    %vm869 = vmand %vm867, %vm868
    %vm870 = vmor %vm869, %vm866
    %v871 = vld [vmem:[#allocation2 + $0x8] sm:$0xee]
    %v872 = vsel %vm870, %v860, %v871
    %873 = vst [vmem:[#allocation2 + $0x8] sm:$0xee] %v872
    %vm874 = vcmask 1041408
    %vm875 = vsmask.f32 1280
    %vm876 = vmand %vm874, %vm875
    %vm877 = vcmask 1045508
    %vm878 = vsmask.f32 5376
    %vm879 = vmand %vm877, %vm878
    %vm880 = vmor %vm879, %vm876
    %v881 = vld [vmem:[#allocation2 + $0x10] sm:$0x33]
    %v882 = vsel %vm880, %v861, %v881
    %883 = vst [vmem:[#allocation2 + $0x10] sm:$0x33] %v882
    %v884 = vunpack.c.h.b16 %v804
    %v885 = vunpack.c.h.b16 %v805
    %v886 = vpack.c.b16 %v885, %v884
    %v888 = vshrl.u32 %v886, 16
    %v890 = vrot.slane %v888, 5
    %v891 = vshll.u32 %v886, 16
    %v893 = vrot.slane %v891, 6
    %v894 = vor.u32 %v890, %v893
    %v895 = vrot.slane %v894, 4
    %vm898 = vcmask 1043458
    %vm899 = vsmask.f32 7946
    %vm900 = vmand %vm898, %vm899
    %vm901 = vcmask 1047558
    %vm902 = vsmask.f32 7962
    %vm903 = vmand %vm901, %vm902
    %vm904 = vmor %vm903, %vm900
    %v905 = vld [vmem:[#allocation2 + $0x10] sm:$0xcc]
    %v906 = vsel %vm904, %v894, %v905
    %907 = vst [vmem:[#allocation2 + $0x10] sm:$0xcc] %v906
    %vm908 = vcmask 1042432
    %vm909 = vsmask.f32 2304
    %vm910 = vmand %vm908, %vm909
    %vm911 = vcmask 1046532
    %vm912 = vsmask.f32 6400
    %vm913 = vmand %vm911, %vm912
    %vm914 = vmor %vm913, %vm910
    %v915 = vld [vmem:[#allocation2 + $0x18] sm:$0x77]
    %v916 = vsel %vm914, %v895, %v915
    %917 = vst [vmem:[#allocation2 + $0x18] sm:$0x77] %v916
    %v920 = vunpack.c.l.b16 %v806
    %v921 = vunpack.c.l.b16 %v807
    %v922 = vpack.c.b16 %v921, %v920
    %v924 = vshll.u32 %v922, 16
    %v926 = vrot.slane %v924, 5
    %v927 = vshrl.u32 %v922, 16
    %v929 = vrot.slane %v927, 4
    %v930 = vor.u32 %v929, %v926
    %v931 = vrot.slane %v930, 4
    %vm934 = vcmask 1043459
    %vm935 = vsmask.f32 7950
    %vm936 = vmand %vm934, %vm935
    %vm937 = vcmask 1047559
    %vm938 = vsmask.f32 7966
    %vm939 = vmand %vm937, %vm938
    %vm940 = vmor %vm939, %vm936
    %v941 = vld [vmem:[#allocation2 + $0x18] sm:$0x88]
    %v942 = vsel %vm940, %v926, %v941
    %943 = vst [vmem:[#allocation2 + $0x18] sm:$0x88] %v942
    %vm944 = vcmask 1043456
    %vm945 = vsmask.f32 3328
    %vm946 = vmand %vm944, %vm945
    %vm947 = vcmask 1047556
    %vm948 = vsmask.f32 7424
    %vm949 = vmand %vm947, %vm948
    %vm950 = vmor %vm949, %vm946
    %v951 = vld [vmem:[#allocation2 + $0x20] sm:$0xff]
    %v952 = vsel %vm950, %v931, %v951
    %953 = vst [vmem:[#allocation2 + $0x20] sm:$0xff] %v952
    %v954 = vunpack.c.h.b16 %v806
    %v955 = vunpack.c.h.b16 %v807
    %v956 = vpack.c.b16 %v955, %v954
    %v958 = vshrl.u32 %v956, 16
    %v960 = vrot.slane %v958, 7
    %v961 = vshll.u32 %v956, 16
    %v963 = vor.u32 %v960, %v961
    %v964 = vrot.slane %v960, 4
    %vm967 = vsmask.f32 7938
    %vm968 = vmand %vm944, %vm967
    %vm969 = vsmask.f32 7954
    %vm970 = vmand %vm947, %vm969
    %vm971 = vmor %vm970, %vm968
    %v972 = vld [vmem:[#allocation2 + $0x28] sm:$0xff]
    %v973 = vsel %vm971, %v963, %v972
    %974 = vst [vmem:[#allocation2 + $0x28] sm:$0xff] %v973
    %vm975 = vcmask 1040384
    %vm976 = vsmask.f32 256
    %vm977 = vmand %vm975, %vm976
    %vm978 = vcmask 1044484
    %vm979 = vsmask.f32 4352
    %vm980 = vmand %vm978, %vm979
    %vm981 = vmor %vm980, %vm977
    %v982 = vld [vmem:[#allocation2 + $0x30] sm:$0x11]
    %v983 = vsel %vm981, %v964, %v982
    %984 = vst [vmem:[#allocation2 + $0x30] sm:$0x11] %v983
    %v987 = vunpack.c.l.b16 %v808
    %v988 = vunpack.c.l.b16 %v809
    %v989 = vpack.c.b16 %v988, %v987
    %v991 = vshrl.u32 %v989, 16
    %v993 = vrot.slane %v991, 6
    %v994 = vshll.u32 %v989, 16
    %v996 = vrot.slane %v994, 7
    %v997 = vor.u32 %v993, %v996
    %v998 = vrot.slane %v997, 4
    %v1001 = vld [vmem:[#allocation2 + $0x30] sm:$0xee]
    %v1002 = vsel %vm870, %v997, %v1001
    %1003 = vst [vmem:[#allocation2 + $0x30] sm:$0xee] %v1002
    %v1004 = vld [vmem:[#allocation2 + $0x38] sm:$0x33]
    %v1005 = vsel %vm880, %v998, %v1004
    %1006 = vst [vmem:[#allocation2 + $0x38] sm:$0x33] %v1005
    %v1007 = vunpack.c.h.b16 %v808
    %v1008 = vunpack.c.h.b16 %v809
    %v1009 = vpack.c.b16 %v1008, %v1007
    %v1011 = vshrl.u32 %v1009, 16
    %v1013 = vrot.slane %v1011, 5
    %v1014 = vshll.u32 %v1009, 16
    %v1016 = vrot.slane %v1014, 6
    %v1017 = vor.u32 %v1013, %v1016
    %v1018 = vrot.slane %v1017, 4
    %v1021 = vld [vmem:[#allocation2 + $0x38] sm:$0xcc]
    %v1022 = vsel %vm904, %v1017, %v1021
    %1023 = vst [vmem:[#allocation2 + $0x38] sm:$0xcc] %v1022
    %v1024 = vld [vmem:[#allocation2 + $0x40] sm:$0x77]
    %v1025 = vsel %vm914, %v1018, %v1024
    %1026 = vst [vmem:[#allocation2 + $0x40] sm:$0x77] %v1025
    %v1029 = vunpack.c.l.b16 %v810
    %v1030 = vunpack.c.l.b16 %v811
    %v1031 = vpack.c.b16 %v1030, %v1029
    %v1033 = vshll.u32 %v1031, 16
    %v1035 = vrot.slane %v1033, 5
    %v1036 = vshrl.u32 %v1031, 16
    %v1038 = vrot.slane %v1036, 4
    %v1039 = vor.u32 %v1038, %v1035
    %v1040 = vrot.slane %v1039, 4
    %v1043 = vld [vmem:[#allocation2 + $0x40] sm:$0x88]
    %v1044 = vsel %vm940, %v1035, %v1043
    %1045 = vst [vmem:[#allocation2 + $0x40] sm:$0x88] %v1044
    %v1046 = vld [vmem:[#allocation2 + $0x48] sm:$0xff]
    %v1047 = vsel %vm950, %v1040, %v1046
    %1048 = vst [vmem:[#allocation2 + $0x48] sm:$0xff] %v1047
    %v1049 = vunpack.c.h.b16 %v810
    %v1050 = vunpack.c.h.b16 %v811
    %v1051 = vpack.c.b16 %v1050, %v1049
    %v1053 = vshrl.u32 %v1051, 16
    %v1055 = vrot.slane %v1053, 7
    %v1056 = vshll.u32 %v1051, 16
    %v1058 = vor.u32 %v1055, %v1056
    %v1059 = vrot.slane %v1055, 4
    %v1062 = vld [vmem:[#allocation2 + $0x50] sm:$0xff]
    %v1063 = vsel %vm971, %v1058, %v1062
    %1064 = vst [vmem:[#allocation2 + $0x50] sm:$0xff] %v1063
    %v1065 = vld [vmem:[#allocation2 + $0x58] sm:$0x11]
    %v1066 = vsel %vm981, %v1059, %v1065
    %1067 = vst [vmem:[#allocation2 + $0x58] sm:$0x11] %v1066
    %v1070 = vunpack.c.l.b16 %v812
    %v1071 = vunpack.c.l.b16 %v813
    %v1072 = vpack.c.b16 %v1071, %v1070
    %v1074 = vshll.u32 %v1072, 16
    %v1076 = vrot.slane %v1074, 5
    %v1077 = vshrl.u32 %v1072, 16
    %v1079 = vrot.slane %v1077, 4
    %v1080 = vor.u32 %v1079, %v1076
    %v1081 = vrot.slane %v1080, 4
    %v1084 = vld [vmem:[#allocation2 + $0x68] sm:$0x88]
    %v1085 = vsel %vm940, %v1076, %v1084
    %1086 = vst [vmem:[#allocation2 + $0x68] sm:$0x88] %v1085
    %v1087 = vld [vmem:[#allocation2 + $0x70] sm:$0xff]
    %v1088 = vsel %vm950, %v1081, %v1087
    %1089 = vst [vmem:[#allocation2 + $0x70] sm:$0xff] %v1088
    %v1090 = vunpack.c.h.b16 %v812
    %v1091 = vunpack.c.h.b16 %v813
    %v1092 = vpack.c.b16 %v1091, %v1090
    %v1094 = vshrl.u32 %v1092, 16
    %v1096 = vrot.slane %v1094, 7
    %v1097 = vshll.u32 %v1092, 16
    %v1099 = vor.u32 %v1096, %v1097
    %v1100 = vrot.slane %v1096, 4
    %v1103 = vld [vmem:[#allocation2 + $0x78] sm:$0xff]
    %v1104 = vsel %vm971, %v1099, %v1103
    %1105 = vst [vmem:[#allocation2 + $0x78] sm:$0xff] %v1104
    %v1106 = vld [vmem:[#allocation2 + $0x80] sm:$0x11]
    %v1107 = vsel %vm981, %v1100, %v1106
    %1108 = vst [vmem:[#allocation2 + $0x80] sm:$0x11] %v1107
    %v1111 = vunpack.c.l.b16 %v814
    %v1112 = vunpack.c.l.b16 %v815
    %v1113 = vpack.c.b16 %v1112, %v1111
    %v1115 = vshrl.u32 %v1113, 16
    %v1117 = vrot.slane %v1115, 6
    %v1118 = vshll.u32 %v1113, 16
    %v1120 = vrot.slane %v1118, 7
    %v1121 = vor.u32 %v1117, %v1120
    %v1122 = vrot.slane %v1121, 4
    %v1125 = vld [vmem:[#allocation2 + $0x80] sm:$0xee]
    %v1126 = vsel %vm870, %v1121, %v1125
    %1127 = vst [vmem:[#allocation2 + $0x80] sm:$0xee] %v1126
    %v1128 = vld [vmem:[#allocation2 + $0x88] sm:$0x33]
    %v1129 = vsel %vm880, %v1122, %v1128
    %1130 = vst [vmem:[#allocation2 + $0x88] sm:$0x33] %v1129
    %v1131 = vunpack.c.h.b16 %v814
    %v1132 = vunpack.c.h.b16 %v815
    %v1133 = vpack.c.b16 %v1132, %v1131
    %v1135 = vshrl.u32 %v1133, 16
    %v1137 = vrot.slane %v1135, 5
    %v1138 = vshll.u32 %v1133, 16
    %v1140 = vrot.slane %v1138, 6
    %v1141 = vor.u32 %v1137, %v1140
    %v1142 = vrot.slane %v1141, 4
    %v1145 = vld [vmem:[#allocation2 + $0x88] sm:$0xcc]
    %v1146 = vsel %vm904, %v1141, %v1145
    %1147 = vst [vmem:[#allocation2 + $0x88] sm:$0xcc] %v1146
    %v1148 = vld [vmem:[#allocation2 + $0x90] sm:$0x77]
    %v1149 = vsel %vm914, %v1142, %v1148
    %1150 = vst [vmem:[#allocation2 + $0x90] sm:$0x77] %v1149
    %v1153 = vunpack.c.l.b16 %v816
    %v1154 = vunpack.c.l.b16 %v817
    %v1155 = vpack.c.b16 %v1154, %v1153
    %v1157 = vshll.u32 %v1155, 16
    %v1159 = vrot.slane %v1157, 5
    %v1160 = vshrl.u32 %v1155, 16
    %v1162 = vrot.slane %v1160, 4
    %v1163 = vor.u32 %v1162, %v1159
    %v1164 = vrot.slane %v1163, 4
    %v1167 = vld [vmem:[#allocation2 + $0x90] sm:$0x88]
    %v1168 = vsel %vm940, %v1159, %v1167
    %1169 = vst [vmem:[#allocation2 + $0x90] sm:$0x88] %v1168
    %v1170 = vld [vmem:[#allocation2 + $0x98] sm:$0xff]
    %v1171 = vsel %vm950, %v1164, %v1170
    %1172 = vst [vmem:[#allocation2 + $0x98] sm:$0xff] %v1171
    %v1173 = vunpack.c.h.b16 %v816
    %v1174 = vunpack.c.h.b16 %v817
    %v1175 = vpack.c.b16 %v1174, %v1173
    %v1177 = vshrl.u32 %v1175, 16
    %v1179 = vrot.slane %v1177, 7
    %v1180 = vshll.u32 %v1175, 16
    %v1182 = vor.u32 %v1179, %v1180
    %v1183 = vrot.slane %v1179, 4
    %v1186 = vld [vmem:[#allocation2 + $0xa0] sm:$0xff]
    %v1187 = vsel %vm971, %v1182, %v1186
    %1188 = vst [vmem:[#allocation2 + $0xa0] sm:$0xff] %v1187
    %v1189 = vld [vmem:[#allocation2 + $0xa8] sm:$0x11]
    %v1190 = vsel %vm981, %v1183, %v1189
    %1191 = vst [vmem:[#allocation2 + $0xa8] sm:$0x11] %v1190
    %v1194 = vunpack.c.l.b16 %v818
    %v1195 = vunpack.c.l.b16 %v819
    %v1196 = vpack.c.b16 %v1195, %v1194
    %v1198 = vshrl.u32 %v1196, 16
    %v1200 = vrot.slane %v1198, 6
    %v1201 = vshll.u32 %v1196, 16
    %v1203 = vrot.slane %v1201, 7
    %v1204 = vor.u32 %v1200, %v1203
    %v1205 = vrot.slane %v1204, 4
    %v1208 = vld [vmem:[#allocation2 + $0xa8] sm:$0xee]
    %v1209 = vsel %vm870, %v1204, %v1208
    %1210 = vst [vmem:[#allocation2 + $0xa8] sm:$0xee] %v1209
    %v1211 = vld [vmem:[#allocation2 + $0xb0] sm:$0x33]
    %v1212 = vsel %vm880, %v1205, %v1211
    %1213 = vst [vmem:[#allocation2 + $0xb0] sm:$0x33] %v1212
    %v1214 = vunpack.c.h.b16 %v818
    %v1215 = vunpack.c.h.b16 %v819
    %v1216 = vpack.c.b16 %v1215, %v1214
    %v1218 = vshrl.u32 %v1216, 16
    %v1220 = vrot.slane %v1218, 5
    %v1221 = vshll.u32 %v1216, 16
    %v1223 = vrot.slane %v1221, 6
    %v1224 = vor.u32 %v1220, %v1223
    %v1225 = vrot.slane %v1224, 4
    %v1228 = vld [vmem:[#allocation2 + $0xb0] sm:$0xcc]
    %v1229 = vsel %vm904, %v1224, %v1228
    %1230 = vst [vmem:[#allocation2 + $0xb0] sm:$0xcc] %v1229
    %v1231 = vld [vmem:[#allocation2 + $0xb8] sm:$0x77]
    %v1232 = vsel %vm914, %v1225, %v1231
    %1233 = vst [vmem:[#allocation2 + $0xb8] sm:$0x77] %v1232
    %v1234 = vld [vmem:[#allocation2] sm:$0xff]
    %v1235 = vld [vmem:[#allocation2 + $0x8] sm:$0xff]
    %v1236 = vld [vmem:[#allocation2 + $0x10] sm:$0xff]
    %v1237 = vld [vmem:[#allocation2 + $0x18] sm:$0xff]
    %v1238 = vld [vmem:[#allocation2 + $0x20] sm:$0xff]
    %v1239 = vld [vmem:[#allocation2 + $0x28] sm:$0xff]
    %v1240 = vld [vmem:[#allocation2 + $0x30] sm:$0xff]
    %v1241 = vld [vmem:[#allocation2 + $0x38] sm:$0xff]
    %v1242 = vld [vmem:[#allocation2 + $0x40] sm:$0xff]
    %v1243 = vld [vmem:[#allocation2 + $0x48] sm:$0xff]
    %v1244 = vld [vmem:[#allocation2 + $0x50] sm:$0xff]
    %v1245 = vld [vmem:[#allocation2 + $0x58] sm:$0xff]
    %v1246 = vld [vmem:[#allocation2 + $0x60] sm:$0xff]
    %v1247 = vld [vmem:[#allocation2 + $0x68] sm:$0xff]
    %v1248 = vld [vmem:[#allocation2 + $0x70] sm:$0xff]
    %v1249 = vld [vmem:[#allocation2 + $0x78] sm:$0xff]
    %v1250 = vld [vmem:[#allocation2 + $0x80] sm:$0xff]
    %v1251 = vld [vmem:[#allocation2 + $0x88] sm:$0xff]
    %v1252 = vld [vmem:[#allocation2 + $0x90] sm:$0xff]
    %v1253 = vld [vmem:[#allocation2 + $0x98] sm:$0xff]
    %v1254 = vld [vmem:[#allocation2 + $0xa0] sm:$0xff]
    %v1255 = vld [vmem:[#allocation2 + $0xa8] sm:$0xff]
    %v1256 = vld [vmem:[#allocation2 + $0xb0] sm:$0xff]
    %v1257 = vld [vmem:[#allocation2 + $0xb8] sm:$0xff]
    %v1258 = vld [vmem:[#allocation2 + $0xc0] sm:$0xff]
    %1259 = vst [vmem:[#allocation3] sm:$0xff] %v1234
    %1260 = vst [vmem:[#allocation3 + $0x48] sm:$0xff] %v1235
    %1261 = vst [vmem:[#allocation3 + $0x90] sm:$0xff] %v1236
    %1262 = vst [vmem:[#allocation3 + $0xd8] sm:$0xff] %v1237
    %1263 = vst [vmem:[#allocation3 + $0x120] sm:$0xff] %v1238
    %1264 = vst [vmem:[#allocation3 + $0x168] sm:$0xff] %v1239
    %1265 = vst [vmem:[#allocation3 + $0x1b0] sm:$0xff] %v1240
    %1266 = vst [vmem:[#allocation3 + $0x1f8] sm:$0xff] %v1241
    %1267 = vst [vmem:[#allocation3 + $0x240] sm:$0xff] %v1242
    %1268 = vst [vmem:[#allocation3 + $0x288] sm:$0xff] %v1243
    %1269 = vst [vmem:[#allocation3 + $0x2d0] sm:$0xff] %v1244
    %1270 = vst [vmem:[#allocation3 + $0x318] sm:$0xff] %v1245
    %1271 = vst [vmem:[#allocation3 + $0x360] sm:$0xff] %v1246
    %1272 = vst [vmem:[#allocation3 + $0x3a8] sm:$0xff] %v1247
    %1273 = vst [vmem:[#allocation3 + $0x3f0] sm:$0xff] %v1248
    %1274 = vst [vmem:[#allocation3 + $0x438] sm:$0xff] %v1249
    %1275 = vst [vmem:[#allocation3 + $0x480] sm:$0xff] %v1250
    %1276 = vst [vmem:[#allocation3 + $0x4c8] sm:$0xff] %v1251
    %1277 = vst [vmem:[#allocation3 + $0x510] sm:$0xff] %v1252
    %1278 = vst [vmem:[#allocation3 + $0x558] sm:$0xff] %v1253
    %1279 = vst [vmem:[#allocation3 + $0x5a0] sm:$0xff] %v1254
    %1280 = vst [vmem:[#allocation3 + $0x5e8] sm:$0xff] %v1255
    %1281 = vst [vmem:[#allocation3 + $0x630] sm:$0xff] %v1256
    %1282 = vst [vmem:[#allocation3 + $0x678] sm:$0xff] %v1257
    %1283 = vst [vmem:[#allocation3 + $0x6c0] sm:$0xff] %v1258
    %v1284 = vld [vmem:[#allocation2] sm:$0xff]
    %v1285 = vld [vmem:[#allocation2 + $0x8] sm:$0xff]
    %v1286 = vld [vmem:[#allocation2 + $0x10] sm:$0xff]
    %v1287 = vld [vmem:[#allocation2 + $0x18] sm:$0xff]
    %v1288 = vld [vmem:[#allocation2 + $0x20] sm:$0xff]
    %v1289 = vld [vmem:[#allocation2 + $0x28] sm:$0xff]
    %v1290 = vld [vmem:[#allocation2 + $0x30] sm:$0xff]
    %v1291 = vld [vmem:[#allocation2 + $0x38] sm:$0xff]
    %v1292 = vld [vmem:[#allocation2 + $0x40] sm:$0xff]
    %v1293 = vld [vmem:[#allocation2 + $0x48] sm:$0xff]
    %v1294 = vld [vmem:[#allocation2 + $0x50] sm:$0xff]
    %v1295 = vld [vmem:[#allocation2 + $0x58] sm:$0xff]
    %v1296 = vld [vmem:[#allocation2 + $0x60] sm:$0xff]
    %v1297 = vld [vmem:[#allocation2 + $0x68] sm:$0xff]
    %v1298 = vld [vmem:[#allocation2 + $0x70] sm:$0xff]
    %v1299 = vld [vmem:[#allocation2 + $0x78] sm:$0xff]
    %v1300 = vld [vmem:[#allocation2 + $0x80] sm:$0xff]
    %v1301 = vld [vmem:[#allocation2 + $0x88] sm:$0xff]
    %v1302 = vld [vmem:[#allocation2 + $0x90] sm:$0xff]
    %v1303 = vld [vmem:[#allocation2 + $0x98] sm:$0xff]
    %v1304 = vld [vmem:[#allocation2 + $0xa0] sm:$0xff]
    %v1305 = vld [vmem:[#allocation2 + $0xa8] sm:$0xff]
    %v1306 = vld [vmem:[#allocation2 + $0xb0] sm:$0xff]
    %v1307 = vld [vmem:[#allocation2 + $0xb8] sm:$0xff]
    %v1308 = vld [vmem:[#allocation2 + $0xc0] sm:$0xff]
    %v1309 = vld [vmem:[#allocation2 + $0xc8] sm:$0x11]
    %vm1310 = vsmask.f32 7440
    %vm1311 = vmor %vm945, %vm1310
    %v1313 = vshrl.u32 %v1284, 16
    %v1315 = vrot.slane %v1313, 4
    %v1316 = vshll.u32 %v1284, 16
    %v1318 = vrot.slane %v1316, 5
    %v1319 = vor.u32 %v1315, %v1318
    %v1320 = vrot.slane %v1319, 4
    %v1322 = vshll.u32 %v1285, 16
    %v1324 = vrot.slane %v1322, 5
    %v1325 = vsel %vm1311, %v1320, %v1324
    %v1326 = vshrl.u32 %v1285, 16
    %v1328 = vrot.slane %v1326, 4
    %v1329 = vor.u32 %v1328, %v1324
    %v1330 = vrot.slane %v1329, 4
    %v1332 = vshll.u32 %v1286, 16
    %v1334 = vrot.slane %v1332, 5
    %v1335 = vsel %vm1311, %v1330, %v1334
    %v1336 = vshrl.u32 %v1286, 16
    %v1338 = vrot.slane %v1336, 4
    %v1339 = vor.u32 %v1338, %v1334
    %v1340 = vrot.slane %v1339, 4
    %v1342 = vshll.u32 %v1287, 16
    %v1344 = vrot.slane %v1342, 5
    %v1345 = vsel %vm1311, %v1340, %v1344
    %v1346 = vshrl.u32 %v1287, 16
    %v1348 = vrot.slane %v1346, 4
    %v1349 = vor.u32 %v1348, %v1344
    %v1350 = vrot.slane %v1349, 4
    %v1352 = vshll.u32 %v1288, 16
    %v1354 = vrot.slane %v1352, 5
    %v1355 = vsel %vm1311, %v1350, %v1354
    %v1356 = vshrl.u32 %v1288, 16
    %v1358 = vrot.slane %v1356, 4
    %v1359 = vor.u32 %v1358, %v1354
    %v1360 = vrot.slane %v1359, 4
    %v1362 = vshll.u32 %v1289, 16
    %v1364 = vrot.slane %v1362, 5
    %v1365 = vsel %vm1311, %v1360, %v1364
    %v1366 = vshrl.u32 %v1289, 16
    %v1368 = vrot.slane %v1366, 4
    %v1369 = vor.u32 %v1368, %v1364
    %v1370 = vrot.slane %v1369, 4
    %v1372 = vshll.u32 %v1290, 16
    %v1374 = vrot.slane %v1372, 5
    %v1375 = vsel %vm1311, %v1370, %v1374
    %v1376 = vshrl.u32 %v1290, 16
    %v1378 = vrot.slane %v1376, 4
    %v1379 = vor.u32 %v1378, %v1374
    %v1380 = vrot.slane %v1379, 4
    %v1382 = vshll.u32 %v1291, 16
    %v1384 = vrot.slane %v1382, 5
    %v1385 = vsel %vm1311, %v1380, %v1384
    %v1386 = vshrl.u32 %v1291, 16
    %v1388 = vrot.slane %v1386, 4
    %v1389 = vor.u32 %v1388, %v1384
    %v1390 = vrot.slane %v1389, 4
    %v1392 = vshll.u32 %v1292, 16
    %v1394 = vrot.slane %v1392, 5
    %v1395 = vsel %vm1311, %v1390, %v1394
    %v1396 = vshrl.u32 %v1292, 16
    %v1398 = vrot.slane %v1396, 4
    %v1399 = vor.u32 %v1398, %v1394
    %v1400 = vrot.slane %v1399, 4
    %v1402 = vshll.u32 %v1293, 16
    %v1404 = vrot.slane %v1402, 5
    %v1405 = vsel %vm1311, %v1400, %v1404
    %v1406 = vshrl.u32 %v1293, 16
    %v1408 = vrot.slane %v1406, 4
    %v1409 = vor.u32 %v1408, %v1404
    %v1410 = vrot.slane %v1409, 4
    %v1412 = vshll.u32 %v1294, 16
    %v1414 = vrot.slane %v1412, 5
    %v1415 = vsel %vm1311, %v1410, %v1414
    %v1416 = vshrl.u32 %v1294, 16
    %v1418 = vrot.slane %v1416, 4
    %v1419 = vor.u32 %v1418, %v1414
    %v1420 = vrot.slane %v1419, 4
    %v1422 = vshll.u32 %v1295, 16
    %v1424 = vrot.slane %v1422, 5
    %v1425 = vsel %vm1311, %v1420, %v1424
    %v1426 = vshrl.u32 %v1295, 16
    %v1428 = vrot.slane %v1426, 4
    %v1429 = vor.u32 %v1428, %v1424
    %v1430 = vrot.slane %v1429, 4
    %v1432 = vshll.u32 %v1296, 16
    %v1434 = vrot.slane %v1432, 5
    %v1435 = vsel %vm1311, %v1430, %v1434
    %v1436 = vshrl.u32 %v1296, 16
    %v1438 = vrot.slane %v1436, 4
    %v1439 = vor.u32 %v1438, %v1434
    %v1440 = vrot.slane %v1439, 4
    %v1442 = vshll.u32 %v1297, 16
    %v1444 = vrot.slane %v1442, 5
    %v1445 = vsel %vm1311, %v1440, %v1444
    %v1446 = vshrl.u32 %v1297, 16
    %v1448 = vrot.slane %v1446, 4
    %v1449 = vor.u32 %v1448, %v1444
    %v1450 = vrot.slane %v1449, 4
    %v1452 = vshll.u32 %v1298, 16
    %v1454 = vrot.slane %v1452, 5
    %v1455 = vsel %vm1311, %v1450, %v1454
    %v1456 = vshrl.u32 %v1298, 16
    %v1458 = vrot.slane %v1456, 4
    %v1459 = vor.u32 %v1458, %v1454
    %v1460 = vrot.slane %v1459, 4
    %v1462 = vshll.u32 %v1299, 16
    %v1464 = vrot.slane %v1462, 5
    %v1465 = vsel %vm1311, %v1460, %v1464
    %v1466 = vshrl.u32 %v1299, 16
    %v1468 = vrot.slane %v1466, 4
    %v1469 = vor.u32 %v1468, %v1464
    %v1470 = vrot.slane %v1469, 4
    %v1472 = vshll.u32 %v1300, 16
    %v1474 = vrot.slane %v1472, 5
    %v1475 = vsel %vm1311, %v1470, %v1474
    %v1476 = vshrl.u32 %v1300, 16
    %v1478 = vrot.slane %v1476, 4
    %v1479 = vor.u32 %v1478, %v1474
    %v1480 = vrot.slane %v1479, 4
    %v1482 = vshll.u32 %v1301, 16
    %v1484 = vrot.slane %v1482, 5
    %v1485 = vsel %vm1311, %v1480, %v1484
    %v1486 = vshrl.u32 %v1301, 16
    %v1488 = vrot.slane %v1486, 4
    %v1489 = vor.u32 %v1488, %v1484
    %v1490 = vrot.slane %v1489, 4
    %v1492 = vshll.u32 %v1302, 16
    %v1494 = vrot.slane %v1492, 5
    %v1495 = vsel %vm1311, %v1490, %v1494
    %v1496 = vshrl.u32 %v1302, 16
    %v1498 = vrot.slane %v1496, 4
    %v1499 = vor.u32 %v1498, %v1494
    %v1500 = vrot.slane %v1499, 4
    %v1502 = vshll.u32 %v1303, 16
    %v1504 = vrot.slane %v1502, 5
    %v1505 = vsel %vm1311, %v1500, %v1504
    %v1506 = vshrl.u32 %v1303, 16
    %v1508 = vrot.slane %v1506, 4
    %v1509 = vor.u32 %v1508, %v1504
    %v1510 = vrot.slane %v1509, 4
    %v1512 = vshll.u32 %v1304, 16
    %v1514 = vrot.slane %v1512, 5
    %v1515 = vsel %vm1311, %v1510, %v1514
    %v1516 = vshrl.u32 %v1304, 16
    %v1518 = vrot.slane %v1516, 4
    %v1519 = vor.u32 %v1518, %v1514
    %v1520 = vrot.slane %v1519, 4
    %v1522 = vshll.u32 %v1305, 16
    %v1524 = vrot.slane %v1522, 5
    %v1525 = vsel %vm1311, %v1520, %v1524
    %v1526 = vshrl.u32 %v1305, 16
    %v1528 = vrot.slane %v1526, 4
    %v1529 = vor.u32 %v1528, %v1524
    %v1530 = vrot.slane %v1529, 4
    %v1532 = vshll.u32 %v1306, 16
    %v1534 = vrot.slane %v1532, 5
    %v1535 = vsel %vm1311, %v1530, %v1534
    %v1536 = vshrl.u32 %v1306, 16
    %v1538 = vrot.slane %v1536, 4
    %v1539 = vor.u32 %v1538, %v1534
    %v1540 = vrot.slane %v1539, 4
    %v1542 = vshll.u32 %v1307, 16
    %v1544 = vrot.slane %v1542, 5
    %v1545 = vsel %vm1311, %v1540, %v1544
    %v1546 = vshrl.u32 %v1307, 16
    %v1548 = vrot.slane %v1546, 4
    %v1549 = vor.u32 %v1548, %v1544
    %v1550 = vrot.slane %v1549, 4
    %v1552 = vshll.u32 %v1308, 16
    %v1554 = vrot.slane %v1552, 5
    %v1555 = vsel %vm1311, %v1550, %v1554
    %v1556 = vshrl.u32 %v1308, 16
    %v1558 = vrot.slane %v1556, 4
    %v1559 = vor.u32 %v1558, %v1554
    %v1560 = vrot.slane %v1559, 4
    %v1562 = vshll.u32 %v1309, 16
    %v1564 = vrot.slane %v1562, 5
    %v1565 = vsel %vm1311, %v1560, %v1564
    %1591 = vst [vmem:[#allocation3 + $0x8] sm:$0xff] %v1325
    %1592 = vst [vmem:[#allocation3 + $0x50] sm:$0xff] %v1335
    %1593 = vst [vmem:[#allocation3 + $0x98] sm:$0xff] %v1345
    %1594 = vst [vmem:[#allocation3 + $0xe0] sm:$0xff] %v1355
    %1595 = vst [vmem:[#allocation3 + $0x128] sm:$0xff] %v1365
    %1596 = vst [vmem:[#allocation3 + $0x170] sm:$0xff] %v1375
    %1597 = vst [vmem:[#allocation3 + $0x1b8] sm:$0xff] %v1385
    %1598 = vst [vmem:[#allocation3 + $0x200] sm:$0xff] %v1395
    %1599 = vst [vmem:[#allocation3 + $0x248] sm:$0xff] %v1405
    %1600 = vst [vmem:[#allocation3 + $0x290] sm:$0xff] %v1415
    %1601 = vst [vmem:[#allocation3 + $0x2d8] sm:$0xff] %v1425
    %1602 = vst [vmem:[#allocation3 + $0x320] sm:$0xff] %v1435
    %1603 = vst [vmem:[#allocation3 + $0x368] sm:$0xff] %v1445
    %1604 = vst [vmem:[#allocation3 + $0x3b0] sm:$0xff] %v1455
    %1605 = vst [vmem:[#allocation3 + $0x3f8] sm:$0xff] %v1465
    %1606 = vst [vmem:[#allocation3 + $0x440] sm:$0xff] %v1475
    %1607 = vst [vmem:[#allocation3 + $0x488] sm:$0xff] %v1485
    %1608 = vst [vmem:[#allocation3 + $0x4d0] sm:$0xff] %v1495
    %1609 = vst [vmem:[#allocation3 + $0x518] sm:$0xff] %v1505
    %1610 = vst [vmem:[#allocation3 + $0x560] sm:$0xff] %v1515
    %1611 = vst [vmem:[#allocation3 + $0x5a8] sm:$0xff] %v1525
    %1612 = vst [vmem:[#allocation3 + $0x5f0] sm:$0xff] %v1535
    %1613 = vst [vmem:[#allocation3 + $0x638] sm:$0xff] %v1545
    %1614 = vst [vmem:[#allocation3 + $0x680] sm:$0xff] %v1555
    %1615 = vst [vmem:[#allocation3 + $0x6c8] sm:$0xff] %v1565
    %v1616 = vld [vmem:[#allocation2] sm:$0xee]
    %v1617 = vld [vmem:[#allocation2 + $0x8] sm:$0xff]
    %v1618 = vld [vmem:[#allocation2 + $0x10] sm:$0xff]
    %v1619 = vld [vmem:[#allocation2 + $0x18] sm:$0xff]
    %v1620 = vld [vmem:[#allocation2 + $0x20] sm:$0xff]
    %v1621 = vld [vmem:[#allocation2 + $0x28] sm:$0xff]
    %v1622 = vld [vmem:[#allocation2 + $0x30] sm:$0xff]
    %v1623 = vld [vmem:[#allocation2 + $0x38] sm:$0xff]
    %v1624 = vld [vmem:[#allocation2 + $0x40] sm:$0xff]
    %v1625 = vld [vmem:[#allocation2 + $0x48] sm:$0xff]
    %v1626 = vld [vmem:[#allocation2 + $0x50] sm:$0xff]
    %v1627 = vld [vmem:[#allocation2 + $0x58] sm:$0xff]
    %v1628 = vld [vmem:[#allocation2 + $0x60] sm:$0xff]
    %v1629 = vld [vmem:[#allocation2 + $0x68] sm:$0xff]
    %v1630 = vld [vmem:[#allocation2 + $0x70] sm:$0xff]
    %v1631 = vld [vmem:[#allocation2 + $0x78] sm:$0xff]
    %v1632 = vld [vmem:[#allocation2 + $0x80] sm:$0xff]
    %v1633 = vld [vmem:[#allocation2 + $0x88] sm:$0xff]
    %v1634 = vld [vmem:[#allocation2 + $0x90] sm:$0xff]
    %v1635 = vld [vmem:[#allocation2 + $0x98] sm:$0xff]
    %v1636 = vld [vmem:[#allocation2 + $0xa0] sm:$0xff]
    %v1637 = vld [vmem:[#allocation2 + $0xa8] sm:$0xff]
    %v1638 = vld [vmem:[#allocation2 + $0xb0] sm:$0xff]
    %v1639 = vld [vmem:[#allocation2 + $0xb8] sm:$0xff]
    %v1640 = vld [vmem:[#allocation2 + $0xc0] sm:$0xff]
    %v1641 = vld [vmem:[#allocation2 + $0xc8] sm:$0x11]
    %vm1668 = vmor %vm908, %vm911
    %v1669 = vrot.slane %v1616, 5
    %v1670 = vrot.slane %v1669, 4
    %v1671 = vrot.slane %v1617, 5
    %v1672 = vsel %vm1668, %v1670, %v1671
    %v1673 = vrot.slane %v1671, 4
    %v1674 = vrot.slane %v1618, 5
    %v1675 = vsel %vm1668, %v1673, %v1674
    %v1676 = vrot.slane %v1674, 4
    %v1677 = vrot.slane %v1619, 5
    %v1678 = vsel %vm1668, %v1676, %v1677
    %v1679 = vrot.slane %v1677, 4
    %v1680 = vrot.slane %v1620, 5
    %v1681 = vsel %vm1668, %v1679, %v1680
    %v1682 = vrot.slane %v1680, 4
    %v1683 = vrot.slane %v1621, 5
    %v1684 = vsel %vm1668, %v1682, %v1683
    %v1685 = vrot.slane %v1683, 4
    %v1686 = vrot.slane %v1622, 5
    %v1687 = vsel %vm1668, %v1685, %v1686
    %v1688 = vrot.slane %v1686, 4
    %v1689 = vrot.slane %v1623, 5
    %v1690 = vsel %vm1668, %v1688, %v1689
    %v1691 = vrot.slane %v1689, 4
    %v1692 = vrot.slane %v1624, 5
    %v1693 = vsel %vm1668, %v1691, %v1692
    %v1694 = vrot.slane %v1692, 4
    %v1695 = vrot.slane %v1625, 5
    %v1696 = vsel %vm1668, %v1694, %v1695
    %v1697 = vrot.slane %v1695, 4
    %v1698 = vrot.slane %v1626, 5
    %v1699 = vsel %vm1668, %v1697, %v1698
    %v1700 = vrot.slane %v1698, 4
    %v1701 = vrot.slane %v1627, 5
    %v1702 = vsel %vm1668, %v1700, %v1701
    %v1703 = vrot.slane %v1701, 4
    %v1704 = vrot.slane %v1628, 5
    %v1705 = vsel %vm1668, %v1703, %v1704
    %v1706 = vrot.slane %v1704, 4
    %v1707 = vrot.slane %v1629, 5
    %v1708 = vsel %vm1668, %v1706, %v1707
    %v1709 = vrot.slane %v1707, 4
    %v1710 = vrot.slane %v1630, 5
    %v1711 = vsel %vm1668, %v1709, %v1710
    %v1712 = vrot.slane %v1710, 4
    %v1713 = vrot.slane %v1631, 5
    %v1714 = vsel %vm1668, %v1712, %v1713
    %v1715 = vrot.slane %v1713, 4
    %v1716 = vrot.slane %v1632, 5
    %v1717 = vsel %vm1668, %v1715, %v1716
    %v1718 = vrot.slane %v1716, 4
    %v1719 = vrot.slane %v1633, 5
    %v1720 = vsel %vm1668, %v1718, %v1719
    %v1721 = vrot.slane %v1719, 4
    %v1722 = vrot.slane %v1634, 5
    %v1723 = vsel %vm1668, %v1721, %v1722
    %v1724 = vrot.slane %v1722, 4
    %v1725 = vrot.slane %v1635, 5
    %v1726 = vsel %vm1668, %v1724, %v1725
    %v1727 = vrot.slane %v1725, 4
    %v1728 = vrot.slane %v1636, 5
    %v1729 = vsel %vm1668, %v1727, %v1728
    %v1730 = vrot.slane %v1728, 4
    %v1731 = vrot.slane %v1637, 5
    %v1732 = vsel %vm1668, %v1730, %v1731
    %v1733 = vrot.slane %v1731, 4
    %v1734 = vrot.slane %v1638, 5
    %v1735 = vsel %vm1668, %v1733, %v1734
    %v1736 = vrot.slane %v1734, 4
    %v1737 = vrot.slane %v1639, 5
    %v1738 = vsel %vm1668, %v1736, %v1737
    %v1739 = vrot.slane %v1737, 4
    %v1740 = vrot.slane %v1640, 5
    %v1741 = vsel %vm1668, %v1739, %v1740
    %v1742 = vrot.slane %v1740, 4
    %v1743 = vrot.slane %v1641, 5
    %v1744 = vsel %vm1668, %v1742, %v1743
    %1770 = vst [vmem:[#allocation3 + $0x10] sm:$0xff] %v1672
    %1771 = vst [vmem:[#allocation3 + $0x58] sm:$0xff] %v1675
    %1772 = vst [vmem:[#allocation3 + $0xa0] sm:$0xff] %v1678
    %1773 = vst [vmem:[#allocation3 + $0xe8] sm:$0xff] %v1681
    %1774 = vst [vmem:[#allocation3 + $0x130] sm:$0xff] %v1684
    %1775 = vst [vmem:[#allocation3 + $0x178] sm:$0xff] %v1687
    %1776 = vst [vmem:[#allocation3 + $0x1c0] sm:$0xff] %v1690
    %1777 = vst [vmem:[#allocation3 + $0x208] sm:$0xff] %v1693
    %1778 = vst [vmem:[#allocation3 + $0x250] sm:$0xff] %v1696
    %1779 = vst [vmem:[#allocation3 + $0x298] sm:$0xff] %v1699
    %1780 = vst [vmem:[#allocation3 + $0x2e0] sm:$0xff] %v1702
    %1781 = vst [vmem:[#allocation3 + $0x328] sm:$0xff] %v1705
    %1782 = vst [vmem:[#allocation3 + $0x370] sm:$0xff] %v1708
    %1783 = vst [vmem:[#allocation3 + $0x3b8] sm:$0xff] %v1711
    %1784 = vst [vmem:[#allocation3 + $0x400] sm:$0xff] %v1714
    %1785 = vst [vmem:[#allocation3 + $0x448] sm:$0xff] %v1717
    %1786 = vst [vmem:[#allocation3 + $0x490] sm:$0xff] %v1720
    %1787 = vst [vmem:[#allocation3 + $0x4d8] sm:$0xff] %v1723
    %1788 = vst [vmem:[#allocation3 + $0x520] sm:$0xff] %v1726
    %1789 = vst [vmem:[#allocation3 + $0x568] sm:$0xff] %v1729
    %1790 = vst [vmem:[#allocation3 + $0x5b0] sm:$0xff] %v1732
    %1791 = vst [vmem:[#allocation3 + $0x5f8] sm:$0xff] %v1735
    %1792 = vst [vmem:[#allocation3 + $0x640] sm:$0xff] %v1738
    %1793 = vst [vmem:[#allocation3 + $0x688] sm:$0xff] %v1741
    %1794 = vst [vmem:[#allocation3 + $0x6d0] sm:$0xff] %v1744
    %v1795 = vld [vmem:[#allocation2 + $0x8] sm:$0xee]
    %v1796 = vld [vmem:[#allocation2 + $0x10] sm:$0xff]
    %v1797 = vld [vmem:[#allocation2 + $0x18] sm:$0xff]
    %v1798 = vld [vmem:[#allocation2 + $0x20] sm:$0xff]
    %v1799 = vld [vmem:[#allocation2 + $0x28] sm:$0xff]
    %v1800 = vld [vmem:[#allocation2 + $0x30] sm:$0xff]
    %v1801 = vld [vmem:[#allocation2 + $0x38] sm:$0xff]
    %v1802 = vld [vmem:[#allocation2 + $0x40] sm:$0xff]
    %v1803 = vld [vmem:[#allocation2 + $0x48] sm:$0xff]
    %v1804 = vld [vmem:[#allocation2 + $0x50] sm:$0xff]
    %v1805 = vld [vmem:[#allocation2 + $0x58] sm:$0xff]
    %v1806 = vld [vmem:[#allocation2 + $0x60] sm:$0xff]
    %v1807 = vld [vmem:[#allocation2 + $0x68] sm:$0xff]
    %v1808 = vld [vmem:[#allocation2 + $0x70] sm:$0xff]
    %v1809 = vld [vmem:[#allocation2 + $0x78] sm:$0xff]
    %v1810 = vld [vmem:[#allocation2 + $0x80] sm:$0xff]
    %v1811 = vld [vmem:[#allocation2 + $0x88] sm:$0xff]
    %v1812 = vld [vmem:[#allocation2 + $0x90] sm:$0xff]
    %v1813 = vld [vmem:[#allocation2 + $0x98] sm:$0xff]
    %v1814 = vld [vmem:[#allocation2 + $0xa0] sm:$0xff]
    %v1815 = vld [vmem:[#allocation2 + $0xa8] sm:$0xff]
    %v1816 = vld [vmem:[#allocation2 + $0xb0] sm:$0xff]
    %v1817 = vld [vmem:[#allocation2 + $0xb8] sm:$0xff]
    %v1818 = vld [vmem:[#allocation2 + $0xc0] sm:$0xff]
    %v1819 = vld [vmem:[#allocation2 + $0xc8] sm:$0xff]
    %v1820 = vld [vmem:[#allocation2 + $0xd0] sm:$0x11]
    %v1847 = vrot.slane %v1795, 5
    %v1848 = vrot.slane %v1847, 4
    %v1849 = vrot.slane %v1796, 5
    %v1850 = vsel %vm1668, %v1848, %v1849
    %v1851 = vrot.slane %v1849, 4
    %v1852 = vrot.slane %v1797, 5
    %v1853 = vsel %vm1668, %v1851, %v1852
    %v1854 = vrot.slane %v1852, 4
    %v1855 = vrot.slane %v1798, 5
    %v1856 = vsel %vm1668, %v1854, %v1855
    %v1857 = vrot.slane %v1855, 4
    %v1858 = vrot.slane %v1799, 5
    %v1859 = vsel %vm1668, %v1857, %v1858
    %v1860 = vrot.slane %v1858, 4
    %v1861 = vrot.slane %v1800, 5
    %v1862 = vsel %vm1668, %v1860, %v1861
    %v1863 = vrot.slane %v1861, 4
    %v1864 = vrot.slane %v1801, 5
    %v1865 = vsel %vm1668, %v1863, %v1864
    %v1866 = vrot.slane %v1864, 4
    %v1867 = vrot.slane %v1802, 5
    %v1868 = vsel %vm1668, %v1866, %v1867
    %v1869 = vrot.slane %v1867, 4
    %v1870 = vrot.slane %v1803, 5
    %v1871 = vsel %vm1668, %v1869, %v1870
    %v1872 = vrot.slane %v1870, 4
    %v1873 = vrot.slane %v1804, 5
    %v1874 = vsel %vm1668, %v1872, %v1873
    %v1875 = vrot.slane %v1873, 4
    %v1876 = vrot.slane %v1805, 5
    %v1877 = vsel %vm1668, %v1875, %v1876
    %v1878 = vrot.slane %v1876, 4
    %v1879 = vrot.slane %v1806, 5
    %v1880 = vsel %vm1668, %v1878, %v1879
    %v1881 = vrot.slane %v1879, 4
    %v1882 = vrot.slane %v1807, 5
    %v1883 = vsel %vm1668, %v1881, %v1882
    %v1884 = vrot.slane %v1882, 4
    %v1885 = vrot.slane %v1808, 5
    %v1886 = vsel %vm1668, %v1884, %v1885
    %v1887 = vrot.slane %v1885, 4
    %v1888 = vrot.slane %v1809, 5
    %v1889 = vsel %vm1668, %v1887, %v1888
    %v1890 = vrot.slane %v1888, 4
    %v1891 = vrot.slane %v1810, 5
    %v1892 = vsel %vm1668, %v1890, %v1891
    %v1893 = vrot.slane %v1891, 4
    %v1894 = vrot.slane %v1811, 5
    %v1895 = vsel %vm1668, %v1893, %v1894
    %v1896 = vrot.slane %v1894, 4
    %v1897 = vrot.slane %v1812, 5
    %v1898 = vsel %vm1668, %v1896, %v1897
    %v1899 = vrot.slane %v1897, 4
    %v1900 = vrot.slane %v1813, 5
    %v1901 = vsel %vm1668, %v1899, %v1900
    %v1902 = vrot.slane %v1900, 4
    %v1903 = vrot.slane %v1814, 5
    %v1904 = vsel %vm1668, %v1902, %v1903
    %v1905 = vrot.slane %v1903, 4
    %v1906 = vrot.slane %v1815, 5
    %v1907 = vsel %vm1668, %v1905, %v1906
    %v1908 = vrot.slane %v1906, 4
    %v1909 = vrot.slane %v1816, 5
    %v1910 = vsel %vm1668, %v1908, %v1909
    %v1911 = vrot.slane %v1909, 4
    %v1912 = vrot.slane %v1817, 5
    %v1913 = vsel %vm1668, %v1911, %v1912
    %v1914 = vrot.slane %v1912, 4
    %v1915 = vrot.slane %v1818, 5
    %v1916 = vsel %vm1668, %v1914, %v1915
    %v1917 = vrot.slane %v1915, 4
    %v1918 = vrot.slane %v1819, 5
    %v1919 = vsel %vm1668, %v1917, %v1918
    %v1920 = vrot.slane %v1918, 4
    %v1921 = vrot.slane %v1820, 5
    %v1922 = vsel %vm1668, %v1920, %v1921
    %1948 = vst [vmem:[#allocation3 + $0x18] sm:$0xff] %v1850
    %1949 = vst [vmem:[#allocation3 + $0x60] sm:$0xff] %v1853
    %1950 = vst [vmem:[#allocation3 + $0xa8] sm:$0xff] %v1856
    %1951 = vst [vmem:[#allocation3 + $0xf0] sm:$0xff] %v1859
    %1952 = vst [vmem:[#allocation3 + $0x138] sm:$0xff] %v1862
    %1953 = vst [vmem:[#allocation3 + $0x180] sm:$0xff] %v1865
    %1954 = vst [vmem:[#allocation3 + $0x1c8] sm:$0xff] %v1868
    %1955 = vst [vmem:[#allocation3 + $0x210] sm:$0xff] %v1871
    %1956 = vst [vmem:[#allocation3 + $0x258] sm:$0xff] %v1874
    %1957 = vst [vmem:[#allocation3 + $0x2a0] sm:$0xff] %v1877
    %1958 = vst [vmem:[#allocation3 + $0x2e8] sm:$0xff] %v1880
    %1959 = vst [vmem:[#allocation3 + $0x330] sm:$0xff] %v1883
    %1960 = vst [vmem:[#allocation3 + $0x378] sm:$0xff] %v1886
    %1961 = vst [vmem:[#allocation3 + $0x3c0] sm:$0xff] %v1889
    %1962 = vst [vmem:[#allocation3 + $0x408] sm:$0xff] %v1892
    %1963 = vst [vmem:[#allocation3 + $0x450] sm:$0xff] %v1895
    %1964 = vst [vmem:[#allocation3 + $0x498] sm:$0xff] %v1898
    %1965 = vst [vmem:[#allocation3 + $0x4e0] sm:$0xff] %v1901
    %1966 = vst [vmem:[#allocation3 + $0x528] sm:$0xff] %v1904
    %1967 = vst [vmem:[#allocation3 + $0x570] sm:$0xff] %v1907
    %1968 = vst [vmem:[#allocation3 + $0x5b8] sm:$0xff] %v1910
    %1969 = vst [vmem:[#allocation3 + $0x600] sm:$0xff] %v1913
    %1970 = vst [vmem:[#allocation3 + $0x648] sm:$0xff] %v1916
    %1971 = vst [vmem:[#allocation3 + $0x690] sm:$0xff] %v1919
    %1972 = vst [vmem:[#allocation3 + $0x6d8] sm:$0xff] %v1922
    %v1973 = vld [vmem:[#allocation2 + $0x8] sm:$0xee]
    %v1974 = vld [vmem:[#allocation2 + $0x10] sm:$0xff]
    %v1975 = vld [vmem:[#allocation2 + $0x18] sm:$0xff]
    %v1976 = vld [vmem:[#allocation2 + $0x20] sm:$0xff]
    %v1977 = vld [vmem:[#allocation2 + $0x28] sm:$0xff]
    %v1978 = vld [vmem:[#allocation2 + $0x30] sm:$0xff]
    %v1979 = vld [vmem:[#allocation2 + $0x38] sm:$0xff]
    %v1980 = vld [vmem:[#allocation2 + $0x40] sm:$0xff]
    %v1981 = vld [vmem:[#allocation2 + $0x48] sm:$0xff]
    %v1982 = vld [vmem:[#allocation2 + $0x50] sm:$0xff]
    %v1983 = vld [vmem:[#allocation2 + $0x58] sm:$0xff]
    %v1984 = vld [vmem:[#allocation2 + $0x60] sm:$0xff]
    %v1985 = vld [vmem:[#allocation2 + $0x68] sm:$0xff]
    %v1986 = vld [vmem:[#allocation2 + $0x70] sm:$0xff]
    %v1987 = vld [vmem:[#allocation2 + $0x78] sm:$0xff]
    %v1988 = vld [vmem:[#allocation2 + $0x80] sm:$0xff]
    %v1989 = vld [vmem:[#allocation2 + $0x88] sm:$0xff]
    %v1990 = vld [vmem:[#allocation2 + $0x90] sm:$0xff]
    %v1991 = vld [vmem:[#allocation2 + $0x98] sm:$0xff]
    %v1992 = vld [vmem:[#allocation2 + $0xa0] sm:$0xff]
    %v1993 = vld [vmem:[#allocation2 + $0xa8] sm:$0xff]
    %v1994 = vld [vmem:[#allocation2 + $0xb0] sm:$0xff]
    %v1995 = vld [vmem:[#allocation2 + $0xb8] sm:$0xff]
    %v1996 = vld [vmem:[#allocation2 + $0xc0] sm:$0xff]
    %v1997 = vld [vmem:[#allocation2 + $0xc8] sm:$0xff]
    %v1998 = vld [vmem:[#allocation2 + $0xd0] sm:$0x33]
    %vm1999 = vsmask.f32 6416
    %vm2000 = vmor %vm909, %vm1999
    %v2002 = vshrl.u32 %v1973, 16
    %v2004 = vrot.slane %v2002, 5
    %v2005 = vshll.u32 %v1973, 16
    %v2007 = vrot.slane %v2005, 6
    %v2008 = vor.u32 %v2004, %v2007
    %v2009 = vrot.slane %v2008, 4
    %v2011 = vshrl.u32 %v1974, 16
    %v2013 = vrot.slane %v2011, 5
    %v2014 = vshll.u32 %v1974, 16
    %v2016 = vrot.slane %v2014, 6
    %v2017 = vor.u32 %v2013, %v2016
    %v2018 = vsel %vm2000, %v2009, %v2017
    %v2019 = vrot.slane %v2017, 4
    %v2021 = vshrl.u32 %v1975, 16
    %v2023 = vrot.slane %v2021, 5
    %v2024 = vshll.u32 %v1975, 16
    %v2026 = vrot.slane %v2024, 6
    %v2027 = vor.u32 %v2023, %v2026
    %v2028 = vsel %vm2000, %v2019, %v2027
    %v2029 = vrot.slane %v2027, 4
    %v2031 = vshrl.u32 %v1976, 16
    %v2033 = vrot.slane %v2031, 5
    %v2034 = vshll.u32 %v1976, 16
    %v2036 = vrot.slane %v2034, 6
    %v2037 = vor.u32 %v2033, %v2036
    %v2038 = vsel %vm2000, %v2029, %v2037
    %v2039 = vrot.slane %v2037, 4
    %v2041 = vshrl.u32 %v1977, 16
    %v2043 = vrot.slane %v2041, 5
    %v2044 = vshll.u32 %v1977, 16
    %v2046 = vrot.slane %v2044, 6
    %v2047 = vor.u32 %v2043, %v2046
    %v2048 = vsel %vm2000, %v2039, %v2047
    %v2049 = vrot.slane %v2047, 4
    %v2051 = vshrl.u32 %v1978, 16
    %v2053 = vrot.slane %v2051, 5
    %v2054 = vshll.u32 %v1978, 16
    %v2056 = vrot.slane %v2054, 6
    %v2057 = vor.u32 %v2053, %v2056
    %v2058 = vsel %vm2000, %v2049, %v2057
    %v2059 = vrot.slane %v2057, 4
    %v2061 = vshrl.u32 %v1979, 16
    %v2063 = vrot.slane %v2061, 5
    %v2064 = vshll.u32 %v1979, 16
    %v2066 = vrot.slane %v2064, 6
    %v2067 = vor.u32 %v2063, %v2066
    %v2068 = vsel %vm2000, %v2059, %v2067
    %v2069 = vrot.slane %v2067, 4
    %v2071 = vshrl.u32 %v1980, 16
    %v2073 = vrot.slane %v2071, 5
    %v2074 = vshll.u32 %v1980, 16
    %v2076 = vrot.slane %v2074, 6
    %v2077 = vor.u32 %v2073, %v2076
    %v2078 = vsel %vm2000, %v2069, %v2077
    %v2079 = vrot.slane %v2077, 4
    %v2081 = vshrl.u32 %v1981, 16
    %v2083 = vrot.slane %v2081, 5
    %v2084 = vshll.u32 %v1981, 16
    %v2086 = vrot.slane %v2084, 6
    %v2087 = vor.u32 %v2083, %v2086
    %v2088 = vsel %vm2000, %v2079, %v2087
    %v2089 = vrot.slane %v2087, 4
    %v2091 = vshrl.u32 %v1982, 16
    %v2093 = vrot.slane %v2091, 5
    %v2094 = vshll.u32 %v1982, 16
    %v2096 = vrot.slane %v2094, 6
    %v2097 = vor.u32 %v2093, %v2096
    %v2098 = vsel %vm2000, %v2089, %v2097
    %v2099 = vrot.slane %v2097, 4
    %v2101 = vshrl.u32 %v1983, 16
    %v2103 = vrot.slane %v2101, 5
    %v2104 = vshll.u32 %v1983, 16
    %v2106 = vrot.slane %v2104, 6
    %v2107 = vor.u32 %v2103, %v2106
    %v2108 = vsel %vm2000, %v2099, %v2107
    %v2109 = vrot.slane %v2107, 4
    %v2111 = vshrl.u32 %v1984, 16
    %v2113 = vrot.slane %v2111, 5
    %v2114 = vshll.u32 %v1984, 16
    %v2116 = vrot.slane %v2114, 6
    %v2117 = vor.u32 %v2113, %v2116
    %v2118 = vsel %vm2000, %v2109, %v2117
    %v2119 = vrot.slane %v2117, 4
    %v2121 = vshrl.u32 %v1985, 16
    %v2123 = vrot.slane %v2121, 5
    %v2124 = vshll.u32 %v1985, 16
    %v2126 = vrot.slane %v2124, 6
    %v2127 = vor.u32 %v2123, %v2126
    %v2128 = vsel %vm2000, %v2119, %v2127
    %v2129 = vrot.slane %v2127, 4
    %v2131 = vshrl.u32 %v1986, 16
    %v2133 = vrot.slane %v2131, 5
    %v2134 = vshll.u32 %v1986, 16
    %v2136 = vrot.slane %v2134, 6
    %v2137 = vor.u32 %v2133, %v2136
    %v2138 = vsel %vm2000, %v2129, %v2137
    %v2139 = vrot.slane %v2137, 4
    %v2141 = vshrl.u32 %v1987, 16
    %v2143 = vrot.slane %v2141, 5
    %v2144 = vshll.u32 %v1987, 16
    %v2146 = vrot.slane %v2144, 6
    %v2147 = vor.u32 %v2143, %v2146
    %v2148 = vsel %vm2000, %v2139, %v2147
    %v2149 = vrot.slane %v2147, 4
    %v2151 = vshrl.u32 %v1988, 16
    %v2153 = vrot.slane %v2151, 5
    %v2154 = vshll.u32 %v1988, 16
    %v2156 = vrot.slane %v2154, 6
    %v2157 = vor.u32 %v2153, %v2156
    %v2158 = vsel %vm2000, %v2149, %v2157
    %v2159 = vrot.slane %v2157, 4
    %v2161 = vshrl.u32 %v1989, 16
    %v2163 = vrot.slane %v2161, 5
    %v2164 = vshll.u32 %v1989, 16
    %v2166 = vrot.slane %v2164, 6
    %v2167 = vor.u32 %v2163, %v2166
    %v2168 = vsel %vm2000, %v2159, %v2167
    %v2169 = vrot.slane %v2167, 4
    %v2171 = vshrl.u32 %v1990, 16
    %v2173 = vrot.slane %v2171, 5
    %v2174 = vshll.u32 %v1990, 16
    %v2176 = vrot.slane %v2174, 6
    %v2177 = vor.u32 %v2173, %v2176
    %v2178 = vsel %vm2000, %v2169, %v2177
    %v2179 = vrot.slane %v2177, 4
    %v2181 = vshrl.u32 %v1991, 16
    %v2183 = vrot.slane %v2181, 5
    %v2184 = vshll.u32 %v1991, 16
    %v2186 = vrot.slane %v2184, 6
    %v2187 = vor.u32 %v2183, %v2186
    %v2188 = vsel %vm2000, %v2179, %v2187
    %v2189 = vrot.slane %v2187, 4
    %v2191 = vshrl.u32 %v1992, 16
    %v2193 = vrot.slane %v2191, 5
    %v2194 = vshll.u32 %v1992, 16
    %v2196 = vrot.slane %v2194, 6
    %v2197 = vor.u32 %v2193, %v2196
    %v2198 = vsel %vm2000, %v2189, %v2197
    %v2199 = vrot.slane %v2197, 4
    %v2201 = vshrl.u32 %v1993, 16
    %v2203 = vrot.slane %v2201, 5
    %v2204 = vshll.u32 %v1993, 16
    %v2206 = vrot.slane %v2204, 6
    %v2207 = vor.u32 %v2203, %v2206
    %v2208 = vsel %vm2000, %v2199, %v2207
    %v2209 = vrot.slane %v2207, 4
    %v2211 = vshrl.u32 %v1994, 16
    %v2213 = vrot.slane %v2211, 5
    %v2214 = vshll.u32 %v1994, 16
    %v2216 = vrot.slane %v2214, 6
    %v2217 = vor.u32 %v2213, %v2216
    %v2218 = vsel %vm2000, %v2209, %v2217
    %v2219 = vrot.slane %v2217, 4
    %v2221 = vshrl.u32 %v1995, 16
    %v2223 = vrot.slane %v2221, 5
    %v2224 = vshll.u32 %v1995, 16
    %v2226 = vrot.slane %v2224, 6
    %v2227 = vor.u32 %v2223, %v2226
    %v2228 = vsel %vm2000, %v2219, %v2227
    %v2229 = vrot.slane %v2227, 4
    %v2231 = vshrl.u32 %v1996, 16
    %v2233 = vrot.slane %v2231, 5
    %v2234 = vshll.u32 %v1996, 16
    %v2236 = vrot.slane %v2234, 6
    %v2237 = vor.u32 %v2233, %v2236
    %v2238 = vsel %vm2000, %v2229, %v2237
    %v2239 = vrot.slane %v2237, 4
    %v2241 = vshrl.u32 %v1997, 16
    %v2243 = vrot.slane %v2241, 5
    %v2244 = vshll.u32 %v1997, 16
    %v2246 = vrot.slane %v2244, 6
    %v2247 = vor.u32 %v2243, %v2246
    %v2248 = vsel %vm2000, %v2239, %v2247
    %v2249 = vrot.slane %v2247, 4
    %v2251 = vshrl.u32 %v1998, 16
    %v2253 = vrot.slane %v2251, 5
    %v2254 = vshll.u32 %v1998, 16
    %v2256 = vrot.slane %v2254, 6
    %v2257 = vor.u32 %v2253, %v2256
    %v2258 = vsel %vm2000, %v2249, %v2257
    %2284 = vst [vmem:[#allocation3 + $0x20] sm:$0xff] %v2018
    %2285 = vst [vmem:[#allocation3 + $0x68] sm:$0xff] %v2028
    %2286 = vst [vmem:[#allocation3 + $0xb0] sm:$0xff] %v2038
    %2287 = vst [vmem:[#allocation3 + $0xf8] sm:$0xff] %v2048
    %2288 = vst [vmem:[#allocation3 + $0x140] sm:$0xff] %v2058
    %2289 = vst [vmem:[#allocation3 + $0x188] sm:$0xff] %v2068
    %2290 = vst [vmem:[#allocation3 + $0x1d0] sm:$0xff] %v2078
    %2291 = vst [vmem:[#allocation3 + $0x218] sm:$0xff] %v2088
    %2292 = vst [vmem:[#allocation3 + $0x260] sm:$0xff] %v2098
    %2293 = vst [vmem:[#allocation3 + $0x2a8] sm:$0xff] %v2108
    %2294 = vst [vmem:[#allocation3 + $0x2f0] sm:$0xff] %v2118
    %2295 = vst [vmem:[#allocation3 + $0x338] sm:$0xff] %v2128
    %2296 = vst [vmem:[#allocation3 + $0x380] sm:$0xff] %v2138
    %2297 = vst [vmem:[#allocation3 + $0x3c8] sm:$0xff] %v2148
    %2298 = vst [vmem:[#allocation3 + $0x410] sm:$0xff] %v2158
    %2299 = vst [vmem:[#allocation3 + $0x458] sm:$0xff] %v2168
    %2300 = vst [vmem:[#allocation3 + $0x4a0] sm:$0xff] %v2178
    %2301 = vst [vmem:[#allocation3 + $0x4e8] sm:$0xff] %v2188
    %2302 = vst [vmem:[#allocation3 + $0x530] sm:$0xff] %v2198
    %2303 = vst [vmem:[#allocation3 + $0x578] sm:$0xff] %v2208
    %2304 = vst [vmem:[#allocation3 + $0x5c0] sm:$0xff] %v2218
    %2305 = vst [vmem:[#allocation3 + $0x608] sm:$0xff] %v2228
    %2306 = vst [vmem:[#allocation3 + $0x650] sm:$0xff] %v2238
    %2307 = vst [vmem:[#allocation3 + $0x698] sm:$0xff] %v2248
    %2308 = vst [vmem:[#allocation3 + $0x6e0] sm:$0xff] %v2258
    %v2309 = vld [vmem:[#allocation2 + $0x8] sm:$0xcc]
    %v2310 = vld [vmem:[#allocation2 + $0x10] sm:$0xff]
    %v2311 = vld [vmem:[#allocation2 + $0x18] sm:$0xff]
    %v2312 = vld [vmem:[#allocation2 + $0x20] sm:$0xff]
    %v2313 = vld [vmem:[#allocation2 + $0x28] sm:$0xff]
    %v2314 = vld [vmem:[#allocation2 + $0x30] sm:$0xff]
    %v2315 = vld [vmem:[#allocation2 + $0x38] sm:$0xff]
    %v2316 = vld [vmem:[#allocation2 + $0x40] sm:$0xff]
    %v2317 = vld [vmem:[#allocation2 + $0x48] sm:$0xff]
    %v2318 = vld [vmem:[#allocation2 + $0x50] sm:$0xff]
    %v2319 = vld [vmem:[#allocation2 + $0x58] sm:$0xff]
    %v2320 = vld [vmem:[#allocation2 + $0x60] sm:$0xff]
    %v2321 = vld [vmem:[#allocation2 + $0x68] sm:$0xff]
    %v2322 = vld [vmem:[#allocation2 + $0x70] sm:$0xff]
    %v2323 = vld [vmem:[#allocation2 + $0x78] sm:$0xff]
    %v2324 = vld [vmem:[#allocation2 + $0x80] sm:$0xff]
    %v2325 = vld [vmem:[#allocation2 + $0x88] sm:$0xff]
    %v2326 = vld [vmem:[#allocation2 + $0x90] sm:$0xff]
    %v2327 = vld [vmem:[#allocation2 + $0x98] sm:$0xff]
    %v2328 = vld [vmem:[#allocation2 + $0xa0] sm:$0xff]
    %v2329 = vld [vmem:[#allocation2 + $0xa8] sm:$0xff]
    %v2330 = vld [vmem:[#allocation2 + $0xb0] sm:$0xff]
    %v2331 = vld [vmem:[#allocation2 + $0xb8] sm:$0xff]
    %v2332 = vld [vmem:[#allocation2 + $0xc0] sm:$0xff]
    %v2333 = vld [vmem:[#allocation2 + $0xc8] sm:$0xff]
    %v2334 = vld [vmem:[#allocation2 + $0xd0] sm:$0x33]
    %vm2361 = vmor %vm874, %vm877
    %v2362 = vrot.slane %v2309, 6
    %v2363 = vrot.slane %v2362, 4
    %v2364 = vrot.slane %v2310, 6
    %v2365 = vsel %vm2361, %v2363, %v2364
    %v2366 = vrot.slane %v2364, 4
    %v2367 = vrot.slane %v2311, 6
    %v2368 = vsel %vm2361, %v2366, %v2367
    %v2369 = vrot.slane %v2367, 4
    %v2370 = vrot.slane %v2312, 6
    %v2371 = vsel %vm2361, %v2369, %v2370
    %v2372 = vrot.slane %v2370, 4
    %v2373 = vrot.slane %v2313, 6
    %v2374 = vsel %vm2361, %v2372, %v2373
    %v2375 = vrot.slane %v2373, 4
    %v2376 = vrot.slane %v2314, 6
    %v2377 = vsel %vm2361, %v2375, %v2376
    %v2378 = vrot.slane %v2376, 4
    %v2379 = vrot.slane %v2315, 6
    %v2380 = vsel %vm2361, %v2378, %v2379
    %v2381 = vrot.slane %v2379, 4
    %v2382 = vrot.slane %v2316, 6
    %v2383 = vsel %vm2361, %v2381, %v2382
    %v2384 = vrot.slane %v2382, 4
    %v2385 = vrot.slane %v2317, 6
    %v2386 = vsel %vm2361, %v2384, %v2385
    %v2387 = vrot.slane %v2385, 4
    %v2388 = vrot.slane %v2318, 6
    %v2389 = vsel %vm2361, %v2387, %v2388
    %v2390 = vrot.slane %v2388, 4
    %v2391 = vrot.slane %v2319, 6
    %v2392 = vsel %vm2361, %v2390, %v2391
    %v2393 = vrot.slane %v2391, 4
    %v2394 = vrot.slane %v2320, 6
    %v2395 = vsel %vm2361, %v2393, %v2394
    %v2396 = vrot.slane %v2394, 4
    %v2397 = vrot.slane %v2321, 6
    %v2398 = vsel %vm2361, %v2396, %v2397
    %v2399 = vrot.slane %v2397, 4
    %v2400 = vrot.slane %v2322, 6
    %v2401 = vsel %vm2361, %v2399, %v2400
    %v2402 = vrot.slane %v2400, 4
    %v2403 = vrot.slane %v2323, 6
    %v2404 = vsel %vm2361, %v2402, %v2403
    %v2405 = vrot.slane %v2403, 4
    %v2406 = vrot.slane %v2324, 6
    %v2407 = vsel %vm2361, %v2405, %v2406
    %v2408 = vrot.slane %v2406, 4
    %v2409 = vrot.slane %v2325, 6
    %v2410 = vsel %vm2361, %v2408, %v2409
    %v2411 = vrot.slane %v2409, 4
    %v2412 = vrot.slane %v2326, 6
    %v2413 = vsel %vm2361, %v2411, %v2412
    %v2414 = vrot.slane %v2412, 4
    %v2415 = vrot.slane %v2327, 6
    %v2416 = vsel %vm2361, %v2414, %v2415
    %v2417 = vrot.slane %v2415, 4
    %v2418 = vrot.slane %v2328, 6
    %v2419 = vsel %vm2361, %v2417, %v2418
    %v2420 = vrot.slane %v2418, 4
    %v2421 = vrot.slane %v2329, 6
    %v2422 = vsel %vm2361, %v2420, %v2421
    %v2423 = vrot.slane %v2421, 4
    %v2424 = vrot.slane %v2330, 6
    %v2425 = vsel %vm2361, %v2423, %v2424
    %v2426 = vrot.slane %v2424, 4
    %v2427 = vrot.slane %v2331, 6
    %v2428 = vsel %vm2361, %v2426, %v2427
    %v2429 = vrot.slane %v2427, 4
    %v2430 = vrot.slane %v2332, 6
    %v2431 = vsel %vm2361, %v2429, %v2430
    %v2432 = vrot.slane %v2430, 4
    %v2433 = vrot.slane %v2333, 6
    %v2434 = vsel %vm2361, %v2432, %v2433
    %v2435 = vrot.slane %v2433, 4
    %v2436 = vrot.slane %v2334, 6
    %v2437 = vsel %vm2361, %v2435, %v2436
    %2463 = vst [vmem:[#allocation3 + $0x28] sm:$0xff] %v2365
    %2464 = vst [vmem:[#allocation3 + $0x70] sm:$0xff] %v2368
    %2465 = vst [vmem:[#allocation3 + $0xb8] sm:$0xff] %v2371
    %2466 = vst [vmem:[#allocation3 + $0x100] sm:$0xff] %v2374
    %2467 = vst [vmem:[#allocation3 + $0x148] sm:$0xff] %v2377
    %2468 = vst [vmem:[#allocation3 + $0x190] sm:$0xff] %v2380
    %2469 = vst [vmem:[#allocation3 + $0x1d8] sm:$0xff] %v2383
    %2470 = vst [vmem:[#allocation3 + $0x220] sm:$0xff] %v2386
    %2471 = vst [vmem:[#allocation3 + $0x268] sm:$0xff] %v2389
    %2472 = vst [vmem:[#allocation3 + $0x2b0] sm:$0xff] %v2392
    %2473 = vst [vmem:[#allocation3 + $0x2f8] sm:$0xff] %v2395
    %2474 = vst [vmem:[#allocation3 + $0x340] sm:$0xff] %v2398
    %2475 = vst [vmem:[#allocation3 + $0x388] sm:$0xff] %v2401
    %2476 = vst [vmem:[#allocation3 + $0x3d0] sm:$0xff] %v2404
    %2477 = vst [vmem:[#allocation3 + $0x418] sm:$0xff] %v2407
    %2478 = vst [vmem:[#allocation3 + $0x460] sm:$0xff] %v2410
    %2479 = vst [vmem:[#allocation3 + $0x4a8] sm:$0xff] %v2413
    %2480 = vst [vmem:[#allocation3 + $0x4f0] sm:$0xff] %v2416
    %2481 = vst [vmem:[#allocation3 + $0x538] sm:$0xff] %v2419
    %2482 = vst [vmem:[#allocation3 + $0x580] sm:$0xff] %v2422
    %2483 = vst [vmem:[#allocation3 + $0x5c8] sm:$0xff] %v2425
    %2484 = vst [vmem:[#allocation3 + $0x610] sm:$0xff] %v2428
    %2485 = vst [vmem:[#allocation3 + $0x658] sm:$0xff] %v2431
    %2486 = vst [vmem:[#allocation3 + $0x6a0] sm:$0xff] %v2434
    %2487 = vst [vmem:[#allocation3 + $0x6e8] sm:$0xff] %v2437
    %v2488 = vld [vmem:[#allocation2 + $0x10] sm:$0xcc]
    %v2489 = vld [vmem:[#allocation2 + $0x18] sm:$0xff]
    %v2490 = vld [vmem:[#allocation2 + $0x20] sm:$0xff]
    %v2491 = vld [vmem:[#allocation2 + $0x28] sm:$0xff]
    %v2492 = vld [vmem:[#allocation2 + $0x30] sm:$0xff]
    %v2493 = vld [vmem:[#allocation2 + $0x38] sm:$0xff]
    %v2494 = vld [vmem:[#allocation2 + $0x40] sm:$0xff]
    %v2495 = vld [vmem:[#allocation2 + $0x48] sm:$0xff]
    %v2496 = vld [vmem:[#allocation2 + $0x50] sm:$0xff]
    %v2497 = vld [vmem:[#allocation2 + $0x58] sm:$0xff]
    %v2498 = vld [vmem:[#allocation2 + $0x60] sm:$0xff]
    %v2499 = vld [vmem:[#allocation2 + $0x68] sm:$0xff]
    %v2500 = vld [vmem:[#allocation2 + $0x70] sm:$0xff]
    %v2501 = vld [vmem:[#allocation2 + $0x78] sm:$0xff]
    %v2502 = vld [vmem:[#allocation2 + $0x80] sm:$0xff]
    %v2503 = vld [vmem:[#allocation2 + $0x88] sm:$0xff]
    %v2504 = vld [vmem:[#allocation2 + $0x90] sm:$0xff]
    %v2505 = vld [vmem:[#allocation2 + $0x98] sm:$0xff]
    %v2506 = vld [vmem:[#allocation2 + $0xa0] sm:$0xff]
    %v2507 = vld [vmem:[#allocation2 + $0xa8] sm:$0xff]
    %v2508 = vld [vmem:[#allocation2 + $0xb0] sm:$0xff]
    %v2509 = vld [vmem:[#allocation2 + $0xb8] sm:$0xff]
    %v2510 = vld [vmem:[#allocation2 + $0xc0] sm:$0xff]
    %v2511 = vld [vmem:[#allocation2 + $0xc8] sm:$0xff]
    %v2512 = vld [vmem:[#allocation2 + $0xd0] sm:$0xff]
    %v2513 = vld [vmem:[#allocation2 + $0xd8] sm:$0x33]
    %v2540 = vrot.slane %v2488, 6
    %v2541 = vrot.slane %v2540, 4
    %v2542 = vrot.slane %v2489, 6
    %v2543 = vsel %vm2361, %v2541, %v2542
    %v2544 = vrot.slane %v2542, 4
    %v2545 = vrot.slane %v2490, 6
    %v2546 = vsel %vm2361, %v2544, %v2545
    %v2547 = vrot.slane %v2545, 4
    %v2548 = vrot.slane %v2491, 6
    %v2549 = vsel %vm2361, %v2547, %v2548
    %v2550 = vrot.slane %v2548, 4
    %v2551 = vrot.slane %v2492, 6
    %v2552 = vsel %vm2361, %v2550, %v2551
    %v2553 = vrot.slane %v2551, 4
    %v2554 = vrot.slane %v2493, 6
    %v2555 = vsel %vm2361, %v2553, %v2554
    %v2556 = vrot.slane %v2554, 4
    %v2557 = vrot.slane %v2494, 6
    %v2558 = vsel %vm2361, %v2556, %v2557
    %v2559 = vrot.slane %v2557, 4
    %v2560 = vrot.slane %v2495, 6
    %v2561 = vsel %vm2361, %v2559, %v2560
    %v2562 = vrot.slane %v2560, 4
    %v2563 = vrot.slane %v2496, 6
    %v2564 = vsel %vm2361, %v2562, %v2563
    %v2565 = vrot.slane %v2563, 4
    %v2566 = vrot.slane %v2497, 6
    %v2567 = vsel %vm2361, %v2565, %v2566
    %v2568 = vrot.slane %v2566, 4
    %v2569 = vrot.slane %v2498, 6
    %v2570 = vsel %vm2361, %v2568, %v2569
    %v2571 = vrot.slane %v2569, 4
    %v2572 = vrot.slane %v2499, 6
    %v2573 = vsel %vm2361, %v2571, %v2572
    %v2574 = vrot.slane %v2572, 4
    %v2575 = vrot.slane %v2500, 6
    %v2576 = vsel %vm2361, %v2574, %v2575
    %v2577 = vrot.slane %v2575, 4
    %v2578 = vrot.slane %v2501, 6
    %v2579 = vsel %vm2361, %v2577, %v2578
    %v2580 = vrot.slane %v2578, 4
    %v2581 = vrot.slane %v2502, 6
    %v2582 = vsel %vm2361, %v2580, %v2581
    %v2583 = vrot.slane %v2581, 4
    %v2584 = vrot.slane %v2503, 6
    %v2585 = vsel %vm2361, %v2583, %v2584
    %v2586 = vrot.slane %v2584, 4
    %v2587 = vrot.slane %v2504, 6
    %v2588 = vsel %vm2361, %v2586, %v2587
    %v2589 = vrot.slane %v2587, 4
    %v2590 = vrot.slane %v2505, 6
    %v2591 = vsel %vm2361, %v2589, %v2590
    %v2592 = vrot.slane %v2590, 4
    %v2593 = vrot.slane %v2506, 6
    %v2594 = vsel %vm2361, %v2592, %v2593
    %v2595 = vrot.slane %v2593, 4
    %v2596 = vrot.slane %v2507, 6
    %v2597 = vsel %vm2361, %v2595, %v2596
    %v2598 = vrot.slane %v2596, 4
    %v2599 = vrot.slane %v2508, 6
    %v2600 = vsel %vm2361, %v2598, %v2599
    %v2601 = vrot.slane %v2599, 4
    %v2602 = vrot.slane %v2509, 6
    %v2603 = vsel %vm2361, %v2601, %v2602
    %v2604 = vrot.slane %v2602, 4
    %v2605 = vrot.slane %v2510, 6
    %v2606 = vsel %vm2361, %v2604, %v2605
    %v2607 = vrot.slane %v2605, 4
    %v2608 = vrot.slane %v2511, 6
    %v2609 = vsel %vm2361, %v2607, %v2608
    %v2610 = vrot.slane %v2608, 4
    %v2611 = vrot.slane %v2512, 6
    %v2612 = vsel %vm2361, %v2610, %v2611
    %v2613 = vrot.slane %v2611, 4
    %v2614 = vrot.slane %v2513, 6
    %v2615 = vsel %vm2361, %v2613, %v2614
    %2641 = vst [vmem:[#allocation3 + $0x30] sm:$0xff] %v2543
    %2642 = vst [vmem:[#allocation3 + $0x78] sm:$0xff] %v2546
    %2643 = vst [vmem:[#allocation3 + $0xc0] sm:$0xff] %v2549
    %2644 = vst [vmem:[#allocation3 + $0x108] sm:$0xff] %v2552
    %2645 = vst [vmem:[#allocation3 + $0x150] sm:$0xff] %v2555
    %2646 = vst [vmem:[#allocation3 + $0x198] sm:$0xff] %v2558
    %2647 = vst [vmem:[#allocation3 + $0x1e0] sm:$0xff] %v2561
    %2648 = vst [vmem:[#allocation3 + $0x228] sm:$0xff] %v2564
    %2649 = vst [vmem:[#allocation3 + $0x270] sm:$0xff] %v2567
    %2650 = vst [vmem:[#allocation3 + $0x2b8] sm:$0xff] %v2570
    %2651 = vst [vmem:[#allocation3 + $0x300] sm:$0xff] %v2573
    %2652 = vst [vmem:[#allocation3 + $0x348] sm:$0xff] %v2576
    %2653 = vst [vmem:[#allocation3 + $0x390] sm:$0xff] %v2579
    %2654 = vst [vmem:[#allocation3 + $0x3d8] sm:$0xff] %v2582
    %2655 = vst [vmem:[#allocation3 + $0x420] sm:$0xff] %v2585
    %2656 = vst [vmem:[#allocation3 + $0x468] sm:$0xff] %v2588
    %2657 = vst [vmem:[#allocation3 + $0x4b0] sm:$0xff] %v2591
    %2658 = vst [vmem:[#allocation3 + $0x4f8] sm:$0xff] %v2594
    %2659 = vst [vmem:[#allocation3 + $0x540] sm:$0xff] %v2597
    %2660 = vst [vmem:[#allocation3 + $0x588] sm:$0xff] %v2600
    %2661 = vst [vmem:[#allocation3 + $0x5d0] sm:$0xff] %v2603
    %2662 = vst [vmem:[#allocation3 + $0x618] sm:$0xff] %v2606
    %2663 = vst [vmem:[#allocation3 + $0x660] sm:$0xff] %v2609
    %2664 = vst [vmem:[#allocation3 + $0x6a8] sm:$0xff] %v2612
    %2665 = vst [vmem:[#allocation3 + $0x6f0] sm:$0xff] %v2615
    %v2666 = vld [vmem:[#allocation2 + $0x10] sm:$0xcc]
    %v2667 = vld [vmem:[#allocation2 + $0x18] sm:$0xff]
    %v2668 = vld [vmem:[#allocation2 + $0x20] sm:$0xff]
    %v2669 = vld [vmem:[#allocation2 + $0x28] sm:$0xff]
    %v2670 = vld [vmem:[#allocation2 + $0x30] sm:$0xff]
    %v2671 = vld [vmem:[#allocation2 + $0x38] sm:$0xff]
    %v2672 = vld [vmem:[#allocation2 + $0x40] sm:$0xff]
    %v2673 = vld [vmem:[#allocation2 + $0x48] sm:$0xff]
    %v2674 = vld [vmem:[#allocation2 + $0x50] sm:$0xff]
    %v2675 = vld [vmem:[#allocation2 + $0x58] sm:$0xff]
    %v2676 = vld [vmem:[#allocation2 + $0x60] sm:$0xff]
    %v2677 = vld [vmem:[#allocation2 + $0x68] sm:$0xff]
    %v2678 = vld [vmem:[#allocation2 + $0x70] sm:$0xff]
    %v2679 = vld [vmem:[#allocation2 + $0x78] sm:$0xff]
    %v2680 = vld [vmem:[#allocation2 + $0x80] sm:$0xff]
    %v2681 = vld [vmem:[#allocation2 + $0x88] sm:$0xff]
    %v2682 = vld [vmem:[#allocation2 + $0x90] sm:$0xff]
    %v2683 = vld [vmem:[#allocation2 + $0x98] sm:$0xff]
    %v2684 = vld [vmem:[#allocation2 + $0xa0] sm:$0xff]
    %v2685 = vld [vmem:[#allocation2 + $0xa8] sm:$0xff]
    %v2686 = vld [vmem:[#allocation2 + $0xb0] sm:$0xff]
    %v2687 = vld [vmem:[#allocation2 + $0xb8] sm:$0xff]
    %v2688 = vld [vmem:[#allocation2 + $0xc0] sm:$0xff]
    %v2689 = vld [vmem:[#allocation2 + $0xc8] sm:$0xff]
    %v2690 = vld [vmem:[#allocation2 + $0xd0] sm:$0xff]
    %v2691 = vld [vmem:[#allocation2 + $0xd8] sm:$0x77]
    %vm2692 = vsmask.f32 5392
    %vm2693 = vmor %vm875, %vm2692
    %v2695 = vshrl.u32 %v2666, 16
    %v2697 = vrot.slane %v2695, 6
    %v2698 = vshll.u32 %v2666, 16
    %v2700 = vrot.slane %v2698, 7
    %v2701 = vor.u32 %v2697, %v2700
    %v2702 = vrot.slane %v2701, 4
    %v2704 = vshrl.u32 %v2667, 16
    %v2706 = vrot.slane %v2704, 6
    %v2707 = vshll.u32 %v2667, 16
    %v2709 = vrot.slane %v2707, 7
    %v2710 = vor.u32 %v2706, %v2709
    %v2711 = vsel %vm2693, %v2702, %v2710
    %v2712 = vrot.slane %v2710, 4
    %v2714 = vshrl.u32 %v2668, 16
    %v2716 = vrot.slane %v2714, 6
    %v2717 = vshll.u32 %v2668, 16
    %v2719 = vrot.slane %v2717, 7
    %v2720 = vor.u32 %v2716, %v2719
    %v2721 = vsel %vm2693, %v2712, %v2720
    %v2722 = vrot.slane %v2720, 4
    %v2724 = vshrl.u32 %v2669, 16
    %v2726 = vrot.slane %v2724, 6
    %v2727 = vshll.u32 %v2669, 16
    %v2729 = vrot.slane %v2727, 7
    %v2730 = vor.u32 %v2726, %v2729
    %v2731 = vsel %vm2693, %v2722, %v2730
    %v2732 = vrot.slane %v2730, 4
    %v2734 = vshrl.u32 %v2670, 16
    %v2736 = vrot.slane %v2734, 6
    %v2737 = vshll.u32 %v2670, 16
    %v2739 = vrot.slane %v2737, 7
    %v2740 = vor.u32 %v2736, %v2739
    %v2741 = vsel %vm2693, %v2732, %v2740
    %v2742 = vrot.slane %v2740, 4
    %v2744 = vshrl.u32 %v2671, 16
    %v2746 = vrot.slane %v2744, 6
    %v2747 = vshll.u32 %v2671, 16
    %v2749 = vrot.slane %v2747, 7
    %v2750 = vor.u32 %v2746, %v2749
    %v2751 = vsel %vm2693, %v2742, %v2750
    %v2752 = vrot.slane %v2750, 4
    %v2754 = vshrl.u32 %v2672, 16
    %v2756 = vrot.slane %v2754, 6
    %v2757 = vshll.u32 %v2672, 16
    %v2759 = vrot.slane %v2757, 7
    %v2760 = vor.u32 %v2756, %v2759
    %v2761 = vsel %vm2693, %v2752, %v2760
    %v2762 = vrot.slane %v2760, 4
    %v2764 = vshrl.u32 %v2673, 16
    %v2766 = vrot.slane %v2764, 6
    %v2767 = vshll.u32 %v2673, 16
    %v2769 = vrot.slane %v2767, 7
    %v2770 = vor.u32 %v2766, %v2769
    %v2771 = vsel %vm2693, %v2762, %v2770
    %v2772 = vrot.slane %v2770, 4
    %v2774 = vshrl.u32 %v2674, 16
    %v2776 = vrot.slane %v2774, 6
    %v2777 = vshll.u32 %v2674, 16
    %v2779 = vrot.slane %v2777, 7
    %v2780 = vor.u32 %v2776, %v2779
    %v2781 = vsel %vm2693, %v2772, %v2780
    %v2782 = vrot.slane %v2780, 4
    %v2784 = vshrl.u32 %v2675, 16
    %v2786 = vrot.slane %v2784, 6
    %v2787 = vshll.u32 %v2675, 16
    %v2789 = vrot.slane %v2787, 7
    %v2790 = vor.u32 %v2786, %v2789
    %v2791 = vsel %vm2693, %v2782, %v2790
    %v2792 = vrot.slane %v2790, 4
    %v2794 = vshrl.u32 %v2676, 16
    %v2796 = vrot.slane %v2794, 6
    %v2797 = vshll.u32 %v2676, 16
    %v2799 = vrot.slane %v2797, 7
    %v2800 = vor.u32 %v2796, %v2799
    %v2801 = vsel %vm2693, %v2792, %v2800
    %v2802 = vrot.slane %v2800, 4
    %v2804 = vshrl.u32 %v2677, 16
    %v2806 = vrot.slane %v2804, 6
    %v2807 = vshll.u32 %v2677, 16
    %v2809 = vrot.slane %v2807, 7
    %v2810 = vor.u32 %v2806, %v2809
    %v2811 = vsel %vm2693, %v2802, %v2810
    %v2812 = vrot.slane %v2810, 4
    %v2814 = vshrl.u32 %v2678, 16
    %v2816 = vrot.slane %v2814, 6
    %v2817 = vshll.u32 %v2678, 16
    %v2819 = vrot.slane %v2817, 7
    %v2820 = vor.u32 %v2816, %v2819
    %v2821 = vsel %vm2693, %v2812, %v2820
    %v2822 = vrot.slane %v2820, 4
    %v2824 = vshrl.u32 %v2679, 16
    %v2826 = vrot.slane %v2824, 6
    %v2827 = vshll.u32 %v2679, 16
    %v2829 = vrot.slane %v2827, 7
    %v2830 = vor.u32 %v2826, %v2829
    %v2831 = vsel %vm2693, %v2822, %v2830
    %v2832 = vrot.slane %v2830, 4
    %v2834 = vshrl.u32 %v2680, 16
    %v2836 = vrot.slane %v2834, 6
    %v2837 = vshll.u32 %v2680, 16
    %v2839 = vrot.slane %v2837, 7
    %v2840 = vor.u32 %v2836, %v2839
    %v2841 = vsel %vm2693, %v2832, %v2840
    %v2842 = vrot.slane %v2840, 4
    %v2844 = vshrl.u32 %v2681, 16
    %v2846 = vrot.slane %v2844, 6
    %v2847 = vshll.u32 %v2681, 16
    %v2849 = vrot.slane %v2847, 7
    %v2850 = vor.u32 %v2846, %v2849
    %v2851 = vsel %vm2693, %v2842, %v2850
    %v2852 = vrot.slane %v2850, 4
    %v2854 = vshrl.u32 %v2682, 16
    %v2856 = vrot.slane %v2854, 6
    %v2857 = vshll.u32 %v2682, 16
    %v2859 = vrot.slane %v2857, 7
    %v2860 = vor.u32 %v2856, %v2859
    %v2861 = vsel %vm2693, %v2852, %v2860
    %v2862 = vrot.slane %v2860, 4
    %v2864 = vshrl.u32 %v2683, 16
    %v2866 = vrot.slane %v2864, 6
    %v2867 = vshll.u32 %v2683, 16
    %v2869 = vrot.slane %v2867, 7
    %v2870 = vor.u32 %v2866, %v2869
    %v2871 = vsel %vm2693, %v2862, %v2870
    %v2872 = vrot.slane %v2870, 4
    %v2874 = vshrl.u32 %v2684, 16
    %v2876 = vrot.slane %v2874, 6
    %v2877 = vshll.u32 %v2684, 16
    %v2879 = vrot.slane %v2877, 7
    %v2880 = vor.u32 %v2876, %v2879
    %v2881 = vsel %vm2693, %v2872, %v2880
    %v2882 = vrot.slane %v2880, 4
    %v2884 = vshrl.u32 %v2685, 16
    %v2886 = vrot.slane %v2884, 6
    %v2887 = vshll.u32 %v2685, 16
    %v2889 = vrot.slane %v2887, 7
    %v2890 = vor.u32 %v2886, %v2889
    %v2891 = vsel %vm2693, %v2882, %v2890
    %v2892 = vrot.slane %v2890, 4
    %v2894 = vshrl.u32 %v2686, 16
    %v2896 = vrot.slane %v2894, 6
    %v2897 = vshll.u32 %v2686, 16
    %v2899 = vrot.slane %v2897, 7
    %v2900 = vor.u32 %v2896, %v2899
    %v2901 = vsel %vm2693, %v2892, %v2900
    %v2902 = vrot.slane %v2900, 4
    %v2904 = vshrl.u32 %v2687, 16
    %v2906 = vrot.slane %v2904, 6
    %v2907 = vshll.u32 %v2687, 16
    %v2909 = vrot.slane %v2907, 7
    %v2910 = vor.u32 %v2906, %v2909
    %v2911 = vsel %vm2693, %v2902, %v2910
    %v2912 = vrot.slane %v2910, 4
    %v2914 = vshrl.u32 %v2688, 16
    %v2916 = vrot.slane %v2914, 6
    %v2917 = vshll.u32 %v2688, 16
    %v2919 = vrot.slane %v2917, 7
    %v2920 = vor.u32 %v2916, %v2919
    %v2921 = vsel %vm2693, %v2912, %v2920
    %v2922 = vrot.slane %v2920, 4
    %v2924 = vshrl.u32 %v2689, 16
    %v2926 = vrot.slane %v2924, 6
    %v2927 = vshll.u32 %v2689, 16
    %v2929 = vrot.slane %v2927, 7
    %v2930 = vor.u32 %v2926, %v2929
    %v2931 = vsel %vm2693, %v2922, %v2930
    %v2932 = vrot.slane %v2930, 4
    %v2934 = vshrl.u32 %v2690, 16
    %v2936 = vrot.slane %v2934, 6
    %v2937 = vshll.u32 %v2690, 16
    %v2939 = vrot.slane %v2937, 7
    %v2940 = vor.u32 %v2936, %v2939
    %v2941 = vsel %vm2693, %v2932, %v2940
    %v2942 = vrot.slane %v2940, 4
    %v2944 = vshrl.u32 %v2691, 16
    %v2946 = vrot.slane %v2944, 6
    %v2947 = vshll.u32 %v2691, 16
    %v2949 = vrot.slane %v2947, 7
    %v2950 = vor.u32 %v2946, %v2949
    %v2951 = vsel %vm2693, %v2942, %v2950
    %2977 = vst [vmem:[#allocation3 + $0x38] sm:$0xff] %v2711
    %2978 = vst [vmem:[#allocation3 + $0x80] sm:$0xff] %v2721
    %2979 = vst [vmem:[#allocation3 + $0xc8] sm:$0xff] %v2731
    %2980 = vst [vmem:[#allocation3 + $0x110] sm:$0xff] %v2741
    %2981 = vst [vmem:[#allocation3 + $0x158] sm:$0xff] %v2751
    %2982 = vst [vmem:[#allocation3 + $0x1a0] sm:$0xff] %v2761
    %2983 = vst [vmem:[#allocation3 + $0x1e8] sm:$0xff] %v2771
    %2984 = vst [vmem:[#allocation3 + $0x230] sm:$0xff] %v2781
    %2985 = vst [vmem:[#allocation3 + $0x278] sm:$0xff] %v2791
    %2986 = vst [vmem:[#allocation3 + $0x2c0] sm:$0xff] %v2801
    %2987 = vst [vmem:[#allocation3 + $0x308] sm:$0xff] %v2811
    %2988 = vst [vmem:[#allocation3 + $0x350] sm:$0xff] %v2821
    %2989 = vst [vmem:[#allocation3 + $0x398] sm:$0xff] %v2831
    %2990 = vst [vmem:[#allocation3 + $0x3e0] sm:$0xff] %v2841
    %2991 = vst [vmem:[#allocation3 + $0x428] sm:$0xff] %v2851
    %2992 = vst [vmem:[#allocation3 + $0x470] sm:$0xff] %v2861
    %2993 = vst [vmem:[#allocation3 + $0x4b8] sm:$0xff] %v2871
    %2994 = vst [vmem:[#allocation3 + $0x500] sm:$0xff] %v2881
    %2995 = vst [vmem:[#allocation3 + $0x548] sm:$0xff] %v2891
    %2996 = vst [vmem:[#allocation3 + $0x590] sm:$0xff] %v2901
    %2997 = vst [vmem:[#allocation3 + $0x5d8] sm:$0xff] %v2911
    %2998 = vst [vmem:[#allocation3 + $0x620] sm:$0xff] %v2921
    %2999 = vst [vmem:[#allocation3 + $0x668] sm:$0xff] %v2931
    %3000 = vst [vmem:[#allocation3 + $0x6b0] sm:$0xff] %v2941
    %3001 = vst [vmem:[#allocation3 + $0x6f8] sm:$0xff] %v2951
    %v3002 = vld [vmem:[#allocation2 + $0x10] sm:$0x88]
    %v3003 = vld [vmem:[#allocation2 + $0x18] sm:$0xff]
    %v3004 = vld [vmem:[#allocation2 + $0x20] sm:$0xff]
    %v3005 = vld [vmem:[#allocation2 + $0x28] sm:$0xff]
    %v3006 = vld [vmem:[#allocation2 + $0x30] sm:$0xff]
    %v3007 = vld [vmem:[#allocation2 + $0x38] sm:$0xff]
    %v3008 = vld [vmem:[#allocation2 + $0x40] sm:$0xff]
    %v3009 = vld [vmem:[#allocation2 + $0x48] sm:$0xff]
    %v3010 = vld [vmem:[#allocation2 + $0x50] sm:$0xff]
    %v3011 = vld [vmem:[#allocation2 + $0x58] sm:$0xff]
    %v3012 = vld [vmem:[#allocation2 + $0x60] sm:$0xff]
    %v3013 = vld [vmem:[#allocation2 + $0x68] sm:$0xff]
    %v3014 = vld [vmem:[#allocation2 + $0x70] sm:$0xff]
    %v3015 = vld [vmem:[#allocation2 + $0x78] sm:$0xff]
    %v3016 = vld [vmem:[#allocation2 + $0x80] sm:$0xff]
    %v3017 = vld [vmem:[#allocation2 + $0x88] sm:$0xff]
    %v3018 = vld [vmem:[#allocation2 + $0x90] sm:$0xff]
    %v3019 = vld [vmem:[#allocation2 + $0x98] sm:$0xff]
    %v3020 = vld [vmem:[#allocation2 + $0xa0] sm:$0xff]
    %v3021 = vld [vmem:[#allocation2 + $0xa8] sm:$0xff]
    %v3022 = vld [vmem:[#allocation2 + $0xb0] sm:$0xff]
    %v3023 = vld [vmem:[#allocation2 + $0xb8] sm:$0xff]
    %v3024 = vld [vmem:[#allocation2 + $0xc0] sm:$0xff]
    %v3025 = vld [vmem:[#allocation2 + $0xc8] sm:$0xff]
    %v3026 = vld [vmem:[#allocation2 + $0xd0] sm:$0xff]
    %v3027 = vld [vmem:[#allocation2 + $0xd8] sm:$0x77]
    %vm3054 = vmor %vm975, %vm978
    %v3055 = vrot.slane %v3002, 7
    %v3056 = vrot.slane %v3055, 4
    %v3057 = vrot.slane %v3003, 7
    %v3058 = vsel %vm3054, %v3056, %v3057
    %v3059 = vrot.slane %v3057, 4
    %v3060 = vrot.slane %v3004, 7
    %v3061 = vsel %vm3054, %v3059, %v3060
    %v3062 = vrot.slane %v3060, 4
    %v3063 = vrot.slane %v3005, 7
    %v3064 = vsel %vm3054, %v3062, %v3063
    %v3065 = vrot.slane %v3063, 4
    %v3066 = vrot.slane %v3006, 7
    %v3067 = vsel %vm3054, %v3065, %v3066
    %v3068 = vrot.slane %v3066, 4
    %v3069 = vrot.slane %v3007, 7
    %v3070 = vsel %vm3054, %v3068, %v3069
    %v3071 = vrot.slane %v3069, 4
    %v3072 = vrot.slane %v3008, 7
    %v3073 = vsel %vm3054, %v3071, %v3072
    %v3074 = vrot.slane %v3072, 4
    %v3075 = vrot.slane %v3009, 7
    %v3076 = vsel %vm3054, %v3074, %v3075
    %v3077 = vrot.slane %v3075, 4
    %v3078 = vrot.slane %v3010, 7
    %v3079 = vsel %vm3054, %v3077, %v3078
    %v3080 = vrot.slane %v3078, 4
    %v3081 = vrot.slane %v3011, 7
    %v3082 = vsel %vm3054, %v3080, %v3081
    %v3083 = vrot.slane %v3081, 4
    %v3084 = vrot.slane %v3012, 7
    %v3085 = vsel %vm3054, %v3083, %v3084
    %v3086 = vrot.slane %v3084, 4
    %v3087 = vrot.slane %v3013, 7
    %v3088 = vsel %vm3054, %v3086, %v3087
    %v3089 = vrot.slane %v3087, 4
    %v3090 = vrot.slane %v3014, 7
    %v3091 = vsel %vm3054, %v3089, %v3090
    %v3092 = vrot.slane %v3090, 4
    %v3093 = vrot.slane %v3015, 7
    %v3094 = vsel %vm3054, %v3092, %v3093
    %v3095 = vrot.slane %v3093, 4
    %v3096 = vrot.slane %v3016, 7
    %v3097 = vsel %vm3054, %v3095, %v3096
    %v3098 = vrot.slane %v3096, 4
    %v3099 = vrot.slane %v3017, 7
    %v3100 = vsel %vm3054, %v3098, %v3099
    %v3101 = vrot.slane %v3099, 4
    %v3102 = vrot.slane %v3018, 7
    %v3103 = vsel %vm3054, %v3101, %v3102
    %v3104 = vrot.slane %v3102, 4
    %v3105 = vrot.slane %v3019, 7
    %v3106 = vsel %vm3054, %v3104, %v3105
    %v3107 = vrot.slane %v3105, 4
    %v3108 = vrot.slane %v3020, 7
    %v3109 = vsel %vm3054, %v3107, %v3108
    %v3110 = vrot.slane %v3108, 4
    %v3111 = vrot.slane %v3021, 7
    %v3112 = vsel %vm3054, %v3110, %v3111
    %v3113 = vrot.slane %v3111, 4
    %v3114 = vrot.slane %v3022, 7
    %v3115 = vsel %vm3054, %v3113, %v3114
    %v3116 = vrot.slane %v3114, 4
    %v3117 = vrot.slane %v3023, 7
    %v3118 = vsel %vm3054, %v3116, %v3117
    %v3119 = vrot.slane %v3117, 4
    %v3120 = vrot.slane %v3024, 7
    %v3121 = vsel %vm3054, %v3119, %v3120
    %v3122 = vrot.slane %v3120, 4
    %v3123 = vrot.slane %v3025, 7
    %v3124 = vsel %vm3054, %v3122, %v3123
    %v3125 = vrot.slane %v3123, 4
    %v3126 = vrot.slane %v3026, 7
    %v3127 = vsel %vm3054, %v3125, %v3126
    %v3128 = vrot.slane %v3126, 4
    %v3129 = vrot.slane %v3027, 7
    %v3130 = vsel %vm3054, %v3128, %v3129
    %3156 = vst [vmem:[#allocation3 + $0x40] sm:$0xff] %v3058
    %3157 = vst [vmem:[#allocation3 + $0x88] sm:$0xff] %v3061
    %3158 = vst [vmem:[#allocation3 + $0xd0] sm:$0xff] %v3064
    %3159 = vst [vmem:[#allocation3 + $0x118] sm:$0xff] %v3067
    %3160 = vst [vmem:[#allocation3 + $0x160] sm:$0xff] %v3070
    %3161 = vst [vmem:[#allocation3 + $0x1a8] sm:$0xff] %v3073
    %3162 = vst [vmem:[#allocation3 + $0x1f0] sm:$0xff] %v3076
    %3163 = vst [vmem:[#allocation3 + $0x238] sm:$0xff] %v3079
    %3164 = vst [vmem:[#allocation3 + $0x280] sm:$0xff] %v3082
    %3165 = vst [vmem:[#allocation3 + $0x2c8] sm:$0xff] %v3085
    %3166 = vst [vmem:[#allocation3 + $0x310] sm:$0xff] %v3088
    %3167 = vst [vmem:[#allocation3 + $0x358] sm:$0xff] %v3091
    %3168 = vst [vmem:[#allocation3 + $0x3a0] sm:$0xff] %v3094
    %3169 = vst [vmem:[#allocation3 + $0x3e8] sm:$0xff] %v3097
    %3170 = vst [vmem:[#allocation3 + $0x430] sm:$0xff] %v3100
    %3171 = vst [vmem:[#allocation3 + $0x478] sm:$0xff] %v3103
    %3172 = vst [vmem:[#allocation3 + $0x4c0] sm:$0xff] %v3106
    %3173 = vst [vmem:[#allocation3 + $0x508] sm:$0xff] %v3109
    %3174 = vst [vmem:[#allocation3 + $0x550] sm:$0xff] %v3112
    %3175 = vst [vmem:[#allocation3 + $0x598] sm:$0xff] %v3115
    %3176 = vst [vmem:[#allocation3 + $0x5e0] sm:$0xff] %v3118
    %3177 = vst [vmem:[#allocation3 + $0x628] sm:$0xff] %v3121
    %3178 = vst [vmem:[#allocation3 + $0x670] sm:$0xff] %v3124
    %3179 = vst [vmem:[#allocation3 + $0x6b8] sm:$0xff] %v3127
    %3180 = vst [vmem:[#allocation3 + $0x700] sm:$0xff] %v3130
    %v3181 = vld [vmem:[#allocation3] sm:$0xff]
    %v3182 = vld [vmem:[#allocation3 + $0x8] sm:$0xff]
    %v3183 = vld [vmem:[#allocation3 + $0x10] sm:$0xff]
    %v3184 = vld [vmem:[#allocation3 + $0x18] sm:$0xff]
    %v3185 = vld [vmem:[#allocation3 + $0x20] sm:$0xff]
    %v3186 = vld [vmem:[#allocation3 + $0x28] sm:$0xff]
    %v3187 = vld [vmem:[#allocation3 + $0x30] sm:$0xff]
    %v3188 = vld [vmem:[#allocation3 + $0x38] sm:$0xff]
    %v3189 = vld [vmem:[#allocation3 + $0x40] sm:$0xff]
    %v3190 = vld [vmem:[#allocation3 + $0x48] sm:$0xff]
    %v3191 = vld [vmem:[#allocation3 + $0x50] sm:$0xff]
    %v3192 = vld [vmem:[#allocation3 + $0x58] sm:$0xff]
    %v3193 = vld [vmem:[#allocation3 + $0x60] sm:$0xff]
    %v3194 = vld [vmem:[#allocation3 + $0x68] sm:$0xff]
    %v3195 = vld [vmem:[#allocation3 + $0x70] sm:$0xff]
    %v3196 = vld [vmem:[#allocation3 + $0x78] sm:$0xff]
    %v3197 = vld [vmem:[#allocation3 + $0x80] sm:$0xff]
    %v3198 = vld [vmem:[#allocation3 + $0x88] sm:$0xff]
    %v3199 = vld [vmem:[#allocation3 + $0x90] sm:$0xff]
    %v3200 = vld [vmem:[#allocation3 + $0x98] sm:$0xff]
    %v3201 = vld [vmem:[#allocation3 + $0xa0] sm:$0xff]
    %v3202 = vld [vmem:[#allocation3 + $0xa8] sm:$0xff]
    %v3203 = vld [vmem:[#allocation3 + $0xb0] sm:$0xff]
    %v3204 = vld [vmem:[#allocation3 + $0xb8] sm:$0xff]
    %v3205 = vld [vmem:[#allocation3 + $0xc0] sm:$0xff]
    %v3206 = vld [vmem:[#allocation3 + $0xc8] sm:$0xff]
    %v3207 = vld [vmem:[#allocation3 + $0xd0] sm:$0xff]
    %v3208 = vld [vmem:[#allocation3 + $0xd8] sm:$0xff]
    %v3209 = vld [vmem:[#allocation3 + $0xe0] sm:$0xff]
    %v3210 = vld [vmem:[#allocation3 + $0xe8] sm:$0xff]
    %v3211 = vld [vmem:[#allocation3 + $0xf0] sm:$0xff]
    %v3212 = vld [vmem:[#allocation3 + $0xf8] sm:$0xff]
    %v3213 = vld [vmem:[#allocation3 + $0x100] sm:$0xff]
    %v3214 = vld [vmem:[#allocation3 + $0x108] sm:$0xff]
    %v3215 = vld [vmem:[#allocation3 + $0x110] sm:$0xff]
    %v3216 = vld [vmem:[#allocation3 + $0x118] sm:$0xff]
    %v3217 = vld [vmem:[#allocation3 + $0x120] sm:$0xff]
    %v3218 = vld [vmem:[#allocation3 + $0x128] sm:$0xff]
    %v3219 = vld [vmem:[#allocation3 + $0x130] sm:$0xff]
    %v3220 = vld [vmem:[#allocation3 + $0x138] sm:$0xff]
    %v3221 = vld [vmem:[#allocation3 + $0x140] sm:$0xff]
    %v3222 = vld [vmem:[#allocation3 + $0x148] sm:$0xff]
    %v3223 = vld [vmem:[#allocation3 + $0x150] sm:$0xff]
    %v3224 = vld [vmem:[#allocation3 + $0x158] sm:$0xff]
    %v3225 = vld [vmem:[#allocation3 + $0x160] sm:$0xff]
    %v3226 = vld [vmem:[#allocation3 + $0x168] sm:$0xff]
    %v3227 = vld [vmem:[#allocation3 + $0x170] sm:$0xff]
    %v3228 = vld [vmem:[#allocation3 + $0x178] sm:$0xff]
    %v3229 = vld [vmem:[#allocation3 + $0x180] sm:$0xff]
    %v3230 = vld [vmem:[#allocation3 + $0x188] sm:$0xff]
    %v3231 = vld [vmem:[#allocation3 + $0x190] sm:$0xff]
    %v3232 = vld [vmem:[#allocation3 + $0x198] sm:$0xff]
    %v3233 = vld [vmem:[#allocation3 + $0x1a0] sm:$0xff]
    %v3234 = vld [vmem:[#allocation3 + $0x1a8] sm:$0xff]
    %v3235 = vld [vmem:[#allocation3 + $0x1b0] sm:$0xff]
    %v3236 = vld [vmem:[#allocation3 + $0x1b8] sm:$0xff]
    %v3237 = vld [vmem:[#allocation3 + $0x1c0] sm:$0xff]
    %v3238 = vld [vmem:[#allocation3 + $0x1c8] sm:$0xff]
    %v3239 = vld [vmem:[#allocation3 + $0x1d0] sm:$0xff]
    %v3240 = vld [vmem:[#allocation3 + $0x1d8] sm:$0xff]
    %v3241 = vld [vmem:[#allocation3 + $0x1e0] sm:$0xff]
    %v3242 = vld [vmem:[#allocation3 + $0x1e8] sm:$0xff]
    %v3243 = vld [vmem:[#allocation3 + $0x1f0] sm:$0xff]
    %v3244 = vld [vmem:[#allocation3 + $0x1f8] sm:$0xff]
    %v3245 = vld [vmem:[#allocation3 + $0x200] sm:$0xff]
    %v3246 = vld [vmem:[#allocation3 + $0x208] sm:$0xff]
    %v3247 = vld [vmem:[#allocation3 + $0x210] sm:$0xff]
    %v3248 = vld [vmem:[#allocation3 + $0x218] sm:$0xff]
    %v3249 = vld [vmem:[#allocation3 + $0x220] sm:$0xff]
    %v3250 = vld [vmem:[#allocation3 + $0x228] sm:$0xff]
    %v3251 = vld [vmem:[#allocation3 + $0x230] sm:$0xff]
    %v3252 = vld [vmem:[#allocation3 + $0x238] sm:$0xff]
    %v3253 = vld [vmem:[#allocation3 + $0x240] sm:$0xff]
    %v3254 = vld [vmem:[#allocation3 + $0x248] sm:$0xff]
    %v3255 = vld [vmem:[#allocation3 + $0x250] sm:$0xff]
    %v3256 = vld [vmem:[#allocation3 + $0x258] sm:$0xff]
    %v3257 = vld [vmem:[#allocation3 + $0x260] sm:$0xff]
    %v3258 = vld [vmem:[#allocation3 + $0x268] sm:$0xff]
    %v3259 = vld [vmem:[#allocation3 + $0x270] sm:$0xff]
    %v3260 = vld [vmem:[#allocation3 + $0x278] sm:$0xff]
    %v3261 = vld [vmem:[#allocation3 + $0x280] sm:$0xff]
    %v3262 = vld [vmem:[#allocation3 + $0x288] sm:$0xff]
    %v3263 = vld [vmem:[#allocation3 + $0x290] sm:$0xff]
    %v3264 = vld [vmem:[#allocation3 + $0x298] sm:$0xff]
    %v3265 = vld [vmem:[#allocation3 + $0x2a0] sm:$0xff]
    %v3266 = vld [vmem:[#allocation3 + $0x2a8] sm:$0xff]
    %v3267 = vld [vmem:[#allocation3 + $0x2b0] sm:$0xff]
    %v3268 = vld [vmem:[#allocation3 + $0x2b8] sm:$0xff]
    %v3269 = vld [vmem:[#allocation3 + $0x2c0] sm:$0xff]
    %v3270 = vld [vmem:[#allocation3 + $0x2c8] sm:$0xff]
    %v3271 = vld [vmem:[#allocation3 + $0x2d0] sm:$0xff]
    %v3272 = vld [vmem:[#allocation3 + $0x2d8] sm:$0xff]
    %v3273 = vld [vmem:[#allocation3 + $0x2e0] sm:$0xff]
    %v3274 = vld [vmem:[#allocation3 + $0x2e8] sm:$0xff]
    %v3275 = vld [vmem:[#allocation3 + $0x2f0] sm:$0xff]
    %v3276 = vld [vmem:[#allocation3 + $0x2f8] sm:$0xff]
    %v3277 = vld [vmem:[#allocation3 + $0x300] sm:$0xff]
    %v3278 = vld [vmem:[#allocation3 + $0x308] sm:$0xff]
    %v3279 = vld [vmem:[#allocation3 + $0x310] sm:$0xff]
    %v3280 = vld [vmem:[#allocation3 + $0x318] sm:$0xff]
    %v3281 = vld [vmem:[#allocation3 + $0x320] sm:$0xff]
    %v3282 = vld [vmem:[#allocation3 + $0x328] sm:$0xff]
    %v3283 = vld [vmem:[#allocation3 + $0x330] sm:$0xff]
    %v3284 = vld [vmem:[#allocation3 + $0x338] sm:$0xff]
    %v3285 = vld [vmem:[#allocation3 + $0x340] sm:$0xff]
    %v3286 = vld [vmem:[#allocation3 + $0x348] sm:$0xff]
    %v3287 = vld [vmem:[#allocation3 + $0x350] sm:$0xff]
    %v3288 = vld [vmem:[#allocation3 + $0x358] sm:$0xff]
    %v3289 = vld [vmem:[#allocation3 + $0x360] sm:$0xff]
    %v3290 = vld [vmem:[#allocation3 + $0x368] sm:$0xff]
    %v3291 = vld [vmem:[#allocation3 + $0x370] sm:$0xff]
    %v3292 = vld [vmem:[#allocation3 + $0x378] sm:$0xff]
    %v3293 = vld [vmem:[#allocation3 + $0x380] sm:$0xff]
    %v3294 = vld [vmem:[#allocation3 + $0x388] sm:$0xff]
    %v3295 = vld [vmem:[#allocation3 + $0x390] sm:$0xff]
    %v3296 = vld [vmem:[#allocation3 + $0x398] sm:$0xff]
    %v3297 = vld [vmem:[#allocation3 + $0x3a0] sm:$0xff]
    %v3298 = vld [vmem:[#allocation3 + $0x3a8] sm:$0xff]
    %v3299 = vld [vmem:[#allocation3 + $0x3b0] sm:$0xff]
    %v3300 = vld [vmem:[#allocation3 + $0x3b8] sm:$0xff]
    %v3301 = vld [vmem:[#allocation3 + $0x3c0] sm:$0xff]
    %v3302 = vld [vmem:[#allocation3 + $0x3c8] sm:$0xff]
    %v3303 = vld [vmem:[#allocation3 + $0x3d0] sm:$0xff]
    %v3304 = vld [vmem:[#allocation3 + $0x3d8] sm:$0xff]
    %v3305 = vld [vmem:[#allocation3 + $0x3e0] sm:$0xff]
    %v3306 = vld [vmem:[#allocation3 + $0x3e8] sm:$0xff]
    %v3307 = vld [vmem:[#allocation3 + $0x3f0] sm:$0xff]
    %v3308 = vld [vmem:[#allocation3 + $0x3f8] sm:$0xff]
    %v3309 = vld [vmem:[#allocation3 + $0x400] sm:$0xff]
    %v3310 = vld [vmem:[#allocation3 + $0x408] sm:$0xff]
    %v3311 = vld [vmem:[#allocation3 + $0x410] sm:$0xff]
    %v3312 = vld [vmem:[#allocation3 + $0x418] sm:$0xff]
    %v3313 = vld [vmem:[#allocation3 + $0x420] sm:$0xff]
    %v3314 = vld [vmem:[#allocation3 + $0x428] sm:$0xff]
    %v3315 = vld [vmem:[#allocation3 + $0x430] sm:$0xff]
    %v3316 = vld [vmem:[#allocation3 + $0x438] sm:$0xff]
    %v3317 = vld [vmem:[#allocation3 + $0x440] sm:$0xff]
    %v3318 = vld [vmem:[#allocation3 + $0x448] sm:$0xff]
    %v3319 = vld [vmem:[#allocation3 + $0x450] sm:$0xff]
    %v3320 = vld [vmem:[#allocation3 + $0x458] sm:$0xff]
    %v3321 = vld [vmem:[#allocation3 + $0x460] sm:$0xff]
    %v3322 = vld [vmem:[#allocation3 + $0x468] sm:$0xff]
    %v3323 = vld [vmem:[#allocation3 + $0x470] sm:$0xff]
    %v3324 = vld [vmem:[#allocation3 + $0x478] sm:$0xff]
    %v3325 = vld [vmem:[#allocation3 + $0x480] sm:$0xff]
    %v3326 = vld [vmem:[#allocation3 + $0x488] sm:$0xff]
    %v3327 = vld [vmem:[#allocation3 + $0x490] sm:$0xff]
    %v3328 = vld [vmem:[#allocation3 + $0x498] sm:$0xff]
    %v3329 = vld [vmem:[#allocation3 + $0x4a0] sm:$0xff]
    %v3330 = vld [vmem:[#allocation3 + $0x4a8] sm:$0xff]
    %v3331 = vld [vmem:[#allocation3 + $0x4b0] sm:$0xff]
    %v3332 = vld [vmem:[#allocation3 + $0x4b8] sm:$0xff]
    %v3333 = vld [vmem:[#allocation3 + $0x4c0] sm:$0xff]
    %v3334 = vld [vmem:[#allocation3 + $0x4c8] sm:$0xff]
    %v3335 = vld [vmem:[#allocation3 + $0x4d0] sm:$0xff]
    %v3336 = vld [vmem:[#allocation3 + $0x4d8] sm:$0xff]
    %v3337 = vld [vmem:[#allocation3 + $0x4e0] sm:$0xff]
    %v3338 = vld [vmem:[#allocation3 + $0x4e8] sm:$0xff]
    %v3339 = vld [vmem:[#allocation3 + $0x4f0] sm:$0xff]
    %v3340 = vld [vmem:[#allocation3 + $0x4f8] sm:$0xff]
    %v3341 = vld [vmem:[#allocation3 + $0x500] sm:$0xff]
    %v3342 = vld [vmem:[#allocation3 + $0x508] sm:$0xff]
    %v3343 = vld [vmem:[#allocation3 + $0x510] sm:$0xff]
    %v3344 = vld [vmem:[#allocation3 + $0x518] sm:$0xff]
    %v3345 = vld [vmem:[#allocation3 + $0x520] sm:$0xff]
    %v3346 = vld [vmem:[#allocation3 + $0x528] sm:$0xff]
    %v3347 = vld [vmem:[#allocation3 + $0x530] sm:$0xff]
    %v3348 = vld [vmem:[#allocation3 + $0x538] sm:$0xff]
    %v3349 = vld [vmem:[#allocation3 + $0x540] sm:$0xff]
    %v3350 = vld [vmem:[#allocation3 + $0x548] sm:$0xff]
    %v3351 = vld [vmem:[#allocation3 + $0x550] sm:$0xff]
    %v3352 = vld [vmem:[#allocation3 + $0x558] sm:$0xff]
    %v3353 = vld [vmem:[#allocation3 + $0x560] sm:$0xff]
    %v3354 = vld [vmem:[#allocation3 + $0x568] sm:$0xff]
    %v3355 = vld [vmem:[#allocation3 + $0x570] sm:$0xff]
    %v3356 = vld [vmem:[#allocation3 + $0x578] sm:$0xff]
    %v3357 = vld [vmem:[#allocation3 + $0x580] sm:$0xff]
    %v3358 = vld [vmem:[#allocation3 + $0x588] sm:$0xff]
    %v3359 = vld [vmem:[#allocation3 + $0x590] sm:$0xff]
    %v3360 = vld [vmem:[#allocation3 + $0x598] sm:$0xff]
    %v3361 = vld [vmem:[#allocation3 + $0x5a0] sm:$0xff]
    %v3362 = vld [vmem:[#allocation3 + $0x5a8] sm:$0xff]
    %v3363 = vld [vmem:[#allocation3 + $0x5b0] sm:$0xff]
    %v3364 = vld [vmem:[#allocation3 + $0x5b8] sm:$0xff]
    %v3365 = vld [vmem:[#allocation3 + $0x5c0] sm:$0xff]
    %v3366 = vld [vmem:[#allocation3 + $0x5c8] sm:$0xff]
    %v3367 = vld [vmem:[#allocation3 + $0x5d0] sm:$0xff]
    %v3368 = vld [vmem:[#allocation3 + $0x5d8] sm:$0xff]
    %v3369 = vld [vmem:[#allocation3 + $0x5e0] sm:$0xff]
    %v3370 = vld [vmem:[#allocation3 + $0x5e8] sm:$0xff]
    %v3371 = vld [vmem:[#allocation3 + $0x5f0] sm:$0xff]
    %v3372 = vld [vmem:[#allocation3 + $0x5f8] sm:$0xff]
    %v3373 = vld [vmem:[#allocation3 + $0x600] sm:$0xff]
    %v3374 = vld [vmem:[#allocation3 + $0x608] sm:$0xff]
    %v3375 = vld [vmem:[#allocation3 + $0x610] sm:$0xff]
    %v3376 = vld [vmem:[#allocation3 + $0x618] sm:$0xff]
    %v3377 = vld [vmem:[#allocation3 + $0x620] sm:$0xff]
    %v3378 = vld [vmem:[#allocation3 + $0x628] sm:$0xff]
    %v3379 = vld [vmem:[#allocation3 + $0x630] sm:$0xff]
    %v3380 = vld [vmem:[#allocation3 + $0x638] sm:$0xff]
    %v3381 = vld [vmem:[#allocation3 + $0x640] sm:$0xff]
    %v3382 = vld [vmem:[#allocation3 + $0x648] sm:$0xff]
    %v3383 = vld [vmem:[#allocation3 + $0x650] sm:$0xff]
    %v3384 = vld [vmem:[#allocation3 + $0x658] sm:$0xff]
    %v3385 = vld [vmem:[#allocation3 + $0x660] sm:$0xff]
    %v3386 = vld [vmem:[#allocation3 + $0x668] sm:$0xff]
    %v3387 = vld [vmem:[#allocation3 + $0x670] sm:$0xff]
    %v3388 = vld [vmem:[#allocation3 + $0x678] sm:$0xff]
    %v3389 = vld [vmem:[#allocation3 + $0x680] sm:$0xff]
    %v3390 = vld [vmem:[#allocation3 + $0x688] sm:$0xff]
    %v3391 = vld [vmem:[#allocation3 + $0x690] sm:$0xff]
    %v3392 = vld [vmem:[#allocation3 + $0x698] sm:$0xff]
    %v3393 = vld [vmem:[#allocation3 + $0x6a0] sm:$0xff]
    %v3394 = vld [vmem:[#allocation3 + $0x6a8] sm:$0xff]
    %v3395 = vld [vmem:[#allocation3 + $0x6b0] sm:$0xff]
    %v3396 = vld [vmem:[#allocation3 + $0x6b8] sm:$0xff]
    %v3397 = vld [vmem:[#allocation3 + $0x6c0] sm:$0xff]
    %v3398 = vld [vmem:[#allocation3 + $0x6c8] sm:$0xff]
    %v3399 = vld [vmem:[#allocation3 + $0x6d0] sm:$0xff]
    %v3400 = vld [vmem:[#allocation3 + $0x6d8] sm:$0xff]
    %v3401 = vld [vmem:[#allocation3 + $0x6e0] sm:$0xff]
    %v3402 = vld [vmem:[#allocation3 + $0x6e8] sm:$0xff]
    %v3403 = vld [vmem:[#allocation3 + $0x6f0] sm:$0xff]
    %v3404 = vld [vmem:[#allocation3 + $0x6f8] sm:$0xff]
    %v3405 = vld [vmem:[#allocation3 + $0x700] sm:$0xff]
    %v3406 = vld [vmem:[#allocation11] sm:$0xff]
    %v3407 = vld [vmem:[#allocation11 + $0x8] sm:$0xff]
    %v3408 = vld [vmem:[#allocation11 + $0x10] sm:$0xff]
    %v3409 = vld [vmem:[#allocation11 + $0x18] sm:$0xff]
    %v3410 = vld [vmem:[#allocation11 + $0x20] sm:$0xff]
    %v3411 = vld [vmem:[#allocation11 + $0x28] sm:$0xff]
    %v3412 = vld [vmem:[#allocation11 + $0x30] sm:$0xff]
    %v3413 = vld [vmem:[#allocation11 + $0x38] sm:$0xff]
    %v3414 = vld [vmem:[#allocation11 + $0x40] sm:$0xff]
    %v3415 = vld [vmem:[#allocation11 + $0x48] sm:$0xff]
    %v3416 = vld [vmem:[#allocation11 + $0x50] sm:$0xff]
    %v3417 = vld [vmem:[#allocation11 + $0x58] sm:$0xff]
    %v3418 = vld [vmem:[#allocation11 + $0x60] sm:$0xff]
    %v3419 = vld [vmem:[#allocation11 + $0x68] sm:$0xff]
    %v3420 = vld [vmem:[#allocation11 + $0x70] sm:$0xff]
    %v3421 = vld [vmem:[#allocation11 + $0x78] sm:$0xff]
    %v3422 = vld [vmem:[#allocation11 + $0x80] sm:$0xff]
    %v3423 = vld [vmem:[#allocation11 + $0x88] sm:$0xff]
    %v3424 = vld [vmem:[#allocation11 + $0x90] sm:$0xff]
    %v3425 = vld [vmem:[#allocation11 + $0x98] sm:$0xff]
    %v3426 = vld [vmem:[#allocation11 + $0xa0] sm:$0xff]
    %v3427 = vld [vmem:[#allocation11 + $0xa8] sm:$0xff]
    %v3428 = vld [vmem:[#allocation11 + $0xb0] sm:$0xff]
    %v3429 = vld [vmem:[#allocation11 + $0xb8] sm:$0xff]
    %v3430 = vld [vmem:[#allocation11 + $0xc0] sm:$0xff]
    %v3431 = vld [vmem:[#allocation11 + $0xc8] sm:$0xff]
    %v3432 = vld [vmem:[#allocation11 + $0xd0] sm:$0xff]
    %v3433 = vld [vmem:[#allocation11 + $0xd8] sm:$0xff]
    %v3434 = vld [vmem:[#allocation11 + $0xe0] sm:$0xff]
    %v3435 = vld [vmem:[#allocation11 + $0xe8] sm:$0xff]
    %v3436 = vld [vmem:[#allocation11 + $0xf0] sm:$0xff]
    %v3437 = vld [vmem:[#allocation11 + $0xf8] sm:$0xff]
    %v3438 = vld [vmem:[#allocation11 + $0x100] sm:$0xff]
    %v3439 = vld [vmem:[#allocation11 + $0x108] sm:$0xff]
    %v3440 = vld [vmem:[#allocation11 + $0x110] sm:$0xff]
    %v3441 = vld [vmem:[#allocation11 + $0x118] sm:$0xff]
    %v3442 = vld [vmem:[#allocation11 + $0x120] sm:$0xff]
    %v3443 = vld [vmem:[#allocation11 + $0x128] sm:$0xff]
    %v3444 = vld [vmem:[#allocation11 + $0x130] sm:$0xff]
    %v3445 = vld [vmem:[#allocation11 + $0x138] sm:$0xff]
    %v3446 = vld [vmem:[#allocation11 + $0x140] sm:$0xff]
    %v3447 = vld [vmem:[#allocation11 + $0x148] sm:$0xff]
    %v3448 = vld [vmem:[#allocation11 + $0x150] sm:$0xff]
    %v3449 = vld [vmem:[#allocation11 + $0x158] sm:$0xff]
    %v3450 = vld [vmem:[#allocation11 + $0x160] sm:$0xff]
    %v3451 = vld [vmem:[#allocation11 + $0x168] sm:$0xff]
    %v3452 = vld [vmem:[#allocation11 + $0x170] sm:$0xff]
    %v3453 = vld [vmem:[#allocation11 + $0x178] sm:$0xff]
    %v3454 = vld [vmem:[#allocation11 + $0x180] sm:$0xff]
    %v3455 = vld [vmem:[#allocation11 + $0x188] sm:$0xff]
    %v3456 = vld [vmem:[#allocation11 + $0x190] sm:$0xff]
    %v3457 = vld [vmem:[#allocation11 + $0x198] sm:$0xff]
    %v3458 = vld [vmem:[#allocation11 + $0x1a0] sm:$0xff]
    %v3459 = vld [vmem:[#allocation11 + $0x1a8] sm:$0xff]
    %v3460 = vld [vmem:[#allocation11 + $0x1b0] sm:$0xff]
    %v3461 = vld [vmem:[#allocation11 + $0x1b8] sm:$0xff]
    %v3462 = vld [vmem:[#allocation11 + $0x1c0] sm:$0xff]
    %v3463 = vld [vmem:[#allocation11 + $0x1c8] sm:$0xff]
    %v3464 = vld [vmem:[#allocation11 + $0x1d0] sm:$0xff]
    %v3465 = vld [vmem:[#allocation11 + $0x1d8] sm:$0xff]
    %v3466 = vld [vmem:[#allocation11 + $0x1e0] sm:$0xff]
    %v3467 = vld [vmem:[#allocation11 + $0x1e8] sm:$0xff]
    %v3468 = vld [vmem:[#allocation11 + $0x1f0] sm:$0xff]
    %v3469 = vld [vmem:[#allocation11 + $0x1f8] sm:$0xff]
    %v3470 = vld [vmem:[#allocation11 + $0x200] sm:$0xff]
    %v3471 = vld [vmem:[#allocation11 + $0x208] sm:$0xff]
    %v3472 = vld [vmem:[#allocation11 + $0x210] sm:$0xff]
    %v3473 = vld [vmem:[#allocation11 + $0x218] sm:$0xff]
    %v3474 = vld [vmem:[#allocation11 + $0x220] sm:$0xff]
    %v3475 = vld [vmem:[#allocation11 + $0x228] sm:$0xff]
    %v3476 = vld [vmem:[#allocation11 + $0x230] sm:$0xff]
    %v3477 = vld [vmem:[#allocation11 + $0x238] sm:$0xff]
    %v3478 = vld [vmem:[#allocation11 + $0x240] sm:$0xff]
    %v3479 = vld [vmem:[#allocation11 + $0x248] sm:$0xff]
    %v3480 = vld [vmem:[#allocation11 + $0x250] sm:$0xff]
    %v3481 = vld [vmem:[#allocation11 + $0x258] sm:$0xff]
    %v3482 = vld [vmem:[#allocation11 + $0x260] sm:$0xff]
    %v3483 = vld [vmem:[#allocation11 + $0x268] sm:$0xff]
    %v3484 = vld [vmem:[#allocation11 + $0x270] sm:$0xff]
    %v3485 = vld [vmem:[#allocation11 + $0x278] sm:$0xff]
    %v3486 = vld [vmem:[#allocation11 + $0x280] sm:$0xff]
    %v3487 = vld [vmem:[#allocation11 + $0x288] sm:$0xff]
    %v3488 = vld [vmem:[#allocation11 + $0x290] sm:$0xff]
    %v3489 = vld [vmem:[#allocation11 + $0x298] sm:$0xff]
    %v3490 = vld [vmem:[#allocation11 + $0x2a0] sm:$0xff]
    %v3491 = vld [vmem:[#allocation11 + $0x2a8] sm:$0xff]
    %v3492 = vld [vmem:[#allocation11 + $0x2b0] sm:$0xff]
    %v3493 = vld [vmem:[#allocation11 + $0x2b8] sm:$0xff]
    %v3494 = vld [vmem:[#allocation11 + $0x2c0] sm:$0xff]
    %v3495 = vld [vmem:[#allocation11 + $0x2c8] sm:$0xff]
    %v3496 = vld [vmem:[#allocation11 + $0x2d0] sm:$0xff]
    %v3497 = vld [vmem:[#allocation11 + $0x2d8] sm:$0xff]
    %v3498 = vld [vmem:[#allocation11 + $0x2e0] sm:$0xff]
    %v3499 = vld [vmem:[#allocation11 + $0x2e8] sm:$0xff]
    %v3500 = vld [vmem:[#allocation11 + $0x2f0] sm:$0xff]
    %v3501 = vld [vmem:[#allocation11 + $0x2f8] sm:$0xff]
    %v3502 = vld [vmem:[#allocation11 + $0x300] sm:$0xff]
    %v3503 = vld [vmem:[#allocation11 + $0x308] sm:$0xff]
    %v3504 = vld [vmem:[#allocation11 + $0x310] sm:$0xff]
    %v3505 = vld [vmem:[#allocation11 + $0x318] sm:$0xff]
    %v3506 = vld [vmem:[#allocation11 + $0x320] sm:$0xff]
    %v3507 = vld [vmem:[#allocation11 + $0x328] sm:$0xff]
    %v3508 = vld [vmem:[#allocation11 + $0x330] sm:$0xff]
    %v3509 = vld [vmem:[#allocation11 + $0x338] sm:$0xff]
    %v3510 = vld [vmem:[#allocation11 + $0x340] sm:$0xff]
    %v3511 = vld [vmem:[#allocation11 + $0x348] sm:$0xff]
    %v3512 = vld [vmem:[#allocation11 + $0x350] sm:$0xff]
    %v3513 = vld [vmem:[#allocation11 + $0x358] sm:$0xff]
    %v3514 = vld [vmem:[#allocation11 + $0x360] sm:$0xff]
    %v3515 = vld [vmem:[#allocation11 + $0x368] sm:$0xff]
    %v3516 = vld [vmem:[#allocation11 + $0x370] sm:$0xff]
    %v3517 = vld [vmem:[#allocation11 + $0x378] sm:$0xff]
    %v3518 = vld [vmem:[#allocation11 + $0x380] sm:$0xff]
    %v3519 = vld [vmem:[#allocation11 + $0x388] sm:$0xff]
    %v3520 = vld [vmem:[#allocation11 + $0x390] sm:$0xff]
    %v3521 = vld [vmem:[#allocation11 + $0x398] sm:$0xff]
    %v3522 = vld [vmem:[#allocation11 + $0x3a0] sm:$0xff]
    %v3523 = vld [vmem:[#allocation11 + $0x3a8] sm:$0xff]
    %v3524 = vld [vmem:[#allocation11 + $0x3b0] sm:$0xff]
    %v3525 = vld [vmem:[#allocation11 + $0x3b8] sm:$0xff]
    %v3526 = vld [vmem:[#allocation11 + $0x3c0] sm:$0xff]
    %v3527 = vld [vmem:[#allocation11 + $0x3c8] sm:$0xff]
    %v3528 = vld [vmem:[#allocation11 + $0x3d0] sm:$0xff]
    %v3529 = vld [vmem:[#allocation11 + $0x3d8] sm:$0xff]
    %v3530 = vld [vmem:[#allocation11 + $0x3e0] sm:$0xff]
    %v3531 = vld [vmem:[#allocation11 + $0x3e8] sm:$0xff]
    %v3532 = vld [vmem:[#allocation11 + $0x3f0] sm:$0xff]
    %v3533 = vld [vmem:[#allocation11 + $0x3f8] sm:$0xff]
    %v3534 = vld [vmem:[#allocation11 + $0x400] sm:$0xff]
    %v3535 = vld [vmem:[#allocation11 + $0x408] sm:$0xff]
    %v3536 = vld [vmem:[#allocation11 + $0x410] sm:$0xff]
    %v3537 = vld [vmem:[#allocation11 + $0x418] sm:$0xff]
    %v3538 = vld [vmem:[#allocation11 + $0x420] sm:$0xff]
    %v3539 = vld [vmem:[#allocation11 + $0x428] sm:$0xff]
    %v3540 = vld [vmem:[#allocation11 + $0x430] sm:$0xff]
    %v3541 = vld [vmem:[#allocation11 + $0x438] sm:$0xff]
    %v3542 = vld [vmem:[#allocation11 + $0x440] sm:$0xff]
    %v3543 = vld [vmem:[#allocation11 + $0x448] sm:$0xff]
    %v3544 = vld [vmem:[#allocation11 + $0x450] sm:$0xff]
    %v3545 = vld [vmem:[#allocation11 + $0x458] sm:$0xff]
    %v3546 = vld [vmem:[#allocation11 + $0x460] sm:$0xff]
    %v3547 = vld [vmem:[#allocation11 + $0x468] sm:$0xff]
    %v3548 = vld [vmem:[#allocation11 + $0x470] sm:$0xff]
    %v3549 = vld [vmem:[#allocation11 + $0x478] sm:$0xff]
    %v3550 = vld [vmem:[#allocation11 + $0x480] sm:$0xff]
    %v3551 = vld [vmem:[#allocation11 + $0x488] sm:$0xff]
    %v3552 = vld [vmem:[#allocation11 + $0x490] sm:$0xff]
    %v3553 = vld [vmem:[#allocation11 + $0x498] sm:$0xff]
    %v3554 = vld [vmem:[#allocation11 + $0x4a0] sm:$0xff]
    %v3555 = vld [vmem:[#allocation11 + $0x4a8] sm:$0xff]
    %v3556 = vld [vmem:[#allocation11 + $0x4b0] sm:$0xff]
    %v3557 = vld [vmem:[#allocation11 + $0x4b8] sm:$0xff]
    %v3558 = vld [vmem:[#allocation11 + $0x4c0] sm:$0xff]
    %v3559 = vld [vmem:[#allocation11 + $0x4c8] sm:$0xff]
    %v3560 = vld [vmem:[#allocation11 + $0x4d0] sm:$0xff]
    %v3561 = vld [vmem:[#allocation11 + $0x4d8] sm:$0xff]
    %v3562 = vld [vmem:[#allocation11 + $0x4e0] sm:$0xff]
    %v3563 = vld [vmem:[#allocation11 + $0x4e8] sm:$0xff]
    %v3564 = vld [vmem:[#allocation11 + $0x4f0] sm:$0xff]
    %v3565 = vld [vmem:[#allocation11 + $0x4f8] sm:$0xff]
    %v3566 = vld [vmem:[#allocation11 + $0x500] sm:$0xff]
    %v3567 = vld [vmem:[#allocation11 + $0x508] sm:$0xff]
    %v3568 = vld [vmem:[#allocation11 + $0x510] sm:$0xff]
    %v3569 = vld [vmem:[#allocation11 + $0x518] sm:$0xff]
    %v3570 = vld [vmem:[#allocation11 + $0x520] sm:$0xff]
    %v3571 = vld [vmem:[#allocation11 + $0x528] sm:$0xff]
    %v3572 = vld [vmem:[#allocation11 + $0x530] sm:$0xff]
    %v3573 = vld [vmem:[#allocation11 + $0x538] sm:$0xff]
    %v3574 = vld [vmem:[#allocation11 + $0x540] sm:$0xff]
    %v3575 = vld [vmem:[#allocation11 + $0x548] sm:$0xff]
    %v3576 = vld [vmem:[#allocation11 + $0x550] sm:$0xff]
    %v3577 = vld [vmem:[#allocation11 + $0x558] sm:$0xff]
    %v3578 = vld [vmem:[#allocation11 + $0x560] sm:$0xff]
    %v3579 = vld [vmem:[#allocation11 + $0x568] sm:$0xff]
    %v3580 = vld [vmem:[#allocation11 + $0x570] sm:$0xff]
    %v3581 = vld [vmem:[#allocation11 + $0x578] sm:$0xff]
    %v3582 = vld [vmem:[#allocation11 + $0x580] sm:$0xff]
    %v3583 = vld [vmem:[#allocation11 + $0x588] sm:$0xff]
    %v3584 = vld [vmem:[#allocation11 + $0x590] sm:$0xff]
    %v3585 = vld [vmem:[#allocation11 + $0x598] sm:$0xff]
    %v3586 = vld [vmem:[#allocation11 + $0x5a0] sm:$0xff]
    %v3587 = vld [vmem:[#allocation11 + $0x5a8] sm:$0xff]
    %v3588 = vld [vmem:[#allocation11 + $0x5b0] sm:$0xff]
    %v3589 = vld [vmem:[#allocation11 + $0x5b8] sm:$0xff]
    %v3590 = vld [vmem:[#allocation11 + $0x5c0] sm:$0xff]
    %v3591 = vld [vmem:[#allocation11 + $0x5c8] sm:$0xff]
    %v3592 = vld [vmem:[#allocation11 + $0x5d0] sm:$0xff]
    %v3593 = vld [vmem:[#allocation11 + $0x5d8] sm:$0xff]
    %v3594 = vld [vmem:[#allocation11 + $0x5e0] sm:$0xff]
    %v3595 = vld [vmem:[#allocation11 + $0x5e8] sm:$0xff]
    %v3596 = vld [vmem:[#allocation11 + $0x5f0] sm:$0xff]
    %v3597 = vld [vmem:[#allocation11 + $0x5f8] sm:$0xff]
    %v3598 = vld [vmem:[#allocation11 + $0x600] sm:$0xff]
    %v3599 = vld [vmem:[#allocation11 + $0x608] sm:$0xff]
    %v3600 = vld [vmem:[#allocation11 + $0x610] sm:$0xff]
    %v3601 = vld [vmem:[#allocation11 + $0x618] sm:$0xff]
    %v3602 = vld [vmem:[#allocation11 + $0x620] sm:$0xff]
    %v3603 = vld [vmem:[#allocation11 + $0x628] sm:$0xff]
    %v3604 = vld [vmem:[#allocation11 + $0x630] sm:$0xff]
    %v3605 = vld [vmem:[#allocation11 + $0x638] sm:$0xff]
    %v3606 = vld [vmem:[#allocation11 + $0x640] sm:$0xff]
    %v3607 = vld [vmem:[#allocation11 + $0x648] sm:$0xff]
    %v3608 = vld [vmem:[#allocation11 + $0x650] sm:$0xff]
    %v3609 = vld [vmem:[#allocation11 + $0x658] sm:$0xff]
    %v3610 = vld [vmem:[#allocation11 + $0x660] sm:$0xff]
    %v3611 = vld [vmem:[#allocation11 + $0x668] sm:$0xff]
    %v3612 = vld [vmem:[#allocation11 + $0x670] sm:$0xff]
    %v3613 = vld [vmem:[#allocation11 + $0x678] sm:$0xff]
    %v3614 = vld [vmem:[#allocation11 + $0x680] sm:$0xff]
    %v3615 = vld [vmem:[#allocation11 + $0x688] sm:$0xff]
    %v3616 = vld [vmem:[#allocation11 + $0x690] sm:$0xff]
    %v3617 = vld [vmem:[#allocation11 + $0x698] sm:$0xff]
    %v3618 = vld [vmem:[#allocation11 + $0x6a0] sm:$0xff]
    %v3619 = vld [vmem:[#allocation11 + $0x6a8] sm:$0xff]
    %v3620 = vld [vmem:[#allocation11 + $0x6b0] sm:$0xff]
    %v3621 = vld [vmem:[#allocation11 + $0x6b8] sm:$0xff]
    %v3622 = vld [vmem:[#allocation11 + $0x6c0] sm:$0xff]
    %v3623 = vld [vmem:[#allocation11 + $0x6c8] sm:$0xff]
    %v3624 = vld [vmem:[#allocation11 + $0x6d0] sm:$0xff]
    %v3625 = vld [vmem:[#allocation11 + $0x6d8] sm:$0xff]
    %v3626 = vld [vmem:[#allocation11 + $0x6e0] sm:$0xff]
    %v3627 = vld [vmem:[#allocation11 + $0x6e8] sm:$0xff]
    %v3628 = vld [vmem:[#allocation11 + $0x6f0] sm:$0xff]
    %v3629 = vld [vmem:[#allocation11 + $0x6f8] sm:$0xff]
    %v3630 = vld [vmem:[#allocation11 + $0x700] sm:$0xff]
    %v3631 = vld [vmem:[#allocation11 + $0x708] sm:$0xff]
    %v3632 = vld [vmem:[#allocation11 + $0x710] sm:$0xff]
    %v3633 = vld [vmem:[#allocation11 + $0x718] sm:$0xff]
    %v3634 = vld [vmem:[#allocation11 + $0x720] sm:$0xff]
    %v3635 = vld [vmem:[#allocation11 + $0x728] sm:$0xff]
    %v3636 = vld [vmem:[#allocation11 + $0x730] sm:$0xff]
    %v3637 = vld [vmem:[#allocation11 + $0x738] sm:$0xff]
    %v3638 = vld [vmem:[#allocation11 + $0x740] sm:$0xff]
    %v3639 = vld [vmem:[#allocation11 + $0x748] sm:$0xff]
    %v3640 = vld [vmem:[#allocation11 + $0x750] sm:$0xff]
    %v3641 = vld [vmem:[#allocation11 + $0x758] sm:$0xff]
    %v3642 = vld [vmem:[#allocation11 + $0x760] sm:$0xff]
    %v3643 = vld [vmem:[#allocation11 + $0x768] sm:$0xff]
    %v3644 = vld [vmem:[#allocation11 + $0x770] sm:$0xff]
    %v3645 = vld [vmem:[#allocation11 + $0x778] sm:$0xff]
    %v3646 = vld [vmem:[#allocation11 + $0x780] sm:$0xff]
    %v3647 = vld [vmem:[#allocation11 + $0x788] sm:$0xff]
    %v3648 = vld [vmem:[#allocation11 + $0x790] sm:$0xff]
    %v3649 = vld [vmem:[#allocation11 + $0x798] sm:$0xff]
    %v3650 = vld [vmem:[#allocation11 + $0x7a0] sm:$0xff]
    %v3651 = vld [vmem:[#allocation11 + $0x7a8] sm:$0xff]
    %v3652 = vld [vmem:[#allocation11 + $0x7b0] sm:$0xff]
    %v3653 = vld [vmem:[#allocation11 + $0x7b8] sm:$0xff]
    %v3654 = vld [vmem:[#allocation11 + $0x7c0] sm:$0xff]
    %v3655 = vld [vmem:[#allocation11 + $0x7c8] sm:$0xff]
    %v3656 = vld [vmem:[#allocation11 + $0x7d0] sm:$0xff]
    %v3657 = vld [vmem:[#allocation11 + $0x7d8] sm:$0xff]
    %v3658 = vld [vmem:[#allocation11 + $0x7e0] sm:$0xff]
    %v3659 = vld [vmem:[#allocation11 + $0x7e8] sm:$0xff]
    %v3660 = vld [vmem:[#allocation11 + $0x7f0] sm:$0xff]
    %v3661 = vld [vmem:[#allocation11 + $0x7f8] sm:$0xff]
    %v3662 = vld [vmem:[#allocation11 + $0x800] sm:$0xff]
    %v3663 = vld [vmem:[#allocation11 + $0x808] sm:$0xff]
    %v3664 = vld [vmem:[#allocation11 + $0x810] sm:$0xff]
    %v3665 = vld [vmem:[#allocation11 + $0x818] sm:$0xff]
    %v3666 = vld [vmem:[#allocation11 + $0x820] sm:$0xff]
    %v3667 = vld [vmem:[#allocation11 + $0x828] sm:$0xff]
    %v3668 = vld [vmem:[#allocation11 + $0x830] sm:$0xff]
    %v3669 = vld [vmem:[#allocation11 + $0x838] sm:$0xff]
    %v3670 = vld [vmem:[#allocation11 + $0x840] sm:$0xff]
    %v3671 = vld [vmem:[#allocation11 + $0x848] sm:$0xff]
    %v3672 = vld [vmem:[#allocation11 + $0x850] sm:$0xff]
    %v3673 = vld [vmem:[#allocation11 + $0x858] sm:$0xff]
    %v3674 = vld [vmem:[#allocation11 + $0x860] sm:$0xff]
    %v3675 = vld [vmem:[#allocation11 + $0x868] sm:$0xff]
    %v3676 = vld [vmem:[#allocation11 + $0x870] sm:$0xff]
    %v3677 = vld [vmem:[#allocation11 + $0x878] sm:$0xff]
    %v3678 = vld [vmem:[#allocation11 + $0x880] sm:$0xff]
    %v3679 = vld [vmem:[#allocation11 + $0x888] sm:$0xff]
    %v3680 = vld [vmem:[#allocation11 + $0x890] sm:$0xff]
    %v3681 = vld [vmem:[#allocation11 + $0x898] sm:$0xff]
    %v3682 = vld [vmem:[#allocation11 + $0x8a0] sm:$0xff]
    %v3683 = vld [vmem:[#allocation11 + $0x8a8] sm:$0xff]
    %v3684 = vld [vmem:[#allocation11 + $0x8b0] sm:$0xff]
    %v3685 = vld [vmem:[#allocation11 + $0x8b8] sm:$0xff]
    %v3686 = vld [vmem:[#allocation11 + $0x8c0] sm:$0xff]
    %v3687 = vld [vmem:[#allocation11 + $0x8c8] sm:$0xff]
    %v3688 = vld [vmem:[#allocation11 + $0x8d0] sm:$0xff]
    %v3689 = vld [vmem:[#allocation11 + $0x8d8] sm:$0xff]
    %v3690 = vld [vmem:[#allocation11 + $0x8e0] sm:$0xff]
    %v3691 = vld [vmem:[#allocation11 + $0x8e8] sm:$0xff]
    %v3692 = vld [vmem:[#allocation11 + $0x8f0] sm:$0xff]
    %v3693 = vld [vmem:[#allocation11 + $0x8f8] sm:$0xff]
    %v3694 = vld [vmem:[#allocation11 + $0x900] sm:$0xff]
    %v3695 = vld [vmem:[#allocation11 + $0x908] sm:$0xff]
    %v3696 = vld [vmem:[#allocation11 + $0x910] sm:$0xff]
    %v3697 = vld [vmem:[#allocation11 + $0x918] sm:$0xff]
    %v3698 = vld [vmem:[#allocation11 + $0x920] sm:$0xff]
    %v3699 = vld [vmem:[#allocation11 + $0x928] sm:$0xff]
    %v3700 = vld [vmem:[#allocation11 + $0x930] sm:$0xff]
    %v3701 = vld [vmem:[#allocation11 + $0x938] sm:$0xff]
    %v3702 = vld [vmem:[#allocation11 + $0x940] sm:$0xff]
    %v3703 = vld [vmem:[#allocation11 + $0x948] sm:$0xff]
    %v3704 = vld [vmem:[#allocation11 + $0x950] sm:$0xff]
    %v3705 = vld [vmem:[#allocation11 + $0x958] sm:$0xff]
    %v3706 = vld [vmem:[#allocation11 + $0x960] sm:$0xff]
    %v3707 = vld [vmem:[#allocation11 + $0x968] sm:$0xff]
    %v3708 = vld [vmem:[#allocation11 + $0x970] sm:$0xff]
    %v3709 = vld [vmem:[#allocation11 + $0x978] sm:$0xff]
    %v3710 = vld [vmem:[#allocation11 + $0x980] sm:$0xff]
    %v3711 = vld [vmem:[#allocation11 + $0x988] sm:$0xff]
    %v3712 = vld [vmem:[#allocation11 + $0x990] sm:$0xff]
    %v3713 = vld [vmem:[#allocation11 + $0x998] sm:$0xff]
    %v3714 = vld [vmem:[#allocation11 + $0x9a0] sm:$0xff]
    %v3715 = vld [vmem:[#allocation11 + $0x9a8] sm:$0xff]
    %v3716 = vld [vmem:[#allocation11 + $0x9b0] sm:$0xff]
    %v3717 = vld [vmem:[#allocation11 + $0x9b8] sm:$0xff]
    %v3718 = vld [vmem:[#allocation11 + $0x9c0] sm:$0xff]
    %v3719 = vld [vmem:[#allocation11 + $0x9c8] sm:$0xff]
    %v3720 = vld [vmem:[#allocation11 + $0x9d0] sm:$0xff]
    %v3721 = vld [vmem:[#allocation11 + $0x9d8] sm:$0xff]
    %v3722 = vld [vmem:[#allocation11 + $0x9e0] sm:$0xff]
    %v3723 = vld [vmem:[#allocation11 + $0x9e8] sm:$0xff]
    %v3724 = vld [vmem:[#allocation11 + $0x9f0] sm:$0xff]
    %v3725 = vld [vmem:[#allocation11 + $0x9f8] sm:$0xff]
    %v3726 = vld [vmem:[#allocation11 + $0xa00] sm:$0xff]
    %v3727 = vld [vmem:[#allocation11 + $0xa08] sm:$0xff]
    %v3728 = vld [vmem:[#allocation11 + $0xa10] sm:$0xff]
    %v3729 = vld [vmem:[#allocation11 + $0xa18] sm:$0xff]
    %v3730 = vld [vmem:[#allocation11 + $0xa20] sm:$0xff]
    %v3731 = vld [vmem:[#allocation11 + $0xa28] sm:$0xff]
    %v3732 = vld [vmem:[#allocation11 + $0xa30] sm:$0xff]
    %v3733 = vld [vmem:[#allocation11 + $0xa38] sm:$0xff]
    %v3734 = vld [vmem:[#allocation11 + $0xa40] sm:$0xff]
    %v3735 = vld [vmem:[#allocation11 + $0xa48] sm:$0xff]
    %v3736 = vld [vmem:[#allocation11 + $0xa50] sm:$0xff]
    %v3737 = vld [vmem:[#allocation11 + $0xa58] sm:$0xff]
    %v3738 = vld [vmem:[#allocation11 + $0xa60] sm:$0xff]
    %v3739 = vld [vmem:[#allocation11 + $0xa68] sm:$0xff]
    %v3740 = vld [vmem:[#allocation11 + $0xa70] sm:$0xff]
    %v3741 = vld [vmem:[#allocation11 + $0xa78] sm:$0xff]
    %v3742 = vld [vmem:[#allocation11 + $0xa80] sm:$0xff]
    %v3743 = vld [vmem:[#allocation11 + $0xa88] sm:$0xff]
    %v3744 = vld [vmem:[#allocation11 + $0xa90] sm:$0xff]
    %v3745 = vld [vmem:[#allocation11 + $0xa98] sm:$0xff]
    %v3746 = vld [vmem:[#allocation11 + $0xaa0] sm:$0xff]
    %v3747 = vld [vmem:[#allocation11 + $0xaa8] sm:$0xff]
    %v3748 = vld [vmem:[#allocation11 + $0xab0] sm:$0xff]
    %v3749 = vld [vmem:[#allocation11 + $0xab8] sm:$0xff]
    %v3750 = vld [vmem:[#allocation11 + $0xac0] sm:$0xff]
    %v3751 = vld [vmem:[#allocation11 + $0xac8] sm:$0xff]
    %v3752 = vld [vmem:[#allocation11 + $0xad0] sm:$0xff]
    %v3753 = vld [vmem:[#allocation11 + $0xad8] sm:$0xff]
    %v3754 = vld [vmem:[#allocation11 + $0xae0] sm:$0xff]
    %v3755 = vld [vmem:[#allocation11 + $0xae8] sm:$0xff]
    %v3756 = vld [vmem:[#allocation11 + $0xaf0] sm:$0xff]
    %v3757 = vld [vmem:[#allocation11 + $0xaf8] sm:$0xff]
    %v3758 = vld [vmem:[#allocation11 + $0xb00] sm:$0xff]
    %v3759 = vld [vmem:[#allocation11 + $0xb08] sm:$0xff]
    %v3760 = vld [vmem:[#allocation11 + $0xb10] sm:$0xff]
    %v3761 = vld [vmem:[#allocation11 + $0xb18] sm:$0xff]
    %v3762 = vld [vmem:[#allocation11 + $0xb20] sm:$0xff]
    %v3763 = vld [vmem:[#allocation11 + $0xb28] sm:$0xff]
    %v3764 = vld [vmem:[#allocation11 + $0xb30] sm:$0xff]
    %v3765 = vld [vmem:[#allocation11 + $0xb38] sm:$0xff]
    %v3766 = vld [vmem:[#allocation11 + $0xb40] sm:$0xff]
    %v3767 = vld [vmem:[#allocation11 + $0xb48] sm:$0xff]
    %v3768 = vld [vmem:[#allocation11 + $0xb50] sm:$0xff]
    %v3769 = vld [vmem:[#allocation11 + $0xb58] sm:$0xff]
    %v3770 = vld [vmem:[#allocation11 + $0xb60] sm:$0xff]
    %v3771 = vld [vmem:[#allocation11 + $0xb68] sm:$0xff]
    %v3772 = vld [vmem:[#allocation11 + $0xb70] sm:$0xff]
    %v3773 = vld [vmem:[#allocation11 + $0xb78] sm:$0xff]
    %v3774 = vld [vmem:[#allocation11 + $0xb80] sm:$0xff]
    %v3775 = vld [vmem:[#allocation11 + $0xb88] sm:$0xff]
    %v3776 = vld [vmem:[#allocation11 + $0xb90] sm:$0xff]
    %v3777 = vld [vmem:[#allocation11 + $0xb98] sm:$0xff]
    %v3778 = vld [vmem:[#allocation11 + $0xba0] sm:$0xff]
    %v3779 = vld [vmem:[#allocation11 + $0xba8] sm:$0xff]
    %v3780 = vld [vmem:[#allocation11 + $0xbb0] sm:$0xff]
    %v3781 = vld [vmem:[#allocation11 + $0xbb8] sm:$0xff]
    %v3782 = vld [vmem:[#allocation11 + $0xbc0] sm:$0xff]
    %v3783 = vld [vmem:[#allocation11 + $0xbc8] sm:$0xff]
    %v3784 = vld [vmem:[#allocation11 + $0xbd0] sm:$0xff]
    %v3785 = vld [vmem:[#allocation11 + $0xbd8] sm:$0xff]
    %v3786 = vld [vmem:[#allocation11 + $0xbe0] sm:$0xff]
    %v3787 = vld [vmem:[#allocation11 + $0xbe8] sm:$0xff]
    %v3788 = vld [vmem:[#allocation11 + $0xbf0] sm:$0xff]
    %v3789 = vld [vmem:[#allocation11 + $0xbf8] sm:$0xff]
    %v3790 = vld [vmem:[#allocation11 + $0xc00] sm:$0xff]
    %v3791 = vld [vmem:[#allocation11 + $0xc08] sm:$0xff]
    %v3792 = vld [vmem:[#allocation11 + $0xc10] sm:$0xff]
    %v3793 = vld [vmem:[#allocation11 + $0xc18] sm:$0xff]
    %v3794 = vld [vmem:[#allocation11 + $0xc20] sm:$0xff]
    %v3795 = vld [vmem:[#allocation11 + $0xc28] sm:$0xff]
    %v3796 = vld [vmem:[#allocation11 + $0xc30] sm:$0xff]
    %v3797 = vld [vmem:[#allocation11 + $0xc38] sm:$0xff]
    %v3798 = vld [vmem:[#allocation11 + $0xc40] sm:$0xff]
    %v3799 = vld [vmem:[#allocation11 + $0xc48] sm:$0xff]
    %v3800 = vld [vmem:[#allocation11 + $0xc50] sm:$0xff]
    %v3801 = vld [vmem:[#allocation11 + $0xc58] sm:$0xff]
    %v3802 = vld [vmem:[#allocation11 + $0xc60] sm:$0xff]
    %v3803 = vld [vmem:[#allocation11 + $0xc68] sm:$0xff]
    %v3804 = vld [vmem:[#allocation11 + $0xc70] sm:$0xff]
    %v3805 = vld [vmem:[#allocation11 + $0xc78] sm:$0xff]
    %v3806 = vld [vmem:[#allocation11 + $0xc80] sm:$0xff]
    %v3807 = vld [vmem:[#allocation11 + $0xc88] sm:$0xff]
    %v3808 = vld [vmem:[#allocation11 + $0xc90] sm:$0xff]
    %v3809 = vld [vmem:[#allocation11 + $0xc98] sm:$0xff]
    %v3810 = vld [vmem:[#allocation11 + $0xca0] sm:$0xff]
    %v3811 = vld [vmem:[#allocation11 + $0xca8] sm:$0xff]
    %v3812 = vld [vmem:[#allocation11 + $0xcb0] sm:$0xff]
    %v3813 = vld [vmem:[#allocation11 + $0xcb8] sm:$0xff]
    %v3814 = vld [vmem:[#allocation11 + $0xcc0] sm:$0xff]
    %v3815 = vld [vmem:[#allocation11 + $0xcc8] sm:$0xff]
    %v3816 = vld [vmem:[#allocation11 + $0xcd0] sm:$0xff]
    %v3817 = vld [vmem:[#allocation11 + $0xcd8] sm:$0xff]
    %v3818 = vld [vmem:[#allocation11 + $0xce0] sm:$0xff]
    %v3819 = vld [vmem:[#allocation11 + $0xce8] sm:$0xff]
    %v3820 = vld [vmem:[#allocation11 + $0xcf0] sm:$0xff]
    %v3821 = vld [vmem:[#allocation11 + $0xcf8] sm:$0xff]
    %v3822 = vld [vmem:[#allocation11 + $0xd00] sm:$0xff]
    %v3823 = vld [vmem:[#allocation11 + $0xd08] sm:$0xff]
    %v3824 = vld [vmem:[#allocation11 + $0xd10] sm:$0xff]
    %v3825 = vld [vmem:[#allocation11 + $0xd18] sm:$0xff]
    %v3826 = vld [vmem:[#allocation11 + $0xd20] sm:$0xff]
    %v3827 = vld [vmem:[#allocation11 + $0xd28] sm:$0xff]
    %v3828 = vld [vmem:[#allocation11 + $0xd30] sm:$0xff]
    %v3829 = vld [vmem:[#allocation11 + $0xd38] sm:$0xff]
    %v3830 = vld [vmem:[#allocation11 + $0xd40] sm:$0xff]
    %v3831 = vld [vmem:[#allocation11 + $0xd48] sm:$0xff]
    %v3832 = vld [vmem:[#allocation11 + $0xd50] sm:$0xff]
    %v3833 = vld [vmem:[#allocation11 + $0xd58] sm:$0xff]
    %v3834 = vld [vmem:[#allocation11 + $0xd60] sm:$0xff]
    %v3835 = vld [vmem:[#allocation11 + $0xd68] sm:$0xff]
    %v3836 = vld [vmem:[#allocation11 + $0xd70] sm:$0xff]
    %v3837 = vld [vmem:[#allocation11 + $0xd78] sm:$0xff]
    %v3838 = vld [vmem:[#allocation11 + $0xd80] sm:$0xff]
    %v3839 = vld [vmem:[#allocation11 + $0xd88] sm:$0xff]
    %v3840 = vld [vmem:[#allocation11 + $0xd90] sm:$0xff]
    %v3841 = vld [vmem:[#allocation11 + $0xd98] sm:$0xff]
    %v3842 = vld [vmem:[#allocation11 + $0xda0] sm:$0xff]
    %v3843 = vld [vmem:[#allocation11 + $0xda8] sm:$0xff]
    %v3844 = vld [vmem:[#allocation11 + $0xdb0] sm:$0xff]
    %v3845 = vld [vmem:[#allocation11 + $0xdb8] sm:$0xff]
    %v3846 = vld [vmem:[#allocation11 + $0xdc0] sm:$0xff]
    %v3847 = vld [vmem:[#allocation11 + $0xdc8] sm:$0xff]
    %v3848 = vld [vmem:[#allocation11 + $0xdd0] sm:$0xff]
    %v3849 = vld [vmem:[#allocation11 + $0xdd8] sm:$0xff]
    %v3850 = vld [vmem:[#allocation11 + $0xde0] sm:$0xff]
    %v3851 = vld [vmem:[#allocation11 + $0xde8] sm:$0xff]
    %v3852 = vld [vmem:[#allocation11 + $0xdf0] sm:$0xff]
    %v3853 = vld [vmem:[#allocation11 + $0xdf8] sm:$0xff]
    %v3854 = vld [vmem:[#allocation11 + $0xe00] sm:$0xff]
    %v3855 = vld [vmem:[#allocation11 + $0xe08] sm:$0xff]
    %v3856 = vld [vmem:[#allocation11 + $0xe10] sm:$0xff]
    %v3857 = vld [vmem:[#allocation11 + $0xe18] sm:$0xff]
    %v3858 = vld [vmem:[#allocation11 + $0xe20] sm:$0xff]
    %v3859 = vld [vmem:[#allocation11 + $0xe28] sm:$0xff]
    %v3860 = vld [vmem:[#allocation11 + $0xe30] sm:$0xff]
    %v3861 = vld [vmem:[#allocation11 + $0xe38] sm:$0xff]
    %v3862 = vld [vmem:[#allocation11 + $0xe40] sm:$0xff]
    %v3863 = vld [vmem:[#allocation11 + $0xe48] sm:$0xff]
    %v3864 = vld [vmem:[#allocation11 + $0xe50] sm:$0xff]
    %v3865 = vld [vmem:[#allocation11 + $0xe58] sm:$0xff]
    %v3866 = vld [vmem:[#allocation11 + $0xe60] sm:$0xff]
    %v3867 = vld [vmem:[#allocation11 + $0xe68] sm:$0xff]
    %v3868 = vld [vmem:[#allocation11 + $0xe70] sm:$0xff]
    %v3869 = vld [vmem:[#allocation11 + $0xe78] sm:$0xff]
    %v3870 = vld [vmem:[#allocation11 + $0xe80] sm:$0xff]
    %v3871 = vld [vmem:[#allocation11 + $0xe88] sm:$0xff]
    %v3872 = vld [vmem:[#allocation11 + $0xe90] sm:$0xff]
    %v3873 = vld [vmem:[#allocation11 + $0xe98] sm:$0xff]
    %v3874 = vld [vmem:[#allocation11 + $0xea0] sm:$0xff]
    %v3875 = vld [vmem:[#allocation11 + $0xea8] sm:$0xff]
    %v3876 = vld [vmem:[#allocation11 + $0xeb0] sm:$0xff]
    %v3877 = vld [vmem:[#allocation11 + $0xeb8] sm:$0xff]
    %v3878 = vld [vmem:[#allocation11 + $0xec0] sm:$0xff]
    %v3879 = vld [vmem:[#allocation11 + $0xec8] sm:$0xff]
    %v3880 = vld [vmem:[#allocation11 + $0xed0] sm:$0xff]
    %v3881 = vld [vmem:[#allocation11 + $0xed8] sm:$0xff]
    %v3882 = vld [vmem:[#allocation11 + $0xee0] sm:$0xff]
    %v3883 = vld [vmem:[#allocation11 + $0xee8] sm:$0xff]
    %v3884 = vld [vmem:[#allocation11 + $0xef0] sm:$0xff]
    %v3885 = vld [vmem:[#allocation11 + $0xef8] sm:$0xff]
    %v3886 = vld [vmem:[#allocation11 + $0xf00] sm:$0xff]
    %v3887 = vld [vmem:[#allocation11 + $0xf08] sm:$0xff]
    %v3888 = vld [vmem:[#allocation11 + $0xf10] sm:$0xff]
    %v3889 = vld [vmem:[#allocation11 + $0xf18] sm:$0xff]
    %v3890 = vld [vmem:[#allocation11 + $0xf20] sm:$0xff]
    %v3891 = vld [vmem:[#allocation11 + $0xf28] sm:$0xff]
    %v3892 = vld [vmem:[#allocation11 + $0xf30] sm:$0xff]
    %v3893 = vld [vmem:[#allocation11 + $0xf38] sm:$0xff]
    %v3894 = vld [vmem:[#allocation11 + $0xf40] sm:$0xff]
    %v3895 = vld [vmem:[#allocation11 + $0xf48] sm:$0xff]
    %v3896 = vld [vmem:[#allocation11 + $0xf50] sm:$0xff]
    %v3897 = vld [vmem:[#allocation11 + $0xf58] sm:$0xff]
    %v3898 = vld [vmem:[#allocation11 + $0xf60] sm:$0xff]
    %v3899 = vld [vmem:[#allocation11 + $0xf68] sm:$0xff]
    %v3900 = vld [vmem:[#allocation11 + $0xf70] sm:$0xff]
    %v3901 = vld [vmem:[#allocation11 + $0xf78] sm:$0xff]
    %v3902 = vld [vmem:[#allocation11 + $0xf80] sm:$0xff]
    %v3903 = vld [vmem:[#allocation11 + $0xf88] sm:$0xff]
    %v3904 = vld [vmem:[#allocation11 + $0xf90] sm:$0xff]
    %v3905 = vld [vmem:[#allocation11 + $0xf98] sm:$0xff]
    %v3906 = vld [vmem:[#allocation11 + $0xfa0] sm:$0xff]
    %v3907 = vld [vmem:[#allocation11 + $0xfa8] sm:$0xff]
    %v3908 = vld [vmem:[#allocation11 + $0xfb0] sm:$0xff]
    %v3909 = vld [vmem:[#allocation11 + $0xfb8] sm:$0xff]
    %v3910 = vld [vmem:[#allocation11 + $0xfc0] sm:$0xff]
    %v3911 = vld [vmem:[#allocation11 + $0xfc8] sm:$0xff]
    %v3912 = vld [vmem:[#allocation11 + $0xfd0] sm:$0xff]
    %v3913 = vld [vmem:[#allocation11 + $0xfd8] sm:$0xff]
    %v3914 = vld [vmem:[#allocation11 + $0xfe0] sm:$0xff]
    %v3915 = vld [vmem:[#allocation11 + $0xfe8] sm:$0xff]
    %v3916 = vld [vmem:[#allocation11 + $0xff0] sm:$0xff]
    %v3917 = vld [vmem:[#allocation11 + $0xff8] sm:$0xff]
    %v3918 = vld [vmem:[#allocation11 + $0x1000] sm:$0xff]
    %v3919 = vld [vmem:[#allocation11 + $0x1008] sm:$0xff]
    %v3920 = vld [vmem:[#allocation11 + $0x1010] sm:$0xff]
    %v3921 = vld [vmem:[#allocation11 + $0x1018] sm:$0xff]
    %v3922 = vld [vmem:[#allocation11 + $0x1020] sm:$0xff]
    %v3923 = vld [vmem:[#allocation11 + $0x1028] sm:$0xff]
    %v3924 = vld [vmem:[#allocation11 + $0x1030] sm:$0xff]
    %v3925 = vld [vmem:[#allocation11 + $0x1038] sm:$0xff]
    %v3926 = vld [vmem:[#allocation11 + $0x1040] sm:$0xff]
    %v3927 = vld [vmem:[#allocation11 + $0x1048] sm:$0xff]
    %v3928 = vld [vmem:[#allocation11 + $0x1050] sm:$0xff]
    %v3929 = vld [vmem:[#allocation11 + $0x1058] sm:$0xff]
    %v3930 = vld [vmem:[#allocation11 + $0x1060] sm:$0xff]
    %v3931 = vld [vmem:[#allocation11 + $0x1068] sm:$0xff]
    %v3932 = vld [vmem:[#allocation11 + $0x1070] sm:$0xff]
    %v3933 = vld [vmem:[#allocation11 + $0x1078] sm:$0xff]
    %v3934 = vld [vmem:[#allocation11 + $0x1080] sm:$0xff]
    %v3935 = vld [vmem:[#allocation11 + $0x1088] sm:$0xff]
    %v3936 = vld [vmem:[#allocation11 + $0x1090] sm:$0xff]
    %v3937 = vld [vmem:[#allocation11 + $0x1098] sm:$0xff]
    %v3938 = vld [vmem:[#allocation11 + $0x10a0] sm:$0xff]
    %v3939 = vld [vmem:[#allocation11 + $0x10a8] sm:$0xff]
    %v3940 = vld [vmem:[#allocation11 + $0x10b0] sm:$0xff]
    %v3941 = vld [vmem:[#allocation11 + $0x10b8] sm:$0xff]
    %v3942 = vld [vmem:[#allocation11 + $0x10c0] sm:$0xff]
    %v3943 = vld [vmem:[#allocation11 + $0x10c8] sm:$0xff]
    %v3944 = vld [vmem:[#allocation11 + $0x10d0] sm:$0xff]
    %v3945 = vld [vmem:[#allocation11 + $0x10d8] sm:$0xff]
    %v3946 = vld [vmem:[#allocation11 + $0x10e0] sm:$0xff]
    %v3947 = vld [vmem:[#allocation11 + $0x10e8] sm:$0xff]
    %v3948 = vld [vmem:[#allocation11 + $0x10f0] sm:$0xff]
    %v3949 = vld [vmem:[#allocation11 + $0x10f8] sm:$0xff]
    %v3950 = vld [vmem:[#allocation11 + $0x1100] sm:$0xff]
    %v3951 = vld [vmem:[#allocation11 + $0x1108] sm:$0xff]
    %v3952 = vld [vmem:[#allocation11 + $0x1110] sm:$0xff]
    %v3953 = vld [vmem:[#allocation11 + $0x1118] sm:$0xff]
    %v3954 = vld [vmem:[#allocation11 + $0x1120] sm:$0xff]
    %v3955 = vld [vmem:[#allocation11 + $0x1128] sm:$0xff]
    %v3956 = vld [vmem:[#allocation11 + $0x1130] sm:$0xff]
    %v3957 = vld [vmem:[#allocation11 + $0x1138] sm:$0xff]
    %v3958 = vld [vmem:[#allocation11 + $0x1140] sm:$0xff]
    %v3959 = vld [vmem:[#allocation11 + $0x1148] sm:$0xff]
    %v3960 = vld [vmem:[#allocation11 + $0x1150] sm:$0xff]
    %v3961 = vld [vmem:[#allocation11 + $0x1158] sm:$0xff]
    %v3962 = vld [vmem:[#allocation11 + $0x1160] sm:$0xff]
    %v3963 = vld [vmem:[#allocation11 + $0x1168] sm:$0xff]
    %v3964 = vld [vmem:[#allocation11 + $0x1170] sm:$0xff]
    %v3965 = vld [vmem:[#allocation11 + $0x1178] sm:$0xff]
    %v3966 = vld [vmem:[#allocation11 + $0x1180] sm:$0xff]
    %v3967 = vld [vmem:[#allocation11 + $0x1188] sm:$0xff]
    %v3968 = vld [vmem:[#allocation11 + $0x1190] sm:$0xff]
    %v3969 = vld [vmem:[#allocation11 + $0x1198] sm:$0xff]
    %v3970 = vld [vmem:[#allocation11 + $0x11a0] sm:$0xff]
    %v3971 = vld [vmem:[#allocation11 + $0x11a8] sm:$0xff]
    %v3972 = vld [vmem:[#allocation11 + $0x11b0] sm:$0xff]
    %v3973 = vld [vmem:[#allocation11 + $0x11b8] sm:$0xff]
    %v3974 = vld [vmem:[#allocation11 + $0x11c0] sm:$0xff]
    %v3975 = vld [vmem:[#allocation11 + $0x11c8] sm:$0xff]
    %v3976 = vld [vmem:[#allocation11 + $0x11d0] sm:$0xff]
    %v3977 = vld [vmem:[#allocation11 + $0x11d8] sm:$0xff]
    %v3978 = vld [vmem:[#allocation11 + $0x11e0] sm:$0xff]
    %v3979 = vld [vmem:[#allocation11 + $0x11e8] sm:$0xff]
    %v3980 = vld [vmem:[#allocation11 + $0x11f0] sm:$0xff]
    %v3981 = vld [vmem:[#allocation11 + $0x11f8] sm:$0xff]
    %v4207 = vunpack.c.l.b16 %v3181
    %v4208 = vunpack.c.h.b16 %v3181
    %v4209 = vunpack.c.l.b16 %v3182
    %v4210 = vunpack.c.h.b16 %v3182
    %v4211 = vunpack.c.l.b16 %v3183
    %v4212 = vunpack.c.h.b16 %v3183
    %v4213 = vunpack.c.l.b16 %v3184
    %v4214 = vunpack.c.h.b16 %v3184
    %v4215 = vunpack.c.l.b16 %v3185
    %v4216 = vunpack.c.h.b16 %v3185
    %v4217 = vunpack.c.l.b16 %v3186
    %v4218 = vunpack.c.h.b16 %v3186
    %v4219 = vunpack.c.l.b16 %v3187
    %v4220 = vunpack.c.h.b16 %v3187
    %v4221 = vunpack.c.l.b16 %v3188
    %v4222 = vunpack.c.h.b16 %v3188
    %v4223 = vunpack.c.l.b16 %v3189
    %v4224 = vunpack.c.h.b16 %v3189
    %v4225 = vunpack.c.l.b16 %v3190
    %v4226 = vunpack.c.h.b16 %v3190
    %v4227 = vunpack.c.l.b16 %v3191
    %v4228 = vunpack.c.h.b16 %v3191
    %v4229 = vunpack.c.l.b16 %v3192
    %v4230 = vunpack.c.h.b16 %v3192
    %v4231 = vunpack.c.l.b16 %v3193
    %v4232 = vunpack.c.h.b16 %v3193
    %v4233 = vunpack.c.l.b16 %v3194
    %v4234 = vunpack.c.h.b16 %v3194
    %v4235 = vunpack.c.l.b16 %v3195
    %v4236 = vunpack.c.h.b16 %v3195
    %v4237 = vunpack.c.l.b16 %v3196
    %v4238 = vunpack.c.h.b16 %v3196
    %v4239 = vunpack.c.l.b16 %v3197
    %v4240 = vunpack.c.h.b16 %v3197
    %v4241 = vunpack.c.l.b16 %v3198
    %v4242 = vunpack.c.h.b16 %v3198
    %v4243 = vunpack.c.l.b16 %v3199
    %v4244 = vunpack.c.h.b16 %v3199
    %v4245 = vunpack.c.l.b16 %v3200
    %v4246 = vunpack.c.h.b16 %v3200
    %v4247 = vunpack.c.l.b16 %v3201
    %v4248 = vunpack.c.h.b16 %v3201
    %v4249 = vunpack.c.l.b16 %v3202
    %v4250 = vunpack.c.h.b16 %v3202
    %v4251 = vunpack.c.l.b16 %v3203
    %v4252 = vunpack.c.h.b16 %v3203
    %v4253 = vunpack.c.l.b16 %v3204
    %v4254 = vunpack.c.h.b16 %v3204
    %v4255 = vunpack.c.l.b16 %v3205
    %v4256 = vunpack.c.h.b16 %v3205
    %v4257 = vunpack.c.l.b16 %v3206
    %v4258 = vunpack.c.h.b16 %v3206
    %v4259 = vunpack.c.l.b16 %v3207
    %v4260 = vunpack.c.h.b16 %v3207
    %v4261 = vunpack.c.l.b16 %v3208
    %v4262 = vunpack.c.h.b16 %v3208
    %v4263 = vunpack.c.l.b16 %v3209
    %v4264 = vunpack.c.h.b16 %v3209
    %v4265 = vunpack.c.l.b16 %v3210
    %v4266 = vunpack.c.h.b16 %v3210
    %v4267 = vunpack.c.l.b16 %v3211
    %v4268 = vunpack.c.h.b16 %v3211
    %v4269 = vunpack.c.l.b16 %v3212
    %v4270 = vunpack.c.h.b16 %v3212
    %v4271 = vunpack.c.l.b16 %v3213
    %v4272 = vunpack.c.h.b16 %v3213
    %v4273 = vunpack.c.l.b16 %v3214
    %v4274 = vunpack.c.h.b16 %v3214
    %v4275 = vunpack.c.l.b16 %v3215
    %v4276 = vunpack.c.h.b16 %v3215
    %v4277 = vunpack.c.l.b16 %v3216
    %v4278 = vunpack.c.h.b16 %v3216
    %v4279 = vunpack.c.l.b16 %v3217
    %v4280 = vunpack.c.h.b16 %v3217
    %v4281 = vunpack.c.l.b16 %v3218
    %v4282 = vunpack.c.h.b16 %v3218
    %v4283 = vunpack.c.l.b16 %v3219
    %v4284 = vunpack.c.h.b16 %v3219
    %v4285 = vunpack.c.l.b16 %v3220
    %v4286 = vunpack.c.h.b16 %v3220
    %v4287 = vunpack.c.l.b16 %v3221
    %v4288 = vunpack.c.h.b16 %v3221
    %v4289 = vunpack.c.l.b16 %v3222
    %v4290 = vunpack.c.h.b16 %v3222
    %v4291 = vunpack.c.l.b16 %v3223
    %v4292 = vunpack.c.h.b16 %v3223
    %v4293 = vunpack.c.l.b16 %v3224
    %v4294 = vunpack.c.h.b16 %v3224
    %v4295 = vunpack.c.l.b16 %v3225
    %v4296 = vunpack.c.h.b16 %v3225
    %v4297 = vunpack.c.l.b16 %v3226
    %v4298 = vunpack.c.h.b16 %v3226
    %v4299 = vunpack.c.l.b16 %v3227
    %v4300 = vunpack.c.h.b16 %v3227
    %v4301 = vunpack.c.l.b16 %v3228
    %v4302 = vunpack.c.h.b16 %v3228
    %v4303 = vunpack.c.l.b16 %v3229
    %v4304 = vunpack.c.h.b16 %v3229
    %v4305 = vunpack.c.l.b16 %v3230
    %v4306 = vunpack.c.h.b16 %v3230
    %v4307 = vunpack.c.l.b16 %v3231
    %v4308 = vunpack.c.h.b16 %v3231
    %v4309 = vunpack.c.l.b16 %v3232
    %v4310 = vunpack.c.h.b16 %v3232
    %v4311 = vunpack.c.l.b16 %v3233
    %v4312 = vunpack.c.h.b16 %v3233
    %v4313 = vunpack.c.l.b16 %v3234
    %v4314 = vunpack.c.h.b16 %v3234
    %v4315 = vunpack.c.l.b16 %v3235
    %v4316 = vunpack.c.h.b16 %v3235
    %v4317 = vunpack.c.l.b16 %v3236
    %v4318 = vunpack.c.h.b16 %v3236
    %v4319 = vunpack.c.l.b16 %v3237
    %v4320 = vunpack.c.h.b16 %v3237
    %v4321 = vunpack.c.l.b16 %v3238
    %v4322 = vunpack.c.h.b16 %v3238
    %v4323 = vunpack.c.l.b16 %v3239
    %v4324 = vunpack.c.h.b16 %v3239
    %v4325 = vunpack.c.l.b16 %v3240
    %v4326 = vunpack.c.h.b16 %v3240
    %v4327 = vunpack.c.l.b16 %v3241
    %v4328 = vunpack.c.h.b16 %v3241
    %v4329 = vunpack.c.l.b16 %v3242
    %v4330 = vunpack.c.h.b16 %v3242
    %v4331 = vunpack.c.l.b16 %v3243
    %v4332 = vunpack.c.h.b16 %v3243
    %v4333 = vunpack.c.l.b16 %v3244
    %v4334 = vunpack.c.h.b16 %v3244
    %v4335 = vunpack.c.l.b16 %v3245
    %v4336 = vunpack.c.h.b16 %v3245
    %v4337 = vunpack.c.l.b16 %v3246
    %v4338 = vunpack.c.h.b16 %v3246
    %v4339 = vunpack.c.l.b16 %v3247
    %v4340 = vunpack.c.h.b16 %v3247
    %v4341 = vunpack.c.l.b16 %v3248
    %v4342 = vunpack.c.h.b16 %v3248
    %v4343 = vunpack.c.l.b16 %v3249
    %v4344 = vunpack.c.h.b16 %v3249
    %v4345 = vunpack.c.l.b16 %v3250
    %v4346 = vunpack.c.h.b16 %v3250
    %v4347 = vunpack.c.l.b16 %v3251
    %v4348 = vunpack.c.h.b16 %v3251
    %v4349 = vunpack.c.l.b16 %v3252
    %v4350 = vunpack.c.h.b16 %v3252
    %v4351 = vunpack.c.l.b16 %v3253
    %v4352 = vunpack.c.h.b16 %v3253
    %v4353 = vunpack.c.l.b16 %v3254
    %v4354 = vunpack.c.h.b16 %v3254
    %v4355 = vunpack.c.l.b16 %v3255
    %v4356 = vunpack.c.h.b16 %v3255
    %v4357 = vunpack.c.l.b16 %v3256
    %v4358 = vunpack.c.h.b16 %v3256
    %v4359 = vunpack.c.l.b16 %v3257
    %v4360 = vunpack.c.h.b16 %v3257
    %v4361 = vunpack.c.l.b16 %v3258
    %v4362 = vunpack.c.h.b16 %v3258
    %v4363 = vunpack.c.l.b16 %v3259
    %v4364 = vunpack.c.h.b16 %v3259
    %v4365 = vunpack.c.l.b16 %v3260
    %v4366 = vunpack.c.h.b16 %v3260
    %v4367 = vunpack.c.l.b16 %v3261
    %v4368 = vunpack.c.h.b16 %v3261
    %v4369 = vunpack.c.l.b16 %v3262
    %v4370 = vunpack.c.h.b16 %v3262
    %v4371 = vunpack.c.l.b16 %v3263
    %v4372 = vunpack.c.h.b16 %v3263
    %v4373 = vunpack.c.l.b16 %v3264
    %v4374 = vunpack.c.h.b16 %v3264
    %v4375 = vunpack.c.l.b16 %v3265
    %v4376 = vunpack.c.h.b16 %v3265
    %v4377 = vunpack.c.l.b16 %v3266
    %v4378 = vunpack.c.h.b16 %v3266
    %v4379 = vunpack.c.l.b16 %v3267
    %v4380 = vunpack.c.h.b16 %v3267
    %v4381 = vunpack.c.l.b16 %v3268
    %v4382 = vunpack.c.h.b16 %v3268
    %v4383 = vunpack.c.l.b16 %v3269
    %v4384 = vunpack.c.h.b16 %v3269
    %v4385 = vunpack.c.l.b16 %v3270
    %v4386 = vunpack.c.h.b16 %v3270
    %v4387 = vunpack.c.l.b16 %v3271
    %v4388 = vunpack.c.h.b16 %v3271
    %v4389 = vunpack.c.l.b16 %v3272
    %v4390 = vunpack.c.h.b16 %v3272
    %v4391 = vunpack.c.l.b16 %v3273
    %v4392 = vunpack.c.h.b16 %v3273
    %v4393 = vunpack.c.l.b16 %v3274
    %v4394 = vunpack.c.h.b16 %v3274
    %v4395 = vunpack.c.l.b16 %v3275
    %v4396 = vunpack.c.h.b16 %v3275
    %v4397 = vunpack.c.l.b16 %v3276
    %v4398 = vunpack.c.h.b16 %v3276
    %v4399 = vunpack.c.l.b16 %v3277
    %v4400 = vunpack.c.h.b16 %v3277
    %v4401 = vunpack.c.l.b16 %v3278
    %v4402 = vunpack.c.h.b16 %v3278
    %v4403 = vunpack.c.l.b16 %v3279
    %v4404 = vunpack.c.h.b16 %v3279
    %v4405 = vunpack.c.l.b16 %v3280
    %v4406 = vunpack.c.h.b16 %v3280
    %v4407 = vunpack.c.l.b16 %v3281
    %v4408 = vunpack.c.h.b16 %v3281
    %v4409 = vunpack.c.l.b16 %v3282
    %v4410 = vunpack.c.h.b16 %v3282
    %v4411 = vunpack.c.l.b16 %v3283
    %v4412 = vunpack.c.h.b16 %v3283
    %v4413 = vunpack.c.l.b16 %v3284
    %v4414 = vunpack.c.h.b16 %v3284
    %v4415 = vunpack.c.l.b16 %v3285
    %v4416 = vunpack.c.h.b16 %v3285
    %v4417 = vunpack.c.l.b16 %v3286
    %v4418 = vunpack.c.h.b16 %v3286
    %v4419 = vunpack.c.l.b16 %v3287
    %v4420 = vunpack.c.h.b16 %v3287
    %v4421 = vunpack.c.l.b16 %v3288
    %v4422 = vunpack.c.h.b16 %v3288
    %v4423 = vunpack.c.l.b16 %v3289
    %v4424 = vunpack.c.h.b16 %v3289
    %v4425 = vunpack.c.l.b16 %v3290
    %v4426 = vunpack.c.h.b16 %v3290
    %v4427 = vunpack.c.l.b16 %v3291
    %v4428 = vunpack.c.h.b16 %v3291
    %v4429 = vunpack.c.l.b16 %v3292
    %v4430 = vunpack.c.h.b16 %v3292
    %v4431 = vunpack.c.l.b16 %v3293
    %v4432 = vunpack.c.h.b16 %v3293
    %v4433 = vunpack.c.l.b16 %v3294
    %v4434 = vunpack.c.h.b16 %v3294
    %v4435 = vunpack.c.l.b16 %v3295
    %v4436 = vunpack.c.h.b16 %v3295
    %v4437 = vunpack.c.l.b16 %v3296
    %v4438 = vunpack.c.h.b16 %v3296
    %v4439 = vunpack.c.l.b16 %v3297
    %v4440 = vunpack.c.h.b16 %v3297
    %v4441 = vunpack.c.l.b16 %v3298
    %v4442 = vunpack.c.h.b16 %v3298
    %v4443 = vunpack.c.l.b16 %v3299
    %v4444 = vunpack.c.h.b16 %v3299
    %v4445 = vunpack.c.l.b16 %v3300
    %v4446 = vunpack.c.h.b16 %v3300
    %v4447 = vunpack.c.l.b16 %v3301
    %v4448 = vunpack.c.h.b16 %v3301
    %v4449 = vunpack.c.l.b16 %v3302
    %v4450 = vunpack.c.h.b16 %v3302
    %v4451 = vunpack.c.l.b16 %v3303
    %v4452 = vunpack.c.h.b16 %v3303
    %v4453 = vunpack.c.l.b16 %v3304
    %v4454 = vunpack.c.h.b16 %v3304
    %v4455 = vunpack.c.l.b16 %v3305
    %v4456 = vunpack.c.h.b16 %v3305
    %v4457 = vunpack.c.l.b16 %v3306
    %v4458 = vunpack.c.h.b16 %v3306
    %v4459 = vunpack.c.l.b16 %v3307
    %v4460 = vunpack.c.h.b16 %v3307
    %v4461 = vunpack.c.l.b16 %v3308
    %v4462 = vunpack.c.h.b16 %v3308
    %v4463 = vunpack.c.l.b16 %v3309
    %v4464 = vunpack.c.h.b16 %v3309
    %v4465 = vunpack.c.l.b16 %v3310
    %v4466 = vunpack.c.h.b16 %v3310
    %v4467 = vunpack.c.l.b16 %v3311
    %v4468 = vunpack.c.h.b16 %v3311
    %v4469 = vunpack.c.l.b16 %v3312
    %v4470 = vunpack.c.h.b16 %v3312
    %v4471 = vunpack.c.l.b16 %v3313
    %v4472 = vunpack.c.h.b16 %v3313
    %v4473 = vunpack.c.l.b16 %v3314
    %v4474 = vunpack.c.h.b16 %v3314
    %v4475 = vunpack.c.l.b16 %v3315
    %v4476 = vunpack.c.h.b16 %v3315
    %v4477 = vunpack.c.l.b16 %v3316
    %v4478 = vunpack.c.h.b16 %v3316
    %v4479 = vunpack.c.l.b16 %v3317
    %v4480 = vunpack.c.h.b16 %v3317
    %v4481 = vunpack.c.l.b16 %v3318
    %v4482 = vunpack.c.h.b16 %v3318
    %v4483 = vunpack.c.l.b16 %v3319
    %v4484 = vunpack.c.h.b16 %v3319
    %v4485 = vunpack.c.l.b16 %v3320
    %v4486 = vunpack.c.h.b16 %v3320
    %v4487 = vunpack.c.l.b16 %v3321
    %v4488 = vunpack.c.h.b16 %v3321
    %v4489 = vunpack.c.l.b16 %v3322
    %v4490 = vunpack.c.h.b16 %v3322
    %v4491 = vunpack.c.l.b16 %v3323
    %v4492 = vunpack.c.h.b16 %v3323
    %v4493 = vunpack.c.l.b16 %v3324
    %v4494 = vunpack.c.h.b16 %v3324
    %v4495 = vunpack.c.l.b16 %v3325
    %v4496 = vunpack.c.h.b16 %v3325
    %v4497 = vunpack.c.l.b16 %v3326
    %v4498 = vunpack.c.h.b16 %v3326
    %v4499 = vunpack.c.l.b16 %v3327
    %v4500 = vunpack.c.h.b16 %v3327
    %v4501 = vunpack.c.l.b16 %v3328
    %v4502 = vunpack.c.h.b16 %v3328
    %v4503 = vunpack.c.l.b16 %v3329
    %v4504 = vunpack.c.h.b16 %v3329
    %v4505 = vunpack.c.l.b16 %v3330
    %v4506 = vunpack.c.h.b16 %v3330
    %v4507 = vunpack.c.l.b16 %v3331
    %v4508 = vunpack.c.h.b16 %v3331
    %v4509 = vunpack.c.l.b16 %v3332
    %v4510 = vunpack.c.h.b16 %v3332
    %v4511 = vunpack.c.l.b16 %v3333
    %v4512 = vunpack.c.h.b16 %v3333
    %v4513 = vunpack.c.l.b16 %v3334
    %v4514 = vunpack.c.h.b16 %v3334
    %v4515 = vunpack.c.l.b16 %v3335
    %v4516 = vunpack.c.h.b16 %v3335
    %v4517 = vunpack.c.l.b16 %v3336
    %v4518 = vunpack.c.h.b16 %v3336
    %v4519 = vunpack.c.l.b16 %v3337
    %v4520 = vunpack.c.h.b16 %v3337
    %v4521 = vunpack.c.l.b16 %v3338
    %v4522 = vunpack.c.h.b16 %v3338
    %v4523 = vunpack.c.l.b16 %v3339
    %v4524 = vunpack.c.h.b16 %v3339
    %v4525 = vunpack.c.l.b16 %v3340
    %v4526 = vunpack.c.h.b16 %v3340
    %v4527 = vunpack.c.l.b16 %v3341
    %v4528 = vunpack.c.h.b16 %v3341
    %v4529 = vunpack.c.l.b16 %v3342
    %v4530 = vunpack.c.h.b16 %v3342
    %v4531 = vunpack.c.l.b16 %v3343
    %v4532 = vunpack.c.h.b16 %v3343
    %v4533 = vunpack.c.l.b16 %v3344
    %v4534 = vunpack.c.h.b16 %v3344
    %v4535 = vunpack.c.l.b16 %v3345
    %v4536 = vunpack.c.h.b16 %v3345
    %v4537 = vunpack.c.l.b16 %v3346
    %v4538 = vunpack.c.h.b16 %v3346
    %v4539 = vunpack.c.l.b16 %v3347
    %v4540 = vunpack.c.h.b16 %v3347
    %v4541 = vunpack.c.l.b16 %v3348
    %v4542 = vunpack.c.h.b16 %v3348
    %v4543 = vunpack.c.l.b16 %v3349
    %v4544 = vunpack.c.h.b16 %v3349
    %v4545 = vunpack.c.l.b16 %v3350
    %v4546 = vunpack.c.h.b16 %v3350
    %v4547 = vunpack.c.l.b16 %v3351
    %v4548 = vunpack.c.h.b16 %v3351
    %v4549 = vunpack.c.l.b16 %v3352
    %v4550 = vunpack.c.h.b16 %v3352
    %v4551 = vunpack.c.l.b16 %v3353
    %v4552 = vunpack.c.h.b16 %v3353
    %v4553 = vunpack.c.l.b16 %v3354
    %v4554 = vunpack.c.h.b16 %v3354
    %v4555 = vunpack.c.l.b16 %v3355
    %v4556 = vunpack.c.h.b16 %v3355
    %v4557 = vunpack.c.l.b16 %v3356
    %v4558 = vunpack.c.h.b16 %v3356
    %v4559 = vunpack.c.l.b16 %v3357
    %v4560 = vunpack.c.h.b16 %v3357
    %v4561 = vunpack.c.l.b16 %v3358
    %v4562 = vunpack.c.h.b16 %v3358
    %v4563 = vunpack.c.l.b16 %v3359
    %v4564 = vunpack.c.h.b16 %v3359
    %v4565 = vunpack.c.l.b16 %v3360
    %v4566 = vunpack.c.h.b16 %v3360
    %v4567 = vunpack.c.l.b16 %v3361
    %v4568 = vunpack.c.h.b16 %v3361
    %v4569 = vunpack.c.l.b16 %v3362
    %v4570 = vunpack.c.h.b16 %v3362
    %v4571 = vunpack.c.l.b16 %v3363
    %v4572 = vunpack.c.h.b16 %v3363
    %v4573 = vunpack.c.l.b16 %v3364
    %v4574 = vunpack.c.h.b16 %v3364
    %v4575 = vunpack.c.l.b16 %v3365
    %v4576 = vunpack.c.h.b16 %v3365
    %v4577 = vunpack.c.l.b16 %v3366
    %v4578 = vunpack.c.h.b16 %v3366
    %v4579 = vunpack.c.l.b16 %v3367
    %v4580 = vunpack.c.h.b16 %v3367
    %v4581 = vunpack.c.l.b16 %v3368
    %v4582 = vunpack.c.h.b16 %v3368
    %v4583 = vunpack.c.l.b16 %v3369
    %v4584 = vunpack.c.h.b16 %v3369
    %v4585 = vunpack.c.l.b16 %v3370
    %v4586 = vunpack.c.h.b16 %v3370
    %v4587 = vunpack.c.l.b16 %v3371
    %v4588 = vunpack.c.h.b16 %v3371
    %v4589 = vunpack.c.l.b16 %v3372
    %v4590 = vunpack.c.h.b16 %v3372
    %v4591 = vunpack.c.l.b16 %v3373
    %v4592 = vunpack.c.h.b16 %v3373
    %v4593 = vunpack.c.l.b16 %v3374
    %v4594 = vunpack.c.h.b16 %v3374
    %v4595 = vunpack.c.l.b16 %v3375
    %v4596 = vunpack.c.h.b16 %v3375
    %v4597 = vunpack.c.l.b16 %v3376
    %v4598 = vunpack.c.h.b16 %v3376
    %v4599 = vunpack.c.l.b16 %v3377
    %v4600 = vunpack.c.h.b16 %v3377
    %v4601 = vunpack.c.l.b16 %v3378
    %v4602 = vunpack.c.h.b16 %v3378
    %v4603 = vunpack.c.l.b16 %v3379
    %v4604 = vunpack.c.h.b16 %v3379
    %v4605 = vunpack.c.l.b16 %v3380
    %v4606 = vunpack.c.h.b16 %v3380
    %v4607 = vunpack.c.l.b16 %v3381
    %v4608 = vunpack.c.h.b16 %v3381
    %v4609 = vunpack.c.l.b16 %v3382
    %v4610 = vunpack.c.h.b16 %v3382
    %v4611 = vunpack.c.l.b16 %v3383
    %v4612 = vunpack.c.h.b16 %v3383
    %v4613 = vunpack.c.l.b16 %v3384
    %v4614 = vunpack.c.h.b16 %v3384
    %v4615 = vunpack.c.l.b16 %v3385
    %v4616 = vunpack.c.h.b16 %v3385
    %v4617 = vunpack.c.l.b16 %v3386
    %v4618 = vunpack.c.h.b16 %v3386
    %v4619 = vunpack.c.l.b16 %v3387
    %v4620 = vunpack.c.h.b16 %v3387
    %v4621 = vunpack.c.l.b16 %v3388
    %v4622 = vunpack.c.h.b16 %v3388
    %v4623 = vunpack.c.l.b16 %v3389
    %v4624 = vunpack.c.h.b16 %v3389
    %v4625 = vunpack.c.l.b16 %v3390
    %v4626 = vunpack.c.h.b16 %v3390
    %v4627 = vunpack.c.l.b16 %v3391
    %v4628 = vunpack.c.h.b16 %v3391
    %v4629 = vunpack.c.l.b16 %v3392
    %v4630 = vunpack.c.h.b16 %v3392
    %v4631 = vunpack.c.l.b16 %v3393
    %v4632 = vunpack.c.h.b16 %v3393
    %v4633 = vunpack.c.l.b16 %v3394
    %v4634 = vunpack.c.h.b16 %v3394
    %v4635 = vunpack.c.l.b16 %v3395
    %v4636 = vunpack.c.h.b16 %v3395
    %v4637 = vunpack.c.l.b16 %v3396
    %v4638 = vunpack.c.h.b16 %v3396
    %v4639 = vunpack.c.l.b16 %v3397
    %v4640 = vunpack.c.h.b16 %v3397
    %v4641 = vunpack.c.l.b16 %v3398
    %v4642 = vunpack.c.h.b16 %v3398
    %v4643 = vunpack.c.l.b16 %v3399
    %v4644 = vunpack.c.h.b16 %v3399
    %v4645 = vunpack.c.l.b16 %v3400
    %v4646 = vunpack.c.h.b16 %v3400
    %v4647 = vunpack.c.l.b16 %v3401
    %v4648 = vunpack.c.h.b16 %v3401
    %v4649 = vunpack.c.l.b16 %v3402
    %v4650 = vunpack.c.h.b16 %v3402
    %v4651 = vunpack.c.l.b16 %v3403
    %v4652 = vunpack.c.h.b16 %v3403
    %v4653 = vunpack.c.l.b16 %v3404
    %v4654 = vunpack.c.h.b16 %v3404
    %v4655 = vunpack.c.l.b16 %v3405
    %v4656 = vunpack.c.h.b16 %v3405
    %v4657 = vpack.c.b16 %v4225, %v4207
    %v4658 = vpack.c.b16 %v4226, %v4208
    %v4659 = vpack.c.b16 %v4227, %v4209
    %v4660 = vpack.c.b16 %v4228, %v4210
    %v4661 = vpack.c.b16 %v4229, %v4211
    %v4662 = vpack.c.b16 %v4230, %v4212
    %v4663 = vpack.c.b16 %v4231, %v4213
    %v4664 = vpack.c.b16 %v4232, %v4214
    %v4665 = vpack.c.b16 %v4233, %v4215
    %v4666 = vpack.c.b16 %v4234, %v4216
    %v4667 = vpack.c.b16 %v4235, %v4217
    %v4668 = vpack.c.b16 %v4236, %v4218
    %v4669 = vpack.c.b16 %v4237, %v4219
    %v4670 = vpack.c.b16 %v4238, %v4220
    %v4671 = vpack.c.b16 %v4239, %v4221
    %v4672 = vpack.c.b16 %v4240, %v4222
    %v4673 = vpack.c.b16 %v4241, %v4223
    %v4674 = vpack.c.b16 %v4242, %v4224
    %v4675 = vpack.c.b16 %v4261, %v4243
    %v4676 = vpack.c.b16 %v4262, %v4244
    %v4677 = vpack.c.b16 %v4263, %v4245
    %v4678 = vpack.c.b16 %v4264, %v4246
    %v4679 = vpack.c.b16 %v4265, %v4247
    %v4680 = vpack.c.b16 %v4266, %v4248
    %v4681 = vpack.c.b16 %v4267, %v4249
    %v4682 = vpack.c.b16 %v4268, %v4250
    %v4683 = vpack.c.b16 %v4269, %v4251
    %v4684 = vpack.c.b16 %v4270, %v4252
    %v4685 = vpack.c.b16 %v4271, %v4253
    %v4686 = vpack.c.b16 %v4272, %v4254
    %v4687 = vpack.c.b16 %v4273, %v4255
    %v4688 = vpack.c.b16 %v4274, %v4256
    %v4689 = vpack.c.b16 %v4275, %v4257
    %v4690 = vpack.c.b16 %v4276, %v4258
    %v4691 = vpack.c.b16 %v4277, %v4259
    %v4692 = vpack.c.b16 %v4278, %v4260
    %v4693 = vpack.c.b16 %v4297, %v4279
    %v4694 = vpack.c.b16 %v4298, %v4280
    %v4695 = vpack.c.b16 %v4299, %v4281
    %v4696 = vpack.c.b16 %v4300, %v4282
    %v4697 = vpack.c.b16 %v4301, %v4283
    %v4698 = vpack.c.b16 %v4302, %v4284
    %v4699 = vpack.c.b16 %v4303, %v4285
    %v4700 = vpack.c.b16 %v4304, %v4286
    %v4701 = vpack.c.b16 %v4305, %v4287
    %v4702 = vpack.c.b16 %v4306, %v4288
    %v4703 = vpack.c.b16 %v4307, %v4289
    %v4704 = vpack.c.b16 %v4308, %v4290
    %v4705 = vpack.c.b16 %v4309, %v4291
    %v4706 = vpack.c.b16 %v4310, %v4292
    %v4707 = vpack.c.b16 %v4311, %v4293
    %v4708 = vpack.c.b16 %v4312, %v4294
    %v4709 = vpack.c.b16 %v4313, %v4295
    %v4710 = vpack.c.b16 %v4314, %v4296
    %v4711 = vpack.c.b16 %v4333, %v4315
    %v4712 = vpack.c.b16 %v4334, %v4316
    %v4713 = vpack.c.b16 %v4335, %v4317
    %v4714 = vpack.c.b16 %v4336, %v4318
    %v4715 = vpack.c.b16 %v4337, %v4319
    %v4716 = vpack.c.b16 %v4338, %v4320
    %v4717 = vpack.c.b16 %v4339, %v4321
    %v4718 = vpack.c.b16 %v4340, %v4322
    %v4719 = vpack.c.b16 %v4341, %v4323
    %v4720 = vpack.c.b16 %v4342, %v4324
    %v4721 = vpack.c.b16 %v4343, %v4325
    %v4722 = vpack.c.b16 %v4344, %v4326
    %v4723 = vpack.c.b16 %v4345, %v4327
    %v4724 = vpack.c.b16 %v4346, %v4328
    %v4725 = vpack.c.b16 %v4347, %v4329
    %v4726 = vpack.c.b16 %v4348, %v4330
    %v4727 = vpack.c.b16 %v4349, %v4331
    %v4728 = vpack.c.b16 %v4350, %v4332
    %v4729 = vpack.c.b16 %v4369, %v4351
    %v4730 = vpack.c.b16 %v4370, %v4352
    %v4731 = vpack.c.b16 %v4371, %v4353
    %v4732 = vpack.c.b16 %v4372, %v4354
    %v4733 = vpack.c.b16 %v4373, %v4355
    %v4734 = vpack.c.b16 %v4374, %v4356
    %v4735 = vpack.c.b16 %v4375, %v4357
    %v4736 = vpack.c.b16 %v4376, %v4358
    %v4737 = vpack.c.b16 %v4377, %v4359
    %v4738 = vpack.c.b16 %v4378, %v4360
    %v4739 = vpack.c.b16 %v4379, %v4361
    %v4740 = vpack.c.b16 %v4380, %v4362
    %v4741 = vpack.c.b16 %v4381, %v4363
    %v4742 = vpack.c.b16 %v4382, %v4364
    %v4743 = vpack.c.b16 %v4383, %v4365
    %v4744 = vpack.c.b16 %v4384, %v4366
    %v4745 = vpack.c.b16 %v4385, %v4367
    %v4746 = vpack.c.b16 %v4386, %v4368
    %v4747 = vpack.c.b16 %v4405, %v4387
    %v4748 = vpack.c.b16 %v4406, %v4388
    %v4749 = vpack.c.b16 %v4407, %v4389
    %v4750 = vpack.c.b16 %v4408, %v4390
    %v4751 = vpack.c.b16 %v4409, %v4391
    %v4752 = vpack.c.b16 %v4410, %v4392
    %v4753 = vpack.c.b16 %v4411, %v4393
    %v4754 = vpack.c.b16 %v4412, %v4394
    %v4755 = vpack.c.b16 %v4413, %v4395
    %v4756 = vpack.c.b16 %v4414, %v4396
    %v4757 = vpack.c.b16 %v4415, %v4397
    %v4758 = vpack.c.b16 %v4416, %v4398
    %v4759 = vpack.c.b16 %v4417, %v4399
    %v4760 = vpack.c.b16 %v4418, %v4400
    %v4761 = vpack.c.b16 %v4419, %v4401
    %v4762 = vpack.c.b16 %v4420, %v4402
    %v4763 = vpack.c.b16 %v4421, %v4403
    %v4764 = vpack.c.b16 %v4422, %v4404
    %v4765 = vpack.c.b16 %v4441, %v4423
    %v4766 = vpack.c.b16 %v4442, %v4424
    %v4767 = vpack.c.b16 %v4443, %v4425
    %v4768 = vpack.c.b16 %v4444, %v4426
    %v4769 = vpack.c.b16 %v4445, %v4427
    %v4770 = vpack.c.b16 %v4446, %v4428
    %v4771 = vpack.c.b16 %v4447, %v4429
    %v4772 = vpack.c.b16 %v4448, %v4430
    %v4773 = vpack.c.b16 %v4449, %v4431
    %v4774 = vpack.c.b16 %v4450, %v4432
    %v4775 = vpack.c.b16 %v4451, %v4433
    %v4776 = vpack.c.b16 %v4452, %v4434
    %v4777 = vpack.c.b16 %v4453, %v4435
    %v4778 = vpack.c.b16 %v4454, %v4436
    %v4779 = vpack.c.b16 %v4455, %v4437
    %v4780 = vpack.c.b16 %v4456, %v4438
    %v4781 = vpack.c.b16 %v4457, %v4439
    %v4782 = vpack.c.b16 %v4458, %v4440
    %v4783 = vpack.c.b16 %v4477, %v4459
    %v4784 = vpack.c.b16 %v4478, %v4460
    %v4785 = vpack.c.b16 %v4479, %v4461
    %v4786 = vpack.c.b16 %v4480, %v4462
    %v4787 = vpack.c.b16 %v4481, %v4463
    %v4788 = vpack.c.b16 %v4482, %v4464
    %v4789 = vpack.c.b16 %v4483, %v4465
    %v4790 = vpack.c.b16 %v4484, %v4466
    %v4791 = vpack.c.b16 %v4485, %v4467
    %v4792 = vpack.c.b16 %v4486, %v4468
    %v4793 = vpack.c.b16 %v4487, %v4469
    %v4794 = vpack.c.b16 %v4488, %v4470
    %v4795 = vpack.c.b16 %v4489, %v4471
    %v4796 = vpack.c.b16 %v4490, %v4472
    %v4797 = vpack.c.b16 %v4491, %v4473
    %v4798 = vpack.c.b16 %v4492, %v4474
    %v4799 = vpack.c.b16 %v4493, %v4475
    %v4800 = vpack.c.b16 %v4494, %v4476
    %v4801 = vpack.c.b16 %v4513, %v4495
    %v4802 = vpack.c.b16 %v4514, %v4496
    %v4803 = vpack.c.b16 %v4515, %v4497
    %v4804 = vpack.c.b16 %v4516, %v4498
    %v4805 = vpack.c.b16 %v4517, %v4499
    %v4806 = vpack.c.b16 %v4518, %v4500
    %v4807 = vpack.c.b16 %v4519, %v4501
    %v4808 = vpack.c.b16 %v4520, %v4502
    %v4809 = vpack.c.b16 %v4521, %v4503
    %v4810 = vpack.c.b16 %v4522, %v4504
    %v4811 = vpack.c.b16 %v4523, %v4505
    %v4812 = vpack.c.b16 %v4524, %v4506
    %v4813 = vpack.c.b16 %v4525, %v4507
    %v4814 = vpack.c.b16 %v4526, %v4508
    %v4815 = vpack.c.b16 %v4527, %v4509
    %v4816 = vpack.c.b16 %v4528, %v4510
    %v4817 = vpack.c.b16 %v4529, %v4511
    %v4818 = vpack.c.b16 %v4530, %v4512
    %v4819 = vpack.c.b16 %v4549, %v4531
    %v4820 = vpack.c.b16 %v4550, %v4532
    %v4821 = vpack.c.b16 %v4551, %v4533
    %v4822 = vpack.c.b16 %v4552, %v4534
    %v4823 = vpack.c.b16 %v4553, %v4535
    %v4824 = vpack.c.b16 %v4554, %v4536
    %v4825 = vpack.c.b16 %v4555, %v4537
    %v4826 = vpack.c.b16 %v4556, %v4538
    %v4827 = vpack.c.b16 %v4557, %v4539
    %v4828 = vpack.c.b16 %v4558, %v4540
    %v4829 = vpack.c.b16 %v4559, %v4541
    %v4830 = vpack.c.b16 %v4560, %v4542
    %v4831 = vpack.c.b16 %v4561, %v4543
    %v4832 = vpack.c.b16 %v4562, %v4544
    %v4833 = vpack.c.b16 %v4563, %v4545
    %v4834 = vpack.c.b16 %v4564, %v4546
    %v4835 = vpack.c.b16 %v4565, %v4547
    %v4836 = vpack.c.b16 %v4566, %v4548
    %v4837 = vpack.c.b16 %v4585, %v4567
    %v4838 = vpack.c.b16 %v4586, %v4568
    %v4839 = vpack.c.b16 %v4587, %v4569
    %v4840 = vpack.c.b16 %v4588, %v4570
    %v4841 = vpack.c.b16 %v4589, %v4571
    %v4842 = vpack.c.b16 %v4590, %v4572
    %v4843 = vpack.c.b16 %v4591, %v4573
    %v4844 = vpack.c.b16 %v4592, %v4574
    %v4845 = vpack.c.b16 %v4593, %v4575
    %v4846 = vpack.c.b16 %v4594, %v4576
    %v4847 = vpack.c.b16 %v4595, %v4577
    %v4848 = vpack.c.b16 %v4596, %v4578
    %v4849 = vpack.c.b16 %v4597, %v4579
    %v4850 = vpack.c.b16 %v4598, %v4580
    %v4851 = vpack.c.b16 %v4599, %v4581
    %v4852 = vpack.c.b16 %v4600, %v4582
    %v4853 = vpack.c.b16 %v4601, %v4583
    %v4854 = vpack.c.b16 %v4602, %v4584
    %v4855 = vpack.c.b16 %v4621, %v4603
    %v4856 = vpack.c.b16 %v4622, %v4604
    %v4857 = vpack.c.b16 %v4623, %v4605
    %v4858 = vpack.c.b16 %v4624, %v4606
    %v4859 = vpack.c.b16 %v4625, %v4607
    %v4860 = vpack.c.b16 %v4626, %v4608
    %v4861 = vpack.c.b16 %v4627, %v4609
    %v4862 = vpack.c.b16 %v4628, %v4610
    %v4863 = vpack.c.b16 %v4629, %v4611
    %v4864 = vpack.c.b16 %v4630, %v4612
    %v4865 = vpack.c.b16 %v4631, %v4613
    %v4866 = vpack.c.b16 %v4632, %v4614
    %v4867 = vpack.c.b16 %v4633, %v4615
    %v4868 = vpack.c.b16 %v4634, %v4616
    %v4869 = vpack.c.b16 %v4635, %v4617
    %v4870 = vpack.c.b16 %v4636, %v4618
    %v4871 = vpack.c.b16 %v4637, %v4619
    %v4872 = vpack.c.b16 %v4638, %v4620
    %v4873 = vpack.c.b16 %v4639, %v4639
    %v4874 = vpack.c.b16 %v4640, %v4640
    %v4875 = vpack.c.b16 %v4641, %v4641
    %v4876 = vpack.c.b16 %v4642, %v4642
    %v4877 = vpack.c.b16 %v4643, %v4643
    %v4878 = vpack.c.b16 %v4644, %v4644
    %v4879 = vpack.c.b16 %v4645, %v4645
    %v4880 = vpack.c.b16 %v4646, %v4646
    %v4881 = vpack.c.b16 %v4647, %v4647
    %v4882 = vpack.c.b16 %v4648, %v4648
    %v4883 = vpack.c.b16 %v4649, %v4649
    %v4884 = vpack.c.b16 %v4650, %v4650
    %v4885 = vpack.c.b16 %v4651, %v4651
    %v4886 = vpack.c.b16 %v4652, %v4652
    %v4887 = vpack.c.b16 %v4653, %v4653
    %v4888 = vpack.c.b16 %v4654, %v4654
    %v4889 = vpack.c.b16 %v4655, %v4655
    %v4890 = vpack.c.b16 %v4656, %v4656
    %v5701 = vunpack.c.l.b16 %v3406
    %v5702 = vunpack.c.h.b16 %v3406
    %v5703 = vunpack.c.l.b16 %v3407
    %v5704 = vunpack.c.h.b16 %v3407
    %v5705 = vunpack.c.l.b16 %v3408
    %v5706 = vunpack.c.h.b16 %v3408
    %v5707 = vunpack.c.l.b16 %v3409
    %v5708 = vunpack.c.h.b16 %v3409
    %v5709 = vunpack.c.l.b16 %v3410
    %v5710 = vunpack.c.h.b16 %v3410
    %v5711 = vunpack.c.l.b16 %v3411
    %v5712 = vunpack.c.h.b16 %v3411
    %v5713 = vunpack.c.l.b16 %v3412
    %v5714 = vunpack.c.h.b16 %v3412
    %v5715 = vunpack.c.l.b16 %v3413
    %v5716 = vunpack.c.h.b16 %v3413
    %v5717 = vunpack.c.l.b16 %v3414
    %v5718 = vunpack.c.h.b16 %v3414
    %v5719 = vunpack.c.l.b16 %v3415
    %v5720 = vunpack.c.h.b16 %v3415
    %v5721 = vunpack.c.l.b16 %v3416
    %v5722 = vunpack.c.h.b16 %v3416
    %v5723 = vunpack.c.l.b16 %v3417
    %v5724 = vunpack.c.h.b16 %v3417
    %v5725 = vunpack.c.l.b16 %v3418
    %v5726 = vunpack.c.h.b16 %v3418
    %v5727 = vunpack.c.l.b16 %v3419
    %v5728 = vunpack.c.h.b16 %v3419
    %v5729 = vunpack.c.l.b16 %v3420
    %v5730 = vunpack.c.h.b16 %v3420
    %v5731 = vunpack.c.l.b16 %v3421
    %v5732 = vunpack.c.h.b16 %v3421
    %v5733 = vunpack.c.l.b16 %v3422
    %v5734 = vunpack.c.h.b16 %v3422
    %v5735 = vunpack.c.l.b16 %v3423
    %v5736 = vunpack.c.h.b16 %v3423
    %v5737 = vunpack.c.l.b16 %v3424
    %v5738 = vunpack.c.h.b16 %v3424
    %v5739 = vunpack.c.l.b16 %v3425
    %v5740 = vunpack.c.h.b16 %v3425
    %v5741 = vunpack.c.l.b16 %v3426
    %v5742 = vunpack.c.h.b16 %v3426
    %v5743 = vunpack.c.l.b16 %v3427
    %v5744 = vunpack.c.h.b16 %v3427
    %v5745 = vunpack.c.l.b16 %v3428
    %v5746 = vunpack.c.h.b16 %v3428
    %v5747 = vunpack.c.l.b16 %v3429
    %v5748 = vunpack.c.h.b16 %v3429
    %v5749 = vunpack.c.l.b16 %v3430
    %v5750 = vunpack.c.h.b16 %v3430
    %v5751 = vunpack.c.l.b16 %v3431
    %v5752 = vunpack.c.h.b16 %v3431
    %v5753 = vunpack.c.l.b16 %v3432
    %v5754 = vunpack.c.h.b16 %v3432
    %v5755 = vunpack.c.l.b16 %v3433
    %v5756 = vunpack.c.h.b16 %v3433
    %v5757 = vunpack.c.l.b16 %v3434
    %v5758 = vunpack.c.h.b16 %v3434
    %v5759 = vunpack.c.l.b16 %v3435
    %v5760 = vunpack.c.h.b16 %v3435
    %v5761 = vunpack.c.l.b16 %v3436
    %v5762 = vunpack.c.h.b16 %v3436
    %v5763 = vunpack.c.l.b16 %v3437
    %v5764 = vunpack.c.h.b16 %v3437
    %v5765 = vunpack.c.l.b16 %v3438
    %v5766 = vunpack.c.h.b16 %v3438
    %v5767 = vunpack.c.l.b16 %v3439
    %v5768 = vunpack.c.h.b16 %v3439
    %v5769 = vunpack.c.l.b16 %v3440
    %v5770 = vunpack.c.h.b16 %v3440
    %v5771 = vunpack.c.l.b16 %v3441
    %v5772 = vunpack.c.h.b16 %v3441
    %v5773 = vunpack.c.l.b16 %v3442
    %v5774 = vunpack.c.h.b16 %v3442
    %v5775 = vunpack.c.l.b16 %v3443
    %v5776 = vunpack.c.h.b16 %v3443
    %v5777 = vunpack.c.l.b16 %v3444
    %v5778 = vunpack.c.h.b16 %v3444
    %v5779 = vunpack.c.l.b16 %v3445
    %v5780 = vunpack.c.h.b16 %v3445
    %v5781 = vunpack.c.l.b16 %v3446
    %v5782 = vunpack.c.h.b16 %v3446
    %v5783 = vunpack.c.l.b16 %v3447
    %v5784 = vunpack.c.h.b16 %v3447
    %v5785 = vunpack.c.l.b16 %v3448
    %v5786 = vunpack.c.h.b16 %v3448
    %v5787 = vunpack.c.l.b16 %v3449
    %v5788 = vunpack.c.h.b16 %v3449
    %v5789 = vunpack.c.l.b16 %v3450
    %v5790 = vunpack.c.h.b16 %v3450
    %v5791 = vunpack.c.l.b16 %v3451
    %v5792 = vunpack.c.h.b16 %v3451
    %v5793 = vunpack.c.l.b16 %v3452
    %v5794 = vunpack.c.h.b16 %v3452
    %v5795 = vunpack.c.l.b16 %v3453
    %v5796 = vunpack.c.h.b16 %v3453
    %v5797 = vunpack.c.l.b16 %v3454
    %v5798 = vunpack.c.h.b16 %v3454
    %v5799 = vunpack.c.l.b16 %v3455
    %v5800 = vunpack.c.h.b16 %v3455
    %v5801 = vunpack.c.l.b16 %v3456
    %v5802 = vunpack.c.h.b16 %v3456
    %v5803 = vunpack.c.l.b16 %v3457
    %v5804 = vunpack.c.h.b16 %v3457
    %v5805 = vunpack.c.l.b16 %v3458
    %v5806 = vunpack.c.h.b16 %v3458
    %v5807 = vunpack.c.l.b16 %v3459
    %v5808 = vunpack.c.h.b16 %v3459
    %v5809 = vunpack.c.l.b16 %v3460
    %v5810 = vunpack.c.h.b16 %v3460
    %v5811 = vunpack.c.l.b16 %v3461
    %v5812 = vunpack.c.h.b16 %v3461
    %v5813 = vunpack.c.l.b16 %v3462
    %v5814 = vunpack.c.h.b16 %v3462
    %v5815 = vunpack.c.l.b16 %v3463
    %v5816 = vunpack.c.h.b16 %v3463
    %v5817 = vunpack.c.l.b16 %v3464
    %v5818 = vunpack.c.h.b16 %v3464
    %v5819 = vunpack.c.l.b16 %v3465
    %v5820 = vunpack.c.h.b16 %v3465
    %v5821 = vunpack.c.l.b16 %v3466
    %v5822 = vunpack.c.h.b16 %v3466
    %v5823 = vunpack.c.l.b16 %v3467
    %v5824 = vunpack.c.h.b16 %v3467
    %v5825 = vunpack.c.l.b16 %v3468
    %v5826 = vunpack.c.h.b16 %v3468
    %v5827 = vunpack.c.l.b16 %v3469
    %v5828 = vunpack.c.h.b16 %v3469
    %v5829 = vunpack.c.l.b16 %v3470
    %v5830 = vunpack.c.h.b16 %v3470
    %v5831 = vunpack.c.l.b16 %v3471
    %v5832 = vunpack.c.h.b16 %v3471
    %v5833 = vunpack.c.l.b16 %v3472
    %v5834 = vunpack.c.h.b16 %v3472
    %v5835 = vunpack.c.l.b16 %v3473
    %v5836 = vunpack.c.h.b16 %v3473
    %v5837 = vunpack.c.l.b16 %v3474
    %v5838 = vunpack.c.h.b16 %v3474
    %v5839 = vunpack.c.l.b16 %v3475
    %v5840 = vunpack.c.h.b16 %v3475
    %v5841 = vunpack.c.l.b16 %v3476
    %v5842 = vunpack.c.h.b16 %v3476
    %v5843 = vunpack.c.l.b16 %v3477
    %v5844 = vunpack.c.h.b16 %v3477
    %v5845 = vunpack.c.l.b16 %v3478
    %v5846 = vunpack.c.h.b16 %v3478
    %v5847 = vunpack.c.l.b16 %v3479
    %v5848 = vunpack.c.h.b16 %v3479
    %v5849 = vunpack.c.l.b16 %v3480
    %v5850 = vunpack.c.h.b16 %v3480
    %v5851 = vunpack.c.l.b16 %v3481
    %v5852 = vunpack.c.h.b16 %v3481
    %v5853 = vunpack.c.l.b16 %v3482
    %v5854 = vunpack.c.h.b16 %v3482
    %v5855 = vunpack.c.l.b16 %v3483
    %v5856 = vunpack.c.h.b16 %v3483
    %v5857 = vunpack.c.l.b16 %v3484
    %v5858 = vunpack.c.h.b16 %v3484
    %v5859 = vunpack.c.l.b16 %v3485
    %v5860 = vunpack.c.h.b16 %v3485
    %v5861 = vunpack.c.l.b16 %v3486
    %v5862 = vunpack.c.h.b16 %v3486
    %v5863 = vunpack.c.l.b16 %v3487
    %v5864 = vunpack.c.h.b16 %v3487
    %v5865 = vunpack.c.l.b16 %v3488
    %v5866 = vunpack.c.h.b16 %v3488
    %v5867 = vunpack.c.l.b16 %v3489
    %v5868 = vunpack.c.h.b16 %v3489
    %v5869 = vunpack.c.l.b16 %v3490
    %v5870 = vunpack.c.h.b16 %v3490
    %v5871 = vunpack.c.l.b16 %v3491
    %v5872 = vunpack.c.h.b16 %v3491
    %v5873 = vunpack.c.l.b16 %v3492
    %v5874 = vunpack.c.h.b16 %v3492
    %v5875 = vunpack.c.l.b16 %v3493
    %v5876 = vunpack.c.h.b16 %v3493
    %v5877 = vunpack.c.l.b16 %v3494
    %v5878 = vunpack.c.h.b16 %v3494
    %v5879 = vunpack.c.l.b16 %v3495
    %v5880 = vunpack.c.h.b16 %v3495
    %v5881 = vunpack.c.l.b16 %v3496
    %v5882 = vunpack.c.h.b16 %v3496
    %v5883 = vunpack.c.l.b16 %v3497
    %v5884 = vunpack.c.h.b16 %v3497
    %v5885 = vunpack.c.l.b16 %v3498
    %v5886 = vunpack.c.h.b16 %v3498
    %v5887 = vunpack.c.l.b16 %v3499
    %v5888 = vunpack.c.h.b16 %v3499
    %v5889 = vunpack.c.l.b16 %v3500
    %v5890 = vunpack.c.h.b16 %v3500
    %v5891 = vunpack.c.l.b16 %v3501
    %v5892 = vunpack.c.h.b16 %v3501
    %v5893 = vunpack.c.l.b16 %v3502
    %v5894 = vunpack.c.h.b16 %v3502
    %v5895 = vunpack.c.l.b16 %v3503
    %v5896 = vunpack.c.h.b16 %v3503
    %v5897 = vunpack.c.l.b16 %v3504
    %v5898 = vunpack.c.h.b16 %v3504
    %v5899 = vunpack.c.l.b16 %v3505
    %v5900 = vunpack.c.h.b16 %v3505
    %v5901 = vunpack.c.l.b16 %v3506
    %v5902 = vunpack.c.h.b16 %v3506
    %v5903 = vunpack.c.l.b16 %v3507
    %v5904 = vunpack.c.h.b16 %v3507
    %v5905 = vunpack.c.l.b16 %v3508
    %v5906 = vunpack.c.h.b16 %v3508
    %v5907 = vunpack.c.l.b16 %v3509
    %v5908 = vunpack.c.h.b16 %v3509
    %v5909 = vunpack.c.l.b16 %v3510
    %v5910 = vunpack.c.h.b16 %v3510
    %v5911 = vunpack.c.l.b16 %v3511
    %v5912 = vunpack.c.h.b16 %v3511
    %v5913 = vunpack.c.l.b16 %v3512
    %v5914 = vunpack.c.h.b16 %v3512
    %v5915 = vunpack.c.l.b16 %v3513
    %v5916 = vunpack.c.h.b16 %v3513
    %v5917 = vunpack.c.l.b16 %v3514
    %v5918 = vunpack.c.h.b16 %v3514
    %v5919 = vunpack.c.l.b16 %v3515
    %v5920 = vunpack.c.h.b16 %v3515
    %v5921 = vunpack.c.l.b16 %v3516
    %v5922 = vunpack.c.h.b16 %v3516
    %v5923 = vunpack.c.l.b16 %v3517
    %v5924 = vunpack.c.h.b16 %v3517
    %v5925 = vunpack.c.l.b16 %v3518
    %v5926 = vunpack.c.h.b16 %v3518
    %v5927 = vunpack.c.l.b16 %v3519
    %v5928 = vunpack.c.h.b16 %v3519
    %v5929 = vunpack.c.l.b16 %v3520
    %v5930 = vunpack.c.h.b16 %v3520
    %v5931 = vunpack.c.l.b16 %v3521
    %v5932 = vunpack.c.h.b16 %v3521
    %v5933 = vunpack.c.l.b16 %v3522
    %v5934 = vunpack.c.h.b16 %v3522
    %v5935 = vunpack.c.l.b16 %v3523
    %v5936 = vunpack.c.h.b16 %v3523
    %v5937 = vunpack.c.l.b16 %v3524
    %v5938 = vunpack.c.h.b16 %v3524
    %v5939 = vunpack.c.l.b16 %v3525
    %v5940 = vunpack.c.h.b16 %v3525
    %v5941 = vunpack.c.l.b16 %v3526
    %v5942 = vunpack.c.h.b16 %v3526
    %v5943 = vunpack.c.l.b16 %v3527
    %v5944 = vunpack.c.h.b16 %v3527
    %v5945 = vunpack.c.l.b16 %v3528
    %v5946 = vunpack.c.h.b16 %v3528
    %v5947 = vunpack.c.l.b16 %v3529
    %v5948 = vunpack.c.h.b16 %v3529
    %v5949 = vunpack.c.l.b16 %v3530
    %v5950 = vunpack.c.h.b16 %v3530
    %v5951 = vunpack.c.l.b16 %v3531
    %v5952 = vunpack.c.h.b16 %v3531
    %v5953 = vunpack.c.l.b16 %v3532
    %v5954 = vunpack.c.h.b16 %v3532
    %v5955 = vunpack.c.l.b16 %v3533
    %v5956 = vunpack.c.h.b16 %v3533
    %v5957 = vunpack.c.l.b16 %v3534
    %v5958 = vunpack.c.h.b16 %v3534
    %v5959 = vunpack.c.l.b16 %v3535
    %v5960 = vunpack.c.h.b16 %v3535
    %v5961 = vunpack.c.l.b16 %v3536
    %v5962 = vunpack.c.h.b16 %v3536
    %v5963 = vunpack.c.l.b16 %v3537
    %v5964 = vunpack.c.h.b16 %v3537
    %v5965 = vunpack.c.l.b16 %v3538
    %v5966 = vunpack.c.h.b16 %v3538
    %v5967 = vunpack.c.l.b16 %v3539
    %v5968 = vunpack.c.h.b16 %v3539
    %v5969 = vunpack.c.l.b16 %v3540
    %v5970 = vunpack.c.h.b16 %v3540
    %v5971 = vunpack.c.l.b16 %v3541
    %v5972 = vunpack.c.h.b16 %v3541
    %v5973 = vunpack.c.l.b16 %v3542
    %v5974 = vunpack.c.h.b16 %v3542
    %v5975 = vunpack.c.l.b16 %v3543
    %v5976 = vunpack.c.h.b16 %v3543
    %v5977 = vunpack.c.l.b16 %v3544
    %v5978 = vunpack.c.h.b16 %v3544
    %v5979 = vunpack.c.l.b16 %v3545
    %v5980 = vunpack.c.h.b16 %v3545
    %v5981 = vunpack.c.l.b16 %v3546
    %v5982 = vunpack.c.h.b16 %v3546
    %v5983 = vunpack.c.l.b16 %v3547
    %v5984 = vunpack.c.h.b16 %v3547
    %v5985 = vunpack.c.l.b16 %v3548
    %v5986 = vunpack.c.h.b16 %v3548
    %v5987 = vunpack.c.l.b16 %v3549
    %v5988 = vunpack.c.h.b16 %v3549
    %v5989 = vunpack.c.l.b16 %v3550
    %v5990 = vunpack.c.h.b16 %v3550
    %v5991 = vunpack.c.l.b16 %v3551
    %v5992 = vunpack.c.h.b16 %v3551
    %v5993 = vunpack.c.l.b16 %v3552
    %v5994 = vunpack.c.h.b16 %v3552
    %v5995 = vunpack.c.l.b16 %v3553
    %v5996 = vunpack.c.h.b16 %v3553
    %v5997 = vunpack.c.l.b16 %v3554
    %v5998 = vunpack.c.h.b16 %v3554
    %v5999 = vunpack.c.l.b16 %v3555
    %v6000 = vunpack.c.h.b16 %v3555
    %v6001 = vunpack.c.l.b16 %v3556
    %v6002 = vunpack.c.h.b16 %v3556
    %v6003 = vunpack.c.l.b16 %v3557
    %v6004 = vunpack.c.h.b16 %v3557
    %v6005 = vunpack.c.l.b16 %v3558
    %v6006 = vunpack.c.h.b16 %v3558
    %v6007 = vunpack.c.l.b16 %v3559
    %v6008 = vunpack.c.h.b16 %v3559
    %v6009 = vunpack.c.l.b16 %v3560
    %v6010 = vunpack.c.h.b16 %v3560
    %v6011 = vunpack.c.l.b16 %v3561
    %v6012 = vunpack.c.h.b16 %v3561
    %v6013 = vunpack.c.l.b16 %v3562
    %v6014 = vunpack.c.h.b16 %v3562
    %v6015 = vunpack.c.l.b16 %v3563
    %v6016 = vunpack.c.h.b16 %v3563
    %v6017 = vunpack.c.l.b16 %v3564
    %v6018 = vunpack.c.h.b16 %v3564
    %v6019 = vunpack.c.l.b16 %v3565
    %v6020 = vunpack.c.h.b16 %v3565
    %v6021 = vunpack.c.l.b16 %v3566
    %v6022 = vunpack.c.h.b16 %v3566
    %v6023 = vunpack.c.l.b16 %v3567
    %v6024 = vunpack.c.h.b16 %v3567
    %v6025 = vunpack.c.l.b16 %v3568
    %v6026 = vunpack.c.h.b16 %v3568
    %v6027 = vunpack.c.l.b16 %v3569
    %v6028 = vunpack.c.h.b16 %v3569
    %v6029 = vunpack.c.l.b16 %v3570
    %v6030 = vunpack.c.h.b16 %v3570
    %v6031 = vunpack.c.l.b16 %v3571
    %v6032 = vunpack.c.h.b16 %v3571
    %v6033 = vunpack.c.l.b16 %v3572
    %v6034 = vunpack.c.h.b16 %v3572
    %v6035 = vunpack.c.l.b16 %v3573
    %v6036 = vunpack.c.h.b16 %v3573
    %v6037 = vunpack.c.l.b16 %v3574
    %v6038 = vunpack.c.h.b16 %v3574
    %v6039 = vunpack.c.l.b16 %v3575
    %v6040 = vunpack.c.h.b16 %v3575
    %v6041 = vunpack.c.l.b16 %v3576
    %v6042 = vunpack.c.h.b16 %v3576
    %v6043 = vunpack.c.l.b16 %v3577
    %v6044 = vunpack.c.h.b16 %v3577
    %v6045 = vunpack.c.l.b16 %v3578
    %v6046 = vunpack.c.h.b16 %v3578
    %v6047 = vunpack.c.l.b16 %v3579
    %v6048 = vunpack.c.h.b16 %v3579
    %v6049 = vunpack.c.l.b16 %v3580
    %v6050 = vunpack.c.h.b16 %v3580
    %v6051 = vunpack.c.l.b16 %v3581
    %v6052 = vunpack.c.h.b16 %v3581
    %v6053 = vunpack.c.l.b16 %v3582
    %v6054 = vunpack.c.h.b16 %v3582
    %v6055 = vunpack.c.l.b16 %v3583
    %v6056 = vunpack.c.h.b16 %v3583
    %v6057 = vunpack.c.l.b16 %v3584
    %v6058 = vunpack.c.h.b16 %v3584
    %v6059 = vunpack.c.l.b16 %v3585
    %v6060 = vunpack.c.h.b16 %v3585
    %v6061 = vunpack.c.l.b16 %v3586
    %v6062 = vunpack.c.h.b16 %v3586
    %v6063 = vunpack.c.l.b16 %v3587
    %v6064 = vunpack.c.h.b16 %v3587
    %v6065 = vunpack.c.l.b16 %v3588
    %v6066 = vunpack.c.h.b16 %v3588
    %v6067 = vunpack.c.l.b16 %v3589
    %v6068 = vunpack.c.h.b16 %v3589
    %v6069 = vunpack.c.l.b16 %v3590
    %v6070 = vunpack.c.h.b16 %v3590
    %v6071 = vunpack.c.l.b16 %v3591
    %v6072 = vunpack.c.h.b16 %v3591
    %v6073 = vunpack.c.l.b16 %v3592
    %v6074 = vunpack.c.h.b16 %v3592
    %v6075 = vunpack.c.l.b16 %v3593
    %v6076 = vunpack.c.h.b16 %v3593
    %v6077 = vunpack.c.l.b16 %v3594
    %v6078 = vunpack.c.h.b16 %v3594
    %v6079 = vunpack.c.l.b16 %v3595
    %v6080 = vunpack.c.h.b16 %v3595
    %v6081 = vunpack.c.l.b16 %v3596
    %v6082 = vunpack.c.h.b16 %v3596
    %v6083 = vunpack.c.l.b16 %v3597
    %v6084 = vunpack.c.h.b16 %v3597
    %v6085 = vunpack.c.l.b16 %v3598
    %v6086 = vunpack.c.h.b16 %v3598
    %v6087 = vunpack.c.l.b16 %v3599
    %v6088 = vunpack.c.h.b16 %v3599
    %v6089 = vunpack.c.l.b16 %v3600
    %v6090 = vunpack.c.h.b16 %v3600
    %v6091 = vunpack.c.l.b16 %v3601
    %v6092 = vunpack.c.h.b16 %v3601
    %v6093 = vunpack.c.l.b16 %v3602
    %v6094 = vunpack.c.h.b16 %v3602
    %v6095 = vunpack.c.l.b16 %v3603
    %v6096 = vunpack.c.h.b16 %v3603
    %v6097 = vunpack.c.l.b16 %v3604
    %v6098 = vunpack.c.h.b16 %v3604
    %v6099 = vunpack.c.l.b16 %v3605
    %v6100 = vunpack.c.h.b16 %v3605
    %v6101 = vunpack.c.l.b16 %v3606
    %v6102 = vunpack.c.h.b16 %v3606
    %v6103 = vunpack.c.l.b16 %v3607
    %v6104 = vunpack.c.h.b16 %v3607
    %v6105 = vunpack.c.l.b16 %v3608
    %v6106 = vunpack.c.h.b16 %v3608
    %v6107 = vunpack.c.l.b16 %v3609
    %v6108 = vunpack.c.h.b16 %v3609
    %v6109 = vunpack.c.l.b16 %v3610
    %v6110 = vunpack.c.h.b16 %v3610
    %v6111 = vunpack.c.l.b16 %v3611
    %v6112 = vunpack.c.h.b16 %v3611
    %v6113 = vunpack.c.l.b16 %v3612
    %v6114 = vunpack.c.h.b16 %v3612
    %v6115 = vunpack.c.l.b16 %v3613
    %v6116 = vunpack.c.h.b16 %v3613
    %v6117 = vunpack.c.l.b16 %v3614
    %v6118 = vunpack.c.h.b16 %v3614
    %v6119 = vunpack.c.l.b16 %v3615
    %v6120 = vunpack.c.h.b16 %v3615
    %v6121 = vunpack.c.l.b16 %v3616
    %v6122 = vunpack.c.h.b16 %v3616
    %v6123 = vunpack.c.l.b16 %v3617
    %v6124 = vunpack.c.h.b16 %v3617
    %v6125 = vunpack.c.l.b16 %v3618
    %v6126 = vunpack.c.h.b16 %v3618
    %v6127 = vunpack.c.l.b16 %v3619
    %v6128 = vunpack.c.h.b16 %v3619
    %v6129 = vunpack.c.l.b16 %v3620
    %v6130 = vunpack.c.h.b16 %v3620
    %v6131 = vunpack.c.l.b16 %v3621
    %v6132 = vunpack.c.h.b16 %v3621
    %v6133 = vunpack.c.l.b16 %v3622
    %v6134 = vunpack.c.h.b16 %v3622
    %v6135 = vunpack.c.l.b16 %v3623
    %v6136 = vunpack.c.h.b16 %v3623
    %v6137 = vunpack.c.l.b16 %v3624
    %v6138 = vunpack.c.h.b16 %v3624
    %v6139 = vunpack.c.l.b16 %v3625
    %v6140 = vunpack.c.h.b16 %v3625
    %v6141 = vunpack.c.l.b16 %v3626
    %v6142 = vunpack.c.h.b16 %v3626
    %v6143 = vunpack.c.l.b16 %v3627
    %v6144 = vunpack.c.h.b16 %v3627
    %v6145 = vunpack.c.l.b16 %v3628
    %v6146 = vunpack.c.h.b16 %v3628
    %v6147 = vunpack.c.l.b16 %v3629
    %v6148 = vunpack.c.h.b16 %v3629
    %v6149 = vunpack.c.l.b16 %v3630
    %v6150 = vunpack.c.h.b16 %v3630
    %v6151 = vunpack.c.l.b16 %v3631
    %v6152 = vunpack.c.h.b16 %v3631
    %v6153 = vunpack.c.l.b16 %v3632
    %v6154 = vunpack.c.h.b16 %v3632
    %v6155 = vunpack.c.l.b16 %v3633
    %v6156 = vunpack.c.h.b16 %v3633
    %v6157 = vunpack.c.l.b16 %v3634
    %v6158 = vunpack.c.h.b16 %v3634
    %v6159 = vunpack.c.l.b16 %v3635
    %v6160 = vunpack.c.h.b16 %v3635
    %v6161 = vunpack.c.l.b16 %v3636
    %v6162 = vunpack.c.h.b16 %v3636
    %v6163 = vunpack.c.l.b16 %v3637
    %v6164 = vunpack.c.h.b16 %v3637
    %v6165 = vunpack.c.l.b16 %v3638
    %v6166 = vunpack.c.h.b16 %v3638
    %v6167 = vunpack.c.l.b16 %v3639
    %v6168 = vunpack.c.h.b16 %v3639
    %v6169 = vunpack.c.l.b16 %v3640
    %v6170 = vunpack.c.h.b16 %v3640
    %v6171 = vunpack.c.l.b16 %v3641
    %v6172 = vunpack.c.h.b16 %v3641
    %v6173 = vunpack.c.l.b16 %v3642
    %v6174 = vunpack.c.h.b16 %v3642
    %v6175 = vunpack.c.l.b16 %v3643
    %v6176 = vunpack.c.h.b16 %v3643
    %v6177 = vunpack.c.l.b16 %v3644
    %v6178 = vunpack.c.h.b16 %v3644
    %v6179 = vunpack.c.l.b16 %v3645
    %v6180 = vunpack.c.h.b16 %v3645
    %v6181 = vunpack.c.l.b16 %v3646
    %v6182 = vunpack.c.h.b16 %v3646
    %v6183 = vunpack.c.l.b16 %v3647
    %v6184 = vunpack.c.h.b16 %v3647
    %v6185 = vunpack.c.l.b16 %v3648
    %v6186 = vunpack.c.h.b16 %v3648
    %v6187 = vunpack.c.l.b16 %v3649
    %v6188 = vunpack.c.h.b16 %v3649
    %v6189 = vunpack.c.l.b16 %v3650
    %v6190 = vunpack.c.h.b16 %v3650
    %v6191 = vunpack.c.l.b16 %v3651
    %v6192 = vunpack.c.h.b16 %v3651
    %v6193 = vunpack.c.l.b16 %v3652
    %v6194 = vunpack.c.h.b16 %v3652
    %v6195 = vunpack.c.l.b16 %v3653
    %v6196 = vunpack.c.h.b16 %v3653
    %v6197 = vunpack.c.l.b16 %v3654
    %v6198 = vunpack.c.h.b16 %v3654
    %v6199 = vunpack.c.l.b16 %v3655
    %v6200 = vunpack.c.h.b16 %v3655
    %v6201 = vunpack.c.l.b16 %v3656
    %v6202 = vunpack.c.h.b16 %v3656
    %v6203 = vunpack.c.l.b16 %v3657
    %v6204 = vunpack.c.h.b16 %v3657
    %v6205 = vunpack.c.l.b16 %v3658
    %v6206 = vunpack.c.h.b16 %v3658
    %v6207 = vunpack.c.l.b16 %v3659
    %v6208 = vunpack.c.h.b16 %v3659
    %v6209 = vunpack.c.l.b16 %v3660
    %v6210 = vunpack.c.h.b16 %v3660
    %v6211 = vunpack.c.l.b16 %v3661
    %v6212 = vunpack.c.h.b16 %v3661
    %v6213 = vunpack.c.l.b16 %v3662
    %v6214 = vunpack.c.h.b16 %v3662
    %v6215 = vunpack.c.l.b16 %v3663
    %v6216 = vunpack.c.h.b16 %v3663
    %v6217 = vunpack.c.l.b16 %v3664
    %v6218 = vunpack.c.h.b16 %v3664
    %v6219 = vunpack.c.l.b16 %v3665
    %v6220 = vunpack.c.h.b16 %v3665
    %v6221 = vunpack.c.l.b16 %v3666
    %v6222 = vunpack.c.h.b16 %v3666
    %v6223 = vunpack.c.l.b16 %v3667
    %v6224 = vunpack.c.h.b16 %v3667
    %v6225 = vunpack.c.l.b16 %v3668
    %v6226 = vunpack.c.h.b16 %v3668
    %v6227 = vunpack.c.l.b16 %v3669
    %v6228 = vunpack.c.h.b16 %v3669
    %v6229 = vunpack.c.l.b16 %v3670
    %v6230 = vunpack.c.h.b16 %v3670
    %v6231 = vunpack.c.l.b16 %v3671
    %v6232 = vunpack.c.h.b16 %v3671
    %v6233 = vunpack.c.l.b16 %v3672
    %v6234 = vunpack.c.h.b16 %v3672
    %v6235 = vunpack.c.l.b16 %v3673
    %v6236 = vunpack.c.h.b16 %v3673
    %v6237 = vunpack.c.l.b16 %v3674
    %v6238 = vunpack.c.h.b16 %v3674
    %v6239 = vunpack.c.l.b16 %v3675
    %v6240 = vunpack.c.h.b16 %v3675
    %v6241 = vunpack.c.l.b16 %v3676
    %v6242 = vunpack.c.h.b16 %v3676
    %v6243 = vunpack.c.l.b16 %v3677
    %v6244 = vunpack.c.h.b16 %v3677
    %v6245 = vunpack.c.l.b16 %v3678
    %v6246 = vunpack.c.h.b16 %v3678
    %v6247 = vunpack.c.l.b16 %v3679
    %v6248 = vunpack.c.h.b16 %v3679
    %v6249 = vunpack.c.l.b16 %v3680
    %v6250 = vunpack.c.h.b16 %v3680
    %v6251 = vunpack.c.l.b16 %v3681
    %v6252 = vunpack.c.h.b16 %v3681
    %v6253 = vunpack.c.l.b16 %v3682
    %v6254 = vunpack.c.h.b16 %v3682
    %v6255 = vunpack.c.l.b16 %v3683
    %v6256 = vunpack.c.h.b16 %v3683
    %v6257 = vunpack.c.l.b16 %v3684
    %v6258 = vunpack.c.h.b16 %v3684
    %v6259 = vunpack.c.l.b16 %v3685
    %v6260 = vunpack.c.h.b16 %v3685
    %v6261 = vunpack.c.l.b16 %v3686
    %v6262 = vunpack.c.h.b16 %v3686
    %v6263 = vunpack.c.l.b16 %v3687
    %v6264 = vunpack.c.h.b16 %v3687
    %v6265 = vunpack.c.l.b16 %v3688
    %v6266 = vunpack.c.h.b16 %v3688
    %v6267 = vunpack.c.l.b16 %v3689
    %v6268 = vunpack.c.h.b16 %v3689
    %v6269 = vunpack.c.l.b16 %v3690
    %v6270 = vunpack.c.h.b16 %v3690
    %v6271 = vunpack.c.l.b16 %v3691
    %v6272 = vunpack.c.h.b16 %v3691
    %v6273 = vunpack.c.l.b16 %v3692
    %v6274 = vunpack.c.h.b16 %v3692
    %v6275 = vunpack.c.l.b16 %v3693
    %v6276 = vunpack.c.h.b16 %v3693
    %v6277 = vunpack.c.l.b16 %v3694
    %v6278 = vunpack.c.h.b16 %v3694
    %v6279 = vunpack.c.l.b16 %v3695
    %v6280 = vunpack.c.h.b16 %v3695
    %v6281 = vunpack.c.l.b16 %v3696
    %v6282 = vunpack.c.h.b16 %v3696
    %v6283 = vunpack.c.l.b16 %v3697
    %v6284 = vunpack.c.h.b16 %v3697
    %v6285 = vunpack.c.l.b16 %v3698
    %v6286 = vunpack.c.h.b16 %v3698
    %v6287 = vunpack.c.l.b16 %v3699
    %v6288 = vunpack.c.h.b16 %v3699
    %v6289 = vunpack.c.l.b16 %v3700
    %v6290 = vunpack.c.h.b16 %v3700
    %v6291 = vunpack.c.l.b16 %v3701
    %v6292 = vunpack.c.h.b16 %v3701
    %v6293 = vunpack.c.l.b16 %v3702
    %v6294 = vunpack.c.h.b16 %v3702
    %v6295 = vunpack.c.l.b16 %v3703
    %v6296 = vunpack.c.h.b16 %v3703
    %v6297 = vunpack.c.l.b16 %v3704
    %v6298 = vunpack.c.h.b16 %v3704
    %v6299 = vunpack.c.l.b16 %v3705
    %v6300 = vunpack.c.h.b16 %v3705
    %v6301 = vunpack.c.l.b16 %v3706
    %v6302 = vunpack.c.h.b16 %v3706
    %v6303 = vunpack.c.l.b16 %v3707
    %v6304 = vunpack.c.h.b16 %v3707
    %v6305 = vunpack.c.l.b16 %v3708
    %v6306 = vunpack.c.h.b16 %v3708
    %v6307 = vunpack.c.l.b16 %v3709
    %v6308 = vunpack.c.h.b16 %v3709
    %v6309 = vunpack.c.l.b16 %v3710
    %v6310 = vunpack.c.h.b16 %v3710
    %v6311 = vunpack.c.l.b16 %v3711
    %v6312 = vunpack.c.h.b16 %v3711
    %v6313 = vunpack.c.l.b16 %v3712
    %v6314 = vunpack.c.h.b16 %v3712
    %v6315 = vunpack.c.l.b16 %v3713
    %v6316 = vunpack.c.h.b16 %v3713
    %v6317 = vunpack.c.l.b16 %v3714
    %v6318 = vunpack.c.h.b16 %v3714
    %v6319 = vunpack.c.l.b16 %v3715
    %v6320 = vunpack.c.h.b16 %v3715
    %v6321 = vunpack.c.l.b16 %v3716
    %v6322 = vunpack.c.h.b16 %v3716
    %v6323 = vunpack.c.l.b16 %v3717
    %v6324 = vunpack.c.h.b16 %v3717
    %v6325 = vunpack.c.l.b16 %v3718
    %v6326 = vunpack.c.h.b16 %v3718
    %v6327 = vunpack.c.l.b16 %v3719
    %v6328 = vunpack.c.h.b16 %v3719
    %v6329 = vunpack.c.l.b16 %v3720
    %v6330 = vunpack.c.h.b16 %v3720
    %v6331 = vunpack.c.l.b16 %v3721
    %v6332 = vunpack.c.h.b16 %v3721
    %v6333 = vunpack.c.l.b16 %v3722
    %v6334 = vunpack.c.h.b16 %v3722
    %v6335 = vunpack.c.l.b16 %v3723
    %v6336 = vunpack.c.h.b16 %v3723
    %v6337 = vunpack.c.l.b16 %v3724
    %v6338 = vunpack.c.h.b16 %v3724
    %v6339 = vunpack.c.l.b16 %v3725
    %v6340 = vunpack.c.h.b16 %v3725
    %v6341 = vunpack.c.l.b16 %v3726
    %v6342 = vunpack.c.h.b16 %v3726
    %v6343 = vunpack.c.l.b16 %v3727
    %v6344 = vunpack.c.h.b16 %v3727
    %v6345 = vunpack.c.l.b16 %v3728
    %v6346 = vunpack.c.h.b16 %v3728
    %v6347 = vunpack.c.l.b16 %v3729
    %v6348 = vunpack.c.h.b16 %v3729
    %v6349 = vunpack.c.l.b16 %v3730
    %v6350 = vunpack.c.h.b16 %v3730
    %v6351 = vunpack.c.l.b16 %v3731
    %v6352 = vunpack.c.h.b16 %v3731
    %v6353 = vunpack.c.l.b16 %v3732
    %v6354 = vunpack.c.h.b16 %v3732
    %v6355 = vunpack.c.l.b16 %v3733
    %v6356 = vunpack.c.h.b16 %v3733
    %v6357 = vunpack.c.l.b16 %v3734
    %v6358 = vunpack.c.h.b16 %v3734
    %v6359 = vunpack.c.l.b16 %v3735
    %v6360 = vunpack.c.h.b16 %v3735
    %v6361 = vunpack.c.l.b16 %v3736
    %v6362 = vunpack.c.h.b16 %v3736
    %v6363 = vunpack.c.l.b16 %v3737
    %v6364 = vunpack.c.h.b16 %v3737
    %v6365 = vunpack.c.l.b16 %v3738
    %v6366 = vunpack.c.h.b16 %v3738
    %v6367 = vunpack.c.l.b16 %v3739
    %v6368 = vunpack.c.h.b16 %v3739
    %v6369 = vunpack.c.l.b16 %v3740
    %v6370 = vunpack.c.h.b16 %v3740
    %v6371 = vunpack.c.l.b16 %v3741
    %v6372 = vunpack.c.h.b16 %v3741
    %v6373 = vunpack.c.l.b16 %v3742
    %v6374 = vunpack.c.h.b16 %v3742
    %v6375 = vunpack.c.l.b16 %v3743
    %v6376 = vunpack.c.h.b16 %v3743
    %v6377 = vunpack.c.l.b16 %v3744
    %v6378 = vunpack.c.h.b16 %v3744
    %v6379 = vunpack.c.l.b16 %v3745
    %v6380 = vunpack.c.h.b16 %v3745
    %v6381 = vunpack.c.l.b16 %v3746
    %v6382 = vunpack.c.h.b16 %v3746
    %v6383 = vunpack.c.l.b16 %v3747
    %v6384 = vunpack.c.h.b16 %v3747
    %v6385 = vunpack.c.l.b16 %v3748
    %v6386 = vunpack.c.h.b16 %v3748
    %v6387 = vunpack.c.l.b16 %v3749
    %v6388 = vunpack.c.h.b16 %v3749
    %v6389 = vunpack.c.l.b16 %v3750
    %v6390 = vunpack.c.h.b16 %v3750
    %v6391 = vunpack.c.l.b16 %v3751
    %v6392 = vunpack.c.h.b16 %v3751
    %v6393 = vunpack.c.l.b16 %v3752
    %v6394 = vunpack.c.h.b16 %v3752
    %v6395 = vunpack.c.l.b16 %v3753
    %v6396 = vunpack.c.h.b16 %v3753
    %v6397 = vunpack.c.l.b16 %v3754
    %v6398 = vunpack.c.h.b16 %v3754
    %v6399 = vunpack.c.l.b16 %v3755
    %v6400 = vunpack.c.h.b16 %v3755
    %v6401 = vunpack.c.l.b16 %v3756
    %v6402 = vunpack.c.h.b16 %v3756
    %v6403 = vunpack.c.l.b16 %v3757
    %v6404 = vunpack.c.h.b16 %v3757
    %v6405 = vunpack.c.l.b16 %v3758
    %v6406 = vunpack.c.h.b16 %v3758
    %v6407 = vunpack.c.l.b16 %v3759
    %v6408 = vunpack.c.h.b16 %v3759
    %v6409 = vunpack.c.l.b16 %v3760
    %v6410 = vunpack.c.h.b16 %v3760
    %v6411 = vunpack.c.l.b16 %v3761
    %v6412 = vunpack.c.h.b16 %v3761
    %v6413 = vunpack.c.l.b16 %v3762
    %v6414 = vunpack.c.h.b16 %v3762
    %v6415 = vunpack.c.l.b16 %v3763
    %v6416 = vunpack.c.h.b16 %v3763
    %v6417 = vunpack.c.l.b16 %v3764
    %v6418 = vunpack.c.h.b16 %v3764
    %v6419 = vunpack.c.l.b16 %v3765
    %v6420 = vunpack.c.h.b16 %v3765
    %v6421 = vunpack.c.l.b16 %v3766
    %v6422 = vunpack.c.h.b16 %v3766
    %v6423 = vunpack.c.l.b16 %v3767
    %v6424 = vunpack.c.h.b16 %v3767
    %v6425 = vunpack.c.l.b16 %v3768
    %v6426 = vunpack.c.h.b16 %v3768
    %v6427 = vunpack.c.l.b16 %v3769
    %v6428 = vunpack.c.h.b16 %v3769
    %v6429 = vunpack.c.l.b16 %v3770
    %v6430 = vunpack.c.h.b16 %v3770
    %v6431 = vunpack.c.l.b16 %v3771
    %v6432 = vunpack.c.h.b16 %v3771
    %v6433 = vunpack.c.l.b16 %v3772
    %v6434 = vunpack.c.h.b16 %v3772
    %v6435 = vunpack.c.l.b16 %v3773
    %v6436 = vunpack.c.h.b16 %v3773
    %v6437 = vunpack.c.l.b16 %v3774
    %v6438 = vunpack.c.h.b16 %v3774
    %v6439 = vunpack.c.l.b16 %v3775
    %v6440 = vunpack.c.h.b16 %v3775
    %v6441 = vunpack.c.l.b16 %v3776
    %v6442 = vunpack.c.h.b16 %v3776
    %v6443 = vunpack.c.l.b16 %v3777
    %v6444 = vunpack.c.h.b16 %v3777
    %v6445 = vunpack.c.l.b16 %v3778
    %v6446 = vunpack.c.h.b16 %v3778
    %v6447 = vunpack.c.l.b16 %v3779
    %v6448 = vunpack.c.h.b16 %v3779
    %v6449 = vunpack.c.l.b16 %v3780
    %v6450 = vunpack.c.h.b16 %v3780
    %v6451 = vunpack.c.l.b16 %v3781
    %v6452 = vunpack.c.h.b16 %v3781
    %v6453 = vunpack.c.l.b16 %v3782
    %v6454 = vunpack.c.h.b16 %v3782
    %v6455 = vunpack.c.l.b16 %v3783
    %v6456 = vunpack.c.h.b16 %v3783
    %v6457 = vunpack.c.l.b16 %v3784
    %v6458 = vunpack.c.h.b16 %v3784
    %v6459 = vunpack.c.l.b16 %v3785
    %v6460 = vunpack.c.h.b16 %v3785
    %v6461 = vunpack.c.l.b16 %v3786
    %v6462 = vunpack.c.h.b16 %v3786
    %v6463 = vunpack.c.l.b16 %v3787
    %v6464 = vunpack.c.h.b16 %v3787
    %v6465 = vunpack.c.l.b16 %v3788
    %v6466 = vunpack.c.h.b16 %v3788
    %v6467 = vunpack.c.l.b16 %v3789
    %v6468 = vunpack.c.h.b16 %v3789
    %v6469 = vunpack.c.l.b16 %v3790
    %v6470 = vunpack.c.h.b16 %v3790
    %v6471 = vunpack.c.l.b16 %v3791
    %v6472 = vunpack.c.h.b16 %v3791
    %v6473 = vunpack.c.l.b16 %v3792
    %v6474 = vunpack.c.h.b16 %v3792
    %v6475 = vunpack.c.l.b16 %v3793
    %v6476 = vunpack.c.h.b16 %v3793
    %v6477 = vunpack.c.l.b16 %v3794
    %v6478 = vunpack.c.h.b16 %v3794
    %v6479 = vunpack.c.l.b16 %v3795
    %v6480 = vunpack.c.h.b16 %v3795
    %v6481 = vunpack.c.l.b16 %v3796
    %v6482 = vunpack.c.h.b16 %v3796
    %v6483 = vunpack.c.l.b16 %v3797
    %v6484 = vunpack.c.h.b16 %v3797
    %v6485 = vunpack.c.l.b16 %v3798
    %v6486 = vunpack.c.h.b16 %v3798
    %v6487 = vunpack.c.l.b16 %v3799
    %v6488 = vunpack.c.h.b16 %v3799
    %v6489 = vunpack.c.l.b16 %v3800
    %v6490 = vunpack.c.h.b16 %v3800
    %v6491 = vunpack.c.l.b16 %v3801
    %v6492 = vunpack.c.h.b16 %v3801
    %v6493 = vunpack.c.l.b16 %v3802
    %v6494 = vunpack.c.h.b16 %v3802
    %v6495 = vunpack.c.l.b16 %v3803
    %v6496 = vunpack.c.h.b16 %v3803
    %v6497 = vunpack.c.l.b16 %v3804
    %v6498 = vunpack.c.h.b16 %v3804
    %v6499 = vunpack.c.l.b16 %v3805
    %v6500 = vunpack.c.h.b16 %v3805
    %v6501 = vunpack.c.l.b16 %v3806
    %v6502 = vunpack.c.h.b16 %v3806
    %v6503 = vunpack.c.l.b16 %v3807
    %v6504 = vunpack.c.h.b16 %v3807
    %v6505 = vunpack.c.l.b16 %v3808
    %v6506 = vunpack.c.h.b16 %v3808
    %v6507 = vunpack.c.l.b16 %v3809
    %v6508 = vunpack.c.h.b16 %v3809
    %v6509 = vunpack.c.l.b16 %v3810
    %v6510 = vunpack.c.h.b16 %v3810
    %v6511 = vunpack.c.l.b16 %v3811
    %v6512 = vunpack.c.h.b16 %v3811
    %v6513 = vunpack.c.l.b16 %v3812
    %v6514 = vunpack.c.h.b16 %v3812
    %v6515 = vunpack.c.l.b16 %v3813
    %v6516 = vunpack.c.h.b16 %v3813
    %v6517 = vunpack.c.l.b16 %v3814
    %v6518 = vunpack.c.h.b16 %v3814
    %v6519 = vunpack.c.l.b16 %v3815
    %v6520 = vunpack.c.h.b16 %v3815
    %v6521 = vunpack.c.l.b16 %v3816
    %v6522 = vunpack.c.h.b16 %v3816
    %v6523 = vunpack.c.l.b16 %v3817
    %v6524 = vunpack.c.h.b16 %v3817
    %v6525 = vunpack.c.l.b16 %v3818
    %v6526 = vunpack.c.h.b16 %v3818
    %v6527 = vunpack.c.l.b16 %v3819
    %v6528 = vunpack.c.h.b16 %v3819
    %v6529 = vunpack.c.l.b16 %v3820
    %v6530 = vunpack.c.h.b16 %v3820
    %v6531 = vunpack.c.l.b16 %v3821
    %v6532 = vunpack.c.h.b16 %v3821
    %v6533 = vunpack.c.l.b16 %v3822
    %v6534 = vunpack.c.h.b16 %v3822
    %v6535 = vunpack.c.l.b16 %v3823
    %v6536 = vunpack.c.h.b16 %v3823
    %v6537 = vunpack.c.l.b16 %v3824
    %v6538 = vunpack.c.h.b16 %v3824
    %v6539 = vunpack.c.l.b16 %v3825
    %v6540 = vunpack.c.h.b16 %v3825
    %v6541 = vunpack.c.l.b16 %v3826
    %v6542 = vunpack.c.h.b16 %v3826
    %v6543 = vunpack.c.l.b16 %v3827
    %v6544 = vunpack.c.h.b16 %v3827
    %v6545 = vunpack.c.l.b16 %v3828
    %v6546 = vunpack.c.h.b16 %v3828
    %v6547 = vunpack.c.l.b16 %v3829
    %v6548 = vunpack.c.h.b16 %v3829
    %v6549 = vunpack.c.l.b16 %v3830
    %v6550 = vunpack.c.h.b16 %v3830
    %v6551 = vunpack.c.l.b16 %v3831
    %v6552 = vunpack.c.h.b16 %v3831
    %v6553 = vunpack.c.l.b16 %v3832
    %v6554 = vunpack.c.h.b16 %v3832
    %v6555 = vunpack.c.l.b16 %v3833
    %v6556 = vunpack.c.h.b16 %v3833
    %v6557 = vunpack.c.l.b16 %v3834
    %v6558 = vunpack.c.h.b16 %v3834
    %v6559 = vunpack.c.l.b16 %v3835
    %v6560 = vunpack.c.h.b16 %v3835
    %v6561 = vunpack.c.l.b16 %v3836
    %v6562 = vunpack.c.h.b16 %v3836
    %v6563 = vunpack.c.l.b16 %v3837
    %v6564 = vunpack.c.h.b16 %v3837
    %v6565 = vunpack.c.l.b16 %v3838
    %v6566 = vunpack.c.h.b16 %v3838
    %v6567 = vunpack.c.l.b16 %v3839
    %v6568 = vunpack.c.h.b16 %v3839
    %v6569 = vunpack.c.l.b16 %v3840
    %v6570 = vunpack.c.h.b16 %v3840
    %v6571 = vunpack.c.l.b16 %v3841
    %v6572 = vunpack.c.h.b16 %v3841
    %v6573 = vunpack.c.l.b16 %v3842
    %v6574 = vunpack.c.h.b16 %v3842
    %v6575 = vunpack.c.l.b16 %v3843
    %v6576 = vunpack.c.h.b16 %v3843
    %v6577 = vunpack.c.l.b16 %v3844
    %v6578 = vunpack.c.h.b16 %v3844
    %v6579 = vunpack.c.l.b16 %v3845
    %v6580 = vunpack.c.h.b16 %v3845
    %v6581 = vunpack.c.l.b16 %v3846
    %v6582 = vunpack.c.h.b16 %v3846
    %v6583 = vunpack.c.l.b16 %v3847
    %v6584 = vunpack.c.h.b16 %v3847
    %v6585 = vunpack.c.l.b16 %v3848
    %v6586 = vunpack.c.h.b16 %v3848
    %v6587 = vunpack.c.l.b16 %v3849
    %v6588 = vunpack.c.h.b16 %v3849
    %v6589 = vunpack.c.l.b16 %v3850
    %v6590 = vunpack.c.h.b16 %v3850
    %v6591 = vunpack.c.l.b16 %v3851
    %v6592 = vunpack.c.h.b16 %v3851
    %v6593 = vunpack.c.l.b16 %v3852
    %v6594 = vunpack.c.h.b16 %v3852
    %v6595 = vunpack.c.l.b16 %v3853
    %v6596 = vunpack.c.h.b16 %v3853
    %v6597 = vunpack.c.l.b16 %v3854
    %v6598 = vunpack.c.h.b16 %v3854
    %v6599 = vunpack.c.l.b16 %v3855
    %v6600 = vunpack.c.h.b16 %v3855
    %v6601 = vunpack.c.l.b16 %v3856
    %v6602 = vunpack.c.h.b16 %v3856
    %v6603 = vunpack.c.l.b16 %v3857
    %v6604 = vunpack.c.h.b16 %v3857
    %v6605 = vunpack.c.l.b16 %v3858
    %v6606 = vunpack.c.h.b16 %v3858
    %v6607 = vunpack.c.l.b16 %v3859
    %v6608 = vunpack.c.h.b16 %v3859
    %v6609 = vunpack.c.l.b16 %v3860
    %v6610 = vunpack.c.h.b16 %v3860
    %v6611 = vunpack.c.l.b16 %v3861
    %v6612 = vunpack.c.h.b16 %v3861
    %v6613 = vunpack.c.l.b16 %v3862
    %v6614 = vunpack.c.h.b16 %v3862
    %v6615 = vunpack.c.l.b16 %v3863
    %v6616 = vunpack.c.h.b16 %v3863
    %v6617 = vunpack.c.l.b16 %v3864
    %v6618 = vunpack.c.h.b16 %v3864
    %v6619 = vunpack.c.l.b16 %v3865
    %v6620 = vunpack.c.h.b16 %v3865
    %v6621 = vunpack.c.l.b16 %v3866
    %v6622 = vunpack.c.h.b16 %v3866
    %v6623 = vunpack.c.l.b16 %v3867
    %v6624 = vunpack.c.h.b16 %v3867
    %v6625 = vunpack.c.l.b16 %v3868
    %v6626 = vunpack.c.h.b16 %v3868
    %v6627 = vunpack.c.l.b16 %v3869
    %v6628 = vunpack.c.h.b16 %v3869
    %v6629 = vunpack.c.l.b16 %v3870
    %v6630 = vunpack.c.h.b16 %v3870
    %v6631 = vunpack.c.l.b16 %v3871
    %v6632 = vunpack.c.h.b16 %v3871
    %v6633 = vunpack.c.l.b16 %v3872
    %v6634 = vunpack.c.h.b16 %v3872
    %v6635 = vunpack.c.l.b16 %v3873
    %v6636 = vunpack.c.h.b16 %v3873
    %v6637 = vunpack.c.l.b16 %v3874
    %v6638 = vunpack.c.h.b16 %v3874
    %v6639 = vunpack.c.l.b16 %v3875
    %v6640 = vunpack.c.h.b16 %v3875
    %v6641 = vunpack.c.l.b16 %v3876
    %v6642 = vunpack.c.h.b16 %v3876
    %v6643 = vunpack.c.l.b16 %v3877
    %v6644 = vunpack.c.h.b16 %v3877
    %v6645 = vunpack.c.l.b16 %v3878
    %v6646 = vunpack.c.h.b16 %v3878
    %v6647 = vunpack.c.l.b16 %v3879
    %v6648 = vunpack.c.h.b16 %v3879
    %v6649 = vunpack.c.l.b16 %v3880
    %v6650 = vunpack.c.h.b16 %v3880
    %v6651 = vunpack.c.l.b16 %v3881
    %v6652 = vunpack.c.h.b16 %v3881
    %v6653 = vunpack.c.l.b16 %v3882
    %v6654 = vunpack.c.h.b16 %v3882
    %v6655 = vunpack.c.l.b16 %v3883
    %v6656 = vunpack.c.h.b16 %v3883
    %v6657 = vunpack.c.l.b16 %v3884
    %v6658 = vunpack.c.h.b16 %v3884
    %v6659 = vunpack.c.l.b16 %v3885
    %v6660 = vunpack.c.h.b16 %v3885
    %v6661 = vunpack.c.l.b16 %v3886
    %v6662 = vunpack.c.h.b16 %v3886
    %v6663 = vunpack.c.l.b16 %v3887
    %v6664 = vunpack.c.h.b16 %v3887
    %v6665 = vunpack.c.l.b16 %v3888
    %v6666 = vunpack.c.h.b16 %v3888
    %v6667 = vunpack.c.l.b16 %v3889
    %v6668 = vunpack.c.h.b16 %v3889
    %v6669 = vunpack.c.l.b16 %v3890
    %v6670 = vunpack.c.h.b16 %v3890
    %v6671 = vunpack.c.l.b16 %v3891
    %v6672 = vunpack.c.h.b16 %v3891
    %v6673 = vunpack.c.l.b16 %v3892
    %v6674 = vunpack.c.h.b16 %v3892
    %v6675 = vunpack.c.l.b16 %v3893
    %v6676 = vunpack.c.h.b16 %v3893
    %v6677 = vunpack.c.l.b16 %v3894
    %v6678 = vunpack.c.h.b16 %v3894
    %v6679 = vunpack.c.l.b16 %v3895
    %v6680 = vunpack.c.h.b16 %v3895
    %v6681 = vunpack.c.l.b16 %v3896
    %v6682 = vunpack.c.h.b16 %v3896
    %v6683 = vunpack.c.l.b16 %v3897
    %v6684 = vunpack.c.h.b16 %v3897
    %v6685 = vunpack.c.l.b16 %v3898
    %v6686 = vunpack.c.h.b16 %v3898
    %v6687 = vunpack.c.l.b16 %v3899
    %v6688 = vunpack.c.h.b16 %v3899
    %v6689 = vunpack.c.l.b16 %v3900
    %v6690 = vunpack.c.h.b16 %v3900
    %v6691 = vunpack.c.l.b16 %v3901
    %v6692 = vunpack.c.h.b16 %v3901
    %v6693 = vunpack.c.l.b16 %v3902
    %v6694 = vunpack.c.h.b16 %v3902
    %v6695 = vunpack.c.l.b16 %v3903
    %v6696 = vunpack.c.h.b16 %v3903
    %v6697 = vunpack.c.l.b16 %v3904
    %v6698 = vunpack.c.h.b16 %v3904
    %v6699 = vunpack.c.l.b16 %v3905
    %v6700 = vunpack.c.h.b16 %v3905
    %v6701 = vunpack.c.l.b16 %v3906
    %v6702 = vunpack.c.h.b16 %v3906
    %v6703 = vunpack.c.l.b16 %v3907
    %v6704 = vunpack.c.h.b16 %v3907
    %v6705 = vunpack.c.l.b16 %v3908
    %v6706 = vunpack.c.h.b16 %v3908
    %v6707 = vunpack.c.l.b16 %v3909
    %v6708 = vunpack.c.h.b16 %v3909
    %v6709 = vunpack.c.l.b16 %v3910
    %v6710 = vunpack.c.h.b16 %v3910
    %v6711 = vunpack.c.l.b16 %v3911
    %v6712 = vunpack.c.h.b16 %v3911
    %v6713 = vunpack.c.l.b16 %v3912
    %v6714 = vunpack.c.h.b16 %v3912
    %v6715 = vunpack.c.l.b16 %v3913
    %v6716 = vunpack.c.h.b16 %v3913
    %v6717 = vunpack.c.l.b16 %v3914
    %v6718 = vunpack.c.h.b16 %v3914
    %v6719 = vunpack.c.l.b16 %v3915
    %v6720 = vunpack.c.h.b16 %v3915
    %v6721 = vunpack.c.l.b16 %v3916
    %v6722 = vunpack.c.h.b16 %v3916
    %v6723 = vunpack.c.l.b16 %v3917
    %v6724 = vunpack.c.h.b16 %v3917
    %v6725 = vunpack.c.l.b16 %v3918
    %v6726 = vunpack.c.h.b16 %v3918
    %v6727 = vunpack.c.l.b16 %v3919
    %v6728 = vunpack.c.h.b16 %v3919
    %v6729 = vunpack.c.l.b16 %v3920
    %v6730 = vunpack.c.h.b16 %v3920
    %v6731 = vunpack.c.l.b16 %v3921
    %v6732 = vunpack.c.h.b16 %v3921
    %v6733 = vunpack.c.l.b16 %v3922
    %v6734 = vunpack.c.h.b16 %v3922
    %v6735 = vunpack.c.l.b16 %v3923
    %v6736 = vunpack.c.h.b16 %v3923
    %v6737 = vunpack.c.l.b16 %v3924
    %v6738 = vunpack.c.h.b16 %v3924
    %v6739 = vunpack.c.l.b16 %v3925
    %v6740 = vunpack.c.h.b16 %v3925
    %v6741 = vunpack.c.l.b16 %v3926
    %v6742 = vunpack.c.h.b16 %v3926
    %v6743 = vunpack.c.l.b16 %v3927
    %v6744 = vunpack.c.h.b16 %v3927
    %v6745 = vunpack.c.l.b16 %v3928
    %v6746 = vunpack.c.h.b16 %v3928
    %v6747 = vunpack.c.l.b16 %v3929
    %v6748 = vunpack.c.h.b16 %v3929
    %v6749 = vunpack.c.l.b16 %v3930
    %v6750 = vunpack.c.h.b16 %v3930
    %v6751 = vunpack.c.l.b16 %v3931
    %v6752 = vunpack.c.h.b16 %v3931
    %v6753 = vunpack.c.l.b16 %v3932
    %v6754 = vunpack.c.h.b16 %v3932
    %v6755 = vunpack.c.l.b16 %v3933
    %v6756 = vunpack.c.h.b16 %v3933
    %v6757 = vunpack.c.l.b16 %v3934
    %v6758 = vunpack.c.h.b16 %v3934
    %v6759 = vunpack.c.l.b16 %v3935
    %v6760 = vunpack.c.h.b16 %v3935
    %v6761 = vunpack.c.l.b16 %v3936
    %v6762 = vunpack.c.h.b16 %v3936
    %v6763 = vunpack.c.l.b16 %v3937
    %v6764 = vunpack.c.h.b16 %v3937
    %v6765 = vunpack.c.l.b16 %v3938
    %v6766 = vunpack.c.h.b16 %v3938
    %v6767 = vunpack.c.l.b16 %v3939
    %v6768 = vunpack.c.h.b16 %v3939
    %v6769 = vunpack.c.l.b16 %v3940
    %v6770 = vunpack.c.h.b16 %v3940
    %v6771 = vunpack.c.l.b16 %v3941
    %v6772 = vunpack.c.h.b16 %v3941
    %v6773 = vunpack.c.l.b16 %v3942
    %v6774 = vunpack.c.h.b16 %v3942
    %v6775 = vunpack.c.l.b16 %v3943
    %v6776 = vunpack.c.h.b16 %v3943
    %v6777 = vunpack.c.l.b16 %v3944
    %v6778 = vunpack.c.h.b16 %v3944
    %v6779 = vunpack.c.l.b16 %v3945
    %v6780 = vunpack.c.h.b16 %v3945
    %v6781 = vunpack.c.l.b16 %v3946
    %v6782 = vunpack.c.h.b16 %v3946
    %v6783 = vunpack.c.l.b16 %v3947
    %v6784 = vunpack.c.h.b16 %v3947
    %v6785 = vunpack.c.l.b16 %v3948
    %v6786 = vunpack.c.h.b16 %v3948
    %v6787 = vunpack.c.l.b16 %v3949
    %v6788 = vunpack.c.h.b16 %v3949
    %v6789 = vunpack.c.l.b16 %v3950
    %v6790 = vunpack.c.h.b16 %v3950
    %v6791 = vunpack.c.l.b16 %v3951
    %v6792 = vunpack.c.h.b16 %v3951
    %v6793 = vunpack.c.l.b16 %v3952
    %v6794 = vunpack.c.h.b16 %v3952
    %v6795 = vunpack.c.l.b16 %v3953
    %v6796 = vunpack.c.h.b16 %v3953
    %v6797 = vunpack.c.l.b16 %v3954
    %v6798 = vunpack.c.h.b16 %v3954
    %v6799 = vunpack.c.l.b16 %v3955
    %v6800 = vunpack.c.h.b16 %v3955
    %v6801 = vunpack.c.l.b16 %v3956
    %v6802 = vunpack.c.h.b16 %v3956
    %v6803 = vunpack.c.l.b16 %v3957
    %v6804 = vunpack.c.h.b16 %v3957
    %v6805 = vunpack.c.l.b16 %v3958
    %v6806 = vunpack.c.h.b16 %v3958
    %v6807 = vunpack.c.l.b16 %v3959
    %v6808 = vunpack.c.h.b16 %v3959
    %v6809 = vunpack.c.l.b16 %v3960
    %v6810 = vunpack.c.h.b16 %v3960
    %v6811 = vunpack.c.l.b16 %v3961
    %v6812 = vunpack.c.h.b16 %v3961
    %v6813 = vunpack.c.l.b16 %v3962
    %v6814 = vunpack.c.h.b16 %v3962
    %v6815 = vunpack.c.l.b16 %v3963
    %v6816 = vunpack.c.h.b16 %v3963
    %v6817 = vunpack.c.l.b16 %v3964
    %v6818 = vunpack.c.h.b16 %v3964
    %v6819 = vunpack.c.l.b16 %v3965
    %v6820 = vunpack.c.h.b16 %v3965
    %v6821 = vunpack.c.l.b16 %v3966
    %v6822 = vunpack.c.h.b16 %v3966
    %v6823 = vunpack.c.l.b16 %v3967
    %v6824 = vunpack.c.h.b16 %v3967
    %v6825 = vunpack.c.l.b16 %v3968
    %v6826 = vunpack.c.h.b16 %v3968
    %v6827 = vunpack.c.l.b16 %v3969
    %v6828 = vunpack.c.h.b16 %v3969
    %v6829 = vunpack.c.l.b16 %v3970
    %v6830 = vunpack.c.h.b16 %v3970
    %v6831 = vunpack.c.l.b16 %v3971
    %v6832 = vunpack.c.h.b16 %v3971
    %v6833 = vunpack.c.l.b16 %v3972
    %v6834 = vunpack.c.h.b16 %v3972
    %v6835 = vunpack.c.l.b16 %v3973
    %v6836 = vunpack.c.h.b16 %v3973
    %v6837 = vunpack.c.l.b16 %v3974
    %v6838 = vunpack.c.h.b16 %v3974
    %v6839 = vunpack.c.l.b16 %v3975
    %v6840 = vunpack.c.h.b16 %v3975
    %v6841 = vunpack.c.l.b16 %v3976
    %v6842 = vunpack.c.h.b16 %v3976
    %v6843 = vunpack.c.l.b16 %v3977
    %v6844 = vunpack.c.h.b16 %v3977
    %v6845 = vunpack.c.l.b16 %v3978
    %v6846 = vunpack.c.h.b16 %v3978
    %v6847 = vunpack.c.l.b16 %v3979
    %v6848 = vunpack.c.h.b16 %v3979
    %v6849 = vunpack.c.l.b16 %v3980
    %v6850 = vunpack.c.h.b16 %v3980
    %v6851 = vunpack.c.l.b16 %v3981
    %v6852 = vunpack.c.h.b16 %v3981
    %v6853 = vpack.c.b16 %v5705, %v5701
    %v6854 = vpack.c.b16 %v5706, %v5702
    %v6855 = vpack.c.b16 %v5707, %v5703
    %v6856 = vpack.c.b16 %v5708, %v5704
    %v6857 = vpack.c.b16 %v5713, %v5709
    %v6858 = vpack.c.b16 %v5714, %v5710
    %v6859 = vpack.c.b16 %v5715, %v5711
    %v6860 = vpack.c.b16 %v5716, %v5712
    %v6861 = vpack.c.b16 %v5721, %v5717
    %v6862 = vpack.c.b16 %v5722, %v5718
    %v6863 = vpack.c.b16 %v5723, %v5719
    %v6864 = vpack.c.b16 %v5724, %v5720
    %v6865 = vpack.c.b16 %v5729, %v5725
    %v6866 = vpack.c.b16 %v5730, %v5726
    %v6867 = vpack.c.b16 %v5731, %v5727
    %v6868 = vpack.c.b16 %v5732, %v5728
    %v6869 = vpack.c.b16 %v5737, %v5733
    %v6870 = vpack.c.b16 %v5738, %v5734
    %v6871 = vpack.c.b16 %v5739, %v5735
    %v6872 = vpack.c.b16 %v5740, %v5736
    %v6873 = vpack.c.b16 %v5745, %v5741
    %v6874 = vpack.c.b16 %v5746, %v5742
    %v6875 = vpack.c.b16 %v5747, %v5743
    %v6876 = vpack.c.b16 %v5748, %v5744
    %v6877 = vpack.c.b16 %v5753, %v5749
    %v6878 = vpack.c.b16 %v5754, %v5750
    %v6879 = vpack.c.b16 %v5755, %v5751
    %v6880 = vpack.c.b16 %v5756, %v5752
    %v6881 = vpack.c.b16 %v5761, %v5757
    %v6882 = vpack.c.b16 %v5762, %v5758
    %v6883 = vpack.c.b16 %v5763, %v5759
    %v6884 = vpack.c.b16 %v5764, %v5760
    %v6885 = vpack.c.b16 %v5769, %v5765
    %v6886 = vpack.c.b16 %v5770, %v5766
    %v6887 = vpack.c.b16 %v5771, %v5767
    %v6888 = vpack.c.b16 %v5772, %v5768
    %v6889 = vpack.c.b16 %v5777, %v5773
    %v6890 = vpack.c.b16 %v5778, %v5774
    %v6891 = vpack.c.b16 %v5779, %v5775
    %v6892 = vpack.c.b16 %v5780, %v5776
    %v6893 = vpack.c.b16 %v5785, %v5781
    %v6894 = vpack.c.b16 %v5786, %v5782
    %v6895 = vpack.c.b16 %v5787, %v5783
    %v6896 = vpack.c.b16 %v5788, %v5784
    %v6897 = vpack.c.b16 %v5793, %v5789
    %v6898 = vpack.c.b16 %v5794, %v5790
    %v6899 = vpack.c.b16 %v5795, %v5791
    %v6900 = vpack.c.b16 %v5796, %v5792
    %v6901 = vpack.c.b16 %v5801, %v5797
    %v6902 = vpack.c.b16 %v5802, %v5798
    %v6903 = vpack.c.b16 %v5803, %v5799
    %v6904 = vpack.c.b16 %v5804, %v5800
    %v6905 = vpack.c.b16 %v5809, %v5805
    %v6906 = vpack.c.b16 %v5810, %v5806
    %v6907 = vpack.c.b16 %v5811, %v5807
    %v6908 = vpack.c.b16 %v5812, %v5808
    %v6909 = vpack.c.b16 %v5817, %v5813
    %v6910 = vpack.c.b16 %v5818, %v5814
    %v6911 = vpack.c.b16 %v5819, %v5815
    %v6912 = vpack.c.b16 %v5820, %v5816
    %v6913 = vpack.c.b16 %v5825, %v5821
    %v6914 = vpack.c.b16 %v5826, %v5822
    %v6915 = vpack.c.b16 %v5827, %v5823
    %v6916 = vpack.c.b16 %v5828, %v5824
    %v6917 = vpack.c.b16 %v5833, %v5829
    %v6918 = vpack.c.b16 %v5834, %v5830
    %v6919 = vpack.c.b16 %v5835, %v5831
    %v6920 = vpack.c.b16 %v5836, %v5832
    %v6921 = vpack.c.b16 %v5841, %v5837
    %v6922 = vpack.c.b16 %v5842, %v5838
    %v6923 = vpack.c.b16 %v5843, %v5839
    %v6924 = vpack.c.b16 %v5844, %v5840
    %v6925 = vpack.c.b16 %v5849, %v5845
    %v6926 = vpack.c.b16 %v5850, %v5846
    %v6927 = vpack.c.b16 %v5851, %v5847
    %v6928 = vpack.c.b16 %v5852, %v5848
    %v6929 = vpack.c.b16 %v5857, %v5853
    %v6930 = vpack.c.b16 %v5858, %v5854
    %v6931 = vpack.c.b16 %v5859, %v5855
    %v6932 = vpack.c.b16 %v5860, %v5856
    %v6933 = vpack.c.b16 %v5865, %v5861
    %v6934 = vpack.c.b16 %v5866, %v5862
    %v6935 = vpack.c.b16 %v5867, %v5863
    %v6936 = vpack.c.b16 %v5868, %v5864
    %v6937 = vpack.c.b16 %v5873, %v5869
    %v6938 = vpack.c.b16 %v5874, %v5870
    %v6939 = vpack.c.b16 %v5875, %v5871
    %v6940 = vpack.c.b16 %v5876, %v5872
    %v6941 = vpack.c.b16 %v5881, %v5877
    %v6942 = vpack.c.b16 %v5882, %v5878
    %v6943 = vpack.c.b16 %v5883, %v5879
    %v6944 = vpack.c.b16 %v5884, %v5880
    %v6945 = vpack.c.b16 %v5889, %v5885
    %v6946 = vpack.c.b16 %v5890, %v5886
    %v6947 = vpack.c.b16 %v5891, %v5887
    %v6948 = vpack.c.b16 %v5892, %v5888
    %v6949 = vpack.c.b16 %v5897, %v5893
    %v6950 = vpack.c.b16 %v5898, %v5894
    %v6951 = vpack.c.b16 %v5899, %v5895
    %v6952 = vpack.c.b16 %v5900, %v5896
    %v6953 = vpack.c.b16 %v5905, %v5901
    %v6954 = vpack.c.b16 %v5906, %v5902
    %v6955 = vpack.c.b16 %v5907, %v5903
    %v6956 = vpack.c.b16 %v5908, %v5904
    %v6957 = vpack.c.b16 %v5913, %v5909
    %v6958 = vpack.c.b16 %v5914, %v5910
    %v6959 = vpack.c.b16 %v5915, %v5911
    %v6960 = vpack.c.b16 %v5916, %v5912
    %v6961 = vpack.c.b16 %v5921, %v5917
    %v6962 = vpack.c.b16 %v5922, %v5918
    %v6963 = vpack.c.b16 %v5923, %v5919
    %v6964 = vpack.c.b16 %v5924, %v5920
    %v6965 = vpack.c.b16 %v5929, %v5925
    %v6966 = vpack.c.b16 %v5930, %v5926
    %v6967 = vpack.c.b16 %v5931, %v5927
    %v6968 = vpack.c.b16 %v5932, %v5928
    %v6969 = vpack.c.b16 %v5937, %v5933
    %v6970 = vpack.c.b16 %v5938, %v5934
    %v6971 = vpack.c.b16 %v5939, %v5935
    %v6972 = vpack.c.b16 %v5940, %v5936
    %v6973 = vpack.c.b16 %v5945, %v5941
    %v6974 = vpack.c.b16 %v5946, %v5942
    %v6975 = vpack.c.b16 %v5947, %v5943
    %v6976 = vpack.c.b16 %v5948, %v5944
    %v6977 = vpack.c.b16 %v5953, %v5949
    %v6978 = vpack.c.b16 %v5954, %v5950
    %v6979 = vpack.c.b16 %v5955, %v5951
    %v6980 = vpack.c.b16 %v5956, %v5952
    %v6981 = vpack.c.b16 %v5961, %v5957
    %v6982 = vpack.c.b16 %v5962, %v5958
    %v6983 = vpack.c.b16 %v5963, %v5959
    %v6984 = vpack.c.b16 %v5964, %v5960
    %v6985 = vpack.c.b16 %v5969, %v5965
    %v6986 = vpack.c.b16 %v5970, %v5966
    %v6987 = vpack.c.b16 %v5971, %v5967
    %v6988 = vpack.c.b16 %v5972, %v5968
    %v6989 = vpack.c.b16 %v5977, %v5973
    %v6990 = vpack.c.b16 %v5978, %v5974
    %v6991 = vpack.c.b16 %v5979, %v5975
    %v6992 = vpack.c.b16 %v5980, %v5976
    %v6993 = vpack.c.b16 %v5985, %v5981
    %v6994 = vpack.c.b16 %v5986, %v5982
    %v6995 = vpack.c.b16 %v5987, %v5983
    %v6996 = vpack.c.b16 %v5988, %v5984
    %v6997 = vpack.c.b16 %v5993, %v5989
    %v6998 = vpack.c.b16 %v5994, %v5990
    %v6999 = vpack.c.b16 %v5995, %v5991
    %v7000 = vpack.c.b16 %v5996, %v5992
    %v7001 = vpack.c.b16 %v6001, %v5997
    %v7002 = vpack.c.b16 %v6002, %v5998
    %v7003 = vpack.c.b16 %v6003, %v5999
    %v7004 = vpack.c.b16 %v6004, %v6000
    %v7005 = vpack.c.b16 %v6009, %v6005
    %v7006 = vpack.c.b16 %v6010, %v6006
    %v7007 = vpack.c.b16 %v6011, %v6007
    %v7008 = vpack.c.b16 %v6012, %v6008
    %v7009 = vpack.c.b16 %v6017, %v6013
    %v7010 = vpack.c.b16 %v6018, %v6014
    %v7011 = vpack.c.b16 %v6019, %v6015
    %v7012 = vpack.c.b16 %v6020, %v6016
    %v7013 = vpack.c.b16 %v6025, %v6021
    %v7014 = vpack.c.b16 %v6026, %v6022
    %v7015 = vpack.c.b16 %v6027, %v6023
    %v7016 = vpack.c.b16 %v6028, %v6024
    %v7017 = vpack.c.b16 %v6033, %v6029
    %v7018 = vpack.c.b16 %v6034, %v6030
    %v7019 = vpack.c.b16 %v6035, %v6031
    %v7020 = vpack.c.b16 %v6036, %v6032
    %v7021 = vpack.c.b16 %v6041, %v6037
    %v7022 = vpack.c.b16 %v6042, %v6038
    %v7023 = vpack.c.b16 %v6043, %v6039
    %v7024 = vpack.c.b16 %v6044, %v6040
    %v7025 = vpack.c.b16 %v6049, %v6045
    %v7026 = vpack.c.b16 %v6050, %v6046
    %v7027 = vpack.c.b16 %v6051, %v6047
    %v7028 = vpack.c.b16 %v6052, %v6048
    %v7029 = vpack.c.b16 %v6057, %v6053
    %v7030 = vpack.c.b16 %v6058, %v6054
    %v7031 = vpack.c.b16 %v6059, %v6055
    %v7032 = vpack.c.b16 %v6060, %v6056
    %v7033 = vpack.c.b16 %v6065, %v6061
    %v7034 = vpack.c.b16 %v6066, %v6062
    %v7035 = vpack.c.b16 %v6067, %v6063
    %v7036 = vpack.c.b16 %v6068, %v6064
    %v7037 = vpack.c.b16 %v6073, %v6069
    %v7038 = vpack.c.b16 %v6074, %v6070
    %v7039 = vpack.c.b16 %v6075, %v6071
    %v7040 = vpack.c.b16 %v6076, %v6072
    %v7041 = vpack.c.b16 %v6081, %v6077
    %v7042 = vpack.c.b16 %v6082, %v6078
    %v7043 = vpack.c.b16 %v6083, %v6079
    %v7044 = vpack.c.b16 %v6084, %v6080
    %v7045 = vpack.c.b16 %v6089, %v6085
    %v7046 = vpack.c.b16 %v6090, %v6086
    %v7047 = vpack.c.b16 %v6091, %v6087
    %v7048 = vpack.c.b16 %v6092, %v6088
    %v7049 = vpack.c.b16 %v6097, %v6093
    %v7050 = vpack.c.b16 %v6098, %v6094
    %v7051 = vpack.c.b16 %v6099, %v6095
    %v7052 = vpack.c.b16 %v6100, %v6096
    %v7053 = vpack.c.b16 %v6105, %v6101
    %v7054 = vpack.c.b16 %v6106, %v6102
    %v7055 = vpack.c.b16 %v6107, %v6103
    %v7056 = vpack.c.b16 %v6108, %v6104
    %v7057 = vpack.c.b16 %v6113, %v6109
    %v7058 = vpack.c.b16 %v6114, %v6110
    %v7059 = vpack.c.b16 %v6115, %v6111
    %v7060 = vpack.c.b16 %v6116, %v6112
    %v7061 = vpack.c.b16 %v6121, %v6117
    %v7062 = vpack.c.b16 %v6122, %v6118
    %v7063 = vpack.c.b16 %v6123, %v6119
    %v7064 = vpack.c.b16 %v6124, %v6120
    %v7065 = vpack.c.b16 %v6129, %v6125
    %v7066 = vpack.c.b16 %v6130, %v6126
    %v7067 = vpack.c.b16 %v6131, %v6127
    %v7068 = vpack.c.b16 %v6132, %v6128
    %v7069 = vpack.c.b16 %v6137, %v6133
    %v7070 = vpack.c.b16 %v6138, %v6134
    %v7071 = vpack.c.b16 %v6139, %v6135
    %v7072 = vpack.c.b16 %v6140, %v6136
    %v7073 = vpack.c.b16 %v6145, %v6141
    %v7074 = vpack.c.b16 %v6146, %v6142
    %v7075 = vpack.c.b16 %v6147, %v6143
    %v7076 = vpack.c.b16 %v6148, %v6144
    %v7077 = vpack.c.b16 %v6153, %v6149
    %v7078 = vpack.c.b16 %v6154, %v6150
    %v7079 = vpack.c.b16 %v6155, %v6151
    %v7080 = vpack.c.b16 %v6156, %v6152
    %v7081 = vpack.c.b16 %v6161, %v6157
    %v7082 = vpack.c.b16 %v6162, %v6158
    %v7083 = vpack.c.b16 %v6163, %v6159
    %v7084 = vpack.c.b16 %v6164, %v6160
    %v7085 = vpack.c.b16 %v6169, %v6165
    %v7086 = vpack.c.b16 %v6170, %v6166
    %v7087 = vpack.c.b16 %v6171, %v6167
    %v7088 = vpack.c.b16 %v6172, %v6168
    %v7089 = vpack.c.b16 %v6177, %v6173
    %v7090 = vpack.c.b16 %v6178, %v6174
    %v7091 = vpack.c.b16 %v6179, %v6175
    %v7092 = vpack.c.b16 %v6180, %v6176
    %v7093 = vpack.c.b16 %v6185, %v6181
    %v7094 = vpack.c.b16 %v6186, %v6182
    %v7095 = vpack.c.b16 %v6187, %v6183
    %v7096 = vpack.c.b16 %v6188, %v6184
    %v7097 = vpack.c.b16 %v6193, %v6189
    %v7098 = vpack.c.b16 %v6194, %v6190
    %v7099 = vpack.c.b16 %v6195, %v6191
    %v7100 = vpack.c.b16 %v6196, %v6192
    %v7101 = vpack.c.b16 %v6201, %v6197
    %v7102 = vpack.c.b16 %v6202, %v6198
    %v7103 = vpack.c.b16 %v6203, %v6199
    %v7104 = vpack.c.b16 %v6204, %v6200
    %v7105 = vpack.c.b16 %v6209, %v6205
    %v7106 = vpack.c.b16 %v6210, %v6206
    %v7107 = vpack.c.b16 %v6211, %v6207
    %v7108 = vpack.c.b16 %v6212, %v6208
    %v7109 = vpack.c.b16 %v6217, %v6213
    %v7110 = vpack.c.b16 %v6218, %v6214
    %v7111 = vpack.c.b16 %v6219, %v6215
    %v7112 = vpack.c.b16 %v6220, %v6216
    %v7113 = vpack.c.b16 %v6225, %v6221
    %v7114 = vpack.c.b16 %v6226, %v6222
    %v7115 = vpack.c.b16 %v6227, %v6223
    %v7116 = vpack.c.b16 %v6228, %v6224
    %v7117 = vpack.c.b16 %v6233, %v6229
    %v7118 = vpack.c.b16 %v6234, %v6230
    %v7119 = vpack.c.b16 %v6235, %v6231
    %v7120 = vpack.c.b16 %v6236, %v6232
    %v7121 = vpack.c.b16 %v6241, %v6237
    %v7122 = vpack.c.b16 %v6242, %v6238
    %v7123 = vpack.c.b16 %v6243, %v6239
    %v7124 = vpack.c.b16 %v6244, %v6240
    %v7125 = vpack.c.b16 %v6249, %v6245
    %v7126 = vpack.c.b16 %v6250, %v6246
    %v7127 = vpack.c.b16 %v6251, %v6247
    %v7128 = vpack.c.b16 %v6252, %v6248
    %v7129 = vpack.c.b16 %v6257, %v6253
    %v7130 = vpack.c.b16 %v6258, %v6254
    %v7131 = vpack.c.b16 %v6259, %v6255
    %v7132 = vpack.c.b16 %v6260, %v6256
    %v7133 = vpack.c.b16 %v6265, %v6261
    %v7134 = vpack.c.b16 %v6266, %v6262
    %v7135 = vpack.c.b16 %v6267, %v6263
    %v7136 = vpack.c.b16 %v6268, %v6264
    %v7137 = vpack.c.b16 %v6273, %v6269
    %v7138 = vpack.c.b16 %v6274, %v6270
    %v7139 = vpack.c.b16 %v6275, %v6271
    %v7140 = vpack.c.b16 %v6276, %v6272
    %v7141 = vpack.c.b16 %v6281, %v6277
    %v7142 = vpack.c.b16 %v6282, %v6278
    %v7143 = vpack.c.b16 %v6283, %v6279
    %v7144 = vpack.c.b16 %v6284, %v6280
    %v7145 = vpack.c.b16 %v6289, %v6285
    %v7146 = vpack.c.b16 %v6290, %v6286
    %v7147 = vpack.c.b16 %v6291, %v6287
    %v7148 = vpack.c.b16 %v6292, %v6288
    %v7149 = vpack.c.b16 %v6297, %v6293
    %v7150 = vpack.c.b16 %v6298, %v6294
    %v7151 = vpack.c.b16 %v6299, %v6295
    %v7152 = vpack.c.b16 %v6300, %v6296
    %v7153 = vpack.c.b16 %v6305, %v6301
    %v7154 = vpack.c.b16 %v6306, %v6302
    %v7155 = vpack.c.b16 %v6307, %v6303
    %v7156 = vpack.c.b16 %v6308, %v6304
    %v7157 = vpack.c.b16 %v6313, %v6309
    %v7158 = vpack.c.b16 %v6314, %v6310
    %v7159 = vpack.c.b16 %v6315, %v6311
    %v7160 = vpack.c.b16 %v6316, %v6312
    %v7161 = vpack.c.b16 %v6321, %v6317
    %v7162 = vpack.c.b16 %v6322, %v6318
    %v7163 = vpack.c.b16 %v6323, %v6319
    %v7164 = vpack.c.b16 %v6324, %v6320
    %v7165 = vpack.c.b16 %v6329, %v6325
    %v7166 = vpack.c.b16 %v6330, %v6326
    %v7167 = vpack.c.b16 %v6331, %v6327
    %v7168 = vpack.c.b16 %v6332, %v6328
    %v7169 = vpack.c.b16 %v6337, %v6333
    %v7170 = vpack.c.b16 %v6338, %v6334
    %v7171 = vpack.c.b16 %v6339, %v6335
    %v7172 = vpack.c.b16 %v6340, %v6336
    %v7173 = vpack.c.b16 %v6345, %v6341
    %v7174 = vpack.c.b16 %v6346, %v6342
    %v7175 = vpack.c.b16 %v6347, %v6343
    %v7176 = vpack.c.b16 %v6348, %v6344
    %v7177 = vpack.c.b16 %v6353, %v6349
    %v7178 = vpack.c.b16 %v6354, %v6350
    %v7179 = vpack.c.b16 %v6355, %v6351
    %v7180 = vpack.c.b16 %v6356, %v6352
    %v7181 = vpack.c.b16 %v6361, %v6357
    %v7182 = vpack.c.b16 %v6362, %v6358
    %v7183 = vpack.c.b16 %v6363, %v6359
    %v7184 = vpack.c.b16 %v6364, %v6360
    %v7185 = vpack.c.b16 %v6369, %v6365
    %v7186 = vpack.c.b16 %v6370, %v6366
    %v7187 = vpack.c.b16 %v6371, %v6367
    %v7188 = vpack.c.b16 %v6372, %v6368
    %v7189 = vpack.c.b16 %v6377, %v6373
    %v7190 = vpack.c.b16 %v6378, %v6374
    %v7191 = vpack.c.b16 %v6379, %v6375
    %v7192 = vpack.c.b16 %v6380, %v6376
    %v7193 = vpack.c.b16 %v6385, %v6381
    %v7194 = vpack.c.b16 %v6386, %v6382
    %v7195 = vpack.c.b16 %v6387, %v6383
    %v7196 = vpack.c.b16 %v6388, %v6384
    %v7197 = vpack.c.b16 %v6393, %v6389
    %v7198 = vpack.c.b16 %v6394, %v6390
    %v7199 = vpack.c.b16 %v6395, %v6391
    %v7200 = vpack.c.b16 %v6396, %v6392
    %v7201 = vpack.c.b16 %v6401, %v6397
    %v7202 = vpack.c.b16 %v6402, %v6398
    %v7203 = vpack.c.b16 %v6403, %v6399
    %v7204 = vpack.c.b16 %v6404, %v6400
    %v7205 = vpack.c.b16 %v6409, %v6405
    %v7206 = vpack.c.b16 %v6410, %v6406
    %v7207 = vpack.c.b16 %v6411, %v6407
    %v7208 = vpack.c.b16 %v6412, %v6408
    %v7209 = vpack.c.b16 %v6417, %v6413
    %v7210 = vpack.c.b16 %v6418, %v6414
    %v7211 = vpack.c.b16 %v6419, %v6415
    %v7212 = vpack.c.b16 %v6420, %v6416
    %v7213 = vpack.c.b16 %v6425, %v6421
    %v7214 = vpack.c.b16 %v6426, %v6422
    %v7215 = vpack.c.b16 %v6427, %v6423
    %v7216 = vpack.c.b16 %v6428, %v6424
    %v7217 = vpack.c.b16 %v6433, %v6429
    %v7218 = vpack.c.b16 %v6434, %v6430
    %v7219 = vpack.c.b16 %v6435, %v6431
    %v7220 = vpack.c.b16 %v6436, %v6432
    %v7221 = vpack.c.b16 %v6441, %v6437
    %v7222 = vpack.c.b16 %v6442, %v6438
    %v7223 = vpack.c.b16 %v6443, %v6439
    %v7224 = vpack.c.b16 %v6444, %v6440
    %v7225 = vpack.c.b16 %v6449, %v6445
    %v7226 = vpack.c.b16 %v6450, %v6446
    %v7227 = vpack.c.b16 %v6451, %v6447
    %v7228 = vpack.c.b16 %v6452, %v6448
    %v7229 = vpack.c.b16 %v6457, %v6453
    %v7230 = vpack.c.b16 %v6458, %v6454
    %v7231 = vpack.c.b16 %v6459, %v6455
    %v7232 = vpack.c.b16 %v6460, %v6456
    %v7233 = vpack.c.b16 %v6465, %v6461
    %v7234 = vpack.c.b16 %v6466, %v6462
    %v7235 = vpack.c.b16 %v6467, %v6463
    %v7236 = vpack.c.b16 %v6468, %v6464
    %v7237 = vpack.c.b16 %v6473, %v6469
    %v7238 = vpack.c.b16 %v6474, %v6470
    %v7239 = vpack.c.b16 %v6475, %v6471
    %v7240 = vpack.c.b16 %v6476, %v6472
    %v7241 = vpack.c.b16 %v6481, %v6477
    %v7242 = vpack.c.b16 %v6482, %v6478
    %v7243 = vpack.c.b16 %v6483, %v6479
    %v7244 = vpack.c.b16 %v6484, %v6480
    %v7245 = vpack.c.b16 %v6489, %v6485
    %v7246 = vpack.c.b16 %v6490, %v6486
    %v7247 = vpack.c.b16 %v6491, %v6487
    %v7248 = vpack.c.b16 %v6492, %v6488
    %v7249 = vpack.c.b16 %v6497, %v6493
    %v7250 = vpack.c.b16 %v6498, %v6494
    %v7251 = vpack.c.b16 %v6499, %v6495
    %v7252 = vpack.c.b16 %v6500, %v6496
    %v7253 = vpack.c.b16 %v6505, %v6501
    %v7254 = vpack.c.b16 %v6506, %v6502
    %v7255 = vpack.c.b16 %v6507, %v6503
    %v7256 = vpack.c.b16 %v6508, %v6504
    %v7257 = vpack.c.b16 %v6513, %v6509
    %v7258 = vpack.c.b16 %v6514, %v6510
    %v7259 = vpack.c.b16 %v6515, %v6511
    %v7260 = vpack.c.b16 %v6516, %v6512
    %v7261 = vpack.c.b16 %v6521, %v6517
    %v7262 = vpack.c.b16 %v6522, %v6518
    %v7263 = vpack.c.b16 %v6523, %v6519
    %v7264 = vpack.c.b16 %v6524, %v6520
    %v7265 = vpack.c.b16 %v6529, %v6525
    %v7266 = vpack.c.b16 %v6530, %v6526
    %v7267 = vpack.c.b16 %v6531, %v6527
    %v7268 = vpack.c.b16 %v6532, %v6528
    %v7269 = vpack.c.b16 %v6537, %v6533
    %v7270 = vpack.c.b16 %v6538, %v6534
    %v7271 = vpack.c.b16 %v6539, %v6535
    %v7272 = vpack.c.b16 %v6540, %v6536
    %v7273 = vpack.c.b16 %v6545, %v6541
    %v7274 = vpack.c.b16 %v6546, %v6542
    %v7275 = vpack.c.b16 %v6547, %v6543
    %v7276 = vpack.c.b16 %v6548, %v6544
    %v7277 = vpack.c.b16 %v6553, %v6549
    %v7278 = vpack.c.b16 %v6554, %v6550
    %v7279 = vpack.c.b16 %v6555, %v6551
    %v7280 = vpack.c.b16 %v6556, %v6552
    %v7281 = vpack.c.b16 %v6561, %v6557
    %v7282 = vpack.c.b16 %v6562, %v6558
    %v7283 = vpack.c.b16 %v6563, %v6559
    %v7284 = vpack.c.b16 %v6564, %v6560
    %v7285 = vpack.c.b16 %v6569, %v6565
    %v7286 = vpack.c.b16 %v6570, %v6566
    %v7287 = vpack.c.b16 %v6571, %v6567
    %v7288 = vpack.c.b16 %v6572, %v6568
    %v7289 = vpack.c.b16 %v6577, %v6573
    %v7290 = vpack.c.b16 %v6578, %v6574
    %v7291 = vpack.c.b16 %v6579, %v6575
    %v7292 = vpack.c.b16 %v6580, %v6576
    %v7293 = vpack.c.b16 %v6585, %v6581
    %v7294 = vpack.c.b16 %v6586, %v6582
    %v7295 = vpack.c.b16 %v6587, %v6583
    %v7296 = vpack.c.b16 %v6588, %v6584
    %v7297 = vpack.c.b16 %v6593, %v6589
    %v7298 = vpack.c.b16 %v6594, %v6590
    %v7299 = vpack.c.b16 %v6595, %v6591
    %v7300 = vpack.c.b16 %v6596, %v6592
    %v7301 = vpack.c.b16 %v6601, %v6597
    %v7302 = vpack.c.b16 %v6602, %v6598
    %v7303 = vpack.c.b16 %v6603, %v6599
    %v7304 = vpack.c.b16 %v6604, %v6600
    %v7305 = vpack.c.b16 %v6609, %v6605
    %v7306 = vpack.c.b16 %v6610, %v6606
    %v7307 = vpack.c.b16 %v6611, %v6607
    %v7308 = vpack.c.b16 %v6612, %v6608
    %v7309 = vpack.c.b16 %v6617, %v6613
    %v7310 = vpack.c.b16 %v6618, %v6614
    %v7311 = vpack.c.b16 %v6619, %v6615
    %v7312 = vpack.c.b16 %v6620, %v6616
    %v7313 = vpack.c.b16 %v6625, %v6621
    %v7314 = vpack.c.b16 %v6626, %v6622
    %v7315 = vpack.c.b16 %v6627, %v6623
    %v7316 = vpack.c.b16 %v6628, %v6624
    %v7317 = vpack.c.b16 %v6633, %v6629
    %v7318 = vpack.c.b16 %v6634, %v6630
    %v7319 = vpack.c.b16 %v6635, %v6631
    %v7320 = vpack.c.b16 %v6636, %v6632
    %v7321 = vpack.c.b16 %v6641, %v6637
    %v7322 = vpack.c.b16 %v6642, %v6638
    %v7323 = vpack.c.b16 %v6643, %v6639
    %v7324 = vpack.c.b16 %v6644, %v6640
    %v7325 = vpack.c.b16 %v6649, %v6645
    %v7326 = vpack.c.b16 %v6650, %v6646
    %v7327 = vpack.c.b16 %v6651, %v6647
    %v7328 = vpack.c.b16 %v6652, %v6648
    %v7329 = vpack.c.b16 %v6657, %v6653
    %v7330 = vpack.c.b16 %v6658, %v6654
    %v7331 = vpack.c.b16 %v6659, %v6655
    %v7332 = vpack.c.b16 %v6660, %v6656
    %v7333 = vpack.c.b16 %v6665, %v6661
    %v7334 = vpack.c.b16 %v6666, %v6662
    %v7335 = vpack.c.b16 %v6667, %v6663
    %v7336 = vpack.c.b16 %v6668, %v6664
    %v7337 = vpack.c.b16 %v6673, %v6669
    %v7338 = vpack.c.b16 %v6674, %v6670
    %v7339 = vpack.c.b16 %v6675, %v6671
    %v7340 = vpack.c.b16 %v6676, %v6672
    %v7341 = vpack.c.b16 %v6681, %v6677
    %v7342 = vpack.c.b16 %v6682, %v6678
    %v7343 = vpack.c.b16 %v6683, %v6679
    %v7344 = vpack.c.b16 %v6684, %v6680
    %v7345 = vpack.c.b16 %v6689, %v6685
    %v7346 = vpack.c.b16 %v6690, %v6686
    %v7347 = vpack.c.b16 %v6691, %v6687
    %v7348 = vpack.c.b16 %v6692, %v6688
    %v7349 = vpack.c.b16 %v6697, %v6693
    %v7350 = vpack.c.b16 %v6698, %v6694
    %v7351 = vpack.c.b16 %v6699, %v6695
    %v7352 = vpack.c.b16 %v6700, %v6696
    %v7353 = vpack.c.b16 %v6705, %v6701
    %v7354 = vpack.c.b16 %v6706, %v6702
    %v7355 = vpack.c.b16 %v6707, %v6703
    %v7356 = vpack.c.b16 %v6708, %v6704
    %v7357 = vpack.c.b16 %v6713, %v6709
    %v7358 = vpack.c.b16 %v6714, %v6710
    %v7359 = vpack.c.b16 %v6715, %v6711
    %v7360 = vpack.c.b16 %v6716, %v6712
    %v7361 = vpack.c.b16 %v6721, %v6717
    %v7362 = vpack.c.b16 %v6722, %v6718
    %v7363 = vpack.c.b16 %v6723, %v6719
    %v7364 = vpack.c.b16 %v6724, %v6720
    %v7365 = vpack.c.b16 %v6729, %v6725
    %v7366 = vpack.c.b16 %v6730, %v6726
    %v7367 = vpack.c.b16 %v6731, %v6727
    %v7368 = vpack.c.b16 %v6732, %v6728
    %v7369 = vpack.c.b16 %v6737, %v6733
    %v7370 = vpack.c.b16 %v6738, %v6734
    %v7371 = vpack.c.b16 %v6739, %v6735
    %v7372 = vpack.c.b16 %v6740, %v6736
    %v7373 = vpack.c.b16 %v6745, %v6741
    %v7374 = vpack.c.b16 %v6746, %v6742
    %v7375 = vpack.c.b16 %v6747, %v6743
    %v7376 = vpack.c.b16 %v6748, %v6744
    %v7377 = vpack.c.b16 %v6753, %v6749
    %v7378 = vpack.c.b16 %v6754, %v6750
    %v7379 = vpack.c.b16 %v6755, %v6751
    %v7380 = vpack.c.b16 %v6756, %v6752
    %v7381 = vpack.c.b16 %v6761, %v6757
    %v7382 = vpack.c.b16 %v6762, %v6758
    %v7383 = vpack.c.b16 %v6763, %v6759
    %v7384 = vpack.c.b16 %v6764, %v6760
    %v7385 = vpack.c.b16 %v6769, %v6765
    %v7386 = vpack.c.b16 %v6770, %v6766
    %v7387 = vpack.c.b16 %v6771, %v6767
    %v7388 = vpack.c.b16 %v6772, %v6768
    %v7389 = vpack.c.b16 %v6777, %v6773
    %v7390 = vpack.c.b16 %v6778, %v6774
    %v7391 = vpack.c.b16 %v6779, %v6775
    %v7392 = vpack.c.b16 %v6780, %v6776
    %v7393 = vpack.c.b16 %v6785, %v6781
    %v7394 = vpack.c.b16 %v6786, %v6782
    %v7395 = vpack.c.b16 %v6787, %v6783
    %v7396 = vpack.c.b16 %v6788, %v6784
    %v7397 = vpack.c.b16 %v6793, %v6789
    %v7398 = vpack.c.b16 %v6794, %v6790
    %v7399 = vpack.c.b16 %v6795, %v6791
    %v7400 = vpack.c.b16 %v6796, %v6792
    %v7401 = vpack.c.b16 %v6801, %v6797
    %v7402 = vpack.c.b16 %v6802, %v6798
    %v7403 = vpack.c.b16 %v6803, %v6799
    %v7404 = vpack.c.b16 %v6804, %v6800
    %v7405 = vpack.c.b16 %v6809, %v6805
    %v7406 = vpack.c.b16 %v6810, %v6806
    %v7407 = vpack.c.b16 %v6811, %v6807
    %v7408 = vpack.c.b16 %v6812, %v6808
    %v7409 = vpack.c.b16 %v6817, %v6813
    %v7410 = vpack.c.b16 %v6818, %v6814
    %v7411 = vpack.c.b16 %v6819, %v6815
    %v7412 = vpack.c.b16 %v6820, %v6816
    %v7413 = vpack.c.b16 %v6825, %v6821
    %v7414 = vpack.c.b16 %v6826, %v6822
    %v7415 = vpack.c.b16 %v6827, %v6823
    %v7416 = vpack.c.b16 %v6828, %v6824
    %v7417 = vpack.c.b16 %v6833, %v6829
    %v7418 = vpack.c.b16 %v6834, %v6830
    %v7419 = vpack.c.b16 %v6835, %v6831
    %v7420 = vpack.c.b16 %v6836, %v6832
    %v7421 = vpack.c.b16 %v6841, %v6837
    %v7422 = vpack.c.b16 %v6842, %v6838
    %v7423 = vpack.c.b16 %v6843, %v6839
    %v7424 = vpack.c.b16 %v6844, %v6840
    %v7425 = vpack.c.b16 %v6849, %v6845
    %v7426 = vpack.c.b16 %v6850, %v6846
    %v7427 = vpack.c.b16 %v6851, %v6847
    %v7428 = vpack.c.b16 %v6852, %v6848
    %8005 = vmatprep.subr.bf16.mxu0 %v6882
    %8006 = vmatpush1.bf16.msra.mxu0 %v6881
    %8007 = vmatprep.subr.bf16.mxu0 %v6878
    %8008 = vmatpush1.bf16.msra.mxu0 %v6877
    %8009 = vmatprep.subr.bf16.mxu0 %v6874
    %8010 = vmatpush1.bf16.msra.mxu0 %v6873
    %8011 = vmatprep.subr.bf16.mxu0 %v6870
    %8012 = vmatpush1.bf16.msra.mxu0 %v6869
    %8013 = vmatprep.subr.bf16.mxu0 %v6866
    %8014 = vmatpush1.bf16.msra.mxu0 %v6865
    %8015 = vmatprep.subr.bf16.mxu0 %v6862
    %8016 = vmatpush1.bf16.msra.mxu0 %v6861
    %8017 = vmatprep.subr.bf16.mxu0 %v6858
    %8018 = vmatpush1.bf16.msra.mxu0 %v6857
    %8019 = vmatprep.subr.bf16.mxu0 %v6854
    %8020 = vmatpush1.bf16.msra.mxu0 %v6853
    %8021 = vmatprep.subr.bf16.mxu0 %v6914
    %8022 = vmatpush2.bf16.msra.mxu0 %v6913
    %8023 = vmatprep.subr.bf16.mxu0 %v6910
    %8024 = vmatpush2.bf16.msra.mxu0 %v6909
    %8025 = vmatprep.subr.bf16.mxu0 %v6906
    %8026 = vmatpush2.bf16.msra.mxu0 %v6905
    %8027 = vmatprep.subr.bf16.mxu0 %v6902
    %8028 = vmatpush2.bf16.msra.mxu0 %v6901
    %8029 = vmatprep.subr.bf16.mxu0 %v6898
    %8030 = vmatpush2.bf16.msra.mxu0 %v6897
    %8031 = vmatprep.subr.bf16.mxu0 %v6894
    %8032 = vmatpush2.bf16.msra.mxu0 %v6893
    %8033 = vmatprep.subr.bf16.mxu0 %v6890
    %8034 = vmatpush2.bf16.msra.mxu0 %v6889
    %8035 = vmatprep.subr.bf16.mxu0 %v6886
    %8036 = vmatpush2.bf16.msra.mxu0 %v6885
    %8037 = vmatprep.mubr.bf16.mxu0 %v4658
    %8038 = vmatmul.mubr.bf16.gmra.mxu0 %v4657
    %v8039 = vpop.f32.mrf.mxu0
    %v8040 = vadd.f32 0.0, %v8039
    %v8041 = vpop.f32.mrf.mxu0
    %v8042 = vadd.f32 0.0, %v8041
    %v8043 = vpop.f32.mrf.mxu0
    %v8044 = vadd.f32 0.0, %v8043
    %v8045 = vpop.f32.mrf.mxu0
    %v8046 = vadd.f32 0.0, %v8045
    %8047 = vmatprep.mubr.bf16.mxu0 %v4676
    %8048 = vmatmul.mubr.bf16.gmra.mxu0 %v4675
    %v8049 = vpop.f32.mrf.mxu0
    %v8050 = vadd.f32 0.0, %v8049
    %v8051 = vpop.f32.mrf.mxu0
    %v8052 = vadd.f32 0.0, %v8051
    %v8053 = vpop.f32.mrf.mxu0
    %v8054 = vadd.f32 0.0, %v8053
    %v8055 = vpop.f32.mrf.mxu0
    %v8056 = vadd.f32 0.0, %v8055
    %8057 = vmatprep.mubr.bf16.mxu0 %v4694
    %8058 = vmatmul.mubr.bf16.gmra.mxu0 %v4693
    %v8059 = vpop.f32.mrf.mxu0
    %v8060 = vadd.f32 0.0, %v8059
    %v8061 = vpop.f32.mrf.mxu0
    %v8062 = vadd.f32 0.0, %v8061
    %v8063 = vpop.f32.mrf.mxu0
    %v8064 = vadd.f32 0.0, %v8063
    %v8065 = vpop.f32.mrf.mxu0
    %v8066 = vadd.f32 0.0, %v8065
    %8067 = vmatprep.mubr.bf16.mxu0 %v4712
    %8068 = vmatmul.mubr.bf16.gmra.mxu0 %v4711
    %v8069 = vpop.f32.mrf.mxu0
    %v8070 = vadd.f32 0.0, %v8069
    %v8071 = vpop.f32.mrf.mxu0
    %v8072 = vadd.f32 0.0, %v8071
    %v8073 = vpop.f32.mrf.mxu0
    %v8074 = vadd.f32 0.0, %v8073
    %v8075 = vpop.f32.mrf.mxu0
    %v8076 = vadd.f32 0.0, %v8075
    %8077 = vmatprep.mubr.bf16.mxu0 %v4730
    %8078 = vmatmul.mubr.bf16.gmra.mxu0 %v4729
    %v8079 = vpop.f32.mrf.mxu0
    %v8080 = vadd.f32 0.0, %v8079
    %v8081 = vpop.f32.mrf.mxu0
    %v8082 = vadd.f32 0.0, %v8081
    %v8083 = vpop.f32.mrf.mxu0
    %v8084 = vadd.f32 0.0, %v8083
    %v8085 = vpop.f32.mrf.mxu0
    %v8086 = vadd.f32 0.0, %v8085
    %8087 = vmatprep.mubr.bf16.mxu0 %v4748
    %8088 = vmatmul.mubr.bf16.gmra.mxu0 %v4747
    %v8089 = vpop.f32.mrf.mxu0
    %v8090 = vadd.f32 0.0, %v8089
    %v8091 = vpop.f32.mrf.mxu0
    %v8092 = vadd.f32 0.0, %v8091
    %v8093 = vpop.f32.mrf.mxu0
    %v8094 = vadd.f32 0.0, %v8093
    %v8095 = vpop.f32.mrf.mxu0
    %v8096 = vadd.f32 0.0, %v8095
    %8097 = vmatprep.mubr.bf16.mxu0 %v4766
    %8098 = vmatmul.mubr.bf16.gmra.mxu0 %v4765
    %v8099 = vpop.f32.mrf.mxu0
    %v8100 = vadd.f32 0.0, %v8099
    %v8101 = vpop.f32.mrf.mxu0
    %v8102 = vadd.f32 0.0, %v8101
    %v8103 = vpop.f32.mrf.mxu0
    %v8104 = vadd.f32 0.0, %v8103
    %v8105 = vpop.f32.mrf.mxu0
    %v8106 = vadd.f32 0.0, %v8105
    %8107 = vmatprep.mubr.bf16.mxu0 %v4784
    %8108 = vmatmul.mubr.bf16.gmra.mxu0 %v4783
    %v8109 = vpop.f32.mrf.mxu0
    %v8110 = vadd.f32 0.0, %v8109
    %v8111 = vpop.f32.mrf.mxu0
    %v8112 = vadd.f32 0.0, %v8111
    %v8113 = vpop.f32.mrf.mxu0
    %v8114 = vadd.f32 0.0, %v8113
    %v8115 = vpop.f32.mrf.mxu0
    %v8116 = vadd.f32 0.0, %v8115
    %8117 = vmatprep.mubr.bf16.mxu0 %v4802
    %8118 = vmatmul.mubr.bf16.gmra.mxu0 %v4801
    %v8119 = vpop.f32.mrf.mxu0
    %v8120 = vadd.f32 0.0, %v8119
    %v8121 = vpop.f32.mrf.mxu0
    %v8122 = vadd.f32 0.0, %v8121
    %v8123 = vpop.f32.mrf.mxu0
    %v8124 = vadd.f32 0.0, %v8123
    %v8125 = vpop.f32.mrf.mxu0
    %v8126 = vadd.f32 0.0, %v8125
    %8127 = vmatprep.mubr.bf16.mxu0 %v4820
    %8128 = vmatmul.mubr.bf16.gmra.mxu0 %v4819
    %v8129 = vpop.f32.mrf.mxu0
    %v8130 = vadd.f32 0.0, %v8129
    %v8131 = vpop.f32.mrf.mxu0
    %v8132 = vadd.f32 0.0, %v8131
    %v8133 = vpop.f32.mrf.mxu0
    %v8134 = vadd.f32 0.0, %v8133
    %v8135 = vpop.f32.mrf.mxu0
    %v8136 = vadd.f32 0.0, %v8135
    %8137 = vmatprep.mubr.bf16.mxu0 %v4838
    %8138 = vmatmul.mubr.bf16.gmra.mxu0 %v4837
    %v8139 = vpop.f32.mrf.mxu0
    %v8140 = vadd.f32 0.0, %v8139
    %v8141 = vpop.f32.mrf.mxu0
    %v8142 = vadd.f32 0.0, %v8141
    %v8143 = vpop.f32.mrf.mxu0
    %v8144 = vadd.f32 0.0, %v8143
    %v8145 = vpop.f32.mrf.mxu0
    %v8146 = vadd.f32 0.0, %v8145
    %8147 = vmatprep.mubr.bf16.mxu0 %v4856
    %8148 = vmatmul.mubr.bf16.gmra.mxu0 %v4855
    %v8149 = vpop.f32.mrf.mxu0
    %v8150 = vadd.f32 0.0, %v8149
    %v8151 = vpop.f32.mrf.mxu0
    %v8152 = vadd.f32 0.0, %v8151
    %v8153 = vpop.f32.mrf.mxu0
    %v8154 = vadd.f32 0.0, %v8153
    %v8155 = vpop.f32.mrf.mxu0
    %v8156 = vadd.f32 0.0, %v8155
    %8157 = vmatprep.mubr.bf16.mxu0 %v4874
    %8158 = vmatmul.mubr.bf16.gmra.mxu0 %v4873
    %v8159 = vpop.f32.mrf.mxu0
    %v8160 = vadd.f32 0.0, %v8159
    %v8161 = vpop.f32.mrf.mxu0
    %v8162 = vadd.f32 0.0, %v8161
    %v8163 = vpop.f32.mrf.mxu0
    %v8164 = vpop.f32.mrf.mxu0
    %8165 = vdwg.mxu0
    %8166 = vmatprep.subr.bf16.mxu0 %v6946
    %8167 = vmatpush1.bf16.msra.mxu0 %v6945
    %8168 = vmatprep.subr.bf16.mxu0 %v6942
    %8169 = vmatpush1.bf16.msra.mxu0 %v6941
    %8170 = vmatprep.subr.bf16.mxu0 %v6938
    %8171 = vmatpush1.bf16.msra.mxu0 %v6937
    %8172 = vmatprep.subr.bf16.mxu0 %v6934
    %8173 = vmatpush1.bf16.msra.mxu0 %v6933
    %8174 = vmatprep.subr.bf16.mxu0 %v6930
    %8175 = vmatpush1.bf16.msra.mxu0 %v6929
    %8176 = vmatprep.subr.bf16.mxu0 %v6926
    %8177 = vmatpush1.bf16.msra.mxu0 %v6925
    %8178 = vmatprep.subr.bf16.mxu0 %v6922
    %8179 = vmatpush1.bf16.msra.mxu0 %v6921
    %8180 = vmatprep.subr.bf16.mxu0 %v6918
    %8181 = vmatpush1.bf16.msra.mxu0 %v6917
    %8182 = vmatprep.subr.bf16.mxu0 %v6978
    %8183 = vmatpush2.bf16.msra.mxu0 %v6977
    %8184 = vmatprep.subr.bf16.mxu0 %v6974
    %8185 = vmatpush2.bf16.msra.mxu0 %v6973
    %8186 = vmatprep.subr.bf16.mxu0 %v6970
    %8187 = vmatpush2.bf16.msra.mxu0 %v6969
    %8188 = vmatprep.subr.bf16.mxu0 %v6966
    %8189 = vmatpush2.bf16.msra.mxu0 %v6965
    %8190 = vmatprep.subr.bf16.mxu0 %v6962
    %8191 = vmatpush2.bf16.msra.mxu0 %v6961
    %8192 = vmatprep.subr.bf16.mxu0 %v6958
    %8193 = vmatpush2.bf16.msra.mxu0 %v6957
    %8194 = vmatprep.subr.bf16.mxu0 %v6954
    %8195 = vmatpush2.bf16.msra.mxu0 %v6953
    %8196 = vmatprep.subr.bf16.mxu0 %v6950
    %8197 = vmatpush2.bf16.msra.mxu0 %v6949
    %8198 = vmatprep.mubr.bf16.mxu0 %v4660
    %8199 = vmatmul.mubr.bf16.gmra.mxu0 %v4659
    %v8200 = vpop.f32.mrf.mxu0
    %v8201 = vadd.f32 %v8040, %v8200
    %v8202 = vpop.f32.mrf.mxu0
    %v8203 = vadd.f32 %v8042, %v8202
    %v8204 = vpop.f32.mrf.mxu0
    %v8205 = vadd.f32 %v8044, %v8204
    %v8206 = vpop.f32.mrf.mxu0
    %v8207 = vadd.f32 %v8046, %v8206
    %8208 = vmatprep.mubr.bf16.mxu0 %v4678
    %8209 = vmatmul.mubr.bf16.gmra.mxu0 %v4677
    %v8210 = vpop.f32.mrf.mxu0
    %v8211 = vadd.f32 %v8050, %v8210
    %v8212 = vpop.f32.mrf.mxu0
    %v8213 = vadd.f32 %v8052, %v8212
    %v8214 = vpop.f32.mrf.mxu0
    %v8215 = vadd.f32 %v8054, %v8214
    %v8216 = vpop.f32.mrf.mxu0
    %v8217 = vadd.f32 %v8056, %v8216
    %8218 = vmatprep.mubr.bf16.mxu0 %v4696
    %8219 = vmatmul.mubr.bf16.gmra.mxu0 %v4695
    %v8220 = vpop.f32.mrf.mxu0
    %v8221 = vadd.f32 %v8060, %v8220
    %v8222 = vpop.f32.mrf.mxu0
    %v8223 = vadd.f32 %v8062, %v8222
    %v8224 = vpop.f32.mrf.mxu0
    %v8225 = vadd.f32 %v8064, %v8224
    %v8226 = vpop.f32.mrf.mxu0
    %v8227 = vadd.f32 %v8066, %v8226
    %8228 = vmatprep.mubr.bf16.mxu0 %v4714
    %8229 = vmatmul.mubr.bf16.gmra.mxu0 %v4713
    %v8230 = vpop.f32.mrf.mxu0
    %v8231 = vadd.f32 %v8070, %v8230
    %v8232 = vpop.f32.mrf.mxu0
    %v8233 = vadd.f32 %v8072, %v8232
    %v8234 = vpop.f32.mrf.mxu0
    %v8235 = vadd.f32 %v8074, %v8234
    %v8236 = vpop.f32.mrf.mxu0
    %v8237 = vadd.f32 %v8076, %v8236
    %8238 = vmatprep.mubr.bf16.mxu0 %v4732
    %8239 = vmatmul.mubr.bf16.gmra.mxu0 %v4731
    %v8240 = vpop.f32.mrf.mxu0
    %v8241 = vadd.f32 %v8080, %v8240
    %v8242 = vpop.f32.mrf.mxu0
    %v8243 = vadd.f32 %v8082, %v8242
    %v8244 = vpop.f32.mrf.mxu0
    %v8245 = vadd.f32 %v8084, %v8244
    %v8246 = vpop.f32.mrf.mxu0
    %v8247 = vadd.f32 %v8086, %v8246
    %8248 = vmatprep.mubr.bf16.mxu0 %v4750
    %8249 = vmatmul.mubr.bf16.gmra.mxu0 %v4749
    %v8250 = vpop.f32.mrf.mxu0
    %v8251 = vadd.f32 %v8090, %v8250
    %v8252 = vpop.f32.mrf.mxu0
    %v8253 = vadd.f32 %v8092, %v8252
    %v8254 = vpop.f32.mrf.mxu0
    %v8255 = vadd.f32 %v8094, %v8254
    %v8256 = vpop.f32.mrf.mxu0
    %v8257 = vadd.f32 %v8096, %v8256
    %8258 = vmatprep.mubr.bf16.mxu0 %v4768
    %8259 = vmatmul.mubr.bf16.gmra.mxu0 %v4767
    %v8260 = vpop.f32.mrf.mxu0
    %v8261 = vadd.f32 %v8100, %v8260
    %v8262 = vpop.f32.mrf.mxu0
    %v8263 = vadd.f32 %v8102, %v8262
    %v8264 = vpop.f32.mrf.mxu0
    %v8265 = vadd.f32 %v8104, %v8264
    %v8266 = vpop.f32.mrf.mxu0
    %v8267 = vadd.f32 %v8106, %v8266
    %8268 = vmatprep.mubr.bf16.mxu0 %v4786
    %8269 = vmatmul.mubr.bf16.gmra.mxu0 %v4785
    %v8270 = vpop.f32.mrf.mxu0
    %v8271 = vadd.f32 %v8110, %v8270
    %v8272 = vpop.f32.mrf.mxu0
    %v8273 = vadd.f32 %v8112, %v8272
    %v8274 = vpop.f32.mrf.mxu0
    %v8275 = vadd.f32 %v8114, %v8274
    %v8276 = vpop.f32.mrf.mxu0
    %v8277 = vadd.f32 %v8116, %v8276
    %8278 = vmatprep.mubr.bf16.mxu0 %v4804
    %8279 = vmatmul.mubr.bf16.gmra.mxu0 %v4803
    %v8280 = vpop.f32.mrf.mxu0
    %v8281 = vadd.f32 %v8120, %v8280
    %v8282 = vpop.f32.mrf.mxu0
    %v8283 = vadd.f32 %v8122, %v8282
    %v8284 = vpop.f32.mrf.mxu0
    %v8285 = vadd.f32 %v8124, %v8284
    %v8286 = vpop.f32.mrf.mxu0
    %v8287 = vadd.f32 %v8126, %v8286
    %8288 = vmatprep.mubr.bf16.mxu0 %v4822
    %8289 = vmatmul.mubr.bf16.gmra.mxu0 %v4821
    %v8290 = vpop.f32.mrf.mxu0
    %v8291 = vadd.f32 %v8130, %v8290
    %v8292 = vpop.f32.mrf.mxu0
    %v8293 = vadd.f32 %v8132, %v8292
    %v8294 = vpop.f32.mrf.mxu0
    %v8295 = vadd.f32 %v8134, %v8294
    %v8296 = vpop.f32.mrf.mxu0
    %v8297 = vadd.f32 %v8136, %v8296
    %8298 = vmatprep.mubr.bf16.mxu0 %v4840
    %8299 = vmatmul.mubr.bf16.gmra.mxu0 %v4839
    %v8300 = vpop.f32.mrf.mxu0
    %v8301 = vadd.f32 %v8140, %v8300
    %v8302 = vpop.f32.mrf.mxu0
    %v8303 = vadd.f32 %v8142, %v8302
    %v8304 = vpop.f32.mrf.mxu0
    %v8305 = vadd.f32 %v8144, %v8304
    %v8306 = vpop.f32.mrf.mxu0
    %v8307 = vadd.f32 %v8146, %v8306
    %8308 = vmatprep.mubr.bf16.mxu0 %v4858
    %8309 = vmatmul.mubr.bf16.gmra.mxu0 %v4857
    %v8310 = vpop.f32.mrf.mxu0
    %v8311 = vadd.f32 %v8150, %v8310
    %v8312 = vpop.f32.mrf.mxu0
    %v8313 = vadd.f32 %v8152, %v8312
    %v8314 = vpop.f32.mrf.mxu0
    %v8315 = vadd.f32 %v8154, %v8314
    %v8316 = vpop.f32.mrf.mxu0
    %v8317 = vadd.f32 %v8156, %v8316
    %8318 = vmatprep.mubr.bf16.mxu0 %v4876
    %8319 = vmatmul.mubr.bf16.gmra.mxu0 %v4875
    %v8320 = vpop.f32.mrf.mxu0
    %v8321 = vadd.f32 %v8160, %v8320
    %v8322 = vpop.f32.mrf.mxu0
    %v8323 = vadd.f32 %v8162, %v8322
    %v8324 = vpop.f32.mrf.mxu0
    %v8325 = vpop.f32.mrf.mxu0
    %8326 = vdwg.mxu0
    %8327 = vmatprep.subr.bf16.mxu0 %v7010
    %8328 = vmatpush1.bf16.msra.mxu0 %v7009
    %8329 = vmatprep.subr.bf16.mxu0 %v7006
    %8330 = vmatpush1.bf16.msra.mxu0 %v7005
    %8331 = vmatprep.subr.bf16.mxu0 %v7002
    %8332 = vmatpush1.bf16.msra.mxu0 %v7001
    %8333 = vmatprep.subr.bf16.mxu0 %v6998
    %8334 = vmatpush1.bf16.msra.mxu0 %v6997
    %8335 = vmatprep.subr.bf16.mxu0 %v6994
    %8336 = vmatpush1.bf16.msra.mxu0 %v6993
    %8337 = vmatprep.subr.bf16.mxu0 %v6990
    %8338 = vmatpush1.bf16.msra.mxu0 %v6989
    %8339 = vmatprep.subr.bf16.mxu0 %v6986
    %8340 = vmatpush1.bf16.msra.mxu0 %v6985
    %8341 = vmatprep.subr.bf16.mxu0 %v6982
    %8342 = vmatpush1.bf16.msra.mxu0 %v6981
    %8343 = vmatprep.subr.bf16.mxu0 %v7042
    %8344 = vmatpush2.bf16.msra.mxu0 %v7041
    %8345 = vmatprep.subr.bf16.mxu0 %v7038
    %8346 = vmatpush2.bf16.msra.mxu0 %v7037
    %8347 = vmatprep.subr.bf16.mxu0 %v7034
    %8348 = vmatpush2.bf16.msra.mxu0 %v7033
    %8349 = vmatprep.subr.bf16.mxu0 %v7030
    %8350 = vmatpush2.bf16.msra.mxu0 %v7029
    %8351 = vmatprep.subr.bf16.mxu0 %v7026
    %8352 = vmatpush2.bf16.msra.mxu0 %v7025
    %8353 = vmatprep.subr.bf16.mxu0 %v7022
    %8354 = vmatpush2.bf16.msra.mxu0 %v7021
    %8355 = vmatprep.subr.bf16.mxu0 %v7018
    %8356 = vmatpush2.bf16.msra.mxu0 %v7017
    %8357 = vmatprep.subr.bf16.mxu0 %v7014
    %8358 = vmatpush2.bf16.msra.mxu0 %v7013
    %8359 = vmatprep.mubr.bf16.mxu0 %v4662
    %8360 = vmatmul.mubr.bf16.gmra.mxu0 %v4661
    %v8361 = vpop.f32.mrf.mxu0
    %v8362 = vadd.f32 %v8201, %v8361
    %v8363 = vpop.f32.mrf.mxu0
    %v8364 = vadd.f32 %v8203, %v8363
    %v8365 = vpop.f32.mrf.mxu0
    %v8366 = vadd.f32 %v8205, %v8365
    %v8367 = vpop.f32.mrf.mxu0
    %v8368 = vadd.f32 %v8207, %v8367
    %8369 = vmatprep.mubr.bf16.mxu0 %v4680
    %8370 = vmatmul.mubr.bf16.gmra.mxu0 %v4679
    %v8371 = vpop.f32.mrf.mxu0
    %v8372 = vadd.f32 %v8211, %v8371
    %v8373 = vpop.f32.mrf.mxu0
    %v8374 = vadd.f32 %v8213, %v8373
    %v8375 = vpop.f32.mrf.mxu0
    %v8376 = vadd.f32 %v8215, %v8375
    %v8377 = vpop.f32.mrf.mxu0
    %v8378 = vadd.f32 %v8217, %v8377
    %8379 = vmatprep.mubr.bf16.mxu0 %v4698
    %8380 = vmatmul.mubr.bf16.gmra.mxu0 %v4697
    %v8381 = vpop.f32.mrf.mxu0
    %v8382 = vadd.f32 %v8221, %v8381
    %v8383 = vpop.f32.mrf.mxu0
    %v8384 = vadd.f32 %v8223, %v8383
    %v8385 = vpop.f32.mrf.mxu0
    %v8386 = vadd.f32 %v8225, %v8385
    %v8387 = vpop.f32.mrf.mxu0
    %v8388 = vadd.f32 %v8227, %v8387
    %8389 = vmatprep.mubr.bf16.mxu0 %v4716
    %8390 = vmatmul.mubr.bf16.gmra.mxu0 %v4715
    %v8391 = vpop.f32.mrf.mxu0
    %v8392 = vadd.f32 %v8231, %v8391
    %v8393 = vpop.f32.mrf.mxu0
    %v8394 = vadd.f32 %v8233, %v8393
    %v8395 = vpop.f32.mrf.mxu0
    %v8396 = vadd.f32 %v8235, %v8395
    %v8397 = vpop.f32.mrf.mxu0
    %v8398 = vadd.f32 %v8237, %v8397
    %8399 = vmatprep.mubr.bf16.mxu0 %v4734
    %8400 = vmatmul.mubr.bf16.gmra.mxu0 %v4733
    %v8401 = vpop.f32.mrf.mxu0
    %v8402 = vadd.f32 %v8241, %v8401
    %v8403 = vpop.f32.mrf.mxu0
    %v8404 = vadd.f32 %v8243, %v8403
    %v8405 = vpop.f32.mrf.mxu0
    %v8406 = vadd.f32 %v8245, %v8405
    %v8407 = vpop.f32.mrf.mxu0
    %v8408 = vadd.f32 %v8247, %v8407
    %8409 = vmatprep.mubr.bf16.mxu0 %v4752
    %8410 = vmatmul.mubr.bf16.gmra.mxu0 %v4751
    %v8411 = vpop.f32.mrf.mxu0
    %v8412 = vadd.f32 %v8251, %v8411
    %v8413 = vpop.f32.mrf.mxu0
    %v8414 = vadd.f32 %v8253, %v8413
    %v8415 = vpop.f32.mrf.mxu0
    %v8416 = vadd.f32 %v8255, %v8415
    %v8417 = vpop.f32.mrf.mxu0
    %v8418 = vadd.f32 %v8257, %v8417
    %8419 = vmatprep.mubr.bf16.mxu0 %v4770
    %8420 = vmatmul.mubr.bf16.gmra.mxu0 %v4769
    %v8421 = vpop.f32.mrf.mxu0
    %v8422 = vadd.f32 %v8261, %v8421
    %v8423 = vpop.f32.mrf.mxu0
    %v8424 = vadd.f32 %v8263, %v8423
    %v8425 = vpop.f32.mrf.mxu0
    %v8426 = vadd.f32 %v8265, %v8425
    %v8427 = vpop.f32.mrf.mxu0
    %v8428 = vadd.f32 %v8267, %v8427
    %8429 = vmatprep.mubr.bf16.mxu0 %v4788
    %8430 = vmatmul.mubr.bf16.gmra.mxu0 %v4787
    %v8431 = vpop.f32.mrf.mxu0
    %v8432 = vadd.f32 %v8271, %v8431
    %v8433 = vpop.f32.mrf.mxu0
    %v8434 = vadd.f32 %v8273, %v8433
    %v8435 = vpop.f32.mrf.mxu0
    %v8436 = vadd.f32 %v8275, %v8435
    %v8437 = vpop.f32.mrf.mxu0
    %v8438 = vadd.f32 %v8277, %v8437
    %8439 = vmatprep.mubr.bf16.mxu0 %v4806
    %8440 = vmatmul.mubr.bf16.gmra.mxu0 %v4805
    %v8441 = vpop.f32.mrf.mxu0
    %v8442 = vadd.f32 %v8281, %v8441
    %v8443 = vpop.f32.mrf.mxu0
    %v8444 = vadd.f32 %v8283, %v8443
    %v8445 = vpop.f32.mrf.mxu0
    %v8446 = vadd.f32 %v8285, %v8445
    %v8447 = vpop.f32.mrf.mxu0
    %v8448 = vadd.f32 %v8287, %v8447
    %8449 = vmatprep.mubr.bf16.mxu0 %v4824
    %8450 = vmatmul.mubr.bf16.gmra.mxu0 %v4823
    %v8451 = vpop.f32.mrf.mxu0
    %v8452 = vadd.f32 %v8291, %v8451
    %v8453 = vpop.f32.mrf.mxu0
    %v8454 = vadd.f32 %v8293, %v8453
    %v8455 = vpop.f32.mrf.mxu0
    %v8456 = vadd.f32 %v8295, %v8455
    %v8457 = vpop.f32.mrf.mxu0
    %v8458 = vadd.f32 %v8297, %v8457
    %8459 = vmatprep.mubr.bf16.mxu0 %v4842
    %8460 = vmatmul.mubr.bf16.gmra.mxu0 %v4841
    %v8461 = vpop.f32.mrf.mxu0
    %v8462 = vadd.f32 %v8301, %v8461
    %v8463 = vpop.f32.mrf.mxu0
    %v8464 = vadd.f32 %v8303, %v8463
    %v8465 = vpop.f32.mrf.mxu0
    %v8466 = vadd.f32 %v8305, %v8465
    %v8467 = vpop.f32.mrf.mxu0
    %v8468 = vadd.f32 %v8307, %v8467
    %8469 = vmatprep.mubr.bf16.mxu0 %v4860
    %8470 = vmatmul.mubr.bf16.gmra.mxu0 %v4859
    %v8471 = vpop.f32.mrf.mxu0
    %v8472 = vadd.f32 %v8311, %v8471
    %v8473 = vpop.f32.mrf.mxu0
    %v8474 = vadd.f32 %v8313, %v8473
    %v8475 = vpop.f32.mrf.mxu0
    %v8476 = vadd.f32 %v8315, %v8475
    %v8477 = vpop.f32.mrf.mxu0
    %v8478 = vadd.f32 %v8317, %v8477
    %8479 = vmatprep.mubr.bf16.mxu0 %v4878
    %8480 = vmatmul.mubr.bf16.gmra.mxu0 %v4877
    %v8481 = vpop.f32.mrf.mxu0
    %v8482 = vadd.f32 %v8321, %v8481
    %v8483 = vpop.f32.mrf.mxu0
    %v8484 = vadd.f32 %v8323, %v8483
    %v8485 = vpop.f32.mrf.mxu0
    %v8486 = vpop.f32.mrf.mxu0
    %8487 = vdwg.mxu0
    %8488 = vmatprep.subr.bf16.mxu0 %v7074
    %8489 = vmatpush1.bf16.msra.mxu0 %v7073
    %8490 = vmatprep.subr.bf16.mxu0 %v7070
    %8491 = vmatpush1.bf16.msra.mxu0 %v7069
    %8492 = vmatprep.subr.bf16.mxu0 %v7066
    %8493 = vmatpush1.bf16.msra.mxu0 %v7065
    %8494 = vmatprep.subr.bf16.mxu0 %v7062
    %8495 = vmatpush1.bf16.msra.mxu0 %v7061
    %8496 = vmatprep.subr.bf16.mxu0 %v7058
    %8497 = vmatpush1.bf16.msra.mxu0 %v7057
    %8498 = vmatprep.subr.bf16.mxu0 %v7054
    %8499 = vmatpush1.bf16.msra.mxu0 %v7053
    %8500 = vmatprep.subr.bf16.mxu0 %v7050
    %8501 = vmatpush1.bf16.msra.mxu0 %v7049
    %8502 = vmatprep.subr.bf16.mxu0 %v7046
    %8503 = vmatpush1.bf16.msra.mxu0 %v7045
    %8504 = vmatprep.subr.bf16.mxu0 %v7106
    %8505 = vmatpush2.bf16.msra.mxu0 %v7105
    %8506 = vmatprep.subr.bf16.mxu0 %v7102
    %8507 = vmatpush2.bf16.msra.mxu0 %v7101
    %8508 = vmatprep.subr.bf16.mxu0 %v7098
    %8509 = vmatpush2.bf16.msra.mxu0 %v7097
    %8510 = vmatprep.subr.bf16.mxu0 %v7094
    %8511 = vmatpush2.bf16.msra.mxu0 %v7093
    %8512 = vmatprep.subr.bf16.mxu0 %v7090
    %8513 = vmatpush2.bf16.msra.mxu0 %v7089
    %8514 = vmatprep.subr.bf16.mxu0 %v7086
    %8515 = vmatpush2.bf16.msra.mxu0 %v7085
    %8516 = vmatprep.subr.bf16.mxu0 %v7082
    %8517 = vmatpush2.bf16.msra.mxu0 %v7081
    %8518 = vmatprep.subr.bf16.mxu0 %v7078
    %8519 = vmatpush2.bf16.msra.mxu0 %v7077
    %8520 = vmatprep.mubr.bf16.mxu0 %v4664
    %8521 = vmatmul.mubr.bf16.gmra.mxu0 %v4663
    %v8522 = vpop.f32.mrf.mxu0
    %v8523 = vadd.f32 %v8362, %v8522
    %v8524 = vpop.f32.mrf.mxu0
    %v8525 = vadd.f32 %v8364, %v8524
    %v8526 = vpop.f32.mrf.mxu0
    %v8527 = vadd.f32 %v8366, %v8526
    %v8528 = vpop.f32.mrf.mxu0
    %v8529 = vadd.f32 %v8368, %v8528
    %8530 = vmatprep.mubr.bf16.mxu0 %v4682
    %8531 = vmatmul.mubr.bf16.gmra.mxu0 %v4681
    %v8532 = vpop.f32.mrf.mxu0
    %v8533 = vadd.f32 %v8372, %v8532
    %v8534 = vpop.f32.mrf.mxu0
    %v8535 = vadd.f32 %v8374, %v8534
    %v8536 = vpop.f32.mrf.mxu0
    %v8537 = vadd.f32 %v8376, %v8536
    %v8538 = vpop.f32.mrf.mxu0
    %v8539 = vadd.f32 %v8378, %v8538
    %8540 = vmatprep.mubr.bf16.mxu0 %v4700
    %8541 = vmatmul.mubr.bf16.gmra.mxu0 %v4699
    %v8542 = vpop.f32.mrf.mxu0
    %v8543 = vadd.f32 %v8382, %v8542
    %v8544 = vpop.f32.mrf.mxu0
    %v8545 = vadd.f32 %v8384, %v8544
    %v8546 = vpop.f32.mrf.mxu0
    %v8547 = vadd.f32 %v8386, %v8546
    %v8548 = vpop.f32.mrf.mxu0
    %v8549 = vadd.f32 %v8388, %v8548
    %8550 = vmatprep.mubr.bf16.mxu0 %v4718
    %8551 = vmatmul.mubr.bf16.gmra.mxu0 %v4717
    %v8552 = vpop.f32.mrf.mxu0
    %v8553 = vadd.f32 %v8392, %v8552
    %v8554 = vpop.f32.mrf.mxu0
    %v8555 = vadd.f32 %v8394, %v8554
    %v8556 = vpop.f32.mrf.mxu0
    %v8557 = vadd.f32 %v8396, %v8556
    %v8558 = vpop.f32.mrf.mxu0
    %v8559 = vadd.f32 %v8398, %v8558
    %8560 = vmatprep.mubr.bf16.mxu0 %v4736
    %8561 = vmatmul.mubr.bf16.gmra.mxu0 %v4735
    %v8562 = vpop.f32.mrf.mxu0
    %v8563 = vadd.f32 %v8402, %v8562
    %v8564 = vpop.f32.mrf.mxu0
    %v8565 = vadd.f32 %v8404, %v8564
    %v8566 = vpop.f32.mrf.mxu0
    %v8567 = vadd.f32 %v8406, %v8566
    %v8568 = vpop.f32.mrf.mxu0
    %v8569 = vadd.f32 %v8408, %v8568
    %8570 = vmatprep.mubr.bf16.mxu0 %v4754
    %8571 = vmatmul.mubr.bf16.gmra.mxu0 %v4753
    %v8572 = vpop.f32.mrf.mxu0
    %v8573 = vadd.f32 %v8412, %v8572
    %v8574 = vpop.f32.mrf.mxu0
    %v8575 = vadd.f32 %v8414, %v8574
    %v8576 = vpop.f32.mrf.mxu0
    %v8577 = vadd.f32 %v8416, %v8576
    %v8578 = vpop.f32.mrf.mxu0
    %v8579 = vadd.f32 %v8418, %v8578
    %8580 = vmatprep.mubr.bf16.mxu0 %v4772
    %8581 = vmatmul.mubr.bf16.gmra.mxu0 %v4771
    %v8582 = vpop.f32.mrf.mxu0
    %v8583 = vadd.f32 %v8422, %v8582
    %v8584 = vpop.f32.mrf.mxu0
    %v8585 = vadd.f32 %v8424, %v8584
    %v8586 = vpop.f32.mrf.mxu0
    %v8587 = vadd.f32 %v8426, %v8586
    %v8588 = vpop.f32.mrf.mxu0
    %v8589 = vadd.f32 %v8428, %v8588
    %8590 = vmatprep.mubr.bf16.mxu0 %v4790
    %8591 = vmatmul.mubr.bf16.gmra.mxu0 %v4789
    %v8592 = vpop.f32.mrf.mxu0
    %v8593 = vadd.f32 %v8432, %v8592
    %v8594 = vpop.f32.mrf.mxu0
    %v8595 = vadd.f32 %v8434, %v8594
    %v8596 = vpop.f32.mrf.mxu0
    %v8597 = vadd.f32 %v8436, %v8596
    %v8598 = vpop.f32.mrf.mxu0
    %v8599 = vadd.f32 %v8438, %v8598
    %8600 = vmatprep.mubr.bf16.mxu0 %v4808
    %8601 = vmatmul.mubr.bf16.gmra.mxu0 %v4807
    %v8602 = vpop.f32.mrf.mxu0
    %v8603 = vadd.f32 %v8442, %v8602
    %v8604 = vpop.f32.mrf.mxu0
    %v8605 = vadd.f32 %v8444, %v8604
    %v8606 = vpop.f32.mrf.mxu0
    %v8607 = vadd.f32 %v8446, %v8606
    %v8608 = vpop.f32.mrf.mxu0
    %v8609 = vadd.f32 %v8448, %v8608
    %8610 = vmatprep.mubr.bf16.mxu0 %v4826
    %8611 = vmatmul.mubr.bf16.gmra.mxu0 %v4825
    %v8612 = vpop.f32.mrf.mxu0
    %v8613 = vadd.f32 %v8452, %v8612
    %v8614 = vpop.f32.mrf.mxu0
    %v8615 = vadd.f32 %v8454, %v8614
    %v8616 = vpop.f32.mrf.mxu0
    %v8617 = vadd.f32 %v8456, %v8616
    %v8618 = vpop.f32.mrf.mxu0
    %v8619 = vadd.f32 %v8458, %v8618
    %8620 = vmatprep.mubr.bf16.mxu0 %v4844
    %8621 = vmatmul.mubr.bf16.gmra.mxu0 %v4843
    %v8622 = vpop.f32.mrf.mxu0
    %v8623 = vadd.f32 %v8462, %v8622
    %v8624 = vpop.f32.mrf.mxu0
    %v8625 = vadd.f32 %v8464, %v8624
    %v8626 = vpop.f32.mrf.mxu0
    %v8627 = vadd.f32 %v8466, %v8626
    %v8628 = vpop.f32.mrf.mxu0
    %v8629 = vadd.f32 %v8468, %v8628
    %8630 = vmatprep.mubr.bf16.mxu0 %v4862
    %8631 = vmatmul.mubr.bf16.gmra.mxu0 %v4861
    %v8632 = vpop.f32.mrf.mxu0
    %v8633 = vadd.f32 %v8472, %v8632
    %v8634 = vpop.f32.mrf.mxu0
    %v8635 = vadd.f32 %v8474, %v8634
    %v8636 = vpop.f32.mrf.mxu0
    %v8637 = vadd.f32 %v8476, %v8636
    %v8638 = vpop.f32.mrf.mxu0
    %v8639 = vadd.f32 %v8478, %v8638
    %8640 = vmatprep.mubr.bf16.mxu0 %v4880
    %8641 = vmatmul.mubr.bf16.gmra.mxu0 %v4879
    %v8642 = vpop.f32.mrf.mxu0
    %v8643 = vadd.f32 %v8482, %v8642
    %v8644 = vpop.f32.mrf.mxu0
    %v8645 = vadd.f32 %v8484, %v8644
    %v8646 = vpop.f32.mrf.mxu0
    %v8647 = vpop.f32.mrf.mxu0
    %8648 = vdwg.mxu0
    %8649 = vmatprep.subr.bf16.mxu0 %v7138
    %8650 = vmatpush1.bf16.msra.mxu0 %v7137
    %8651 = vmatprep.subr.bf16.mxu0 %v7134
    %8652 = vmatpush1.bf16.msra.mxu0 %v7133
    %8653 = vmatprep.subr.bf16.mxu0 %v7130
    %8654 = vmatpush1.bf16.msra.mxu0 %v7129
    %8655 = vmatprep.subr.bf16.mxu0 %v7126
    %8656 = vmatpush1.bf16.msra.mxu0 %v7125
    %8657 = vmatprep.subr.bf16.mxu0 %v7122
    %8658 = vmatpush1.bf16.msra.mxu0 %v7121
    %8659 = vmatprep.subr.bf16.mxu0 %v7118
    %8660 = vmatpush1.bf16.msra.mxu0 %v7117
    %8661 = vmatprep.subr.bf16.mxu0 %v7114
    %8662 = vmatpush1.bf16.msra.mxu0 %v7113
    %8663 = vmatprep.subr.bf16.mxu0 %v7110
    %8664 = vmatpush1.bf16.msra.mxu0 %v7109
    %8665 = vmatprep.subr.bf16.mxu0 %v7170
    %8666 = vmatpush2.bf16.msra.mxu0 %v7169
    %8667 = vmatprep.subr.bf16.mxu0 %v7166
    %8668 = vmatpush2.bf16.msra.mxu0 %v7165
    %8669 = vmatprep.subr.bf16.mxu0 %v7162
    %8670 = vmatpush2.bf16.msra.mxu0 %v7161
    %8671 = vmatprep.subr.bf16.mxu0 %v7158
    %8672 = vmatpush2.bf16.msra.mxu0 %v7157
    %8673 = vmatprep.subr.bf16.mxu0 %v7154
    %8674 = vmatpush2.bf16.msra.mxu0 %v7153
    %8675 = vmatprep.subr.bf16.mxu0 %v7150
    %8676 = vmatpush2.bf16.msra.mxu0 %v7149
    %8677 = vmatprep.subr.bf16.mxu0 %v7146
    %8678 = vmatpush2.bf16.msra.mxu0 %v7145
    %8679 = vmatprep.subr.bf16.mxu0 %v7142
    %8680 = vmatpush2.bf16.msra.mxu0 %v7141
    %8681 = vmatprep.mubr.bf16.mxu0 %v4666
    %8682 = vmatmul.mubr.bf16.gmra.mxu0 %v4665
    %v8683 = vpop.f32.mrf.mxu0
    %v8684 = vadd.f32 %v8523, %v8683
    %v8685 = vpop.f32.mrf.mxu0
    %v8686 = vadd.f32 %v8525, %v8685
    %v8687 = vpop.f32.mrf.mxu0
    %v8688 = vadd.f32 %v8527, %v8687
    %v8689 = vpop.f32.mrf.mxu0
    %v8690 = vadd.f32 %v8529, %v8689
    %8691 = vmatprep.mubr.bf16.mxu0 %v4684
    %8692 = vmatmul.mubr.bf16.gmra.mxu0 %v4683
    %v8693 = vpop.f32.mrf.mxu0
    %v8694 = vadd.f32 %v8533, %v8693
    %v8695 = vpop.f32.mrf.mxu0
    %v8696 = vadd.f32 %v8535, %v8695
    %v8697 = vpop.f32.mrf.mxu0
    %v8698 = vadd.f32 %v8537, %v8697
    %v8699 = vpop.f32.mrf.mxu0
    %v8700 = vadd.f32 %v8539, %v8699
    %8701 = vmatprep.mubr.bf16.mxu0 %v4702
    %8702 = vmatmul.mubr.bf16.gmra.mxu0 %v4701
    %v8703 = vpop.f32.mrf.mxu0
    %v8704 = vadd.f32 %v8543, %v8703
    %v8705 = vpop.f32.mrf.mxu0
    %v8706 = vadd.f32 %v8545, %v8705
    %v8707 = vpop.f32.mrf.mxu0
    %v8708 = vadd.f32 %v8547, %v8707
    %v8709 = vpop.f32.mrf.mxu0
    %v8710 = vadd.f32 %v8549, %v8709
    %8711 = vmatprep.mubr.bf16.mxu0 %v4720
    %8712 = vmatmul.mubr.bf16.gmra.mxu0 %v4719
    %v8713 = vpop.f32.mrf.mxu0
    %v8714 = vadd.f32 %v8553, %v8713
    %v8715 = vpop.f32.mrf.mxu0
    %v8716 = vadd.f32 %v8555, %v8715
    %v8717 = vpop.f32.mrf.mxu0
    %v8718 = vadd.f32 %v8557, %v8717
    %v8719 = vpop.f32.mrf.mxu0
    %v8720 = vadd.f32 %v8559, %v8719
    %8721 = vmatprep.mubr.bf16.mxu0 %v4738
    %8722 = vmatmul.mubr.bf16.gmra.mxu0 %v4737
    %v8723 = vpop.f32.mrf.mxu0
    %v8724 = vadd.f32 %v8563, %v8723
    %v8725 = vpop.f32.mrf.mxu0
    %v8726 = vadd.f32 %v8565, %v8725
    %v8727 = vpop.f32.mrf.mxu0
    %v8728 = vadd.f32 %v8567, %v8727
    %v8729 = vpop.f32.mrf.mxu0
    %v8730 = vadd.f32 %v8569, %v8729
    %8731 = vmatprep.mubr.bf16.mxu0 %v4756
    %8732 = vmatmul.mubr.bf16.gmra.mxu0 %v4755
    %v8733 = vpop.f32.mrf.mxu0
    %v8734 = vadd.f32 %v8573, %v8733
    %v8735 = vpop.f32.mrf.mxu0
    %v8736 = vadd.f32 %v8575, %v8735
    %v8737 = vpop.f32.mrf.mxu0
    %v8738 = vadd.f32 %v8577, %v8737
    %v8739 = vpop.f32.mrf.mxu0
    %v8740 = vadd.f32 %v8579, %v8739
    %8741 = vmatprep.mubr.bf16.mxu0 %v4774
    %8742 = vmatmul.mubr.bf16.gmra.mxu0 %v4773
    %v8743 = vpop.f32.mrf.mxu0
    %v8744 = vadd.f32 %v8583, %v8743
    %v8745 = vpop.f32.mrf.mxu0
    %v8746 = vadd.f32 %v8585, %v8745
    %v8747 = vpop.f32.mrf.mxu0
    %v8748 = vadd.f32 %v8587, %v8747
    %v8749 = vpop.f32.mrf.mxu0
    %v8750 = vadd.f32 %v8589, %v8749
    %8751 = vmatprep.mubr.bf16.mxu0 %v4792
    %8752 = vmatmul.mubr.bf16.gmra.mxu0 %v4791
    %v8753 = vpop.f32.mrf.mxu0
    %v8754 = vadd.f32 %v8593, %v8753
    %v8755 = vpop.f32.mrf.mxu0
    %v8756 = vadd.f32 %v8595, %v8755
    %v8757 = vpop.f32.mrf.mxu0
    %v8758 = vadd.f32 %v8597, %v8757
    %v8759 = vpop.f32.mrf.mxu0
    %v8760 = vadd.f32 %v8599, %v8759
    %8761 = vmatprep.mubr.bf16.mxu0 %v4810
    %8762 = vmatmul.mubr.bf16.gmra.mxu0 %v4809
    %v8763 = vpop.f32.mrf.mxu0
    %v8764 = vadd.f32 %v8603, %v8763
    %v8765 = vpop.f32.mrf.mxu0
    %v8766 = vadd.f32 %v8605, %v8765
    %v8767 = vpop.f32.mrf.mxu0
    %v8768 = vadd.f32 %v8607, %v8767
    %v8769 = vpop.f32.mrf.mxu0
    %v8770 = vadd.f32 %v8609, %v8769
    %8771 = vmatprep.mubr.bf16.mxu0 %v4828
    %8772 = vmatmul.mubr.bf16.gmra.mxu0 %v4827
    %v8773 = vpop.f32.mrf.mxu0
    %v8774 = vadd.f32 %v8613, %v8773
    %v8775 = vpop.f32.mrf.mxu0
    %v8776 = vadd.f32 %v8615, %v8775
    %v8777 = vpop.f32.mrf.mxu0
    %v8778 = vadd.f32 %v8617, %v8777
    %v8779 = vpop.f32.mrf.mxu0
    %v8780 = vadd.f32 %v8619, %v8779
    %8781 = vmatprep.mubr.bf16.mxu0 %v4846
    %8782 = vmatmul.mubr.bf16.gmra.mxu0 %v4845
    %v8783 = vpop.f32.mrf.mxu0
    %v8784 = vadd.f32 %v8623, %v8783
    %v8785 = vpop.f32.mrf.mxu0
    %v8786 = vadd.f32 %v8625, %v8785
    %v8787 = vpop.f32.mrf.mxu0
    %v8788 = vadd.f32 %v8627, %v8787
    %v8789 = vpop.f32.mrf.mxu0
    %v8790 = vadd.f32 %v8629, %v8789
    %8791 = vmatprep.mubr.bf16.mxu0 %v4864
    %8792 = vmatmul.mubr.bf16.gmra.mxu0 %v4863
    %v8793 = vpop.f32.mrf.mxu0
    %v8794 = vadd.f32 %v8633, %v8793
    %v8795 = vpop.f32.mrf.mxu0
    %v8796 = vadd.f32 %v8635, %v8795
    %v8797 = vpop.f32.mrf.mxu0
    %v8798 = vadd.f32 %v8637, %v8797
    %v8799 = vpop.f32.mrf.mxu0
    %v8800 = vadd.f32 %v8639, %v8799
    %8801 = vmatprep.mubr.bf16.mxu0 %v4882
    %8802 = vmatmul.mubr.bf16.gmra.mxu0 %v4881
    %v8803 = vpop.f32.mrf.mxu0
    %v8804 = vadd.f32 %v8643, %v8803
    %v8805 = vpop.f32.mrf.mxu0
    %v8806 = vadd.f32 %v8645, %v8805
    %v8807 = vpop.f32.mrf.mxu0
    %v8808 = vpop.f32.mrf.mxu0
    %8809 = vdwg.mxu0
    %8810 = vmatprep.subr.bf16.mxu0 %v7202
    %8811 = vmatpush1.bf16.msra.mxu0 %v7201
    %8812 = vmatprep.subr.bf16.mxu0 %v7198
    %8813 = vmatpush1.bf16.msra.mxu0 %v7197
    %8814 = vmatprep.subr.bf16.mxu0 %v7194
    %8815 = vmatpush1.bf16.msra.mxu0 %v7193
    %8816 = vmatprep.subr.bf16.mxu0 %v7190
    %8817 = vmatpush1.bf16.msra.mxu0 %v7189
    %8818 = vmatprep.subr.bf16.mxu0 %v7186
    %8819 = vmatpush1.bf16.msra.mxu0 %v7185
    %8820 = vmatprep.subr.bf16.mxu0 %v7182
    %8821 = vmatpush1.bf16.msra.mxu0 %v7181
    %8822 = vmatprep.subr.bf16.mxu0 %v7178
    %8823 = vmatpush1.bf16.msra.mxu0 %v7177
    %8824 = vmatprep.subr.bf16.mxu0 %v7174
    %8825 = vmatpush1.bf16.msra.mxu0 %v7173
    %8826 = vmatprep.subr.bf16.mxu0 %v7234
    %8827 = vmatpush2.bf16.msra.mxu0 %v7233
    %8828 = vmatprep.subr.bf16.mxu0 %v7230
    %8829 = vmatpush2.bf16.msra.mxu0 %v7229
    %8830 = vmatprep.subr.bf16.mxu0 %v7226
    %8831 = vmatpush2.bf16.msra.mxu0 %v7225
    %8832 = vmatprep.subr.bf16.mxu0 %v7222
    %8833 = vmatpush2.bf16.msra.mxu0 %v7221
    %8834 = vmatprep.subr.bf16.mxu0 %v7218
    %8835 = vmatpush2.bf16.msra.mxu0 %v7217
    %8836 = vmatprep.subr.bf16.mxu0 %v7214
    %8837 = vmatpush2.bf16.msra.mxu0 %v7213
    %8838 = vmatprep.subr.bf16.mxu0 %v7210
    %8839 = vmatpush2.bf16.msra.mxu0 %v7209
    %8840 = vmatprep.subr.bf16.mxu0 %v7206
    %8841 = vmatpush2.bf16.msra.mxu0 %v7205
    %8842 = vmatprep.mubr.bf16.mxu0 %v4668
    %8843 = vmatmul.mubr.bf16.gmra.mxu0 %v4667
    %v8844 = vpop.f32.mrf.mxu0
    %v8845 = vadd.f32 %v8684, %v8844
    %v8846 = vpop.f32.mrf.mxu0
    %v8847 = vadd.f32 %v8686, %v8846
    %v8848 = vpop.f32.mrf.mxu0
    %v8849 = vadd.f32 %v8688, %v8848
    %v8850 = vpop.f32.mrf.mxu0
    %v8851 = vadd.f32 %v8690, %v8850
    %8852 = vmatprep.mubr.bf16.mxu0 %v4686
    %8853 = vmatmul.mubr.bf16.gmra.mxu0 %v4685
    %v8854 = vpop.f32.mrf.mxu0
    %v8855 = vadd.f32 %v8694, %v8854
    %v8856 = vpop.f32.mrf.mxu0
    %v8857 = vadd.f32 %v8696, %v8856
    %v8858 = vpop.f32.mrf.mxu0
    %v8859 = vadd.f32 %v8698, %v8858
    %v8860 = vpop.f32.mrf.mxu0
    %v8861 = vadd.f32 %v8700, %v8860
    %8862 = vmatprep.mubr.bf16.mxu0 %v4704
    %8863 = vmatmul.mubr.bf16.gmra.mxu0 %v4703
    %v8864 = vpop.f32.mrf.mxu0
    %v8865 = vadd.f32 %v8704, %v8864
    %v8866 = vpop.f32.mrf.mxu0
    %v8867 = vadd.f32 %v8706, %v8866
    %v8868 = vpop.f32.mrf.mxu0
    %v8869 = vadd.f32 %v8708, %v8868
    %v8870 = vpop.f32.mrf.mxu0
    %v8871 = vadd.f32 %v8710, %v8870
    %8872 = vmatprep.mubr.bf16.mxu0 %v4722
    %8873 = vmatmul.mubr.bf16.gmra.mxu0 %v4721
    %v8874 = vpop.f32.mrf.mxu0
    %v8875 = vadd.f32 %v8714, %v8874
    %v8876 = vpop.f32.mrf.mxu0
    %v8877 = vadd.f32 %v8716, %v8876
    %v8878 = vpop.f32.mrf.mxu0
    %v8879 = vadd.f32 %v8718, %v8878
    %v8880 = vpop.f32.mrf.mxu0
    %v8881 = vadd.f32 %v8720, %v8880
    %8882 = vmatprep.mubr.bf16.mxu0 %v4740
    %8883 = vmatmul.mubr.bf16.gmra.mxu0 %v4739
    %v8884 = vpop.f32.mrf.mxu0
    %v8885 = vadd.f32 %v8724, %v8884
    %v8886 = vpop.f32.mrf.mxu0
    %v8887 = vadd.f32 %v8726, %v8886
    %v8888 = vpop.f32.mrf.mxu0
    %v8889 = vadd.f32 %v8728, %v8888
    %v8890 = vpop.f32.mrf.mxu0
    %v8891 = vadd.f32 %v8730, %v8890
    %8892 = vmatprep.mubr.bf16.mxu0 %v4758
    %8893 = vmatmul.mubr.bf16.gmra.mxu0 %v4757
    %v8894 = vpop.f32.mrf.mxu0
    %v8895 = vadd.f32 %v8734, %v8894
    %v8896 = vpop.f32.mrf.mxu0
    %v8897 = vadd.f32 %v8736, %v8896
    %v8898 = vpop.f32.mrf.mxu0
    %v8899 = vadd.f32 %v8738, %v8898
    %v8900 = vpop.f32.mrf.mxu0
    %v8901 = vadd.f32 %v8740, %v8900
    %8902 = vmatprep.mubr.bf16.mxu0 %v4776
    %8903 = vmatmul.mubr.bf16.gmra.mxu0 %v4775
    %v8904 = vpop.f32.mrf.mxu0
    %v8905 = vadd.f32 %v8744, %v8904
    %v8906 = vpop.f32.mrf.mxu0
    %v8907 = vadd.f32 %v8746, %v8906
    %v8908 = vpop.f32.mrf.mxu0
    %v8909 = vadd.f32 %v8748, %v8908
    %v8910 = vpop.f32.mrf.mxu0
    %v8911 = vadd.f32 %v8750, %v8910
    %8912 = vmatprep.mubr.bf16.mxu0 %v4794
    %8913 = vmatmul.mubr.bf16.gmra.mxu0 %v4793
    %v8914 = vpop.f32.mrf.mxu0
    %v8915 = vadd.f32 %v8754, %v8914
    %v8916 = vpop.f32.mrf.mxu0
    %v8917 = vadd.f32 %v8756, %v8916
    %v8918 = vpop.f32.mrf.mxu0
    %v8919 = vadd.f32 %v8758, %v8918
    %v8920 = vpop.f32.mrf.mxu0
    %v8921 = vadd.f32 %v8760, %v8920
    %8922 = vmatprep.mubr.bf16.mxu0 %v4812
    %8923 = vmatmul.mubr.bf16.gmra.mxu0 %v4811
    %v8924 = vpop.f32.mrf.mxu0
    %v8925 = vadd.f32 %v8764, %v8924
    %v8926 = vpop.f32.mrf.mxu0
    %v8927 = vadd.f32 %v8766, %v8926
    %v8928 = vpop.f32.mrf.mxu0
    %v8929 = vadd.f32 %v8768, %v8928
    %v8930 = vpop.f32.mrf.mxu0
    %v8931 = vadd.f32 %v8770, %v8930
    %8932 = vmatprep.mubr.bf16.mxu0 %v4830
    %8933 = vmatmul.mubr.bf16.gmra.mxu0 %v4829
    %v8934 = vpop.f32.mrf.mxu0
    %v8935 = vadd.f32 %v8774, %v8934
    %v8936 = vpop.f32.mrf.mxu0
    %v8937 = vadd.f32 %v8776, %v8936
    %v8938 = vpop.f32.mrf.mxu0
    %v8939 = vadd.f32 %v8778, %v8938
    %v8940 = vpop.f32.mrf.mxu0
    %v8941 = vadd.f32 %v8780, %v8940
    %8942 = vmatprep.mubr.bf16.mxu0 %v4848
    %8943 = vmatmul.mubr.bf16.gmra.mxu0 %v4847
    %v8944 = vpop.f32.mrf.mxu0
    %v8945 = vadd.f32 %v8784, %v8944
    %v8946 = vpop.f32.mrf.mxu0
    %v8947 = vadd.f32 %v8786, %v8946
    %v8948 = vpop.f32.mrf.mxu0
    %v8949 = vadd.f32 %v8788, %v8948
    %v8950 = vpop.f32.mrf.mxu0
    %v8951 = vadd.f32 %v8790, %v8950
    %8952 = vmatprep.mubr.bf16.mxu0 %v4866
    %8953 = vmatmul.mubr.bf16.gmra.mxu0 %v4865
    %v8954 = vpop.f32.mrf.mxu0
    %v8955 = vadd.f32 %v8794, %v8954
    %v8956 = vpop.f32.mrf.mxu0
    %v8957 = vadd.f32 %v8796, %v8956
    %v8958 = vpop.f32.mrf.mxu0
    %v8959 = vadd.f32 %v8798, %v8958
    %v8960 = vpop.f32.mrf.mxu0
    %v8961 = vadd.f32 %v8800, %v8960
    %8962 = vmatprep.mubr.bf16.mxu0 %v4884
    %8963 = vmatmul.mubr.bf16.gmra.mxu0 %v4883
    %v8964 = vpop.f32.mrf.mxu0
    %v8965 = vadd.f32 %v8804, %v8964
    %v8966 = vpop.f32.mrf.mxu0
    %v8967 = vadd.f32 %v8806, %v8966
    %v8968 = vpop.f32.mrf.mxu0
    %v8969 = vpop.f32.mrf.mxu0
    %8970 = vdwg.mxu0
    %8971 = vmatprep.subr.bf16.mxu0 %v7266
    %8972 = vmatpush1.bf16.msra.mxu0 %v7265
    %8973 = vmatprep.subr.bf16.mxu0 %v7262
    %8974 = vmatpush1.bf16.msra.mxu0 %v7261
    %8975 = vmatprep.subr.bf16.mxu0 %v7258
    %8976 = vmatpush1.bf16.msra.mxu0 %v7257
    %8977 = vmatprep.subr.bf16.mxu0 %v7254
    %8978 = vmatpush1.bf16.msra.mxu0 %v7253
    %8979 = vmatprep.subr.bf16.mxu0 %v7250
    %8980 = vmatpush1.bf16.msra.mxu0 %v7249
    %8981 = vmatprep.subr.bf16.mxu0 %v7246
    %8982 = vmatpush1.bf16.msra.mxu0 %v7245
    %8983 = vmatprep.subr.bf16.mxu0 %v7242
    %8984 = vmatpush1.bf16.msra.mxu0 %v7241
    %8985 = vmatprep.subr.bf16.mxu0 %v7238
    %8986 = vmatpush1.bf16.msra.mxu0 %v7237
    %8987 = vmatprep.subr.bf16.mxu0 %v7298
    %8988 = vmatpush2.bf16.msra.mxu0 %v7297
    %8989 = vmatprep.subr.bf16.mxu0 %v7294
    %8990 = vmatpush2.bf16.msra.mxu0 %v7293
    %8991 = vmatprep.subr.bf16.mxu0 %v7290
    %8992 = vmatpush2.bf16.msra.mxu0 %v7289
    %8993 = vmatprep.subr.bf16.mxu0 %v7286
    %8994 = vmatpush2.bf16.msra.mxu0 %v7285
    %8995 = vmatprep.subr.bf16.mxu0 %v7282
    %8996 = vmatpush2.bf16.msra.mxu0 %v7281
    %8997 = vmatprep.subr.bf16.mxu0 %v7278
    %8998 = vmatpush2.bf16.msra.mxu0 %v7277
    %8999 = vmatprep.subr.bf16.mxu0 %v7274
    %9000 = vmatpush2.bf16.msra.mxu0 %v7273
    %9001 = vmatprep.subr.bf16.mxu0 %v7270
    %9002 = vmatpush2.bf16.msra.mxu0 %v7269
    %9003 = vmatprep.mubr.bf16.mxu0 %v4670
    %9004 = vmatmul.mubr.bf16.gmra.mxu0 %v4669
    %v9005 = vpop.f32.mrf.mxu0
    %v9006 = vadd.f32 %v8845, %v9005
    %v9007 = vpop.f32.mrf.mxu0
    %v9008 = vadd.f32 %v8847, %v9007
    %v9009 = vpop.f32.mrf.mxu0
    %v9010 = vadd.f32 %v8849, %v9009
    %v9011 = vpop.f32.mrf.mxu0
    %v9012 = vadd.f32 %v8851, %v9011
    %9013 = vmatprep.mubr.bf16.mxu0 %v4688
    %9014 = vmatmul.mubr.bf16.gmra.mxu0 %v4687
    %v9015 = vpop.f32.mrf.mxu0
    %v9016 = vadd.f32 %v8855, %v9015
    %v9017 = vpop.f32.mrf.mxu0
    %v9018 = vadd.f32 %v8857, %v9017
    %v9019 = vpop.f32.mrf.mxu0
    %v9020 = vadd.f32 %v8859, %v9019
    %v9021 = vpop.f32.mrf.mxu0
    %v9022 = vadd.f32 %v8861, %v9021
    %9023 = vmatprep.mubr.bf16.mxu0 %v4706
    %9024 = vmatmul.mubr.bf16.gmra.mxu0 %v4705
    %v9025 = vpop.f32.mrf.mxu0
    %v9026 = vadd.f32 %v8865, %v9025
    %v9027 = vpop.f32.mrf.mxu0
    %v9028 = vadd.f32 %v8867, %v9027
    %v9029 = vpop.f32.mrf.mxu0
    %v9030 = vadd.f32 %v8869, %v9029
    %v9031 = vpop.f32.mrf.mxu0
    %v9032 = vadd.f32 %v8871, %v9031
    %9033 = vmatprep.mubr.bf16.mxu0 %v4724
    %9034 = vmatmul.mubr.bf16.gmra.mxu0 %v4723
    %v9035 = vpop.f32.mrf.mxu0
    %v9036 = vadd.f32 %v8875, %v9035
    %v9037 = vpop.f32.mrf.mxu0
    %v9038 = vadd.f32 %v8877, %v9037
    %v9039 = vpop.f32.mrf.mxu0
    %v9040 = vadd.f32 %v8879, %v9039
    %v9041 = vpop.f32.mrf.mxu0
    %v9042 = vadd.f32 %v8881, %v9041
    %9043 = vmatprep.mubr.bf16.mxu0 %v4742
    %9044 = vmatmul.mubr.bf16.gmra.mxu0 %v4741
    %v9045 = vpop.f32.mrf.mxu0
    %v9046 = vadd.f32 %v8885, %v9045
    %v9047 = vpop.f32.mrf.mxu0
    %v9048 = vadd.f32 %v8887, %v9047
    %v9049 = vpop.f32.mrf.mxu0
    %v9050 = vadd.f32 %v8889, %v9049
    %v9051 = vpop.f32.mrf.mxu0
    %v9052 = vadd.f32 %v8891, %v9051
    %9053 = vmatprep.mubr.bf16.mxu0 %v4760
    %9054 = vmatmul.mubr.bf16.gmra.mxu0 %v4759
    %v9055 = vpop.f32.mrf.mxu0
    %v9056 = vadd.f32 %v8895, %v9055
    %v9057 = vpop.f32.mrf.mxu0
    %v9058 = vadd.f32 %v8897, %v9057
    %v9059 = vpop.f32.mrf.mxu0
    %v9060 = vadd.f32 %v8899, %v9059
    %v9061 = vpop.f32.mrf.mxu0
    %v9062 = vadd.f32 %v8901, %v9061
    %9063 = vmatprep.mubr.bf16.mxu0 %v4778
    %9064 = vmatmul.mubr.bf16.gmra.mxu0 %v4777
    %v9065 = vpop.f32.mrf.mxu0
    %v9066 = vadd.f32 %v8905, %v9065
    %v9067 = vpop.f32.mrf.mxu0
    %v9068 = vadd.f32 %v8907, %v9067
    %v9069 = vpop.f32.mrf.mxu0
    %v9070 = vadd.f32 %v8909, %v9069
    %v9071 = vpop.f32.mrf.mxu0
    %v9072 = vadd.f32 %v8911, %v9071
    %9073 = vmatprep.mubr.bf16.mxu0 %v4796
    %9074 = vmatmul.mubr.bf16.gmra.mxu0 %v4795
    %v9075 = vpop.f32.mrf.mxu0
    %v9076 = vadd.f32 %v8915, %v9075
    %v9077 = vpop.f32.mrf.mxu0
    %v9078 = vadd.f32 %v8917, %v9077
    %v9079 = vpop.f32.mrf.mxu0
    %v9080 = vadd.f32 %v8919, %v9079
    %v9081 = vpop.f32.mrf.mxu0
    %v9082 = vadd.f32 %v8921, %v9081
    %9083 = vmatprep.mubr.bf16.mxu0 %v4814
    %9084 = vmatmul.mubr.bf16.gmra.mxu0 %v4813
    %v9085 = vpop.f32.mrf.mxu0
    %v9086 = vadd.f32 %v8925, %v9085
    %v9087 = vpop.f32.mrf.mxu0
    %v9088 = vadd.f32 %v8927, %v9087
    %v9089 = vpop.f32.mrf.mxu0
    %v9090 = vadd.f32 %v8929, %v9089
    %v9091 = vpop.f32.mrf.mxu0
    %v9092 = vadd.f32 %v8931, %v9091
    %9093 = vmatprep.mubr.bf16.mxu0 %v4832
    %9094 = vmatmul.mubr.bf16.gmra.mxu0 %v4831
    %v9095 = vpop.f32.mrf.mxu0
    %v9096 = vadd.f32 %v8935, %v9095
    %v9097 = vpop.f32.mrf.mxu0
    %v9098 = vadd.f32 %v8937, %v9097
    %v9099 = vpop.f32.mrf.mxu0
    %v9100 = vadd.f32 %v8939, %v9099
    %v9101 = vpop.f32.mrf.mxu0
    %v9102 = vadd.f32 %v8941, %v9101
    %9103 = vmatprep.mubr.bf16.mxu0 %v4850
    %9104 = vmatmul.mubr.bf16.gmra.mxu0 %v4849
    %v9105 = vpop.f32.mrf.mxu0
    %v9106 = vadd.f32 %v8945, %v9105
    %v9107 = vpop.f32.mrf.mxu0
    %v9108 = vadd.f32 %v8947, %v9107
    %v9109 = vpop.f32.mrf.mxu0
    %v9110 = vadd.f32 %v8949, %v9109
    %v9111 = vpop.f32.mrf.mxu0
    %v9112 = vadd.f32 %v8951, %v9111
    %9113 = vmatprep.mubr.bf16.mxu0 %v4868
    %9114 = vmatmul.mubr.bf16.gmra.mxu0 %v4867
    %v9115 = vpop.f32.mrf.mxu0
    %v9116 = vadd.f32 %v8955, %v9115
    %v9117 = vpop.f32.mrf.mxu0
    %v9118 = vadd.f32 %v8957, %v9117
    %v9119 = vpop.f32.mrf.mxu0
    %v9120 = vadd.f32 %v8959, %v9119
    %v9121 = vpop.f32.mrf.mxu0
    %v9122 = vadd.f32 %v8961, %v9121
    %9123 = vmatprep.mubr.bf16.mxu0 %v4886
    %9124 = vmatmul.mubr.bf16.gmra.mxu0 %v4885
    %v9125 = vpop.f32.mrf.mxu0
    %v9126 = vadd.f32 %v8965, %v9125
    %v9127 = vpop.f32.mrf.mxu0
    %v9128 = vadd.f32 %v8967, %v9127
    %v9129 = vpop.f32.mrf.mxu0
    %v9130 = vpop.f32.mrf.mxu0
    %9131 = vdwg.mxu0
    %9132 = vmatprep.subr.bf16.mxu0 %v7330
    %9133 = vmatpush1.bf16.msra.mxu0 %v7329
    %9134 = vmatprep.subr.bf16.mxu0 %v7326
    %9135 = vmatpush1.bf16.msra.mxu0 %v7325
    %9136 = vmatprep.subr.bf16.mxu0 %v7322
    %9137 = vmatpush1.bf16.msra.mxu0 %v7321
    %9138 = vmatprep.subr.bf16.mxu0 %v7318
    %9139 = vmatpush1.bf16.msra.mxu0 %v7317
    %9140 = vmatprep.subr.bf16.mxu0 %v7314
    %9141 = vmatpush1.bf16.msra.mxu0 %v7313
    %9142 = vmatprep.subr.bf16.mxu0 %v7310
    %9143 = vmatpush1.bf16.msra.mxu0 %v7309
    %9144 = vmatprep.subr.bf16.mxu0 %v7306
    %9145 = vmatpush1.bf16.msra.mxu0 %v7305
    %9146 = vmatprep.subr.bf16.mxu0 %v7302
    %9147 = vmatpush1.bf16.msra.mxu0 %v7301
    %9148 = vmatprep.subr.bf16.mxu0 %v7362
    %9149 = vmatpush2.bf16.msra.mxu0 %v7361
    %9150 = vmatprep.subr.bf16.mxu0 %v7358
    %9151 = vmatpush2.bf16.msra.mxu0 %v7357
    %9152 = vmatprep.subr.bf16.mxu0 %v7354
    %9153 = vmatpush2.bf16.msra.mxu0 %v7353
    %9154 = vmatprep.subr.bf16.mxu0 %v7350
    %9155 = vmatpush2.bf16.msra.mxu0 %v7349
    %9156 = vmatprep.subr.bf16.mxu0 %v7346
    %9157 = vmatpush2.bf16.msra.mxu0 %v7345
    %9158 = vmatprep.subr.bf16.mxu0 %v7342
    %9159 = vmatpush2.bf16.msra.mxu0 %v7341
    %9160 = vmatprep.subr.bf16.mxu0 %v7338
    %9161 = vmatpush2.bf16.msra.mxu0 %v7337
    %9162 = vmatprep.subr.bf16.mxu0 %v7334
    %9163 = vmatpush2.bf16.msra.mxu0 %v7333
    %9164 = vmatprep.mubr.bf16.mxu0 %v4672
    %9165 = vmatmul.mubr.bf16.gmra.mxu0 %v4671
    %v9166 = vpop.f32.mrf.mxu0
    %v9167 = vadd.f32 %v9006, %v9166
    %v9168 = vpop.f32.mrf.mxu0
    %v9169 = vadd.f32 %v9008, %v9168
    %v9170 = vpop.f32.mrf.mxu0
    %v9171 = vadd.f32 %v9010, %v9170
    %v9172 = vpop.f32.mrf.mxu0
    %v9173 = vadd.f32 %v9012, %v9172
    %9174 = vmatprep.mubr.bf16.mxu0 %v4690
    %9175 = vmatmul.mubr.bf16.gmra.mxu0 %v4689
    %v9176 = vpop.f32.mrf.mxu0
    %v9177 = vadd.f32 %v9016, %v9176
    %v9178 = vpop.f32.mrf.mxu0
    %v9179 = vadd.f32 %v9018, %v9178
    %v9180 = vpop.f32.mrf.mxu0
    %v9181 = vadd.f32 %v9020, %v9180
    %v9182 = vpop.f32.mrf.mxu0
    %v9183 = vadd.f32 %v9022, %v9182
    %9184 = vmatprep.mubr.bf16.mxu0 %v4708
    %9185 = vmatmul.mubr.bf16.gmra.mxu0 %v4707
    %v9186 = vpop.f32.mrf.mxu0
    %v9187 = vadd.f32 %v9026, %v9186
    %v9188 = vpop.f32.mrf.mxu0
    %v9189 = vadd.f32 %v9028, %v9188
    %v9190 = vpop.f32.mrf.mxu0
    %v9191 = vadd.f32 %v9030, %v9190
    %v9192 = vpop.f32.mrf.mxu0
    %v9193 = vadd.f32 %v9032, %v9192
    %9194 = vmatprep.mubr.bf16.mxu0 %v4726
    %9195 = vmatmul.mubr.bf16.gmra.mxu0 %v4725
    %v9196 = vpop.f32.mrf.mxu0
    %v9197 = vadd.f32 %v9036, %v9196
    %v9198 = vpop.f32.mrf.mxu0
    %v9199 = vadd.f32 %v9038, %v9198
    %v9200 = vpop.f32.mrf.mxu0
    %v9201 = vadd.f32 %v9040, %v9200
    %v9202 = vpop.f32.mrf.mxu0
    %v9203 = vadd.f32 %v9042, %v9202
    %9204 = vmatprep.mubr.bf16.mxu0 %v4744
    %9205 = vmatmul.mubr.bf16.gmra.mxu0 %v4743
    %v9206 = vpop.f32.mrf.mxu0
    %v9207 = vadd.f32 %v9046, %v9206
    %v9208 = vpop.f32.mrf.mxu0
    %v9209 = vadd.f32 %v9048, %v9208
    %v9210 = vpop.f32.mrf.mxu0
    %v9211 = vadd.f32 %v9050, %v9210
    %v9212 = vpop.f32.mrf.mxu0
    %v9213 = vadd.f32 %v9052, %v9212
    %9214 = vmatprep.mubr.bf16.mxu0 %v4762
    %9215 = vmatmul.mubr.bf16.gmra.mxu0 %v4761
    %v9216 = vpop.f32.mrf.mxu0
    %v9217 = vadd.f32 %v9056, %v9216
    %v9218 = vpop.f32.mrf.mxu0
    %v9219 = vadd.f32 %v9058, %v9218
    %v9220 = vpop.f32.mrf.mxu0
    %v9221 = vadd.f32 %v9060, %v9220
    %v9222 = vpop.f32.mrf.mxu0
    %v9223 = vadd.f32 %v9062, %v9222
    %9224 = vmatprep.mubr.bf16.mxu0 %v4780
    %9225 = vmatmul.mubr.bf16.gmra.mxu0 %v4779
    %v9226 = vpop.f32.mrf.mxu0
    %v9227 = vadd.f32 %v9066, %v9226
    %v9228 = vpop.f32.mrf.mxu0
    %v9229 = vadd.f32 %v9068, %v9228
    %v9230 = vpop.f32.mrf.mxu0
    %v9231 = vadd.f32 %v9070, %v9230
    %v9232 = vpop.f32.mrf.mxu0
    %v9233 = vadd.f32 %v9072, %v9232
    %9234 = vmatprep.mubr.bf16.mxu0 %v4798
    %9235 = vmatmul.mubr.bf16.gmra.mxu0 %v4797
    %v9236 = vpop.f32.mrf.mxu0
    %v9237 = vadd.f32 %v9076, %v9236
    %v9238 = vpop.f32.mrf.mxu0
    %v9239 = vadd.f32 %v9078, %v9238
    %v9240 = vpop.f32.mrf.mxu0
    %v9241 = vadd.f32 %v9080, %v9240
    %v9242 = vpop.f32.mrf.mxu0
    %v9243 = vadd.f32 %v9082, %v9242
    %9244 = vmatprep.mubr.bf16.mxu0 %v4816
    %9245 = vmatmul.mubr.bf16.gmra.mxu0 %v4815
    %v9246 = vpop.f32.mrf.mxu0
    %v9247 = vadd.f32 %v9086, %v9246
    %v9248 = vpop.f32.mrf.mxu0
    %v9249 = vadd.f32 %v9088, %v9248
    %v9250 = vpop.f32.mrf.mxu0
    %v9251 = vadd.f32 %v9090, %v9250
    %v9252 = vpop.f32.mrf.mxu0
    %v9253 = vadd.f32 %v9092, %v9252
    %9254 = vmatprep.mubr.bf16.mxu0 %v4834
    %9255 = vmatmul.mubr.bf16.gmra.mxu0 %v4833
    %v9256 = vpop.f32.mrf.mxu0
    %v9257 = vadd.f32 %v9096, %v9256
    %v9258 = vpop.f32.mrf.mxu0
    %v9259 = vadd.f32 %v9098, %v9258
    %v9260 = vpop.f32.mrf.mxu0
    %v9261 = vadd.f32 %v9100, %v9260
    %v9262 = vpop.f32.mrf.mxu0
    %v9263 = vadd.f32 %v9102, %v9262
    %9264 = vmatprep.mubr.bf16.mxu0 %v4852
    %9265 = vmatmul.mubr.bf16.gmra.mxu0 %v4851
    %v9266 = vpop.f32.mrf.mxu0
    %v9267 = vadd.f32 %v9106, %v9266
    %v9268 = vpop.f32.mrf.mxu0
    %v9269 = vadd.f32 %v9108, %v9268
    %v9270 = vpop.f32.mrf.mxu0
    %v9271 = vadd.f32 %v9110, %v9270
    %v9272 = vpop.f32.mrf.mxu0
    %v9273 = vadd.f32 %v9112, %v9272
    %9274 = vmatprep.mubr.bf16.mxu0 %v4870
    %9275 = vmatmul.mubr.bf16.gmra.mxu0 %v4869
    %v9276 = vpop.f32.mrf.mxu0
    %v9277 = vadd.f32 %v9116, %v9276
    %v9278 = vpop.f32.mrf.mxu0
    %v9279 = vadd.f32 %v9118, %v9278
    %v9280 = vpop.f32.mrf.mxu0
    %v9281 = vadd.f32 %v9120, %v9280
    %v9282 = vpop.f32.mrf.mxu0
    %v9283 = vadd.f32 %v9122, %v9282
    %9284 = vmatprep.mubr.bf16.mxu0 %v4888
    %9285 = vmatmul.mubr.bf16.gmra.mxu0 %v4887
    %v9286 = vpop.f32.mrf.mxu0
    %v9287 = vadd.f32 %v9126, %v9286
    %v9288 = vpop.f32.mrf.mxu0
    %v9289 = vadd.f32 %v9128, %v9288
    %v9290 = vpop.f32.mrf.mxu0
    %v9291 = vpop.f32.mrf.mxu0
    %9292 = vdwg.mxu0
    %9293 = vmatprep.subr.bf16.mxu0 %v7394
    %9294 = vmatpush1.bf16.msra.mxu0 %v7393
    %9295 = vmatprep.subr.bf16.mxu0 %v7390
    %9296 = vmatpush1.bf16.msra.mxu0 %v7389
    %9297 = vmatprep.subr.bf16.mxu0 %v7386
    %9298 = vmatpush1.bf16.msra.mxu0 %v7385
    %9299 = vmatprep.subr.bf16.mxu0 %v7382
    %9300 = vmatpush1.bf16.msra.mxu0 %v7381
    %9301 = vmatprep.subr.bf16.mxu0 %v7378
    %9302 = vmatpush1.bf16.msra.mxu0 %v7377
    %9303 = vmatprep.subr.bf16.mxu0 %v7374
    %9304 = vmatpush1.bf16.msra.mxu0 %v7373
    %9305 = vmatprep.subr.bf16.mxu0 %v7370
    %9306 = vmatpush1.bf16.msra.mxu0 %v7369
    %9307 = vmatprep.subr.bf16.mxu0 %v7366
    %9308 = vmatpush1.bf16.msra.mxu0 %v7365
    %9309 = vmatprep.subr.bf16.mxu0 %v7426
    %9310 = vmatpush2.bf16.msra.mxu0 %v7425
    %9311 = vmatprep.subr.bf16.mxu0 %v7422
    %9312 = vmatpush2.bf16.msra.mxu0 %v7421
    %9313 = vmatprep.subr.bf16.mxu0 %v7418
    %9314 = vmatpush2.bf16.msra.mxu0 %v7417
    %9315 = vmatprep.subr.bf16.mxu0 %v7414
    %9316 = vmatpush2.bf16.msra.mxu0 %v7413
    %9317 = vmatprep.subr.bf16.mxu0 %v7410
    %9318 = vmatpush2.bf16.msra.mxu0 %v7409
    %9319 = vmatprep.subr.bf16.mxu0 %v7406
    %9320 = vmatpush2.bf16.msra.mxu0 %v7405
    %9321 = vmatprep.subr.bf16.mxu0 %v7402
    %9322 = vmatpush2.bf16.msra.mxu0 %v7401
    %9323 = vmatprep.subr.bf16.mxu0 %v7398
    %9324 = vmatpush2.bf16.msra.mxu0 %v7397
    %9325 = vmatprep.mubr.bf16.mxu0 %v4674
    %9326 = vmatmul.mubr.bf16.gmra.mxu0 %v4673
    %v9327 = vpop.f32.mrf.mxu0
    %v9328 = vadd.f32 %v9167, %v9327
    %v9329 = vpop.f32.mrf.mxu0
    %v9330 = vadd.f32 %v9169, %v9329
    %v9331 = vpop.f32.mrf.mxu0
    %v9332 = vadd.f32 %v9171, %v9331
    %v9333 = vpop.f32.mrf.mxu0
    %v9334 = vadd.f32 %v9173, %v9333
    %9335 = vmatprep.mubr.bf16.mxu0 %v4692
    %9336 = vmatmul.mubr.bf16.gmra.mxu0 %v4691
    %v9337 = vpop.f32.mrf.mxu0
    %v9338 = vadd.f32 %v9177, %v9337
    %v9339 = vpop.f32.mrf.mxu0
    %v9340 = vadd.f32 %v9179, %v9339
    %v9341 = vpop.f32.mrf.mxu0
    %v9342 = vadd.f32 %v9181, %v9341
    %v9343 = vpop.f32.mrf.mxu0
    %v9344 = vadd.f32 %v9183, %v9343
    %9345 = vmatprep.mubr.bf16.mxu0 %v4710
    %9346 = vmatmul.mubr.bf16.gmra.mxu0 %v4709
    %v9347 = vpop.f32.mrf.mxu0
    %v9348 = vadd.f32 %v9187, %v9347
    %v9349 = vpop.f32.mrf.mxu0
    %v9350 = vadd.f32 %v9189, %v9349
    %v9351 = vpop.f32.mrf.mxu0
    %v9352 = vadd.f32 %v9191, %v9351
    %v9353 = vpop.f32.mrf.mxu0
    %v9354 = vadd.f32 %v9193, %v9353
    %9355 = vmatprep.mubr.bf16.mxu0 %v4728
    %9356 = vmatmul.mubr.bf16.gmra.mxu0 %v4727
    %v9357 = vpop.f32.mrf.mxu0
    %v9358 = vadd.f32 %v9197, %v9357
    %v9359 = vpop.f32.mrf.mxu0
    %v9360 = vadd.f32 %v9199, %v9359
    %v9361 = vpop.f32.mrf.mxu0
    %v9362 = vadd.f32 %v9201, %v9361
    %v9363 = vpop.f32.mrf.mxu0
    %v9364 = vadd.f32 %v9203, %v9363
    %9365 = vmatprep.mubr.bf16.mxu0 %v4746
    %9366 = vmatmul.mubr.bf16.gmra.mxu0 %v4745
    %v9367 = vpop.f32.mrf.mxu0
    %v9368 = vadd.f32 %v9207, %v9367
    %v9369 = vpop.f32.mrf.mxu0
    %v9370 = vadd.f32 %v9209, %v9369
    %v9371 = vpop.f32.mrf.mxu0
    %v9372 = vadd.f32 %v9211, %v9371
    %v9373 = vpop.f32.mrf.mxu0
    %v9374 = vadd.f32 %v9213, %v9373
    %9375 = vmatprep.mubr.bf16.mxu0 %v4764
    %9376 = vmatmul.mubr.bf16.gmra.mxu0 %v4763
    %v9377 = vpop.f32.mrf.mxu0
    %v9378 = vadd.f32 %v9217, %v9377
    %v9379 = vpop.f32.mrf.mxu0
    %v9380 = vadd.f32 %v9219, %v9379
    %v9381 = vpop.f32.mrf.mxu0
    %v9382 = vadd.f32 %v9221, %v9381
    %v9383 = vpop.f32.mrf.mxu0
    %v9384 = vadd.f32 %v9223, %v9383
    %9385 = vmatprep.mubr.bf16.mxu0 %v4782
    %9386 = vmatmul.mubr.bf16.gmra.mxu0 %v4781
    %v9387 = vpop.f32.mrf.mxu0
    %v9388 = vadd.f32 %v9227, %v9387
    %v9389 = vpop.f32.mrf.mxu0
    %v9390 = vadd.f32 %v9229, %v9389
    %v9391 = vpop.f32.mrf.mxu0
    %v9392 = vadd.f32 %v9231, %v9391
    %v9393 = vpop.f32.mrf.mxu0
    %v9394 = vadd.f32 %v9233, %v9393
    %9395 = vmatprep.mubr.bf16.mxu0 %v4800
    %9396 = vmatmul.mubr.bf16.gmra.mxu0 %v4799
    %v9397 = vpop.f32.mrf.mxu0
    %v9398 = vadd.f32 %v9237, %v9397
    %v9399 = vpop.f32.mrf.mxu0
    %v9400 = vadd.f32 %v9239, %v9399
    %v9401 = vpop.f32.mrf.mxu0
    %v9402 = vadd.f32 %v9241, %v9401
    %v9403 = vpop.f32.mrf.mxu0
    %v9404 = vadd.f32 %v9243, %v9403
    %9405 = vmatprep.mubr.bf16.mxu0 %v4818
    %9406 = vmatmul.mubr.bf16.gmra.mxu0 %v4817
    %v9407 = vpop.f32.mrf.mxu0
    %v9408 = vadd.f32 %v9247, %v9407
    %v9409 = vpop.f32.mrf.mxu0
    %v9410 = vadd.f32 %v9249, %v9409
    %v9411 = vpop.f32.mrf.mxu0
    %v9412 = vadd.f32 %v9251, %v9411
    %v9413 = vpop.f32.mrf.mxu0
    %v9414 = vadd.f32 %v9253, %v9413
    %9415 = vmatprep.mubr.bf16.mxu0 %v4836
    %9416 = vmatmul.mubr.bf16.gmra.mxu0 %v4835
    %v9417 = vpop.f32.mrf.mxu0
    %v9418 = vadd.f32 %v9257, %v9417
    %v9419 = vpop.f32.mrf.mxu0
    %v9420 = vadd.f32 %v9259, %v9419
    %v9421 = vpop.f32.mrf.mxu0
    %v9422 = vadd.f32 %v9261, %v9421
    %v9423 = vpop.f32.mrf.mxu0
    %v9424 = vadd.f32 %v9263, %v9423
    %9425 = vmatprep.mubr.bf16.mxu0 %v4854
    %9426 = vmatmul.mubr.bf16.gmra.mxu0 %v4853
    %v9427 = vpop.f32.mrf.mxu0
    %v9428 = vadd.f32 %v9267, %v9427
    %v9429 = vpop.f32.mrf.mxu0
    %v9430 = vadd.f32 %v9269, %v9429
    %v9431 = vpop.f32.mrf.mxu0
    %v9432 = vadd.f32 %v9271, %v9431
    %v9433 = vpop.f32.mrf.mxu0
    %v9434 = vadd.f32 %v9273, %v9433
    %9435 = vmatprep.mubr.bf16.mxu0 %v4872
    %9436 = vmatmul.mubr.bf16.gmra.mxu0 %v4871
    %v9437 = vpop.f32.mrf.mxu0
    %v9438 = vadd.f32 %v9277, %v9437
    %v9439 = vpop.f32.mrf.mxu0
    %v9440 = vadd.f32 %v9279, %v9439
    %v9441 = vpop.f32.mrf.mxu0
    %v9442 = vadd.f32 %v9281, %v9441
    %v9443 = vpop.f32.mrf.mxu0
    %v9444 = vadd.f32 %v9283, %v9443
    %9445 = vmatprep.mubr.bf16.mxu0 %v4890
    %9446 = vmatmul.mubr.bf16.gmra.mxu0 %v4889
    %v9447 = vpop.f32.mrf.mxu0
    %v9448 = vadd.f32 %v9287, %v9447
    %v9449 = vpop.f32.mrf.mxu0
    %v9450 = vadd.f32 %v9289, %v9449
    %v9451 = vpop.f32.mrf.mxu0
    %v9452 = vpop.f32.mrf.mxu0
    %9453 = vdwg.mxu0
    %9454 = vmatprep.subr.bf16.mxu0 %v6884
    %9455 = vmatpush1.bf16.msra.mxu0 %v6883
    %9456 = vmatprep.subr.bf16.mxu0 %v6880
    %9457 = vmatpush1.bf16.msra.mxu0 %v6879
    %9458 = vmatprep.subr.bf16.mxu0 %v6876
    %9459 = vmatpush1.bf16.msra.mxu0 %v6875
    %9460 = vmatprep.subr.bf16.mxu0 %v6872
    %9461 = vmatpush1.bf16.msra.mxu0 %v6871
    %9462 = vmatprep.subr.bf16.mxu0 %v6868
    %9463 = vmatpush1.bf16.msra.mxu0 %v6867
    %9464 = vmatprep.subr.bf16.mxu0 %v6864
    %9465 = vmatpush1.bf16.msra.mxu0 %v6863
    %9466 = vmatprep.subr.bf16.mxu0 %v6860
    %9467 = vmatpush1.bf16.msra.mxu0 %v6859
    %9468 = vmatprep.subr.bf16.mxu0 %v6856
    %9469 = vmatpush1.bf16.msra.mxu0 %v6855
    %9470 = vmatprep.subr.bf16.mxu0 %v6916
    %9471 = vmatpush2.bf16.msra.mxu0 %v6915
    %9472 = vmatprep.subr.bf16.mxu0 %v6912
    %9473 = vmatpush2.bf16.msra.mxu0 %v6911
    %9474 = vmatprep.subr.bf16.mxu0 %v6908
    %9475 = vmatpush2.bf16.msra.mxu0 %v6907
    %9476 = vmatprep.subr.bf16.mxu0 %v6904
    %9477 = vmatpush2.bf16.msra.mxu0 %v6903
    %9478 = vmatprep.subr.bf16.mxu0 %v6900
    %9479 = vmatpush2.bf16.msra.mxu0 %v6899
    %9480 = vmatprep.subr.bf16.mxu0 %v6896
    %9481 = vmatpush2.bf16.msra.mxu0 %v6895
    %9482 = vmatprep.subr.bf16.mxu0 %v6892
    %9483 = vmatpush2.bf16.msra.mxu0 %v6891
    %9484 = vmatprep.subr.bf16.mxu0 %v6888
    %9485 = vmatpush2.bf16.msra.mxu0 %v6887
    %9486 = vmatprep.mubr.bf16.mxu0 %v4658
    %9487 = vmatmul.mubr.bf16.gmra.mxu0 %v4657
    %v9488 = vpop.f32.mrf.mxu0
    %v9489 = vadd.f32 0.0, %v9488
    %v9490 = vpop.f32.mrf.mxu0
    %v9491 = vadd.f32 0.0, %v9490
    %v9492 = vpop.f32.mrf.mxu0
    %v9493 = vadd.f32 0.0, %v9492
    %v9494 = vpop.f32.mrf.mxu0
    %v9495 = vadd.f32 0.0, %v9494
    %9496 = vmatprep.mubr.bf16.mxu0 %v4676
    %9497 = vmatmul.mubr.bf16.gmra.mxu0 %v4675
    %v9498 = vpop.f32.mrf.mxu0
    %v9499 = vadd.f32 0.0, %v9498
    %v9500 = vpop.f32.mrf.mxu0
    %v9501 = vadd.f32 0.0, %v9500
    %v9502 = vpop.f32.mrf.mxu0
    %v9503 = vadd.f32 0.0, %v9502
    %v9504 = vpop.f32.mrf.mxu0
    %v9505 = vadd.f32 0.0, %v9504
    %9506 = vmatprep.mubr.bf16.mxu0 %v4694
    %9507 = vmatmul.mubr.bf16.gmra.mxu0 %v4693
    %v9508 = vpop.f32.mrf.mxu0
    %v9509 = vadd.f32 0.0, %v9508
    %v9510 = vpop.f32.mrf.mxu0
    %v9511 = vadd.f32 0.0, %v9510
    %v9512 = vpop.f32.mrf.mxu0
    %v9513 = vadd.f32 0.0, %v9512
    %v9514 = vpop.f32.mrf.mxu0
    %v9515 = vadd.f32 0.0, %v9514
    %9516 = vmatprep.mubr.bf16.mxu0 %v4712
    %9517 = vmatmul.mubr.bf16.gmra.mxu0 %v4711
    %v9518 = vpop.f32.mrf.mxu0
    %v9519 = vadd.f32 0.0, %v9518
    %v9520 = vpop.f32.mrf.mxu0
    %v9521 = vadd.f32 0.0, %v9520
    %v9522 = vpop.f32.mrf.mxu0
    %v9523 = vadd.f32 0.0, %v9522
    %v9524 = vpop.f32.mrf.mxu0
    %v9525 = vadd.f32 0.0, %v9524
    %9526 = vmatprep.mubr.bf16.mxu0 %v4730
    %9527 = vmatmul.mubr.bf16.gmra.mxu0 %v4729
    %v9528 = vpop.f32.mrf.mxu0
    %v9529 = vadd.f32 0.0, %v9528
    %v9530 = vpop.f32.mrf.mxu0
    %v9531 = vadd.f32 0.0, %v9530
    %v9532 = vpop.f32.mrf.mxu0
    %v9533 = vadd.f32 0.0, %v9532
    %v9534 = vpop.f32.mrf.mxu0
    %v9535 = vadd.f32 0.0, %v9534
    %9536 = vmatprep.mubr.bf16.mxu0 %v4748
    %9537 = vmatmul.mubr.bf16.gmra.mxu0 %v4747
    %v9538 = vpop.f32.mrf.mxu0
    %v9539 = vadd.f32 0.0, %v9538
    %v9540 = vpop.f32.mrf.mxu0
    %v9541 = vadd.f32 0.0, %v9540
    %v9542 = vpop.f32.mrf.mxu0
    %v9543 = vadd.f32 0.0, %v9542
    %v9544 = vpop.f32.mrf.mxu0
    %v9545 = vadd.f32 0.0, %v9544
    %9546 = vmatprep.mubr.bf16.mxu0 %v4766
    %9547 = vmatmul.mubr.bf16.gmra.mxu0 %v4765
    %v9548 = vpop.f32.mrf.mxu0
    %v9549 = vadd.f32 0.0, %v9548
    %v9550 = vpop.f32.mrf.mxu0
    %v9551 = vadd.f32 0.0, %v9550
    %v9552 = vpop.f32.mrf.mxu0
    %v9553 = vadd.f32 0.0, %v9552
    %v9554 = vpop.f32.mrf.mxu0
    %v9555 = vadd.f32 0.0, %v9554
    %9556 = vmatprep.mubr.bf16.mxu0 %v4784
    %9557 = vmatmul.mubr.bf16.gmra.mxu0 %v4783
    %v9558 = vpop.f32.mrf.mxu0
    %v9559 = vadd.f32 0.0, %v9558
    %v9560 = vpop.f32.mrf.mxu0
    %v9561 = vadd.f32 0.0, %v9560
    %v9562 = vpop.f32.mrf.mxu0
    %v9563 = vadd.f32 0.0, %v9562
    %v9564 = vpop.f32.mrf.mxu0
    %v9565 = vadd.f32 0.0, %v9564
    %9566 = vmatprep.mubr.bf16.mxu0 %v4802
    %9567 = vmatmul.mubr.bf16.gmra.mxu0 %v4801
    %v9568 = vpop.f32.mrf.mxu0
    %v9569 = vadd.f32 0.0, %v9568
    %v9570 = vpop.f32.mrf.mxu0
    %v9571 = vadd.f32 0.0, %v9570
    %v9572 = vpop.f32.mrf.mxu0
    %v9573 = vadd.f32 0.0, %v9572
    %v9574 = vpop.f32.mrf.mxu0
    %v9575 = vadd.f32 0.0, %v9574
    %9576 = vmatprep.mubr.bf16.mxu0 %v4820
    %9577 = vmatmul.mubr.bf16.gmra.mxu0 %v4819
    %v9578 = vpop.f32.mrf.mxu0
    %v9579 = vadd.f32 0.0, %v9578
    %v9580 = vpop.f32.mrf.mxu0
    %v9581 = vadd.f32 0.0, %v9580
    %v9582 = vpop.f32.mrf.mxu0
    %v9583 = vadd.f32 0.0, %v9582
    %v9584 = vpop.f32.mrf.mxu0
    %v9585 = vadd.f32 0.0, %v9584
    %9586 = vmatprep.mubr.bf16.mxu0 %v4838
    %9587 = vmatmul.mubr.bf16.gmra.mxu0 %v4837
    %v9588 = vpop.f32.mrf.mxu0
    %v9589 = vadd.f32 0.0, %v9588
    %v9590 = vpop.f32.mrf.mxu0
    %v9591 = vadd.f32 0.0, %v9590
    %v9592 = vpop.f32.mrf.mxu0
    %v9593 = vadd.f32 0.0, %v9592
    %v9594 = vpop.f32.mrf.mxu0
    %v9595 = vadd.f32 0.0, %v9594
    %9596 = vmatprep.mubr.bf16.mxu0 %v4856
    %9597 = vmatmul.mubr.bf16.gmra.mxu0 %v4855
    %v9598 = vpop.f32.mrf.mxu0
    %v9599 = vadd.f32 0.0, %v9598
    %v9600 = vpop.f32.mrf.mxu0
    %v9601 = vadd.f32 0.0, %v9600
    %v9602 = vpop.f32.mrf.mxu0
    %v9603 = vadd.f32 0.0, %v9602
    %v9604 = vpop.f32.mrf.mxu0
    %v9605 = vadd.f32 0.0, %v9604
    %9606 = vmatprep.mubr.bf16.mxu0 %v4874
    %9607 = vmatmul.mubr.bf16.gmra.mxu0 %v4873
    %v9608 = vpop.f32.mrf.mxu0
    %v9609 = vadd.f32 0.0, %v9608
    %v9610 = vpop.f32.mrf.mxu0
    %v9611 = vadd.f32 0.0, %v9610
    %v9612 = vpop.f32.mrf.mxu0
    %v9613 = vpop.f32.mrf.mxu0
    %9614 = vdwg.mxu0
    %9615 = vmatprep.subr.bf16.mxu0 %v6948
    %9616 = vmatpush1.bf16.msra.mxu0 %v6947
    %9617 = vmatprep.subr.bf16.mxu0 %v6944
    %9618 = vmatpush1.bf16.msra.mxu0 %v6943
    %9619 = vmatprep.subr.bf16.mxu0 %v6940
    %9620 = vmatpush1.bf16.msra.mxu0 %v6939
    %9621 = vmatprep.subr.bf16.mxu0 %v6936
    %9622 = vmatpush1.bf16.msra.mxu0 %v6935
    %9623 = vmatprep.subr.bf16.mxu0 %v6932
    %9624 = vmatpush1.bf16.msra.mxu0 %v6931
    %9625 = vmatprep.subr.bf16.mxu0 %v6928
    %9626 = vmatpush1.bf16.msra.mxu0 %v6927
    %9627 = vmatprep.subr.bf16.mxu0 %v6924
    %9628 = vmatpush1.bf16.msra.mxu0 %v6923
    %9629 = vmatprep.subr.bf16.mxu0 %v6920
    %9630 = vmatpush1.bf16.msra.mxu0 %v6919
    %9631 = vmatprep.subr.bf16.mxu0 %v6980
    %9632 = vmatpush2.bf16.msra.mxu0 %v6979
    %9633 = vmatprep.subr.bf16.mxu0 %v6976
    %9634 = vmatpush2.bf16.msra.mxu0 %v6975
    %9635 = vmatprep.subr.bf16.mxu0 %v6972
    %9636 = vmatpush2.bf16.msra.mxu0 %v6971
    %9637 = vmatprep.subr.bf16.mxu0 %v6968
    %9638 = vmatpush2.bf16.msra.mxu0 %v6967
    %9639 = vmatprep.subr.bf16.mxu0 %v6964
    %9640 = vmatpush2.bf16.msra.mxu0 %v6963
    %9641 = vmatprep.subr.bf16.mxu0 %v6960
    %9642 = vmatpush2.bf16.msra.mxu0 %v6959
    %9643 = vmatprep.subr.bf16.mxu0 %v6956
    %9644 = vmatpush2.bf16.msra.mxu0 %v6955
    %9645 = vmatprep.subr.bf16.mxu0 %v6952
    %9646 = vmatpush2.bf16.msra.mxu0 %v6951
    %9647 = vmatprep.mubr.bf16.mxu0 %v4660
    %9648 = vmatmul.mubr.bf16.gmra.mxu0 %v4659
    %v9649 = vpop.f32.mrf.mxu0
    %v9650 = vadd.f32 %v9489, %v9649
    %v9651 = vpop.f32.mrf.mxu0
    %v9652 = vadd.f32 %v9491, %v9651
    %v9653 = vpop.f32.mrf.mxu0
    %v9654 = vadd.f32 %v9493, %v9653
    %v9655 = vpop.f32.mrf.mxu0
    %v9656 = vadd.f32 %v9495, %v9655
    %9657 = vmatprep.mubr.bf16.mxu0 %v4678
    %9658 = vmatmul.mubr.bf16.gmra.mxu0 %v4677
    %v9659 = vpop.f32.mrf.mxu0
    %v9660 = vadd.f32 %v9499, %v9659
    %v9661 = vpop.f32.mrf.mxu0
    %v9662 = vadd.f32 %v9501, %v9661
    %v9663 = vpop.f32.mrf.mxu0
    %v9664 = vadd.f32 %v9503, %v9663
    %v9665 = vpop.f32.mrf.mxu0
    %v9666 = vadd.f32 %v9505, %v9665
    %9667 = vmatprep.mubr.bf16.mxu0 %v4696
    %9668 = vmatmul.mubr.bf16.gmra.mxu0 %v4695
    %v9669 = vpop.f32.mrf.mxu0
    %v9670 = vadd.f32 %v9509, %v9669
    %v9671 = vpop.f32.mrf.mxu0
    %v9672 = vadd.f32 %v9511, %v9671
    %v9673 = vpop.f32.mrf.mxu0
    %v9674 = vadd.f32 %v9513, %v9673
    %v9675 = vpop.f32.mrf.mxu0
    %v9676 = vadd.f32 %v9515, %v9675
    %9677 = vmatprep.mubr.bf16.mxu0 %v4714
    %9678 = vmatmul.mubr.bf16.gmra.mxu0 %v4713
    %v9679 = vpop.f32.mrf.mxu0
    %v9680 = vadd.f32 %v9519, %v9679
    %v9681 = vpop.f32.mrf.mxu0
    %v9682 = vadd.f32 %v9521, %v9681
    %v9683 = vpop.f32.mrf.mxu0
    %v9684 = vadd.f32 %v9523, %v9683
    %v9685 = vpop.f32.mrf.mxu0
    %v9686 = vadd.f32 %v9525, %v9685
    %9687 = vmatprep.mubr.bf16.mxu0 %v4732
    %9688 = vmatmul.mubr.bf16.gmra.mxu0 %v4731
    %v9689 = vpop.f32.mrf.mxu0
    %v9690 = vadd.f32 %v9529, %v9689
    %v9691 = vpop.f32.mrf.mxu0
    %v9692 = vadd.f32 %v9531, %v9691
    %v9693 = vpop.f32.mrf.mxu0
    %v9694 = vadd.f32 %v9533, %v9693
    %v9695 = vpop.f32.mrf.mxu0
    %v9696 = vadd.f32 %v9535, %v9695
    %9697 = vmatprep.mubr.bf16.mxu0 %v4750
    %9698 = vmatmul.mubr.bf16.gmra.mxu0 %v4749
    %v9699 = vpop.f32.mrf.mxu0
    %v9700 = vadd.f32 %v9539, %v9699
    %v9701 = vpop.f32.mrf.mxu0
    %v9702 = vadd.f32 %v9541, %v9701
    %v9703 = vpop.f32.mrf.mxu0
    %v9704 = vadd.f32 %v9543, %v9703
    %v9705 = vpop.f32.mrf.mxu0
    %v9706 = vadd.f32 %v9545, %v9705
    %9707 = vmatprep.mubr.bf16.mxu0 %v4768
    %9708 = vmatmul.mubr.bf16.gmra.mxu0 %v4767
    %v9709 = vpop.f32.mrf.mxu0
    %v9710 = vadd.f32 %v9549, %v9709
    %v9711 = vpop.f32.mrf.mxu0
    %v9712 = vadd.f32 %v9551, %v9711
    %v9713 = vpop.f32.mrf.mxu0
    %v9714 = vadd.f32 %v9553, %v9713
    %v9715 = vpop.f32.mrf.mxu0
    %v9716 = vadd.f32 %v9555, %v9715
    %9717 = vmatprep.mubr.bf16.mxu0 %v4786
    %9718 = vmatmul.mubr.bf16.gmra.mxu0 %v4785
    %v9719 = vpop.f32.mrf.mxu0
    %v9720 = vadd.f32 %v9559, %v9719
    %v9721 = vpop.f32.mrf.mxu0
    %v9722 = vadd.f32 %v9561, %v9721
    %v9723 = vpop.f32.mrf.mxu0
    %v9724 = vadd.f32 %v9563, %v9723
    %v9725 = vpop.f32.mrf.mxu0
    %v9726 = vadd.f32 %v9565, %v9725
    %9727 = vmatprep.mubr.bf16.mxu0 %v4804
    %9728 = vmatmul.mubr.bf16.gmra.mxu0 %v4803
    %v9729 = vpop.f32.mrf.mxu0
    %v9730 = vadd.f32 %v9569, %v9729
    %v9731 = vpop.f32.mrf.mxu0
    %v9732 = vadd.f32 %v9571, %v9731
    %v9733 = vpop.f32.mrf.mxu0
    %v9734 = vadd.f32 %v9573, %v9733
    %v9735 = vpop.f32.mrf.mxu0
    %v9736 = vadd.f32 %v9575, %v9735
    %9737 = vmatprep.mubr.bf16.mxu0 %v4822
    %9738 = vmatmul.mubr.bf16.gmra.mxu0 %v4821
    %v9739 = vpop.f32.mrf.mxu0
    %v9740 = vadd.f32 %v9579, %v9739
    %v9741 = vpop.f32.mrf.mxu0
    %v9742 = vadd.f32 %v9581, %v9741
    %v9743 = vpop.f32.mrf.mxu0
    %v9744 = vadd.f32 %v9583, %v9743
    %v9745 = vpop.f32.mrf.mxu0
    %v9746 = vadd.f32 %v9585, %v9745
    %9747 = vmatprep.mubr.bf16.mxu0 %v4840
    %9748 = vmatmul.mubr.bf16.gmra.mxu0 %v4839
    %v9749 = vpop.f32.mrf.mxu0
    %v9750 = vadd.f32 %v9589, %v9749
    %v9751 = vpop.f32.mrf.mxu0
    %v9752 = vadd.f32 %v9591, %v9751
    %v9753 = vpop.f32.mrf.mxu0
    %v9754 = vadd.f32 %v9593, %v9753
    %v9755 = vpop.f32.mrf.mxu0
    %v9756 = vadd.f32 %v9595, %v9755
    %9757 = vmatprep.mubr.bf16.mxu0 %v4858
    %9758 = vmatmul.mubr.bf16.gmra.mxu0 %v4857
    %v9759 = vpop.f32.mrf.mxu0
    %v9760 = vadd.f32 %v9599, %v9759
    %v9761 = vpop.f32.mrf.mxu0
    %v9762 = vadd.f32 %v9601, %v9761
    %v9763 = vpop.f32.mrf.mxu0
    %v9764 = vadd.f32 %v9603, %v9763
    %v9765 = vpop.f32.mrf.mxu0
    %v9766 = vadd.f32 %v9605, %v9765
    %9767 = vmatprep.mubr.bf16.mxu0 %v4876
    %9768 = vmatmul.mubr.bf16.gmra.mxu0 %v4875
    %v9769 = vpop.f32.mrf.mxu0
    %v9770 = vadd.f32 %v9609, %v9769
    %v9771 = vpop.f32.mrf.mxu0
    %v9772 = vadd.f32 %v9611, %v9771
    %v9773 = vpop.f32.mrf.mxu0
    %v9774 = vpop.f32.mrf.mxu0
    %9775 = vdwg.mxu0
    %9776 = vmatprep.subr.bf16.mxu0 %v7012
    %9777 = vmatpush1.bf16.msra.mxu0 %v7011
    %9778 = vmatprep.subr.bf16.mxu0 %v7008
    %9779 = vmatpush1.bf16.msra.mxu0 %v7007
    %9780 = vmatprep.subr.bf16.mxu0 %v7004
    %9781 = vmatpush1.bf16.msra.mxu0 %v7003
    %9782 = vmatprep.subr.bf16.mxu0 %v7000
    %9783 = vmatpush1.bf16.msra.mxu0 %v6999
    %9784 = vmatprep.subr.bf16.mxu0 %v6996
    %9785 = vmatpush1.bf16.msra.mxu0 %v6995
    %9786 = vmatprep.subr.bf16.mxu0 %v6992
    %9787 = vmatpush1.bf16.msra.mxu0 %v6991
    %9788 = vmatprep.subr.bf16.mxu0 %v6988
    %9789 = vmatpush1.bf16.msra.mxu0 %v6987
    %9790 = vmatprep.subr.bf16.mxu0 %v6984
    %9791 = vmatpush1.bf16.msra.mxu0 %v6983
    %9792 = vmatprep.subr.bf16.mxu0 %v7044
    %9793 = vmatpush2.bf16.msra.mxu0 %v7043
    %9794 = vmatprep.subr.bf16.mxu0 %v7040
    %9795 = vmatpush2.bf16.msra.mxu0 %v7039
    %9796 = vmatprep.subr.bf16.mxu0 %v7036
    %9797 = vmatpush2.bf16.msra.mxu0 %v7035
    %9798 = vmatprep.subr.bf16.mxu0 %v7032
    %9799 = vmatpush2.bf16.msra.mxu0 %v7031
    %9800 = vmatprep.subr.bf16.mxu0 %v7028
    %9801 = vmatpush2.bf16.msra.mxu0 %v7027
    %9802 = vmatprep.subr.bf16.mxu0 %v7024
    %9803 = vmatpush2.bf16.msra.mxu0 %v7023
    %9804 = vmatprep.subr.bf16.mxu0 %v7020
    %9805 = vmatpush2.bf16.msra.mxu0 %v7019
    %9806 = vmatprep.subr.bf16.mxu0 %v7016
    %9807 = vmatpush2.bf16.msra.mxu0 %v7015
    %9808 = vmatprep.mubr.bf16.mxu0 %v4662
    %9809 = vmatmul.mubr.bf16.gmra.mxu0 %v4661
    %v9810 = vpop.f32.mrf.mxu0
    %v9811 = vadd.f32 %v9650, %v9810
    %v9812 = vpop.f32.mrf.mxu0
    %v9813 = vadd.f32 %v9652, %v9812
    %v9814 = vpop.f32.mrf.mxu0
    %v9815 = vadd.f32 %v9654, %v9814
    %v9816 = vpop.f32.mrf.mxu0
    %v9817 = vadd.f32 %v9656, %v9816
    %9818 = vmatprep.mubr.bf16.mxu0 %v4680
    %9819 = vmatmul.mubr.bf16.gmra.mxu0 %v4679
    %v9820 = vpop.f32.mrf.mxu0
    %v9821 = vadd.f32 %v9660, %v9820
    %v9822 = vpop.f32.mrf.mxu0
    %v9823 = vadd.f32 %v9662, %v9822
    %v9824 = vpop.f32.mrf.mxu0
    %v9825 = vadd.f32 %v9664, %v9824
    %v9826 = vpop.f32.mrf.mxu0
    %v9827 = vadd.f32 %v9666, %v9826
    %9828 = vmatprep.mubr.bf16.mxu0 %v4698
    %9829 = vmatmul.mubr.bf16.gmra.mxu0 %v4697
    %v9830 = vpop.f32.mrf.mxu0
    %v9831 = vadd.f32 %v9670, %v9830
    %v9832 = vpop.f32.mrf.mxu0
    %v9833 = vadd.f32 %v9672, %v9832
    %v9834 = vpop.f32.mrf.mxu0
    %v9835 = vadd.f32 %v9674, %v9834
    %v9836 = vpop.f32.mrf.mxu0
    %v9837 = vadd.f32 %v9676, %v9836
    %9838 = vmatprep.mubr.bf16.mxu0 %v4716
    %9839 = vmatmul.mubr.bf16.gmra.mxu0 %v4715
    %v9840 = vpop.f32.mrf.mxu0
    %v9841 = vadd.f32 %v9680, %v9840
    %v9842 = vpop.f32.mrf.mxu0
    %v9843 = vadd.f32 %v9682, %v9842
    %v9844 = vpop.f32.mrf.mxu0
    %v9845 = vadd.f32 %v9684, %v9844
    %v9846 = vpop.f32.mrf.mxu0
    %v9847 = vadd.f32 %v9686, %v9846
    %9848 = vmatprep.mubr.bf16.mxu0 %v4734
    %9849 = vmatmul.mubr.bf16.gmra.mxu0 %v4733
    %v9850 = vpop.f32.mrf.mxu0
    %v9851 = vadd.f32 %v9690, %v9850
    %v9852 = vpop.f32.mrf.mxu0
    %v9853 = vadd.f32 %v9692, %v9852
    %v9854 = vpop.f32.mrf.mxu0
    %v9855 = vadd.f32 %v9694, %v9854
    %v9856 = vpop.f32.mrf.mxu0
    %v9857 = vadd.f32 %v9696, %v9856
    %9858 = vmatprep.mubr.bf16.mxu0 %v4752
    %9859 = vmatmul.mubr.bf16.gmra.mxu0 %v4751
    %v9860 = vpop.f32.mrf.mxu0
    %v9861 = vadd.f32 %v9700, %v9860
    %v9862 = vpop.f32.mrf.mxu0
    %v9863 = vadd.f32 %v9702, %v9862
    %v9864 = vpop.f32.mrf.mxu0
    %v9865 = vadd.f32 %v9704, %v9864
    %v9866 = vpop.f32.mrf.mxu0
    %v9867 = vadd.f32 %v9706, %v9866
    %9868 = vmatprep.mubr.bf16.mxu0 %v4770
    %9869 = vmatmul.mubr.bf16.gmra.mxu0 %v4769
    %v9870 = vpop.f32.mrf.mxu0
    %v9871 = vadd.f32 %v9710, %v9870
    %v9872 = vpop.f32.mrf.mxu0
    %v9873 = vadd.f32 %v9712, %v9872
    %v9874 = vpop.f32.mrf.mxu0
    %v9875 = vadd.f32 %v9714, %v9874
    %v9876 = vpop.f32.mrf.mxu0
    %v9877 = vadd.f32 %v9716, %v9876
    %9878 = vmatprep.mubr.bf16.mxu0 %v4788
    %9879 = vmatmul.mubr.bf16.gmra.mxu0 %v4787
    %v9880 = vpop.f32.mrf.mxu0
    %v9881 = vadd.f32 %v9720, %v9880
    %v9882 = vpop.f32.mrf.mxu0
    %v9883 = vadd.f32 %v9722, %v9882
    %v9884 = vpop.f32.mrf.mxu0
    %v9885 = vadd.f32 %v9724, %v9884
    %v9886 = vpop.f32.mrf.mxu0
    %v9887 = vadd.f32 %v9726, %v9886
    %9888 = vmatprep.mubr.bf16.mxu0 %v4806
    %9889 = vmatmul.mubr.bf16.gmra.mxu0 %v4805
    %v9890 = vpop.f32.mrf.mxu0
    %v9891 = vadd.f32 %v9730, %v9890
    %v9892 = vpop.f32.mrf.mxu0
    %v9893 = vadd.f32 %v9732, %v9892
    %v9894 = vpop.f32.mrf.mxu0
    %v9895 = vadd.f32 %v9734, %v9894
    %v9896 = vpop.f32.mrf.mxu0
    %v9897 = vadd.f32 %v9736, %v9896
    %9898 = vmatprep.mubr.bf16.mxu0 %v4824
    %9899 = vmatmul.mubr.bf16.gmra.mxu0 %v4823
    %v9900 = vpop.f32.mrf.mxu0
    %v9901 = vadd.f32 %v9740, %v9900
    %v9902 = vpop.f32.mrf.mxu0
    %v9903 = vadd.f32 %v9742, %v9902
    %v9904 = vpop.f32.mrf.mxu0
    %v9905 = vadd.f32 %v9744, %v9904
    %v9906 = vpop.f32.mrf.mxu0
    %v9907 = vadd.f32 %v9746, %v9906
    %9908 = vmatprep.mubr.bf16.mxu0 %v4842
    %9909 = vmatmul.mubr.bf16.gmra.mxu0 %v4841
    %v9910 = vpop.f32.mrf.mxu0
    %v9911 = vadd.f32 %v9750, %v9910
    %v9912 = vpop.f32.mrf.mxu0
    %v9913 = vadd.f32 %v9752, %v9912
    %v9914 = vpop.f32.mrf.mxu0
    %v9915 = vadd.f32 %v9754, %v9914
    %v9916 = vpop.f32.mrf.mxu0
    %v9917 = vadd.f32 %v9756, %v9916
    %9918 = vmatprep.mubr.bf16.mxu0 %v4860
    %9919 = vmatmul.mubr.bf16.gmra.mxu0 %v4859
    %v9920 = vpop.f32.mrf.mxu0
    %v9921 = vadd.f32 %v9760, %v9920
    %v9922 = vpop.f32.mrf.mxu0
    %v9923 = vadd.f32 %v9762, %v9922
    %v9924 = vpop.f32.mrf.mxu0
    %v9925 = vadd.f32 %v9764, %v9924
    %v9926 = vpop.f32.mrf.mxu0
    %v9927 = vadd.f32 %v9766, %v9926
    %9928 = vmatprep.mubr.bf16.mxu0 %v4878
    %9929 = vmatmul.mubr.bf16.gmra.mxu0 %v4877
    %v9930 = vpop.f32.mrf.mxu0
    %v9931 = vadd.f32 %v9770, %v9930
    %v9932 = vpop.f32.mrf.mxu0
    %v9933 = vadd.f32 %v9772, %v9932
    %v9934 = vpop.f32.mrf.mxu0
    %v9935 = vpop.f32.mrf.mxu0
    %9936 = vdwg.mxu0
    %9937 = vmatprep.subr.bf16.mxu0 %v7076
    %9938 = vmatpush1.bf16.msra.mxu0 %v7075
    %9939 = vmatprep.subr.bf16.mxu0 %v7072
    %9940 = vmatpush1.bf16.msra.mxu0 %v7071
    %9941 = vmatprep.subr.bf16.mxu0 %v7068
    %9942 = vmatpush1.bf16.msra.mxu0 %v7067
    %9943 = vmatprep.subr.bf16.mxu0 %v7064
    %9944 = vmatpush1.bf16.msra.mxu0 %v7063
    %9945 = vmatprep.subr.bf16.mxu0 %v7060
    %9946 = vmatpush1.bf16.msra.mxu0 %v7059
    %9947 = vmatprep.subr.bf16.mxu0 %v7056
    %9948 = vmatpush1.bf16.msra.mxu0 %v7055
    %9949 = vmatprep.subr.bf16.mxu0 %v7052
    %9950 = vmatpush1.bf16.msra.mxu0 %v7051
    %9951 = vmatprep.subr.bf16.mxu0 %v7048
    %9952 = vmatpush1.bf16.msra.mxu0 %v7047
    %9953 = vmatprep.subr.bf16.mxu0 %v7108
    %9954 = vmatpush2.bf16.msra.mxu0 %v7107
    %9955 = vmatprep.subr.bf16.mxu0 %v7104
    %9956 = vmatpush2.bf16.msra.mxu0 %v7103
    %9957 = vmatprep.subr.bf16.mxu0 %v7100
    %9958 = vmatpush2.bf16.msra.mxu0 %v7099
    %9959 = vmatprep.subr.bf16.mxu0 %v7096
    %9960 = vmatpush2.bf16.msra.mxu0 %v7095
    %9961 = vmatprep.subr.bf16.mxu0 %v7092
    %9962 = vmatpush2.bf16.msra.mxu0 %v7091
    %9963 = vmatprep.subr.bf16.mxu0 %v7088
    %9964 = vmatpush2.bf16.msra.mxu0 %v7087
    %9965 = vmatprep.subr.bf16.mxu0 %v7084
    %9966 = vmatpush2.bf16.msra.mxu0 %v7083
    %9967 = vmatprep.subr.bf16.mxu0 %v7080
    %9968 = vmatpush2.bf16.msra.mxu0 %v7079
    %9969 = vmatprep.mubr.bf16.mxu0 %v4664
    %9970 = vmatmul.mubr.bf16.gmra.mxu0 %v4663
    %v9971 = vpop.f32.mrf.mxu0
    %v9972 = vadd.f32 %v9811, %v9971
    %v9973 = vpop.f32.mrf.mxu0
    %v9974 = vadd.f32 %v9813, %v9973
    %v9975 = vpop.f32.mrf.mxu0
    %v9976 = vadd.f32 %v9815, %v9975
    %v9977 = vpop.f32.mrf.mxu0
    %v9978 = vadd.f32 %v9817, %v9977
    %9979 = vmatprep.mubr.bf16.mxu0 %v4682
    %9980 = vmatmul.mubr.bf16.gmra.mxu0 %v4681
    %v9981 = vpop.f32.mrf.mxu0
    %v9982 = vadd.f32 %v9821, %v9981
    %v9983 = vpop.f32.mrf.mxu0
    %v9984 = vadd.f32 %v9823, %v9983
    %v9985 = vpop.f32.mrf.mxu0
    %v9986 = vadd.f32 %v9825, %v9985
    %v9987 = vpop.f32.mrf.mxu0
    %v9988 = vadd.f32 %v9827, %v9987
    %9989 = vmatprep.mubr.bf16.mxu0 %v4700
    %9990 = vmatmul.mubr.bf16.gmra.mxu0 %v4699
    %v9991 = vpop.f32.mrf.mxu0
    %v9992 = vadd.f32 %v9831, %v9991
    %v9993 = vpop.f32.mrf.mxu0
    %v9994 = vadd.f32 %v9833, %v9993
    %v9995 = vpop.f32.mrf.mxu0
    %v9996 = vadd.f32 %v9835, %v9995
    %v9997 = vpop.f32.mrf.mxu0
    %v9998 = vadd.f32 %v9837, %v9997
    %9999 = vmatprep.mubr.bf16.mxu0 %v4718
    %10000 = vmatmul.mubr.bf16.gmra.mxu0 %v4717
    %v10001 = vpop.f32.mrf.mxu0
    %v10002 = vadd.f32 %v9841, %v10001
    %v10003 = vpop.f32.mrf.mxu0
    %v10004 = vadd.f32 %v9843, %v10003
    %v10005 = vpop.f32.mrf.mxu0
    %v10006 = vadd.f32 %v9845, %v10005
    %v10007 = vpop.f32.mrf.mxu0
    %v10008 = vadd.f32 %v9847, %v10007
    %10009 = vmatprep.mubr.bf16.mxu0 %v4736
    %10010 = vmatmul.mubr.bf16.gmra.mxu0 %v4735
    %v10011 = vpop.f32.mrf.mxu0
    %v10012 = vadd.f32 %v9851, %v10011
    %v10013 = vpop.f32.mrf.mxu0
    %v10014 = vadd.f32 %v9853, %v10013
    %v10015 = vpop.f32.mrf.mxu0
    %v10016 = vadd.f32 %v9855, %v10015
    %v10017 = vpop.f32.mrf.mxu0
    %v10018 = vadd.f32 %v9857, %v10017
    %10019 = vmatprep.mubr.bf16.mxu0 %v4754
    %10020 = vmatmul.mubr.bf16.gmra.mxu0 %v4753
    %v10021 = vpop.f32.mrf.mxu0
    %v10022 = vadd.f32 %v9861, %v10021
    %v10023 = vpop.f32.mrf.mxu0
    %v10024 = vadd.f32 %v9863, %v10023
    %v10025 = vpop.f32.mrf.mxu0
    %v10026 = vadd.f32 %v9865, %v10025
    %v10027 = vpop.f32.mrf.mxu0
    %v10028 = vadd.f32 %v9867, %v10027
    %10029 = vmatprep.mubr.bf16.mxu0 %v4772
    %10030 = vmatmul.mubr.bf16.gmra.mxu0 %v4771
    %v10031 = vpop.f32.mrf.mxu0
    %v10032 = vadd.f32 %v9871, %v10031
    %v10033 = vpop.f32.mrf.mxu0
    %v10034 = vadd.f32 %v9873, %v10033
    %v10035 = vpop.f32.mrf.mxu0
    %v10036 = vadd.f32 %v9875, %v10035
    %v10037 = vpop.f32.mrf.mxu0
    %v10038 = vadd.f32 %v9877, %v10037
    %10039 = vmatprep.mubr.bf16.mxu0 %v4790
    %10040 = vmatmul.mubr.bf16.gmra.mxu0 %v4789
    %v10041 = vpop.f32.mrf.mxu0
    %v10042 = vadd.f32 %v9881, %v10041
    %v10043 = vpop.f32.mrf.mxu0
    %v10044 = vadd.f32 %v9883, %v10043
    %v10045 = vpop.f32.mrf.mxu0
    %v10046 = vadd.f32 %v9885, %v10045
    %v10047 = vpop.f32.mrf.mxu0
    %v10048 = vadd.f32 %v9887, %v10047
    %10049 = vmatprep.mubr.bf16.mxu0 %v4808
    %10050 = vmatmul.mubr.bf16.gmra.mxu0 %v4807
    %v10051 = vpop.f32.mrf.mxu0
    %v10052 = vadd.f32 %v9891, %v10051
    %v10053 = vpop.f32.mrf.mxu0
    %v10054 = vadd.f32 %v9893, %v10053
    %v10055 = vpop.f32.mrf.mxu0
    %v10056 = vadd.f32 %v9895, %v10055
    %v10057 = vpop.f32.mrf.mxu0
    %v10058 = vadd.f32 %v9897, %v10057
    %10059 = vmatprep.mubr.bf16.mxu0 %v4826
    %10060 = vmatmul.mubr.bf16.gmra.mxu0 %v4825
    %v10061 = vpop.f32.mrf.mxu0
    %v10062 = vadd.f32 %v9901, %v10061
    %v10063 = vpop.f32.mrf.mxu0
    %v10064 = vadd.f32 %v9903, %v10063
    %v10065 = vpop.f32.mrf.mxu0
    %v10066 = vadd.f32 %v9905, %v10065
    %v10067 = vpop.f32.mrf.mxu0
    %v10068 = vadd.f32 %v9907, %v10067
    %10069 = vmatprep.mubr.bf16.mxu0 %v4844
    %10070 = vmatmul.mubr.bf16.gmra.mxu0 %v4843
    %v10071 = vpop.f32.mrf.mxu0
    %v10072 = vadd.f32 %v9911, %v10071
    %v10073 = vpop.f32.mrf.mxu0
    %v10074 = vadd.f32 %v9913, %v10073
    %v10075 = vpop.f32.mrf.mxu0
    %v10076 = vadd.f32 %v9915, %v10075
    %v10077 = vpop.f32.mrf.mxu0
    %v10078 = vadd.f32 %v9917, %v10077
    %10079 = vmatprep.mubr.bf16.mxu0 %v4862
    %10080 = vmatmul.mubr.bf16.gmra.mxu0 %v4861
    %v10081 = vpop.f32.mrf.mxu0
    %v10082 = vadd.f32 %v9921, %v10081
    %v10083 = vpop.f32.mrf.mxu0
    %v10084 = vadd.f32 %v9923, %v10083
    %v10085 = vpop.f32.mrf.mxu0
    %v10086 = vadd.f32 %v9925, %v10085
    %v10087 = vpop.f32.mrf.mxu0
    %v10088 = vadd.f32 %v9927, %v10087
    %10089 = vmatprep.mubr.bf16.mxu0 %v4880
    %10090 = vmatmul.mubr.bf16.gmra.mxu0 %v4879
    %v10091 = vpop.f32.mrf.mxu0
    %v10092 = vadd.f32 %v9931, %v10091
    %v10093 = vpop.f32.mrf.mxu0
    %v10094 = vadd.f32 %v9933, %v10093
    %v10095 = vpop.f32.mrf.mxu0
    %v10096 = vpop.f32.mrf.mxu0
    %10097 = vdwg.mxu0
    %10098 = vmatprep.subr.bf16.mxu0 %v7140
    %10099 = vmatpush1.bf16.msra.mxu0 %v7139
    %10100 = vmatprep.subr.bf16.mxu0 %v7136
    %10101 = vmatpush1.bf16.msra.mxu0 %v7135
    %10102 = vmatprep.subr.bf16.mxu0 %v7132
    %10103 = vmatpush1.bf16.msra.mxu0 %v7131
    %10104 = vmatprep.subr.bf16.mxu0 %v7128
    %10105 = vmatpush1.bf16.msra.mxu0 %v7127
    %10106 = vmatprep.subr.bf16.mxu0 %v7124
    %10107 = vmatpush1.bf16.msra.mxu0 %v7123
    %10108 = vmatprep.subr.bf16.mxu0 %v7120
    %10109 = vmatpush1.bf16.msra.mxu0 %v7119
    %10110 = vmatprep.subr.bf16.mxu0 %v7116
    %10111 = vmatpush1.bf16.msra.mxu0 %v7115
    %10112 = vmatprep.subr.bf16.mxu0 %v7112
    %10113 = vmatpush1.bf16.msra.mxu0 %v7111
    %10114 = vmatprep.subr.bf16.mxu0 %v7172
    %10115 = vmatpush2.bf16.msra.mxu0 %v7171
    %10116 = vmatprep.subr.bf16.mxu0 %v7168
    %10117 = vmatpush2.bf16.msra.mxu0 %v7167
    %10118 = vmatprep.subr.bf16.mxu0 %v7164
    %10119 = vmatpush2.bf16.msra.mxu0 %v7163
    %10120 = vmatprep.subr.bf16.mxu0 %v7160
    %10121 = vmatpush2.bf16.msra.mxu0 %v7159
    %10122 = vmatprep.subr.bf16.mxu0 %v7156
    %10123 = vmatpush2.bf16.msra.mxu0 %v7155
    %10124 = vmatprep.subr.bf16.mxu0 %v7152
    %10125 = vmatpush2.bf16.msra.mxu0 %v7151
    %10126 = vmatprep.subr.bf16.mxu0 %v7148
    %10127 = vmatpush2.bf16.msra.mxu0 %v7147
    %10128 = vmatprep.subr.bf16.mxu0 %v7144
    %10129 = vmatpush2.bf16.msra.mxu0 %v7143
    %10130 = vmatprep.mubr.bf16.mxu0 %v4666
    %10131 = vmatmul.mubr.bf16.gmra.mxu0 %v4665
    %v10132 = vpop.f32.mrf.mxu0
    %v10133 = vadd.f32 %v9972, %v10132
    %v10134 = vpop.f32.mrf.mxu0
    %v10135 = vadd.f32 %v9974, %v10134
    %v10136 = vpop.f32.mrf.mxu0
    %v10137 = vadd.f32 %v9976, %v10136
    %v10138 = vpop.f32.mrf.mxu0
    %v10139 = vadd.f32 %v9978, %v10138
    %10140 = vmatprep.mubr.bf16.mxu0 %v4684
    %10141 = vmatmul.mubr.bf16.gmra.mxu0 %v4683
    %v10142 = vpop.f32.mrf.mxu0
    %v10143 = vadd.f32 %v9982, %v10142
    %v10144 = vpop.f32.mrf.mxu0
    %v10145 = vadd.f32 %v9984, %v10144
    %v10146 = vpop.f32.mrf.mxu0
    %v10147 = vadd.f32 %v9986, %v10146
    %v10148 = vpop.f32.mrf.mxu0
    %v10149 = vadd.f32 %v9988, %v10148
    %10150 = vmatprep.mubr.bf16.mxu0 %v4702
    %10151 = vmatmul.mubr.bf16.gmra.mxu0 %v4701
    %v10152 = vpop.f32.mrf.mxu0
    %v10153 = vadd.f32 %v9992, %v10152
    %v10154 = vpop.f32.mrf.mxu0
    %v10155 = vadd.f32 %v9994, %v10154
    %v10156 = vpop.f32.mrf.mxu0
    %v10157 = vadd.f32 %v9996, %v10156
    %v10158 = vpop.f32.mrf.mxu0
    %v10159 = vadd.f32 %v9998, %v10158
    %10160 = vmatprep.mubr.bf16.mxu0 %v4720
    %10161 = vmatmul.mubr.bf16.gmra.mxu0 %v4719
    %v10162 = vpop.f32.mrf.mxu0
    %v10163 = vadd.f32 %v10002, %v10162
    %v10164 = vpop.f32.mrf.mxu0
    %v10165 = vadd.f32 %v10004, %v10164
    %v10166 = vpop.f32.mrf.mxu0
    %v10167 = vadd.f32 %v10006, %v10166
    %v10168 = vpop.f32.mrf.mxu0
    %v10169 = vadd.f32 %v10008, %v10168
    %10170 = vmatprep.mubr.bf16.mxu0 %v4738
    %10171 = vmatmul.mubr.bf16.gmra.mxu0 %v4737
    %v10172 = vpop.f32.mrf.mxu0
    %v10173 = vadd.f32 %v10012, %v10172
    %v10174 = vpop.f32.mrf.mxu0
    %v10175 = vadd.f32 %v10014, %v10174
    %v10176 = vpop.f32.mrf.mxu0
    %v10177 = vadd.f32 %v10016, %v10176
    %v10178 = vpop.f32.mrf.mxu0
    %v10179 = vadd.f32 %v10018, %v10178
    %10180 = vmatprep.mubr.bf16.mxu0 %v4756
    %10181 = vmatmul.mubr.bf16.gmra.mxu0 %v4755
    %v10182 = vpop.f32.mrf.mxu0
    %v10183 = vadd.f32 %v10022, %v10182
    %v10184 = vpop.f32.mrf.mxu0
    %v10185 = vadd.f32 %v10024, %v10184
    %v10186 = vpop.f32.mrf.mxu0
    %v10187 = vadd.f32 %v10026, %v10186
    %v10188 = vpop.f32.mrf.mxu0
    %v10189 = vadd.f32 %v10028, %v10188
    %10190 = vmatprep.mubr.bf16.mxu0 %v4774
    %10191 = vmatmul.mubr.bf16.gmra.mxu0 %v4773
    %v10192 = vpop.f32.mrf.mxu0
    %v10193 = vadd.f32 %v10032, %v10192
    %v10194 = vpop.f32.mrf.mxu0
    %v10195 = vadd.f32 %v10034, %v10194
    %v10196 = vpop.f32.mrf.mxu0
    %v10197 = vadd.f32 %v10036, %v10196
    %v10198 = vpop.f32.mrf.mxu0
    %v10199 = vadd.f32 %v10038, %v10198
    %10200 = vmatprep.mubr.bf16.mxu0 %v4792
    %10201 = vmatmul.mubr.bf16.gmra.mxu0 %v4791
    %v10202 = vpop.f32.mrf.mxu0
    %v10203 = vadd.f32 %v10042, %v10202
    %v10204 = vpop.f32.mrf.mxu0
    %v10205 = vadd.f32 %v10044, %v10204
    %v10206 = vpop.f32.mrf.mxu0
    %v10207 = vadd.f32 %v10046, %v10206
    %v10208 = vpop.f32.mrf.mxu0
    %v10209 = vadd.f32 %v10048, %v10208
    %10210 = vmatprep.mubr.bf16.mxu0 %v4810
    %10211 = vmatmul.mubr.bf16.gmra.mxu0 %v4809
    %v10212 = vpop.f32.mrf.mxu0
    %v10213 = vadd.f32 %v10052, %v10212
    %v10214 = vpop.f32.mrf.mxu0
    %v10215 = vadd.f32 %v10054, %v10214
    %v10216 = vpop.f32.mrf.mxu0
    %v10217 = vadd.f32 %v10056, %v10216
    %v10218 = vpop.f32.mrf.mxu0
    %v10219 = vadd.f32 %v10058, %v10218
    %10220 = vmatprep.mubr.bf16.mxu0 %v4828
    %10221 = vmatmul.mubr.bf16.gmra.mxu0 %v4827
    %v10222 = vpop.f32.mrf.mxu0
    %v10223 = vadd.f32 %v10062, %v10222
    %v10224 = vpop.f32.mrf.mxu0
    %v10225 = vadd.f32 %v10064, %v10224
    %v10226 = vpop.f32.mrf.mxu0
    %v10227 = vadd.f32 %v10066, %v10226
    %v10228 = vpop.f32.mrf.mxu0
    %v10229 = vadd.f32 %v10068, %v10228
    %10230 = vmatprep.mubr.bf16.mxu0 %v4846
    %10231 = vmatmul.mubr.bf16.gmra.mxu0 %v4845
    %v10232 = vpop.f32.mrf.mxu0
    %v10233 = vadd.f32 %v10072, %v10232
    %v10234 = vpop.f32.mrf.mxu0
    %v10235 = vadd.f32 %v10074, %v10234
    %v10236 = vpop.f32.mrf.mxu0
    %v10237 = vadd.f32 %v10076, %v10236
    %v10238 = vpop.f32.mrf.mxu0
    %v10239 = vadd.f32 %v10078, %v10238
    %10240 = vmatprep.mubr.bf16.mxu0 %v4864
    %10241 = vmatmul.mubr.bf16.gmra.mxu0 %v4863
    %v10242 = vpop.f32.mrf.mxu0
    %v10243 = vadd.f32 %v10082, %v10242
    %v10244 = vpop.f32.mrf.mxu0
    %v10245 = vadd.f32 %v10084, %v10244
    %v10246 = vpop.f32.mrf.mxu0
    %v10247 = vadd.f32 %v10086, %v10246
    %v10248 = vpop.f32.mrf.mxu0
    %v10249 = vadd.f32 %v10088, %v10248
    %10250 = vmatprep.mubr.bf16.mxu0 %v4882
    %10251 = vmatmul.mubr.bf16.gmra.mxu0 %v4881
    %v10252 = vpop.f32.mrf.mxu0
    %v10253 = vadd.f32 %v10092, %v10252
    %v10254 = vpop.f32.mrf.mxu0
    %v10255 = vadd.f32 %v10094, %v10254
    %v10256 = vpop.f32.mrf.mxu0
    %v10257 = vpop.f32.mrf.mxu0
    %10258 = vdwg.mxu0
    %10259 = vmatprep.subr.bf16.mxu0 %v7204
    %10260 = vmatpush1.bf16.msra.mxu0 %v7203
    %10261 = vmatprep.subr.bf16.mxu0 %v7200
    %10262 = vmatpush1.bf16.msra.mxu0 %v7199
    %10263 = vmatprep.subr.bf16.mxu0 %v7196
    %10264 = vmatpush1.bf16.msra.mxu0 %v7195
    %10265 = vmatprep.subr.bf16.mxu0 %v7192
    %10266 = vmatpush1.bf16.msra.mxu0 %v7191
    %10267 = vmatprep.subr.bf16.mxu0 %v7188
    %10268 = vmatpush1.bf16.msra.mxu0 %v7187
    %10269 = vmatprep.subr.bf16.mxu0 %v7184
    %10270 = vmatpush1.bf16.msra.mxu0 %v7183
    %10271 = vmatprep.subr.bf16.mxu0 %v7180
    %10272 = vmatpush1.bf16.msra.mxu0 %v7179
    %10273 = vmatprep.subr.bf16.mxu0 %v7176
    %10274 = vmatpush1.bf16.msra.mxu0 %v7175
    %10275 = vmatprep.subr.bf16.mxu0 %v7236
    %10276 = vmatpush2.bf16.msra.mxu0 %v7235
    %10277 = vmatprep.subr.bf16.mxu0 %v7232
    %10278 = vmatpush2.bf16.msra.mxu0 %v7231
    %10279 = vmatprep.subr.bf16.mxu0 %v7228
    %10280 = vmatpush2.bf16.msra.mxu0 %v7227
    %10281 = vmatprep.subr.bf16.mxu0 %v7224
    %10282 = vmatpush2.bf16.msra.mxu0 %v7223
    %10283 = vmatprep.subr.bf16.mxu0 %v7220
    %10284 = vmatpush2.bf16.msra.mxu0 %v7219
    %10285 = vmatprep.subr.bf16.mxu0 %v7216
    %10286 = vmatpush2.bf16.msra.mxu0 %v7215
    %10287 = vmatprep.subr.bf16.mxu0 %v7212
    %10288 = vmatpush2.bf16.msra.mxu0 %v7211
    %10289 = vmatprep.subr.bf16.mxu0 %v7208
    %10290 = vmatpush2.bf16.msra.mxu0 %v7207
    %10291 = vmatprep.mubr.bf16.mxu0 %v4668
    %10292 = vmatmul.mubr.bf16.gmra.mxu0 %v4667
    %v10293 = vpop.f32.mrf.mxu0
    %v10294 = vadd.f32 %v10133, %v10293
    %v10295 = vpop.f32.mrf.mxu0
    %v10296 = vadd.f32 %v10135, %v10295
    %v10297 = vpop.f32.mrf.mxu0
    %v10298 = vadd.f32 %v10137, %v10297
    %v10299 = vpop.f32.mrf.mxu0
    %v10300 = vadd.f32 %v10139, %v10299
    %10301 = vmatprep.mubr.bf16.mxu0 %v4686
    %10302 = vmatmul.mubr.bf16.gmra.mxu0 %v4685
    %v10303 = vpop.f32.mrf.mxu0
    %v10304 = vadd.f32 %v10143, %v10303
    %v10305 = vpop.f32.mrf.mxu0
    %v10306 = vadd.f32 %v10145, %v10305
    %v10307 = vpop.f32.mrf.mxu0
    %v10308 = vadd.f32 %v10147, %v10307
    %v10309 = vpop.f32.mrf.mxu0
    %v10310 = vadd.f32 %v10149, %v10309
    %10311 = vmatprep.mubr.bf16.mxu0 %v4704
    %10312 = vmatmul.mubr.bf16.gmra.mxu0 %v4703
    %v10313 = vpop.f32.mrf.mxu0
    %v10314 = vadd.f32 %v10153, %v10313
    %v10315 = vpop.f32.mrf.mxu0
    %v10316 = vadd.f32 %v10155, %v10315
    %v10317 = vpop.f32.mrf.mxu0
    %v10318 = vadd.f32 %v10157, %v10317
    %v10319 = vpop.f32.mrf.mxu0
    %v10320 = vadd.f32 %v10159, %v10319
    %10321 = vmatprep.mubr.bf16.mxu0 %v4722
    %10322 = vmatmul.mubr.bf16.gmra.mxu0 %v4721
    %v10323 = vpop.f32.mrf.mxu0
    %v10324 = vadd.f32 %v10163, %v10323
    %v10325 = vpop.f32.mrf.mxu0
    %v10326 = vadd.f32 %v10165, %v10325
    %v10327 = vpop.f32.mrf.mxu0
    %v10328 = vadd.f32 %v10167, %v10327
    %v10329 = vpop.f32.mrf.mxu0
    %v10330 = vadd.f32 %v10169, %v10329
    %10331 = vmatprep.mubr.bf16.mxu0 %v4740
    %10332 = vmatmul.mubr.bf16.gmra.mxu0 %v4739
    %v10333 = vpop.f32.mrf.mxu0
    %v10334 = vadd.f32 %v10173, %v10333
    %v10335 = vpop.f32.mrf.mxu0
    %v10336 = vadd.f32 %v10175, %v10335
    %v10337 = vpop.f32.mrf.mxu0
    %v10338 = vadd.f32 %v10177, %v10337
    %v10339 = vpop.f32.mrf.mxu0
    %v10340 = vadd.f32 %v10179, %v10339
    %10341 = vmatprep.mubr.bf16.mxu0 %v4758
    %10342 = vmatmul.mubr.bf16.gmra.mxu0 %v4757
    %v10343 = vpop.f32.mrf.mxu0
    %v10344 = vadd.f32 %v10183, %v10343
    %v10345 = vpop.f32.mrf.mxu0
    %v10346 = vadd.f32 %v10185, %v10345
    %v10347 = vpop.f32.mrf.mxu0
    %v10348 = vadd.f32 %v10187, %v10347
    %v10349 = vpop.f32.mrf.mxu0
    %v10350 = vadd.f32 %v10189, %v10349
    %10351 = vmatprep.mubr.bf16.mxu0 %v4776
    %10352 = vmatmul.mubr.bf16.gmra.mxu0 %v4775
    %v10353 = vpop.f32.mrf.mxu0
    %v10354 = vadd.f32 %v10193, %v10353
    %v10355 = vpop.f32.mrf.mxu0
    %v10356 = vadd.f32 %v10195, %v10355
    %v10357 = vpop.f32.mrf.mxu0
    %v10358 = vadd.f32 %v10197, %v10357
    %v10359 = vpop.f32.mrf.mxu0
    %v10360 = vadd.f32 %v10199, %v10359
    %10361 = vmatprep.mubr.bf16.mxu0 %v4794
    %10362 = vmatmul.mubr.bf16.gmra.mxu0 %v4793
    %v10363 = vpop.f32.mrf.mxu0
    %v10364 = vadd.f32 %v10203, %v10363
    %v10365 = vpop.f32.mrf.mxu0
    %v10366 = vadd.f32 %v10205, %v10365
    %v10367 = vpop.f32.mrf.mxu0
    %v10368 = vadd.f32 %v10207, %v10367
    %v10369 = vpop.f32.mrf.mxu0
    %v10370 = vadd.f32 %v10209, %v10369
    %10371 = vmatprep.mubr.bf16.mxu0 %v4812
    %10372 = vmatmul.mubr.bf16.gmra.mxu0 %v4811
    %v10373 = vpop.f32.mrf.mxu0
    %v10374 = vadd.f32 %v10213, %v10373
    %v10375 = vpop.f32.mrf.mxu0
    %v10376 = vadd.f32 %v10215, %v10375
    %v10377 = vpop.f32.mrf.mxu0
    %v10378 = vadd.f32 %v10217, %v10377
    %v10379 = vpop.f32.mrf.mxu0
    %v10380 = vadd.f32 %v10219, %v10379
    %10381 = vmatprep.mubr.bf16.mxu0 %v4830
    %10382 = vmatmul.mubr.bf16.gmra.mxu0 %v4829
    %v10383 = vpop.f32.mrf.mxu0
    %v10384 = vadd.f32 %v10223, %v10383
    %v10385 = vpop.f32.mrf.mxu0
    %v10386 = vadd.f32 %v10225, %v10385
    %v10387 = vpop.f32.mrf.mxu0
    %v10388 = vadd.f32 %v10227, %v10387
    %v10389 = vpop.f32.mrf.mxu0
    %v10390 = vadd.f32 %v10229, %v10389
    %10391 = vmatprep.mubr.bf16.mxu0 %v4848
    %10392 = vmatmul.mubr.bf16.gmra.mxu0 %v4847
    %v10393 = vpop.f32.mrf.mxu0
    %v10394 = vadd.f32 %v10233, %v10393
    %v10395 = vpop.f32.mrf.mxu0
    %v10396 = vadd.f32 %v10235, %v10395
    %v10397 = vpop.f32.mrf.mxu0
    %v10398 = vadd.f32 %v10237, %v10397
    %v10399 = vpop.f32.mrf.mxu0
    %v10400 = vadd.f32 %v10239, %v10399
    %10401 = vmatprep.mubr.bf16.mxu0 %v4866
    %10402 = vmatmul.mubr.bf16.gmra.mxu0 %v4865
    %v10403 = vpop.f32.mrf.mxu0
    %v10404 = vadd.f32 %v10243, %v10403
    %v10405 = vpop.f32.mrf.mxu0
    %v10406 = vadd.f32 %v10245, %v10405
    %v10407 = vpop.f32.mrf.mxu0
    %v10408 = vadd.f32 %v10247, %v10407
    %v10409 = vpop.f32.mrf.mxu0
    %v10410 = vadd.f32 %v10249, %v10409
    %10411 = vmatprep.mubr.bf16.mxu0 %v4884
    %10412 = vmatmul.mubr.bf16.gmra.mxu0 %v4883
    %v10413 = vpop.f32.mrf.mxu0
    %v10414 = vadd.f32 %v10253, %v10413
    %v10415 = vpop.f32.mrf.mxu0
    %v10416 = vadd.f32 %v10255, %v10415
    %v10417 = vpop.f32.mrf.mxu0
    %v10418 = vpop.f32.mrf.mxu0
    %10419 = vdwg.mxu0
    %10420 = vmatprep.subr.bf16.mxu0 %v7268
    %10421 = vmatpush1.bf16.msra.mxu0 %v7267
    %10422 = vmatprep.subr.bf16.mxu0 %v7264
    %10423 = vmatpush1.bf16.msra.mxu0 %v7263
    %10424 = vmatprep.subr.bf16.mxu0 %v7260
    %10425 = vmatpush1.bf16.msra.mxu0 %v7259
    %10426 = vmatprep.subr.bf16.mxu0 %v7256
    %10427 = vmatpush1.bf16.msra.mxu0 %v7255
    %10428 = vmatprep.subr.bf16.mxu0 %v7252
    %10429 = vmatpush1.bf16.msra.mxu0 %v7251
    %10430 = vmatprep.subr.bf16.mxu0 %v7248
    %10431 = vmatpush1.bf16.msra.mxu0 %v7247
    %10432 = vmatprep.subr.bf16.mxu0 %v7244
    %10433 = vmatpush1.bf16.msra.mxu0 %v7243
    %10434 = vmatprep.subr.bf16.mxu0 %v7240
    %10435 = vmatpush1.bf16.msra.mxu0 %v7239
    %10436 = vmatprep.subr.bf16.mxu0 %v7300
    %10437 = vmatpush2.bf16.msra.mxu0 %v7299
    %10438 = vmatprep.subr.bf16.mxu0 %v7296
    %10439 = vmatpush2.bf16.msra.mxu0 %v7295
    %10440 = vmatprep.subr.bf16.mxu0 %v7292
    %10441 = vmatpush2.bf16.msra.mxu0 %v7291
    %10442 = vmatprep.subr.bf16.mxu0 %v7288
    %10443 = vmatpush2.bf16.msra.mxu0 %v7287
    %10444 = vmatprep.subr.bf16.mxu0 %v7284
    %10445 = vmatpush2.bf16.msra.mxu0 %v7283
    %10446 = vmatprep.subr.bf16.mxu0 %v7280
    %10447 = vmatpush2.bf16.msra.mxu0 %v7279
    %10448 = vmatprep.subr.bf16.mxu0 %v7276
    %10449 = vmatpush2.bf16.msra.mxu0 %v7275
    %10450 = vmatprep.subr.bf16.mxu0 %v7272
    %10451 = vmatpush2.bf16.msra.mxu0 %v7271
    %10452 = vmatprep.mubr.bf16.mxu0 %v4670
    %10453 = vmatmul.mubr.bf16.gmra.mxu0 %v4669
    %v10454 = vpop.f32.mrf.mxu0
    %v10455 = vadd.f32 %v10294, %v10454
    %v10456 = vpop.f32.mrf.mxu0
    %v10457 = vadd.f32 %v10296, %v10456
    %v10458 = vpop.f32.mrf.mxu0
    %v10459 = vadd.f32 %v10298, %v10458
    %v10460 = vpop.f32.mrf.mxu0
    %v10461 = vadd.f32 %v10300, %v10460
    %10462 = vmatprep.mubr.bf16.mxu0 %v4688
    %10463 = vmatmul.mubr.bf16.gmra.mxu0 %v4687
    %v10464 = vpop.f32.mrf.mxu0
    %v10465 = vadd.f32 %v10304, %v10464
    %v10466 = vpop.f32.mrf.mxu0
    %v10467 = vadd.f32 %v10306, %v10466
    %v10468 = vpop.f32.mrf.mxu0
    %v10469 = vadd.f32 %v10308, %v10468
    %v10470 = vpop.f32.mrf.mxu0
    %v10471 = vadd.f32 %v10310, %v10470
    %10472 = vmatprep.mubr.bf16.mxu0 %v4706
    %10473 = vmatmul.mubr.bf16.gmra.mxu0 %v4705
    %v10474 = vpop.f32.mrf.mxu0
    %v10475 = vadd.f32 %v10314, %v10474
    %v10476 = vpop.f32.mrf.mxu0
    %v10477 = vadd.f32 %v10316, %v10476
    %v10478 = vpop.f32.mrf.mxu0
    %v10479 = vadd.f32 %v10318, %v10478
    %v10480 = vpop.f32.mrf.mxu0
    %v10481 = vadd.f32 %v10320, %v10480
    %10482 = vmatprep.mubr.bf16.mxu0 %v4724
    %10483 = vmatmul.mubr.bf16.gmra.mxu0 %v4723
    %v10484 = vpop.f32.mrf.mxu0
    %v10485 = vadd.f32 %v10324, %v10484
    %v10486 = vpop.f32.mrf.mxu0
    %v10487 = vadd.f32 %v10326, %v10486
    %v10488 = vpop.f32.mrf.mxu0
    %v10489 = vadd.f32 %v10328, %v10488
    %v10490 = vpop.f32.mrf.mxu0
    %v10491 = vadd.f32 %v10330, %v10490
    %10492 = vmatprep.mubr.bf16.mxu0 %v4742
    %10493 = vmatmul.mubr.bf16.gmra.mxu0 %v4741
    %v10494 = vpop.f32.mrf.mxu0
    %v10495 = vadd.f32 %v10334, %v10494
    %v10496 = vpop.f32.mrf.mxu0
    %v10497 = vadd.f32 %v10336, %v10496
    %v10498 = vpop.f32.mrf.mxu0
    %v10499 = vadd.f32 %v10338, %v10498
    %v10500 = vpop.f32.mrf.mxu0
    %v10501 = vadd.f32 %v10340, %v10500
    %10502 = vmatprep.mubr.bf16.mxu0 %v4760
    %10503 = vmatmul.mubr.bf16.gmra.mxu0 %v4759
    %v10504 = vpop.f32.mrf.mxu0
    %v10505 = vadd.f32 %v10344, %v10504
    %v10506 = vpop.f32.mrf.mxu0
    %v10507 = vadd.f32 %v10346, %v10506
    %v10508 = vpop.f32.mrf.mxu0
    %v10509 = vadd.f32 %v10348, %v10508
    %v10510 = vpop.f32.mrf.mxu0
    %v10511 = vadd.f32 %v10350, %v10510
    %10512 = vmatprep.mubr.bf16.mxu0 %v4778
    %10513 = vmatmul.mubr.bf16.gmra.mxu0 %v4777
    %v10514 = vpop.f32.mrf.mxu0
    %v10515 = vadd.f32 %v10354, %v10514
    %v10516 = vpop.f32.mrf.mxu0
    %v10517 = vadd.f32 %v10356, %v10516
    %v10518 = vpop.f32.mrf.mxu0
    %v10519 = vadd.f32 %v10358, %v10518
    %v10520 = vpop.f32.mrf.mxu0
    %v10521 = vadd.f32 %v10360, %v10520
    %10522 = vmatprep.mubr.bf16.mxu0 %v4796
    %10523 = vmatmul.mubr.bf16.gmra.mxu0 %v4795
    %v10524 = vpop.f32.mrf.mxu0
    %v10525 = vadd.f32 %v10364, %v10524
    %v10526 = vpop.f32.mrf.mxu0
    %v10527 = vadd.f32 %v10366, %v10526
    %v10528 = vpop.f32.mrf.mxu0
    %v10529 = vadd.f32 %v10368, %v10528
    %v10530 = vpop.f32.mrf.mxu0
    %v10531 = vadd.f32 %v10370, %v10530
    %10532 = vmatprep.mubr.bf16.mxu0 %v4814
    %10533 = vmatmul.mubr.bf16.gmra.mxu0 %v4813
    %v10534 = vpop.f32.mrf.mxu0
    %v10535 = vadd.f32 %v10374, %v10534
    %v10536 = vpop.f32.mrf.mxu0
    %v10537 = vadd.f32 %v10376, %v10536
    %v10538 = vpop.f32.mrf.mxu0
    %v10539 = vadd.f32 %v10378, %v10538
    %v10540 = vpop.f32.mrf.mxu0
    %v10541 = vadd.f32 %v10380, %v10540
    %10542 = vmatprep.mubr.bf16.mxu0 %v4832
    %10543 = vmatmul.mubr.bf16.gmra.mxu0 %v4831
    %v10544 = vpop.f32.mrf.mxu0
    %v10545 = vadd.f32 %v10384, %v10544
    %v10546 = vpop.f32.mrf.mxu0
    %v10547 = vadd.f32 %v10386, %v10546
    %v10548 = vpop.f32.mrf.mxu0
    %v10549 = vadd.f32 %v10388, %v10548
    %v10550 = vpop.f32.mrf.mxu0
    %v10551 = vadd.f32 %v10390, %v10550
    %10552 = vmatprep.mubr.bf16.mxu0 %v4850
    %10553 = vmatmul.mubr.bf16.gmra.mxu0 %v4849
    %v10554 = vpop.f32.mrf.mxu0
    %v10555 = vadd.f32 %v10394, %v10554
    %v10556 = vpop.f32.mrf.mxu0
    %v10557 = vadd.f32 %v10396, %v10556
    %v10558 = vpop.f32.mrf.mxu0
    %v10559 = vadd.f32 %v10398, %v10558
    %v10560 = vpop.f32.mrf.mxu0
    %v10561 = vadd.f32 %v10400, %v10560
    %10562 = vmatprep.mubr.bf16.mxu0 %v4868
    %10563 = vmatmul.mubr.bf16.gmra.mxu0 %v4867
    %v10564 = vpop.f32.mrf.mxu0
    %v10565 = vadd.f32 %v10404, %v10564
    %v10566 = vpop.f32.mrf.mxu0
    %v10567 = vadd.f32 %v10406, %v10566
    %v10568 = vpop.f32.mrf.mxu0
    %v10569 = vadd.f32 %v10408, %v10568
    %v10570 = vpop.f32.mrf.mxu0
    %v10571 = vadd.f32 %v10410, %v10570
    %10572 = vmatprep.mubr.bf16.mxu0 %v4886
    %10573 = vmatmul.mubr.bf16.gmra.mxu0 %v4885
    %v10574 = vpop.f32.mrf.mxu0
    %v10575 = vadd.f32 %v10414, %v10574
    %v10576 = vpop.f32.mrf.mxu0
    %v10577 = vadd.f32 %v10416, %v10576
    %v10578 = vpop.f32.mrf.mxu0
    %v10579 = vpop.f32.mrf.mxu0
    %10580 = vdwg.mxu0
    %10581 = vmatprep.subr.bf16.mxu0 %v7332
    %10582 = vmatpush1.bf16.msra.mxu0 %v7331
    %10583 = vmatprep.subr.bf16.mxu0 %v7328
    %10584 = vmatpush1.bf16.msra.mxu0 %v7327
    %10585 = vmatprep.subr.bf16.mxu0 %v7324
    %10586 = vmatpush1.bf16.msra.mxu0 %v7323
    %10587 = vmatprep.subr.bf16.mxu0 %v7320
    %10588 = vmatpush1.bf16.msra.mxu0 %v7319
    %10589 = vmatprep.subr.bf16.mxu0 %v7316
    %10590 = vmatpush1.bf16.msra.mxu0 %v7315
    %10591 = vmatprep.subr.bf16.mxu0 %v7312
    %10592 = vmatpush1.bf16.msra.mxu0 %v7311
    %10593 = vmatprep.subr.bf16.mxu0 %v7308
    %10594 = vmatpush1.bf16.msra.mxu0 %v7307
    %10595 = vmatprep.subr.bf16.mxu0 %v7304
    %10596 = vmatpush1.bf16.msra.mxu0 %v7303
    %10597 = vmatprep.subr.bf16.mxu0 %v7364
    %10598 = vmatpush2.bf16.msra.mxu0 %v7363
    %10599 = vmatprep.subr.bf16.mxu0 %v7360
    %10600 = vmatpush2.bf16.msra.mxu0 %v7359
    %10601 = vmatprep.subr.bf16.mxu0 %v7356
    %10602 = vmatpush2.bf16.msra.mxu0 %v7355
    %10603 = vmatprep.subr.bf16.mxu0 %v7352
    %10604 = vmatpush2.bf16.msra.mxu0 %v7351
    %10605 = vmatprep.subr.bf16.mxu0 %v7348
    %10606 = vmatpush2.bf16.msra.mxu0 %v7347
    %10607 = vmatprep.subr.bf16.mxu0 %v7344
    %10608 = vmatpush2.bf16.msra.mxu0 %v7343
    %10609 = vmatprep.subr.bf16.mxu0 %v7340
    %10610 = vmatpush2.bf16.msra.mxu0 %v7339
    %10611 = vmatprep.subr.bf16.mxu0 %v7336
    %10612 = vmatpush2.bf16.msra.mxu0 %v7335
    %10613 = vmatprep.mubr.bf16.mxu0 %v4672
    %10614 = vmatmul.mubr.bf16.gmra.mxu0 %v4671
    %v10615 = vpop.f32.mrf.mxu0
    %v10616 = vadd.f32 %v10455, %v10615
    %v10617 = vpop.f32.mrf.mxu0
    %v10618 = vadd.f32 %v10457, %v10617
    %v10619 = vpop.f32.mrf.mxu0
    %v10620 = vadd.f32 %v10459, %v10619
    %v10621 = vpop.f32.mrf.mxu0
    %v10622 = vadd.f32 %v10461, %v10621
    %10623 = vmatprep.mubr.bf16.mxu0 %v4690
    %10624 = vmatmul.mubr.bf16.gmra.mxu0 %v4689
    %v10625 = vpop.f32.mrf.mxu0
    %v10626 = vadd.f32 %v10465, %v10625
    %v10627 = vpop.f32.mrf.mxu0
    %v10628 = vadd.f32 %v10467, %v10627
    %v10629 = vpop.f32.mrf.mxu0
    %v10630 = vadd.f32 %v10469, %v10629
    %v10631 = vpop.f32.mrf.mxu0
    %v10632 = vadd.f32 %v10471, %v10631
    %10633 = vmatprep.mubr.bf16.mxu0 %v4708
    %10634 = vmatmul.mubr.bf16.gmra.mxu0 %v4707
    %v10635 = vpop.f32.mrf.mxu0
    %v10636 = vadd.f32 %v10475, %v10635
    %v10637 = vpop.f32.mrf.mxu0
    %v10638 = vadd.f32 %v10477, %v10637
    %v10639 = vpop.f32.mrf.mxu0
    %v10640 = vadd.f32 %v10479, %v10639
    %v10641 = vpop.f32.mrf.mxu0
    %v10642 = vadd.f32 %v10481, %v10641
    %10643 = vmatprep.mubr.bf16.mxu0 %v4726
    %10644 = vmatmul.mubr.bf16.gmra.mxu0 %v4725
    %v10645 = vpop.f32.mrf.mxu0
    %v10646 = vadd.f32 %v10485, %v10645
    %v10647 = vpop.f32.mrf.mxu0
    %v10648 = vadd.f32 %v10487, %v10647
    %v10649 = vpop.f32.mrf.mxu0
    %v10650 = vadd.f32 %v10489, %v10649
    %v10651 = vpop.f32.mrf.mxu0
    %v10652 = vadd.f32 %v10491, %v10651
    %10653 = vmatprep.mubr.bf16.mxu0 %v4744
    %10654 = vmatmul.mubr.bf16.gmra.mxu0 %v4743
    %v10655 = vpop.f32.mrf.mxu0
    %v10656 = vadd.f32 %v10495, %v10655
    %v10657 = vpop.f32.mrf.mxu0
    %v10658 = vadd.f32 %v10497, %v10657
    %v10659 = vpop.f32.mrf.mxu0
    %v10660 = vadd.f32 %v10499, %v10659
    %v10661 = vpop.f32.mrf.mxu0
    %v10662 = vadd.f32 %v10501, %v10661
    %10663 = vmatprep.mubr.bf16.mxu0 %v4762
    %10664 = vmatmul.mubr.bf16.gmra.mxu0 %v4761
    %v10665 = vpop.f32.mrf.mxu0
    %v10666 = vadd.f32 %v10505, %v10665
    %v10667 = vpop.f32.mrf.mxu0
    %v10668 = vadd.f32 %v10507, %v10667
    %v10669 = vpop.f32.mrf.mxu0
    %v10670 = vadd.f32 %v10509, %v10669
    %v10671 = vpop.f32.mrf.mxu0
    %v10672 = vadd.f32 %v10511, %v10671
    %10673 = vmatprep.mubr.bf16.mxu0 %v4780
    %10674 = vmatmul.mubr.bf16.gmra.mxu0 %v4779
    %v10675 = vpop.f32.mrf.mxu0
    %v10676 = vadd.f32 %v10515, %v10675
    %v10677 = vpop.f32.mrf.mxu0
    %v10678 = vadd.f32 %v10517, %v10677
    %v10679 = vpop.f32.mrf.mxu0
    %v10680 = vadd.f32 %v10519, %v10679
    %v10681 = vpop.f32.mrf.mxu0
    %v10682 = vadd.f32 %v10521, %v10681
    %10683 = vmatprep.mubr.bf16.mxu0 %v4798
    %10684 = vmatmul.mubr.bf16.gmra.mxu0 %v4797
    %v10685 = vpop.f32.mrf.mxu0
    %v10686 = vadd.f32 %v10525, %v10685
    %v10687 = vpop.f32.mrf.mxu0
    %v10688 = vadd.f32 %v10527, %v10687
    %v10689 = vpop.f32.mrf.mxu0
    %v10690 = vadd.f32 %v10529, %v10689
    %v10691 = vpop.f32.mrf.mxu0
    %v10692 = vadd.f32 %v10531, %v10691
    %10693 = vmatprep.mubr.bf16.mxu0 %v4816
    %10694 = vmatmul.mubr.bf16.gmra.mxu0 %v4815
    %v10695 = vpop.f32.mrf.mxu0
    %v10696 = vadd.f32 %v10535, %v10695
    %v10697 = vpop.f32.mrf.mxu0
    %v10698 = vadd.f32 %v10537, %v10697
    %v10699 = vpop.f32.mrf.mxu0
    %v10700 = vadd.f32 %v10539, %v10699
    %v10701 = vpop.f32.mrf.mxu0
    %v10702 = vadd.f32 %v10541, %v10701
    %10703 = vmatprep.mubr.bf16.mxu0 %v4834
    %10704 = vmatmul.mubr.bf16.gmra.mxu0 %v4833
    %v10705 = vpop.f32.mrf.mxu0
    %v10706 = vadd.f32 %v10545, %v10705
    %v10707 = vpop.f32.mrf.mxu0
    %v10708 = vadd.f32 %v10547, %v10707
    %v10709 = vpop.f32.mrf.mxu0
    %v10710 = vadd.f32 %v10549, %v10709
    %v10711 = vpop.f32.mrf.mxu0
    %v10712 = vadd.f32 %v10551, %v10711
    %10713 = vmatprep.mubr.bf16.mxu0 %v4852
    %10714 = vmatmul.mubr.bf16.gmra.mxu0 %v4851
    %v10715 = vpop.f32.mrf.mxu0
    %v10716 = vadd.f32 %v10555, %v10715
    %v10717 = vpop.f32.mrf.mxu0
    %v10718 = vadd.f32 %v10557, %v10717
    %v10719 = vpop.f32.mrf.mxu0
    %v10720 = vadd.f32 %v10559, %v10719
    %v10721 = vpop.f32.mrf.mxu0
    %v10722 = vadd.f32 %v10561, %v10721
    %10723 = vmatprep.mubr.bf16.mxu0 %v4870
    %10724 = vmatmul.mubr.bf16.gmra.mxu0 %v4869
    %v10725 = vpop.f32.mrf.mxu0
    %v10726 = vadd.f32 %v10565, %v10725
    %v10727 = vpop.f32.mrf.mxu0
    %v10728 = vadd.f32 %v10567, %v10727
    %v10729 = vpop.f32.mrf.mxu0
    %v10730 = vadd.f32 %v10569, %v10729
    %v10731 = vpop.f32.mrf.mxu0
    %v10732 = vadd.f32 %v10571, %v10731
    %10733 = vmatprep.mubr.bf16.mxu0 %v4888
    %10734 = vmatmul.mubr.bf16.gmra.mxu0 %v4887
    %v10735 = vpop.f32.mrf.mxu0
    %v10736 = vadd.f32 %v10575, %v10735
    %v10737 = vpop.f32.mrf.mxu0
    %v10738 = vadd.f32 %v10577, %v10737
    %v10739 = vpop.f32.mrf.mxu0
    %v10740 = vpop.f32.mrf.mxu0
    %10741 = vdwg.mxu0
    %10742 = vmatprep.subr.bf16.mxu0 %v7396
    %10743 = vmatpush1.bf16.msra.mxu0 %v7395
    %10744 = vmatprep.subr.bf16.mxu0 %v7392
    %10745 = vmatpush1.bf16.msra.mxu0 %v7391
    %10746 = vmatprep.subr.bf16.mxu0 %v7388
    %10747 = vmatpush1.bf16.msra.mxu0 %v7387
    %10748 = vmatprep.subr.bf16.mxu0 %v7384
    %10749 = vmatpush1.bf16.msra.mxu0 %v7383
    %10750 = vmatprep.subr.bf16.mxu0 %v7380
    %10751 = vmatpush1.bf16.msra.mxu0 %v7379
    %10752 = vmatprep.subr.bf16.mxu0 %v7376
    %10753 = vmatpush1.bf16.msra.mxu0 %v7375
    %10754 = vmatprep.subr.bf16.mxu0 %v7372
    %10755 = vmatpush1.bf16.msra.mxu0 %v7371
    %10756 = vmatprep.subr.bf16.mxu0 %v7368
    %10757 = vmatpush1.bf16.msra.mxu0 %v7367
    %10758 = vmatprep.subr.bf16.mxu0 %v7428
    %10759 = vmatpush2.bf16.msra.mxu0 %v7427
    %10760 = vmatprep.subr.bf16.mxu0 %v7424
    %10761 = vmatpush2.bf16.msra.mxu0 %v7423
    %10762 = vmatprep.subr.bf16.mxu0 %v7420
    %10763 = vmatpush2.bf16.msra.mxu0 %v7419
    %10764 = vmatprep.subr.bf16.mxu0 %v7416
    %10765 = vmatpush2.bf16.msra.mxu0 %v7415
    %10766 = vmatprep.subr.bf16.mxu0 %v7412
    %10767 = vmatpush2.bf16.msra.mxu0 %v7411
    %10768 = vmatprep.subr.bf16.mxu0 %v7408
    %10769 = vmatpush2.bf16.msra.mxu0 %v7407
    %10770 = vmatprep.subr.bf16.mxu0 %v7404
    %10771 = vmatpush2.bf16.msra.mxu0 %v7403
    %10772 = vmatprep.subr.bf16.mxu0 %v7400
    %10773 = vmatpush2.bf16.msra.mxu0 %v7399
    %10774 = vmatprep.mubr.bf16.mxu0 %v4674
    %10775 = vmatmul.mubr.bf16.gmra.mxu0 %v4673
    %v10776 = vpop.f32.mrf.mxu0
    %v10777 = vadd.f32 %v10616, %v10776
    %v10778 = vpop.f32.mrf.mxu0
    %v10779 = vadd.f32 %v10618, %v10778
    %v10780 = vpop.f32.mrf.mxu0
    %v10781 = vadd.f32 %v10620, %v10780
    %v10782 = vpop.f32.mrf.mxu0
    %v10783 = vadd.f32 %v10622, %v10782
    %10784 = vmatprep.mubr.bf16.mxu0 %v4692
    %10785 = vmatmul.mubr.bf16.gmra.mxu0 %v4691
    %v10786 = vpop.f32.mrf.mxu0
    %v10787 = vadd.f32 %v10626, %v10786
    %v10788 = vpop.f32.mrf.mxu0
    %v10789 = vadd.f32 %v10628, %v10788
    %v10790 = vpop.f32.mrf.mxu0
    %v10791 = vadd.f32 %v10630, %v10790
    %v10792 = vpop.f32.mrf.mxu0
    %v10793 = vadd.f32 %v10632, %v10792
    %10794 = vmatprep.mubr.bf16.mxu0 %v4710
    %10795 = vmatmul.mubr.bf16.gmra.mxu0 %v4709
    %v10796 = vpop.f32.mrf.mxu0
    %v10797 = vadd.f32 %v10636, %v10796
    %v10798 = vpop.f32.mrf.mxu0
    %v10799 = vadd.f32 %v10638, %v10798
    %v10800 = vpop.f32.mrf.mxu0
    %v10801 = vadd.f32 %v10640, %v10800
    %v10802 = vpop.f32.mrf.mxu0
    %v10803 = vadd.f32 %v10642, %v10802
    %10804 = vmatprep.mubr.bf16.mxu0 %v4728
    %10805 = vmatmul.mubr.bf16.gmra.mxu0 %v4727
    %v10806 = vpop.f32.mrf.mxu0
    %v10807 = vadd.f32 %v10646, %v10806
    %v10808 = vpop.f32.mrf.mxu0
    %v10809 = vadd.f32 %v10648, %v10808
    %v10810 = vpop.f32.mrf.mxu0
    %v10811 = vadd.f32 %v10650, %v10810
    %v10812 = vpop.f32.mrf.mxu0
    %v10813 = vadd.f32 %v10652, %v10812
    %10814 = vmatprep.mubr.bf16.mxu0 %v4746
    %10815 = vmatmul.mubr.bf16.gmra.mxu0 %v4745
    %v10816 = vpop.f32.mrf.mxu0
    %v10817 = vadd.f32 %v10656, %v10816
    %v10818 = vpop.f32.mrf.mxu0
    %v10819 = vadd.f32 %v10658, %v10818
    %v10820 = vpop.f32.mrf.mxu0
    %v10821 = vadd.f32 %v10660, %v10820
    %v10822 = vpop.f32.mrf.mxu0
    %v10823 = vadd.f32 %v10662, %v10822
    %10824 = vmatprep.mubr.bf16.mxu0 %v4764
    %10825 = vmatmul.mubr.bf16.gmra.mxu0 %v4763
    %v10826 = vpop.f32.mrf.mxu0
    %v10827 = vadd.f32 %v10666, %v10826
    %v10828 = vpop.f32.mrf.mxu0
    %v10829 = vadd.f32 %v10668, %v10828
    %v10830 = vpop.f32.mrf.mxu0
    %v10831 = vadd.f32 %v10670, %v10830
    %v10832 = vpop.f32.mrf.mxu0
    %v10833 = vadd.f32 %v10672, %v10832
    %10834 = vmatprep.mubr.bf16.mxu0 %v4782
    %10835 = vmatmul.mubr.bf16.gmra.mxu0 %v4781
    %v10836 = vpop.f32.mrf.mxu0
    %v10837 = vadd.f32 %v10676, %v10836
    %v10838 = vpop.f32.mrf.mxu0
    %v10839 = vadd.f32 %v10678, %v10838
    %v10840 = vpop.f32.mrf.mxu0
    %v10841 = vadd.f32 %v10680, %v10840
    %v10842 = vpop.f32.mrf.mxu0
    %v10843 = vadd.f32 %v10682, %v10842
    %10844 = vmatprep.mubr.bf16.mxu0 %v4800
    %10845 = vmatmul.mubr.bf16.gmra.mxu0 %v4799
    %v10846 = vpop.f32.mrf.mxu0
    %v10847 = vadd.f32 %v10686, %v10846
    %v10848 = vpop.f32.mrf.mxu0
    %v10849 = vadd.f32 %v10688, %v10848
    %v10850 = vpop.f32.mrf.mxu0
    %v10851 = vadd.f32 %v10690, %v10850
    %v10852 = vpop.f32.mrf.mxu0
    %v10853 = vadd.f32 %v10692, %v10852
    %10854 = vmatprep.mubr.bf16.mxu0 %v4818
    %10855 = vmatmul.mubr.bf16.gmra.mxu0 %v4817
    %v10856 = vpop.f32.mrf.mxu0
    %v10857 = vadd.f32 %v10696, %v10856
    %v10858 = vpop.f32.mrf.mxu0
    %v10859 = vadd.f32 %v10698, %v10858
    %v10860 = vpop.f32.mrf.mxu0
    %v10861 = vadd.f32 %v10700, %v10860
    %v10862 = vpop.f32.mrf.mxu0
    %v10863 = vadd.f32 %v10702, %v10862
    %10864 = vmatprep.mubr.bf16.mxu0 %v4836
    %10865 = vmatmul.mubr.bf16.gmra.mxu0 %v4835
    %v10866 = vpop.f32.mrf.mxu0
    %v10867 = vadd.f32 %v10706, %v10866
    %v10868 = vpop.f32.mrf.mxu0
    %v10869 = vadd.f32 %v10708, %v10868
    %v10870 = vpop.f32.mrf.mxu0
    %v10871 = vadd.f32 %v10710, %v10870
    %v10872 = vpop.f32.mrf.mxu0
    %v10873 = vadd.f32 %v10712, %v10872
    %10874 = vmatprep.mubr.bf16.mxu0 %v4854
    %10875 = vmatmul.mubr.bf16.gmra.mxu0 %v4853
    %v10876 = vpop.f32.mrf.mxu0
    %v10877 = vadd.f32 %v10716, %v10876
    %v10878 = vpop.f32.mrf.mxu0
    %v10879 = vadd.f32 %v10718, %v10878
    %v10880 = vpop.f32.mrf.mxu0
    %v10881 = vadd.f32 %v10720, %v10880
    %v10882 = vpop.f32.mrf.mxu0
    %v10883 = vadd.f32 %v10722, %v10882
    %10884 = vmatprep.mubr.bf16.mxu0 %v4872
    %10885 = vmatmul.mubr.bf16.gmra.mxu0 %v4871
    %v10886 = vpop.f32.mrf.mxu0
    %v10887 = vadd.f32 %v10726, %v10886
    %v10888 = vpop.f32.mrf.mxu0
    %v10889 = vadd.f32 %v10728, %v10888
    %v10890 = vpop.f32.mrf.mxu0
    %v10891 = vadd.f32 %v10730, %v10890
    %v10892 = vpop.f32.mrf.mxu0
    %v10893 = vadd.f32 %v10732, %v10892
    %10894 = vmatprep.mubr.bf16.mxu0 %v4890
    %10895 = vmatmul.mubr.bf16.gmra.mxu0 %v4889
    %v10896 = vpop.f32.mrf.mxu0
    %v10897 = vadd.f32 %v10736, %v10896
    %v10898 = vpop.f32.mrf.mxu0
    %v10899 = vadd.f32 %v10738, %v10898
    %v10900 = vpop.f32.mrf.mxu0
    %v10901 = vpop.f32.mrf.mxu0
    %10902 = vdwg.mxu0
    %10903 = vst [vmem:[#allocation4] sm:$0xff] %v9328
    %10904 = vst [vmem:[#allocation4 + $0x8] sm:$0xff] %v9330
    %10905 = vst [vmem:[#allocation4 + $0x10] sm:$0xff] %v10777
    %10906 = vst [vmem:[#allocation4 + $0x18] sm:$0xff] %v10779
    %10907 = vst [vmem:[#allocation4 + $0x20] sm:$0xff] %v9332
    %10908 = vst [vmem:[#allocation4 + $0x28] sm:$0xff] %v9334
    %10909 = vst [vmem:[#allocation4 + $0x30] sm:$0xff] %v10781
    %10910 = vst [vmem:[#allocation4 + $0x38] sm:$0xff] %v10783
    %10911 = vst [vmem:[#allocation4 + $0x40] sm:$0xff] %v9338
    %10912 = vst [vmem:[#allocation4 + $0x48] sm:$0xff] %v9340
    %10913 = vst [vmem:[#allocation4 + $0x50] sm:$0xff] %v10787
    %10914 = vst [vmem:[#allocation4 + $0x58] sm:$0xff] %v10789
    %10915 = vst [vmem:[#allocation4 + $0x60] sm:$0xff] %v9342
    %10916 = vst [vmem:[#allocation4 + $0x68] sm:$0xff] %v9344
    %10917 = vst [vmem:[#allocation4 + $0x70] sm:$0xff] %v10791
    %10918 = vst [vmem:[#allocation4 + $0x78] sm:$0xff] %v10793
    %10919 = vst [vmem:[#allocation4 + $0x80] sm:$0xff] %v9348
    %10920 = vst [vmem:[#allocation4 + $0x88] sm:$0xff] %v9350
    %10921 = vst [vmem:[#allocation4 + $0x90] sm:$0xff] %v10797
    %10922 = vst [vmem:[#allocation4 + $0x98] sm:$0xff] %v10799
    %10923 = vst [vmem:[#allocation4 + $0xa0] sm:$0xff] %v9352
    %10924 = vst [vmem:[#allocation4 + $0xa8] sm:$0xff] %v9354
    %10925 = vst [vmem:[#allocation4 + $0xb0] sm:$0xff] %v10801
    %10926 = vst [vmem:[#allocation4 + $0xb8] sm:$0xff] %v10803
    %10927 = vst [vmem:[#allocation4 + $0xc0] sm:$0xff] %v9358
    %10928 = vst [vmem:[#allocation4 + $0xc8] sm:$0xff] %v9360
    %10929 = vst [vmem:[#allocation4 + $0xd0] sm:$0xff] %v10807
    %10930 = vst [vmem:[#allocation4 + $0xd8] sm:$0xff] %v10809
    %10931 = vst [vmem:[#allocation4 + $0xe0] sm:$0xff] %v9362
    %10932 = vst [vmem:[#allocation4 + $0xe8] sm:$0xff] %v9364
    %10933 = vst [vmem:[#allocation4 + $0xf0] sm:$0xff] %v10811
    %10934 = vst [vmem:[#allocation4 + $0xf8] sm:$0xff] %v10813
    %10935 = vst [vmem:[#allocation4 + $0x100] sm:$0xff] %v9368
    %10936 = vst [vmem:[#allocation4 + $0x108] sm:$0xff] %v9370
    %10937 = vst [vmem:[#allocation4 + $0x110] sm:$0xff] %v10817
    %10938 = vst [vmem:[#allocation4 + $0x118] sm:$0xff] %v10819
    %10939 = vst [vmem:[#allocation4 + $0x120] sm:$0xff] %v9372
    %10940 = vst [vmem:[#allocation4 + $0x128] sm:$0xff] %v9374
    %10941 = vst [vmem:[#allocation4 + $0x130] sm:$0xff] %v10821
    %10942 = vst [vmem:[#allocation4 + $0x138] sm:$0xff] %v10823
    %10943 = vst [vmem:[#allocation4 + $0x140] sm:$0xff] %v9378
    %10944 = vst [vmem:[#allocation4 + $0x148] sm:$0xff] %v9380
    %10945 = vst [vmem:[#allocation4 + $0x150] sm:$0xff] %v10827
    %10946 = vst [vmem:[#allocation4 + $0x158] sm:$0xff] %v10829
    %10947 = vst [vmem:[#allocation4 + $0x160] sm:$0xff] %v9382
    %10948 = vst [vmem:[#allocation4 + $0x168] sm:$0xff] %v9384
    %10949 = vst [vmem:[#allocation4 + $0x170] sm:$0xff] %v10831
    %10950 = vst [vmem:[#allocation4 + $0x178] sm:$0xff] %v10833
    %10951 = vst [vmem:[#allocation4 + $0x180] sm:$0xff] %v9388
    %10952 = vst [vmem:[#allocation4 + $0x188] sm:$0xff] %v9390
    %10953 = vst [vmem:[#allocation4 + $0x190] sm:$0xff] %v10837
    %10954 = vst [vmem:[#allocation4 + $0x198] sm:$0xff] %v10839
    %10955 = vst [vmem:[#allocation4 + $0x1a0] sm:$0xff] %v9392
    %10956 = vst [vmem:[#allocation4 + $0x1a8] sm:$0xff] %v9394
    %10957 = vst [vmem:[#allocation4 + $0x1b0] sm:$0xff] %v10841
    %10958 = vst [vmem:[#allocation4 + $0x1b8] sm:$0xff] %v10843
    %10959 = vst [vmem:[#allocation4 + $0x1c0] sm:$0xff] %v9398
    %10960 = vst [vmem:[#allocation4 + $0x1c8] sm:$0xff] %v9400
    %10961 = vst [vmem:[#allocation4 + $0x1d0] sm:$0xff] %v10847
    %10962 = vst [vmem:[#allocation4 + $0x1d8] sm:$0xff] %v10849
    %10963 = vst [vmem:[#allocation4 + $0x1e0] sm:$0xff] %v9402
    %10964 = vst [vmem:[#allocation4 + $0x1e8] sm:$0xff] %v9404
    %10965 = vst [vmem:[#allocation4 + $0x1f0] sm:$0xff] %v10851
    %10966 = vst [vmem:[#allocation4 + $0x1f8] sm:$0xff] %v10853
    %10967 = vst [vmem:[#allocation4 + $0x200] sm:$0xff] %v9408
    %10968 = vst [vmem:[#allocation4 + $0x208] sm:$0xff] %v9410
    %10969 = vst [vmem:[#allocation4 + $0x210] sm:$0xff] %v10857
    %10970 = vst [vmem:[#allocation4 + $0x218] sm:$0xff] %v10859
    %10971 = vst [vmem:[#allocation4 + $0x220] sm:$0xff] %v9412
    %10972 = vst [vmem:[#allocation4 + $0x228] sm:$0xff] %v9414
    %10973 = vst [vmem:[#allocation4 + $0x230] sm:$0xff] %v10861
    %10974 = vst [vmem:[#allocation4 + $0x238] sm:$0xff] %v10863
    %10975 = vst [vmem:[#allocation4 + $0x240] sm:$0xff] %v9418
    %10976 = vst [vmem:[#allocation4 + $0x248] sm:$0xff] %v9420
    %10977 = vst [vmem:[#allocation4 + $0x250] sm:$0xff] %v10867
    %10978 = vst [vmem:[#allocation4 + $0x258] sm:$0xff] %v10869
    %10979 = vst [vmem:[#allocation4 + $0x260] sm:$0xff] %v9422
    %10980 = vst [vmem:[#allocation4 + $0x268] sm:$0xff] %v9424
    %10981 = vst [vmem:[#allocation4 + $0x270] sm:$0xff] %v10871
    %10982 = vst [vmem:[#allocation4 + $0x278] sm:$0xff] %v10873
    %10983 = vst [vmem:[#allocation4 + $0x280] sm:$0xff] %v9428
    %10984 = vst [vmem:[#allocation4 + $0x288] sm:$0xff] %v9430
    %10985 = vst [vmem:[#allocation4 + $0x290] sm:$0xff] %v10877
    %10986 = vst [vmem:[#allocation4 + $0x298] sm:$0xff] %v10879
    %10987 = vst [vmem:[#allocation4 + $0x2a0] sm:$0xff] %v9432
    %10988 = vst [vmem:[#allocation4 + $0x2a8] sm:$0xff] %v9434
    %10989 = vst [vmem:[#allocation4 + $0x2b0] sm:$0xff] %v10881
    %10990 = vst [vmem:[#allocation4 + $0x2b8] sm:$0xff] %v10883
    %10991 = vst [vmem:[#allocation4 + $0x2c0] sm:$0xff] %v9438
    %10992 = vst [vmem:[#allocation4 + $0x2c8] sm:$0xff] %v9440
    %10993 = vst [vmem:[#allocation4 + $0x2d0] sm:$0xff] %v10887
    %10994 = vst [vmem:[#allocation4 + $0x2d8] sm:$0xff] %v10889
    %10995 = vst [vmem:[#allocation4 + $0x2e0] sm:$0xff] %v9442
    %10996 = vst [vmem:[#allocation4 + $0x2e8] sm:$0xff] %v9444
    %10997 = vst [vmem:[#allocation4 + $0x2f0] sm:$0xff] %v10891
    %10998 = vst [vmem:[#allocation4 + $0x2f8] sm:$0xff] %v10893
    %10999 = vst [vmem:[#allocation4 + $0x300] sm:$0xff] %v9448
    %11000 = vst [vmem:[#allocation4 + $0x308] sm:$0xff] %v9450
    %11001 = vst [vmem:[#allocation4 + $0x310] sm:$0xff] %v10897
    %11002 = vst [vmem:[#allocation4 + $0x318] sm:$0xff] %v10899
    %v11003 = vld [vmem:[#allocation4] sm:$0xff]
    %v11004 = vld [vmem:[#allocation4 + $0x8] sm:$0xff]
    %v11005 = vld [vmem:[#allocation4 + $0x10] sm:$0xff]
    %v11006 = vld [vmem:[#allocation4 + $0x18] sm:$0xff]
    %v11007 = vld [vmem:[#allocation4 + $0x20] sm:$0xff]
    %v11008 = vld [vmem:[#allocation4 + $0x28] sm:$0xff]
    %v11009 = vld [vmem:[#allocation4 + $0x30] sm:$0xff]
    %v11010 = vld [vmem:[#allocation4 + $0x38] sm:$0xff]
    %v11011 = vld [vmem:[#allocation4 + $0x40] sm:$0xff]
    %v11012 = vld [vmem:[#allocation4 + $0x48] sm:$0xff]
    %v11013 = vld [vmem:[#allocation4 + $0x50] sm:$0xff]
    %v11014 = vld [vmem:[#allocation4 + $0x58] sm:$0xff]
    %v11015 = vld [vmem:[#allocation4 + $0x60] sm:$0xff]
    %v11016 = vld [vmem:[#allocation4 + $0x68] sm:$0xff]
    %v11017 = vld [vmem:[#allocation4 + $0x70] sm:$0xff]
    %v11018 = vld [vmem:[#allocation4 + $0x78] sm:$0xff]
    %v11019 = vld [vmem:[#allocation4 + $0x80] sm:$0xff]
    %v11020 = vld [vmem:[#allocation4 + $0x88] sm:$0xff]
    %v11021 = vld [vmem:[#allocation4 + $0x90] sm:$0xff]
    %v11022 = vld [vmem:[#allocation4 + $0x98] sm:$0xff]
    %v11023 = vld [vmem:[#allocation4 + $0xa0] sm:$0xff]
    %v11024 = vld [vmem:[#allocation4 + $0xa8] sm:$0xff]
    %v11025 = vld [vmem:[#allocation4 + $0xb0] sm:$0xff]
    %v11026 = vld [vmem:[#allocation4 + $0xb8] sm:$0xff]
    %v11027 = vld [vmem:[#allocation4 + $0xc0] sm:$0xff]
    %v11028 = vld [vmem:[#allocation4 + $0xc8] sm:$0xff]
    %v11029 = vld [vmem:[#allocation4 + $0xd0] sm:$0xff]
    %v11030 = vld [vmem:[#allocation4 + $0xd8] sm:$0xff]
    %v11031 = vld [vmem:[#allocation4 + $0xe0] sm:$0xff]
    %v11032 = vld [vmem:[#allocation4 + $0xe8] sm:$0xff]
    %v11033 = vld [vmem:[#allocation4 + $0xf0] sm:$0xff]
    %v11034 = vld [vmem:[#allocation4 + $0xf8] sm:$0xff]
    %v11035 = vld [vmem:[#allocation4 + $0x100] sm:$0xff]
    %v11036 = vld [vmem:[#allocation4 + $0x108] sm:$0xff]
    %v11037 = vld [vmem:[#allocation4 + $0x110] sm:$0xff]
    %v11038 = vld [vmem:[#allocation4 + $0x118] sm:$0xff]
    %v11039 = vld [vmem:[#allocation4 + $0x120] sm:$0xff]
    %v11040 = vld [vmem:[#allocation4 + $0x128] sm:$0xff]
    %v11041 = vld [vmem:[#allocation4 + $0x130] sm:$0xff]
    %v11042 = vld [vmem:[#allocation4 + $0x138] sm:$0xff]
    %v11043 = vld [vmem:[#allocation4 + $0x180] sm:$0xff]
    %v11044 = vld [vmem:[#allocation4 + $0x188] sm:$0xff]
    %v11045 = vld [vmem:[#allocation4 + $0x190] sm:$0xff]
    %v11046 = vld [vmem:[#allocation4 + $0x198] sm:$0xff]
    %v11047 = vld [vmem:[#allocation4 + $0x1a0] sm:$0xff]
    %v11048 = vld [vmem:[#allocation4 + $0x1a8] sm:$0xff]
    %v11049 = vld [vmem:[#allocation4 + $0x1b0] sm:$0xff]
    %v11050 = vld [vmem:[#allocation4 + $0x1b8] sm:$0xff]
    %v11051 = vld [vmem:[#allocation4 + $0x1c0] sm:$0xff]
    %v11052 = vld [vmem:[#allocation4 + $0x1c8] sm:$0xff]
    %v11053 = vld [vmem:[#allocation4 + $0x1d0] sm:$0xff]
    %v11054 = vld [vmem:[#allocation4 + $0x1d8] sm:$0xff]
    %v11055 = vld [vmem:[#allocation4 + $0x1e0] sm:$0xff]
    %v11056 = vld [vmem:[#allocation4 + $0x1e8] sm:$0xff]
    %v11057 = vld [vmem:[#allocation4 + $0x1f0] sm:$0xff]
    %v11058 = vld [vmem:[#allocation4 + $0x1f8] sm:$0xff]
    %v11059 = vld [vmem:[#allocation4 + $0x200] sm:$0xff]
    %v11060 = vld [vmem:[#allocation4 + $0x208] sm:$0xff]
    %v11061 = vld [vmem:[#allocation4 + $0x210] sm:$0xff]
    %v11062 = vld [vmem:[#allocation4 + $0x218] sm:$0xff]
    %v11063 = vld [vmem:[#allocation4 + $0x220] sm:$0xff]
    %v11064 = vld [vmem:[#allocation4 + $0x228] sm:$0xff]
    %v11065 = vld [vmem:[#allocation4 + $0x230] sm:$0xff]
    %v11066 = vld [vmem:[#allocation4 + $0x238] sm:$0xff]
    %v11067 = vld [vmem:[#allocation4 + $0x240] sm:$0xff]
    %v11068 = vld [vmem:[#allocation4 + $0x248] sm:$0xff]
    %v11069 = vld [vmem:[#allocation4 + $0x250] sm:$0xff]
    %v11070 = vld [vmem:[#allocation4 + $0x258] sm:$0xff]
    %v11071 = vld [vmem:[#allocation4 + $0x260] sm:$0xff]
    %v11072 = vld [vmem:[#allocation4 + $0x268] sm:$0xff]
    %v11073 = vld [vmem:[#allocation4 + $0x270] sm:$0xff]
    %v11074 = vld [vmem:[#allocation4 + $0x278] sm:$0xff]
    %v11075 = vld [vmem:[#allocation4 + $0x280] sm:$0xff]
    %v11076 = vld [vmem:[#allocation4 + $0x288] sm:$0xff]
    %v11077 = vld [vmem:[#allocation4 + $0x290] sm:$0xff]
    %v11078 = vld [vmem:[#allocation4 + $0x298] sm:$0xff]
    %v11079 = vld [vmem:[#allocation4 + $0x2a0] sm:$0xff]
    %v11080 = vld [vmem:[#allocation4 + $0x2a8] sm:$0xff]
    %v11081 = vld [vmem:[#allocation4 + $0x2b0] sm:$0xff]
    %v11082 = vld [vmem:[#allocation4 + $0x2b8] sm:$0xff]
    %v11083 = vld [vmem:[#allocation4 + $0x2c0] sm:$0xff]
    %v11084 = vld [vmem:[#allocation4 + $0x2c8] sm:$0xff]
    %v11085 = vld [vmem:[#allocation4 + $0x2d0] sm:$0xff]
    %v11086 = vld [vmem:[#allocation4 + $0x2d8] sm:$0xff]
    %v11087 = vld [vmem:[#allocation13] sm:$0xf]
    %v11089 = vlaneseq
    %v11090 = vshrl.u32 %v11089, 7
    %v11091 = vsub.s32 0, %v11090
    %v11092 = vrot.slane %v11087, %v11091
    %v11093 = vlaneseq
    %v11094 = vshrl.u32 %v11093, 7
    %v11095 = vsub.s32 1, %v11094
    %v11096 = vrot.slane %v11087, %v11095
    %v11097 = vlaneseq
    %v11098 = vshrl.u32 %v11097, 7
    %v11099 = vsub.s32 2, %v11098
    %v11100 = vrot.slane %v11087, %v11099
    %v11101 = vlaneseq
    %v11102 = vshrl.u32 %v11101, 7
    %v11103 = vsub.s32 3, %v11102
    %v11104 = vrot.slane %v11087, %v11103
    %v11109 = vadd.f32 %v11003, %v11092
    %v11110 = vadd.f32 %v11004, %v11096
    %v11111 = vadd.f32 %v11005, %v11100
    %v11112 = vadd.f32 %v11006, %v11104
    %v11113 = vadd.f32 %v11007, %v11092
    %v11114 = vadd.f32 %v11008, %v11096
    %v11115 = vadd.f32 %v11009, %v11100
    %v11116 = vadd.f32 %v11010, %v11104
    %v11117 = vadd.f32 %v11011, %v11092
    %v11118 = vadd.f32 %v11012, %v11096
    %v11119 = vadd.f32 %v11013, %v11100
    %v11120 = vadd.f32 %v11014, %v11104
    %v11121 = vadd.f32 %v11015, %v11092
    %v11122 = vadd.f32 %v11016, %v11096
    %v11123 = vadd.f32 %v11017, %v11100
    %v11124 = vadd.f32 %v11018, %v11104
    %v11125 = vadd.f32 %v11019, %v11092
    %v11126 = vadd.f32 %v11020, %v11096
    %v11127 = vadd.f32 %v11021, %v11100
    %v11128 = vadd.f32 %v11022, %v11104
    %v11129 = vadd.f32 %v11023, %v11092
    %v11130 = vadd.f32 %v11024, %v11096
    %v11131 = vadd.f32 %v11025, %v11100
    %v11132 = vadd.f32 %v11026, %v11104
    %v11133 = vadd.f32 %v11027, %v11092
    %v11134 = vadd.f32 %v11028, %v11096
    %v11135 = vadd.f32 %v11029, %v11100
    %v11136 = vadd.f32 %v11030, %v11104
    %v11137 = vadd.f32 %v11031, %v11092
    %v11138 = vadd.f32 %v11032, %v11096
    %v11139 = vadd.f32 %v11033, %v11100
    %v11140 = vadd.f32 %v11034, %v11104
    %v11141 = vadd.f32 %v11035, %v11092
    %v11142 = vadd.f32 %v11036, %v11096
    %v11143 = vadd.f32 %v11037, %v11100
    %v11144 = vadd.f32 %v11038, %v11104
    %v11145 = vadd.f32 %v11039, %v11092
    %v11146 = vadd.f32 %v11040, %v11096
    %v11147 = vadd.f32 %v11041, %v11100
    %v11148 = vadd.f32 %v11042, %v11104
    %v11149 = vadd.f32 %v11043, %v11092
    %v11150 = vadd.f32 %v11044, %v11096
    %v11151 = vadd.f32 %v11045, %v11100
    %v11152 = vadd.f32 %v11046, %v11104
    %v11153 = vadd.f32 %v11047, %v11092
    %v11154 = vadd.f32 %v11048, %v11096
    %v11155 = vadd.f32 %v11049, %v11100
    %v11156 = vadd.f32 %v11050, %v11104
    %v11157 = vadd.f32 %v11051, %v11092
    %v11158 = vadd.f32 %v11052, %v11096
    %v11159 = vadd.f32 %v11053, %v11100
    %v11160 = vadd.f32 %v11054, %v11104
    %v11161 = vadd.f32 %v11055, %v11092
    %v11162 = vadd.f32 %v11056, %v11096
    %v11163 = vadd.f32 %v11057, %v11100
    %v11164 = vadd.f32 %v11058, %v11104
    %v11165 = vadd.f32 %v11059, %v11092
    %v11166 = vadd.f32 %v11060, %v11096
    %v11167 = vadd.f32 %v11061, %v11100
    %v11168 = vadd.f32 %v11062, %v11104
    %v11169 = vadd.f32 %v11063, %v11092
    %v11170 = vadd.f32 %v11064, %v11096
    %v11171 = vadd.f32 %v11065, %v11100
    %v11172 = vadd.f32 %v11066, %v11104
    %v11173 = vadd.f32 %v11067, %v11092
    %v11174 = vadd.f32 %v11068, %v11096
    %v11175 = vadd.f32 %v11069, %v11100
    %v11176 = vadd.f32 %v11070, %v11104
    %v11177 = vadd.f32 %v11071, %v11092
    %v11178 = vadd.f32 %v11072, %v11096
    %v11179 = vadd.f32 %v11073, %v11100
    %v11180 = vadd.f32 %v11074, %v11104
    %v11181 = vadd.f32 %v11075, %v11092
    %v11182 = vadd.f32 %v11076, %v11096
    %v11183 = vadd.f32 %v11077, %v11100
    %v11184 = vadd.f32 %v11078, %v11104
    %v11185 = vadd.f32 %v11079, %v11092
    %v11186 = vadd.f32 %v11080, %v11096
    %v11187 = vadd.f32 %v11081, %v11100
    %v11188 = vadd.f32 %v11082, %v11104
    %v11189 = vadd.f32 %v11083, %v11092
    %v11190 = vadd.f32 %v11084, %v11096
    %v11191 = vadd.f32 %v11085, %v11100
    %v11192 = vadd.f32 %v11086, %v11104
    %v11193 = vmax.f32 %v11109, 0.0
    %v11194 = vmax.f32 %v11110, 0.0
    %v11195 = vmax.f32 %v11111, 0.0
    %v11196 = vmax.f32 %v11112, 0.0
    %v11197 = vmax.f32 %v11113, 0.0
    %v11198 = vmax.f32 %v11114, 0.0
    %v11199 = vmax.f32 %v11115, 0.0
    %v11200 = vmax.f32 %v11116, 0.0
    %v11201 = vmax.f32 %v11117, 0.0
    %v11202 = vmax.f32 %v11118, 0.0
    %v11203 = vmax.f32 %v11119, 0.0
    %v11204 = vmax.f32 %v11120, 0.0
    %v11205 = vmax.f32 %v11121, 0.0
    %v11206 = vmax.f32 %v11122, 0.0
    %v11207 = vmax.f32 %v11123, 0.0
    %v11208 = vmax.f32 %v11124, 0.0
    %v11209 = vmax.f32 %v11125, 0.0
    %v11210 = vmax.f32 %v11126, 0.0
    %v11211 = vmax.f32 %v11127, 0.0
    %v11212 = vmax.f32 %v11128, 0.0
    %v11213 = vmax.f32 %v11129, 0.0
    %v11214 = vmax.f32 %v11130, 0.0
    %v11215 = vmax.f32 %v11131, 0.0
    %v11216 = vmax.f32 %v11132, 0.0
    %v11217 = vmax.f32 %v11133, 0.0
    %v11218 = vmax.f32 %v11134, 0.0
    %v11219 = vmax.f32 %v11135, 0.0
    %v11220 = vmax.f32 %v11136, 0.0
    %v11221 = vmax.f32 %v11137, 0.0
    %v11222 = vmax.f32 %v11138, 0.0
    %v11223 = vmax.f32 %v11139, 0.0
    %v11224 = vmax.f32 %v11140, 0.0
    %v11225 = vmax.f32 %v11141, 0.0
    %v11226 = vmax.f32 %v11142, 0.0
    %v11227 = vmax.f32 %v11143, 0.0
    %v11228 = vmax.f32 %v11144, 0.0
    %v11229 = vmax.f32 %v11145, 0.0
    %v11230 = vmax.f32 %v11146, 0.0
    %v11231 = vmax.f32 %v11147, 0.0
    %v11232 = vmax.f32 %v11148, 0.0
    %v11233 = vmax.f32 %v11149, 0.0
    %v11234 = vmax.f32 %v11150, 0.0
    %v11235 = vmax.f32 %v11151, 0.0
    %v11236 = vmax.f32 %v11152, 0.0
    %v11237 = vmax.f32 %v11153, 0.0
    %v11238 = vmax.f32 %v11154, 0.0
    %v11239 = vmax.f32 %v11155, 0.0
    %v11240 = vmax.f32 %v11156, 0.0
    %v11241 = vmax.f32 %v11157, 0.0
    %v11242 = vmax.f32 %v11158, 0.0
    %v11243 = vmax.f32 %v11159, 0.0
    %v11244 = vmax.f32 %v11160, 0.0
    %v11245 = vmax.f32 %v11161, 0.0
    %v11246 = vmax.f32 %v11162, 0.0
    %v11247 = vmax.f32 %v11163, 0.0
    %v11248 = vmax.f32 %v11164, 0.0
    %v11249 = vmax.f32 %v11165, 0.0
    %v11250 = vmax.f32 %v11166, 0.0
    %v11251 = vmax.f32 %v11167, 0.0
    %v11252 = vmax.f32 %v11168, 0.0
    %v11253 = vmax.f32 %v11169, 0.0
    %v11254 = vmax.f32 %v11170, 0.0
    %v11255 = vmax.f32 %v11171, 0.0
    %v11256 = vmax.f32 %v11172, 0.0
    %v11257 = vmax.f32 %v11173, 0.0
    %v11258 = vmax.f32 %v11174, 0.0
    %v11259 = vmax.f32 %v11175, 0.0
    %v11260 = vmax.f32 %v11176, 0.0
    %v11261 = vmax.f32 %v11177, 0.0
    %v11262 = vmax.f32 %v11178, 0.0
    %v11263 = vmax.f32 %v11179, 0.0
    %v11264 = vmax.f32 %v11180, 0.0
    %v11265 = vmax.f32 %v11181, 0.0
    %v11266 = vmax.f32 %v11182, 0.0
    %v11267 = vmax.f32 %v11183, 0.0
    %v11268 = vmax.f32 %v11184, 0.0
    %v11269 = vmax.f32 %v11185, 0.0
    %v11270 = vmax.f32 %v11186, 0.0
    %v11271 = vmax.f32 %v11187, 0.0
    %v11272 = vmax.f32 %v11188, 0.0
    %v11273 = vmax.f32 %v11189, 0.0
    %v11274 = vmax.f32 %v11190, 0.0
    %v11275 = vmax.f32 %v11191, 0.0
    %v11276 = vmax.f32 %v11192, 0.0
    %v11277 = vadd.f32 %v11193, %v11194
    %v11278 = vadd.f32 %v11277, %v11195
    %v11279 = vadd.f32 %v11278, %v11196
    %11280 = vadd.xlane.f32.xlu0 %v11279
    %v11281 = vpop.xlane.xlu0 %11280
    %v11282 = vadd.f32 %v11197, %v11198
    %v11283 = vadd.f32 %v11282, %v11199
    %v11284 = vadd.f32 %v11283, %v11200
    %11285 = vadd.xlane.f32.xlu0 %v11284
    %v11286 = vpop.xlane.xlu0 %11285
    %v11287 = vadd.f32 %v11201, %v11202
    %v11288 = vadd.f32 %v11287, %v11203
    %v11289 = vadd.f32 %v11288, %v11204
    %11290 = vadd.xlane.f32.xlu0 %v11289
    %v11291 = vpop.xlane.xlu0 %11290
    %v11292 = vadd.f32 %v11205, %v11206
    %v11293 = vadd.f32 %v11292, %v11207
    %v11294 = vadd.f32 %v11293, %v11208
    %11295 = vadd.xlane.f32.xlu0 %v11294
    %v11296 = vpop.xlane.xlu0 %11295
    %v11297 = vadd.f32 %v11209, %v11210
    %v11298 = vadd.f32 %v11297, %v11211
    %v11299 = vadd.f32 %v11298, %v11212
    %11300 = vadd.xlane.f32.xlu0 %v11299
    %v11301 = vpop.xlane.xlu0 %11300
    %v11302 = vadd.f32 %v11213, %v11214
    %v11303 = vadd.f32 %v11302, %v11215
    %v11304 = vadd.f32 %v11303, %v11216
    %11305 = vadd.xlane.f32.xlu0 %v11304
    %v11306 = vpop.xlane.xlu0 %11305
    %v11307 = vadd.f32 %v11217, %v11218
    %v11308 = vadd.f32 %v11307, %v11219
    %v11309 = vadd.f32 %v11308, %v11220
    %11310 = vadd.xlane.f32.xlu0 %v11309
    %v11311 = vpop.xlane.xlu0 %11310
    %v11312 = vadd.f32 %v11221, %v11222
    %v11313 = vadd.f32 %v11312, %v11223
    %v11314 = vadd.f32 %v11313, %v11224
    %11315 = vadd.xlane.f32.xlu0 %v11314
    %v11316 = vpop.xlane.xlu0 %11315
    %v11317 = vadd.f32 %v11225, %v11226
    %v11318 = vadd.f32 %v11317, %v11227
    %v11319 = vadd.f32 %v11318, %v11228
    %11320 = vadd.xlane.f32.xlu0 %v11319
    %v11321 = vpop.xlane.xlu0 %11320
    %v11322 = vadd.f32 %v11229, %v11230
    %v11323 = vadd.f32 %v11322, %v11231
    %v11324 = vadd.f32 %v11323, %v11232
    %11325 = vadd.xlane.f32.xlu0 %v11324
    %v11326 = vpop.xlane.xlu0 %11325
    %v11327 = vadd.f32 %v11233, %v11234
    %v11328 = vadd.f32 %v11327, %v11235
    %v11329 = vadd.f32 %v11328, %v11236
    %11330 = vadd.xlane.f32.xlu0 %v11329
    %v11331 = vpop.xlane.xlu0 %11330
    %v11332 = vadd.f32 %v11237, %v11238
    %v11333 = vadd.f32 %v11332, %v11239
    %v11334 = vadd.f32 %v11333, %v11240
    %11335 = vadd.xlane.f32.xlu0 %v11334
    %v11336 = vpop.xlane.xlu0 %11335
    %v11337 = vadd.f32 %v11241, %v11242
    %v11338 = vadd.f32 %v11337, %v11243
    %v11339 = vadd.f32 %v11338, %v11244
    %11340 = vadd.xlane.f32.xlu0 %v11339
    %v11341 = vpop.xlane.xlu0 %11340
    %v11342 = vadd.f32 %v11245, %v11246
    %v11343 = vadd.f32 %v11342, %v11247
    %v11344 = vadd.f32 %v11343, %v11248
    %11345 = vadd.xlane.f32.xlu0 %v11344
    %v11346 = vpop.xlane.xlu0 %11345
    %v11347 = vadd.f32 %v11249, %v11250
    %v11348 = vadd.f32 %v11347, %v11251
    %v11349 = vadd.f32 %v11348, %v11252
    %11350 = vadd.xlane.f32.xlu0 %v11349
    %v11351 = vpop.xlane.xlu0 %11350
    %v11352 = vadd.f32 %v11253, %v11254
    %v11353 = vadd.f32 %v11352, %v11255
    %v11354 = vadd.f32 %v11353, %v11256
    %11355 = vadd.xlane.f32.xlu0 %v11354
    %v11356 = vpop.xlane.xlu0 %11355
    %v11357 = vadd.f32 %v11257, %v11258
    %v11358 = vadd.f32 %v11357, %v11259
    %v11359 = vadd.f32 %v11358, %v11260
    %11360 = vadd.xlane.f32.xlu0 %v11359
    %v11361 = vpop.xlane.xlu0 %11360
    %v11362 = vadd.f32 %v11261, %v11262
    %v11363 = vadd.f32 %v11362, %v11263
    %v11364 = vadd.f32 %v11363, %v11264
    %11365 = vadd.xlane.f32.xlu0 %v11364
    %v11366 = vpop.xlane.xlu0 %11365
    %v11367 = vadd.f32 %v11265, %v11266
    %v11368 = vadd.f32 %v11367, %v11267
    %v11369 = vadd.f32 %v11368, %v11268
    %11370 = vadd.xlane.f32.xlu0 %v11369
    %v11371 = vpop.xlane.xlu0 %11370
    %v11372 = vadd.f32 %v11269, %v11270
    %v11373 = vadd.f32 %v11372, %v11271
    %v11374 = vadd.f32 %v11373, %v11272
    %11375 = vadd.xlane.f32.xlu0 %v11374
    %v11376 = vpop.xlane.xlu0 %11375
    %v11377 = vadd.f32 %v11273, %v11274
    %v11378 = vadd.f32 %v11377, %v11275
    %v11379 = vadd.f32 %v11378, %v11276
    %11380 = vadd.xlane.f32.xlu0 %v11379
    %v11381 = vpop.xlane.xlu0 %11380
    %v11382 = vld [vmem:[#allocation5] sm:$0xff]
    %v11383 = vld [vmem:[#allocation5 + $0x8] sm:$0xff]
    %v11384 = vld [vmem:[#allocation5 + $0x10] sm:$0xff]
    %v11385 = vld [vmem:[#allocation5 + $0x18] sm:$0xff]
    %v11386 = vmul.f32 %v11382, %v11281
    %v11387 = vmul.f32 %v11383, %v11281
    %v11388 = vmul.f32 %v11384, %v11281
    %v11389 = vmul.f32 %v11385, %v11281
    %11390 = vst [vmem:[#allocation14] sm:$0xff] %v11386
    %11391 = vst [vmem:[#allocation14 + $0x8] sm:$0xff] %v11387
    %11392 = vst [vmem:[#allocation14 + $0x10] sm:$0xff] %v11388
    %11393 = vst [vmem:[#allocation14 + $0x18] sm:$0xff] %v11389
    %s11394 = scalar_lea.vmem [#allocation5], 32
    %v11395 = vld [vmem:[%s11394] sm:$0xff]
    %v11396 = vld [vmem:[%s11394 + $0x8] sm:$0xff]
    %v11397 = vld [vmem:[%s11394 + $0x10] sm:$0xff]
    %v11398 = vld [vmem:[%s11394 + $0x18] sm:$0xff]
    %vm11401 = vcmask 1045504
    %v11402 = vrot.slane %v11286, 2
    %v11403 = vrot.slane %v11291, 2
    %v11404 = vsel %vm11401, %v11402, %v11403
    %v11406 = vmul.f32 %v11395, %v11404
    %v11407 = vmul.f32 %v11396, %v11404
    %v11408 = vmul.f32 %v11397, %v11404
    %v11409 = vmul.f32 %v11398, %v11404
    %s11410 = scalar_lea.vmem [#allocation14], 32
    %11411 = vst [vmem:[%s11410] sm:$0xff] %v11406
    %11412 = vst [vmem:[%s11410 + $0x8] sm:$0xff] %v11407
    %11413 = vst [vmem:[%s11410 + $0x10] sm:$0xff] %v11408
    %11414 = vst [vmem:[%s11410 + $0x18] sm:$0xff] %v11409
    %s11415 = scalar_lea.vmem [#allocation5], 64
    %v11416 = vld [vmem:[%s11415] sm:$0xff]
    %v11417 = vld [vmem:[%s11415 + $0x8] sm:$0xff]
    %v11418 = vld [vmem:[%s11415 + $0x10] sm:$0xff]
    %v11419 = vld [vmem:[%s11415 + $0x18] sm:$0xff]
    %vm11421 = vcmask 1043456
    %v11422 = vrot.slane %v11291, 4
    %v11423 = vrot.slane %v11296, 4
    %v11424 = vsel %vm11421, %v11422, %v11423
    %v11426 = vmul.f32 %v11416, %v11424
    %v11427 = vmul.f32 %v11417, %v11424
    %v11428 = vmul.f32 %v11418, %v11424
    %v11429 = vmul.f32 %v11419, %v11424
    %s11430 = scalar_lea.vmem [#allocation14], 64
    %11431 = vst [vmem:[%s11430] sm:$0xff] %v11426
    %11432 = vst [vmem:[%s11430 + $0x8] sm:$0xff] %v11427
    %11433 = vst [vmem:[%s11430 + $0x10] sm:$0xff] %v11428
    %11434 = vst [vmem:[%s11430 + $0x18] sm:$0xff] %v11429
    %s11435 = scalar_lea.vmem [#allocation5], 96
    %v11436 = vld [vmem:[%s11435] sm:$0xff]
    %v11437 = vld [vmem:[%s11435 + $0x8] sm:$0xff]
    %v11438 = vld [vmem:[%s11435 + $0x10] sm:$0xff]
    %v11439 = vld [vmem:[%s11435 + $0x18] sm:$0xff]
    %vm11441 = vcmask 1041408
    %v11442 = vrot.slane %v11296, 6
    %v11443 = vrot.slane %v11301, 6
    %v11444 = vsel %vm11441, %v11442, %v11443
    %v11446 = vmul.f32 %v11436, %v11444
    %v11447 = vmul.f32 %v11437, %v11444
    %v11448 = vmul.f32 %v11438, %v11444
    %v11449 = vmul.f32 %v11439, %v11444
    %s11450 = scalar_lea.vmem [#allocation14], 96
    %11451 = vst [vmem:[%s11450] sm:$0xff] %v11446
    %11452 = vst [vmem:[%s11450 + $0x8] sm:$0xff] %v11447
    %11453 = vst [vmem:[%s11450 + $0x10] sm:$0xff] %v11448
    %11454 = vst [vmem:[%s11450 + $0x18] sm:$0xff] %v11449
    %s11455 = scalar_lea.vmem [#allocation5], 128
    %v11456 = vld [vmem:[%s11455] sm:$0xff]
    %v11457 = vld [vmem:[%s11455 + $0x8] sm:$0xff]
    %v11458 = vld [vmem:[%s11455 + $0x10] sm:$0xff]
    %v11459 = vld [vmem:[%s11455 + $0x18] sm:$0xff]
    %v11460 = vmul.f32 %v11456, %v11306
    %v11461 = vmul.f32 %v11457, %v11306
    %v11462 = vmul.f32 %v11458, %v11306
    %v11463 = vmul.f32 %v11459, %v11306
    %s11464 = scalar_lea.vmem [#allocation14], 128
    %11465 = vst [vmem:[%s11464] sm:$0xff] %v11460
    %11466 = vst [vmem:[%s11464 + $0x8] sm:$0xff] %v11461
    %11467 = vst [vmem:[%s11464 + $0x10] sm:$0xff] %v11462
    %11468 = vst [vmem:[%s11464 + $0x18] sm:$0xff] %v11463
    %s11469 = scalar_lea.vmem [#allocation5], 160
    %v11470 = vld [vmem:[%s11469] sm:$0xff]
    %v11471 = vld [vmem:[%s11469 + $0x8] sm:$0xff]
    %v11472 = vld [vmem:[%s11469 + $0x10] sm:$0xff]
    %v11473 = vld [vmem:[%s11469 + $0x18] sm:$0xff]
    %v11476 = vrot.slane %v11311, 2
    %v11477 = vrot.slane %v11316, 2
    %v11478 = vsel %vm11401, %v11476, %v11477
    %v11480 = vmul.f32 %v11470, %v11478
    %v11481 = vmul.f32 %v11471, %v11478
    %v11482 = vmul.f32 %v11472, %v11478
    %v11483 = vmul.f32 %v11473, %v11478
    %s11484 = scalar_lea.vmem [#allocation14], 160
    %11485 = vst [vmem:[%s11484] sm:$0xff] %v11480
    %11486 = vst [vmem:[%s11484 + $0x8] sm:$0xff] %v11481
    %11487 = vst [vmem:[%s11484 + $0x10] sm:$0xff] %v11482
    %11488 = vst [vmem:[%s11484 + $0x18] sm:$0xff] %v11483
    %s11489 = scalar_lea.vmem [#allocation5], 192
    %v11490 = vld [vmem:[%s11489] sm:$0xff]
    %v11491 = vld [vmem:[%s11489 + $0x8] sm:$0xff]
    %v11492 = vld [vmem:[%s11489 + $0x10] sm:$0xff]
    %v11493 = vld [vmem:[%s11489 + $0x18] sm:$0xff]
    %v11495 = vrot.slane %v11316, 4
    %v11496 = vrot.slane %v11321, 4
    %v11497 = vsel %vm11421, %v11495, %v11496
    %v11499 = vmul.f32 %v11490, %v11497
    %v11500 = vmul.f32 %v11491, %v11497
    %v11501 = vmul.f32 %v11492, %v11497
    %v11502 = vmul.f32 %v11493, %v11497
    %s11503 = scalar_lea.vmem [#allocation14], 192
    %11504 = vst [vmem:[%s11503] sm:$0xff] %v11499
    %11505 = vst [vmem:[%s11503 + $0x8] sm:$0xff] %v11500
    %11506 = vst [vmem:[%s11503 + $0x10] sm:$0xff] %v11501
    %11507 = vst [vmem:[%s11503 + $0x18] sm:$0xff] %v11502
    %s11508 = scalar_lea.vmem [#allocation5], 224
    %v11509 = vld [vmem:[%s11508] sm:$0xff]
    %v11510 = vld [vmem:[%s11508 + $0x8] sm:$0xff]
    %v11511 = vld [vmem:[%s11508 + $0x10] sm:$0xff]
    %v11512 = vld [vmem:[%s11508 + $0x18] sm:$0xff]
    %v11514 = vrot.slane %v11321, 6
    %v11515 = vrot.slane %v11326, 6
    %v11516 = vsel %vm11441, %v11514, %v11515
    %v11518 = vmul.f32 %v11509, %v11516
    %v11519 = vmul.f32 %v11510, %v11516
    %v11520 = vmul.f32 %v11511, %v11516
    %v11521 = vmul.f32 %v11512, %v11516
    %s11522 = scalar_lea.vmem [#allocation14], 224
    %11523 = vst [vmem:[%s11522] sm:$0xff] %v11518
    %11524 = vst [vmem:[%s11522 + $0x8] sm:$0xff] %v11519
    %11525 = vst [vmem:[%s11522 + $0x10] sm:$0xff] %v11520
    %11526 = vst [vmem:[%s11522 + $0x18] sm:$0xff] %v11521
    %s11527 = scalar_lea.vmem [#allocation5], 256
    %v11528 = vld [vmem:[%s11527] sm:$0xff]
    %v11529 = vld [vmem:[%s11527 + $0x8] sm:$0xff]
    %v11530 = vld [vmem:[%s11527 + $0x10] sm:$0xff]
    %v11531 = vld [vmem:[%s11527 + $0x18] sm:$0xff]
    %v11534 = vrot.slane %v11331, 4
    %v11535 = vrot.slane %v11336, 4
    %v11536 = vsel %vm11421, %v11534, %v11535
    %v11538 = vmul.f32 %v11528, %v11536
    %v11539 = vmul.f32 %v11529, %v11536
    %v11540 = vmul.f32 %v11530, %v11536
    %v11541 = vmul.f32 %v11531, %v11536
    %s11542 = scalar_lea.vmem [#allocation14], 256
    %11543 = vst [vmem:[%s11542] sm:$0xff] %v11538
    %11544 = vst [vmem:[%s11542 + $0x8] sm:$0xff] %v11539
    %11545 = vst [vmem:[%s11542 + $0x10] sm:$0xff] %v11540
    %11546 = vst [vmem:[%s11542 + $0x18] sm:$0xff] %v11541
    %s11547 = scalar_lea.vmem [#allocation5], 288
    %v11548 = vld [vmem:[%s11547] sm:$0xff]
    %v11549 = vld [vmem:[%s11547 + $0x8] sm:$0xff]
    %v11550 = vld [vmem:[%s11547 + $0x10] sm:$0xff]
    %v11551 = vld [vmem:[%s11547 + $0x18] sm:$0xff]
    %v11553 = vrot.slane %v11336, 6
    %v11554 = vrot.slane %v11341, 6
    %v11555 = vsel %vm11441, %v11553, %v11554
    %v11557 = vmul.f32 %v11548, %v11555
    %v11558 = vmul.f32 %v11549, %v11555
    %v11559 = vmul.f32 %v11550, %v11555
    %v11560 = vmul.f32 %v11551, %v11555
    %s11561 = scalar_lea.vmem [#allocation14], 288
    %11562 = vst [vmem:[%s11561] sm:$0xff] %v11557
    %11563 = vst [vmem:[%s11561 + $0x8] sm:$0xff] %v11558
    %11564 = vst [vmem:[%s11561 + $0x10] sm:$0xff] %v11559
    %11565 = vst [vmem:[%s11561 + $0x18] sm:$0xff] %v11560
    %s11566 = scalar_lea.vmem [#allocation5], 320
    %v11567 = vld [vmem:[%s11566] sm:$0xff]
    %v11568 = vld [vmem:[%s11566 + $0x8] sm:$0xff]
    %v11569 = vld [vmem:[%s11566 + $0x10] sm:$0xff]
    %v11570 = vld [vmem:[%s11566 + $0x18] sm:$0xff]
    %v11571 = vmul.f32 %v11567, %v11346
    %v11572 = vmul.f32 %v11568, %v11346
    %v11573 = vmul.f32 %v11569, %v11346
    %v11574 = vmul.f32 %v11570, %v11346
    %s11575 = scalar_lea.vmem [#allocation14], 320
    %11576 = vst [vmem:[%s11575] sm:$0xff] %v11571
    %11577 = vst [vmem:[%s11575 + $0x8] sm:$0xff] %v11572
    %11578 = vst [vmem:[%s11575 + $0x10] sm:$0xff] %v11573
    %11579 = vst [vmem:[%s11575 + $0x18] sm:$0xff] %v11574
    %s11580 = scalar_lea.vmem [#allocation5], 352
    %v11581 = vld [vmem:[%s11580] sm:$0xff]
    %v11582 = vld [vmem:[%s11580 + $0x8] sm:$0xff]
    %v11583 = vld [vmem:[%s11580 + $0x10] sm:$0xff]
    %v11584 = vld [vmem:[%s11580 + $0x18] sm:$0xff]
    %v11587 = vrot.slane %v11351, 2
    %v11588 = vrot.slane %v11356, 2
    %v11589 = vsel %vm11401, %v11587, %v11588
    %v11591 = vmul.f32 %v11581, %v11589
    %v11592 = vmul.f32 %v11582, %v11589
    %v11593 = vmul.f32 %v11583, %v11589
    %v11594 = vmul.f32 %v11584, %v11589
    %s11595 = scalar_lea.vmem [#allocation14], 352
    %11596 = vst [vmem:[%s11595] sm:$0xff] %v11591
    %11597 = vst [vmem:[%s11595 + $0x8] sm:$0xff] %v11592
    %11598 = vst [vmem:[%s11595 + $0x10] sm:$0xff] %v11593
    %11599 = vst [vmem:[%s11595 + $0x18] sm:$0xff] %v11594
    %s11600 = scalar_lea.vmem [#allocation5], 384
    %v11601 = vld [vmem:[%s11600] sm:$0xff]
    %v11602 = vld [vmem:[%s11600 + $0x8] sm:$0xff]
    %v11603 = vld [vmem:[%s11600 + $0x10] sm:$0xff]
    %v11604 = vld [vmem:[%s11600 + $0x18] sm:$0xff]
    %v11606 = vrot.slane %v11356, 4
    %v11607 = vrot.slane %v11361, 4
    %v11608 = vsel %vm11421, %v11606, %v11607
    %v11610 = vmul.f32 %v11601, %v11608
    %v11611 = vmul.f32 %v11602, %v11608
    %v11612 = vmul.f32 %v11603, %v11608
    %v11613 = vmul.f32 %v11604, %v11608
    %s11614 = scalar_lea.vmem [#allocation14], 384
    %11615 = vst [vmem:[%s11614] sm:$0xff] %v11610
    %11616 = vst [vmem:[%s11614 + $0x8] sm:$0xff] %v11611
    %11617 = vst [vmem:[%s11614 + $0x10] sm:$0xff] %v11612
    %11618 = vst [vmem:[%s11614 + $0x18] sm:$0xff] %v11613
    %s11619 = scalar_lea.vmem [#allocation5], 416
    %v11620 = vld [vmem:[%s11619] sm:$0xff]
    %v11621 = vld [vmem:[%s11619 + $0x8] sm:$0xff]
    %v11622 = vld [vmem:[%s11619 + $0x10] sm:$0xff]
    %v11623 = vld [vmem:[%s11619 + $0x18] sm:$0xff]
    %v11625 = vrot.slane %v11361, 6
    %v11626 = vrot.slane %v11366, 6
    %v11627 = vsel %vm11441, %v11625, %v11626
    %v11629 = vmul.f32 %v11620, %v11627
    %v11630 = vmul.f32 %v11621, %v11627
    %v11631 = vmul.f32 %v11622, %v11627
    %v11632 = vmul.f32 %v11623, %v11627
    %s11633 = scalar_lea.vmem [#allocation14], 416
    %11634 = vst [vmem:[%s11633] sm:$0xff] %v11629
    %11635 = vst [vmem:[%s11633 + $0x8] sm:$0xff] %v11630
    %11636 = vst [vmem:[%s11633 + $0x10] sm:$0xff] %v11631
    %11637 = vst [vmem:[%s11633 + $0x18] sm:$0xff] %v11632
    %s11638 = scalar_lea.vmem [#allocation5], 448
    %v11639 = vld [vmem:[%s11638] sm:$0xff]
    %v11640 = vld [vmem:[%s11638 + $0x8] sm:$0xff]
    %v11641 = vld [vmem:[%s11638 + $0x10] sm:$0xff]
    %v11642 = vld [vmem:[%s11638 + $0x18] sm:$0xff]
    %v11643 = vmul.f32 %v11639, %v11371
    %v11644 = vmul.f32 %v11640, %v11371
    %v11645 = vmul.f32 %v11641, %v11371
    %v11646 = vmul.f32 %v11642, %v11371
    %s11647 = scalar_lea.vmem [#allocation14], 448
    %11648 = vst [vmem:[%s11647] sm:$0xff] %v11643
    %11649 = vst [vmem:[%s11647 + $0x8] sm:$0xff] %v11644
    %11650 = vst [vmem:[%s11647 + $0x10] sm:$0xff] %v11645
    %11651 = vst [vmem:[%s11647 + $0x18] sm:$0xff] %v11646
    %s11652 = scalar_lea.vmem [#allocation5], 480
    %v11653 = vld [vmem:[%s11652] sm:$0xff]
    %v11654 = vld [vmem:[%s11652 + $0x8] sm:$0xff]
    %v11655 = vld [vmem:[%s11652 + $0x10] sm:$0xff]
    %v11656 = vld [vmem:[%s11652 + $0x18] sm:$0xff]
    %v11659 = vrot.slane %v11376, 2
    %v11660 = vrot.slane %v11381, 2
    %v11661 = vsel %vm11401, %v11659, %v11660
    %v11663 = vmul.f32 %v11653, %v11661
    %v11664 = vmul.f32 %v11654, %v11661
    %v11665 = vmul.f32 %v11655, %v11661
    %v11666 = vmul.f32 %v11656, %v11661
    %s11667 = scalar_lea.vmem [#allocation14], 480
    %11668 = vst [vmem:[%s11667] sm:$0xff] %v11663
    %11669 = vst [vmem:[%s11667 + $0x8] sm:$0xff] %v11664
    %11670 = vst [vmem:[%s11667 + $0x10] sm:$0xff] %v11665
    %11671 = vst [vmem:[%s11667 + $0x18] sm:$0xff] %v11666
    // Predicated region
    $region42: #{tpu_custom_call.1} parent=1 // pred_check
      _
    $region43: #{tpu_custom_call.1} parent=1 // pred_check_branch
      %11673 = sbr.rel (0) target = $region45
    $region44: #{tpu_custom_call.1} parent=1 // pred_region
      %s11675 = ssub.s32 8192, 8192
      %11676 = vsyncadd [#allocation7], %s11675
      %s11677 = sshll.u32 [#allocation14], 4
      %s11678 = int_to_ptr.vmem [resolvable:$true] %s11677
      %11683 = dma.vmem_to_hbm [thread:$0]  %s11678, 8192, %s5, [#allocation7], 512, 512, 32
    $region45: #{tpu_custom_call.1} parent=1 // pred_fallthru
      _
    // Predicated region
    $region46: #{tpu_custom_call.1} parent=1 // pred_check
      _
    $region47: #{tpu_custom_call.1} parent=1 // pred_check_branch
      %11685 = sbr.rel (0) target = $region49
    $region48: #{tpu_custom_call.1} parent=1 // pred_region
      %11686 = dma.done [#allocation7], 8192
    $region49: #{tpu_custom_call.1} parent=1 // pred_fallthru
      _
    %11687 = vsyncpa [#allocation6], 1
    %11688 = vsyncpa [#allocation9], 1
    %11689 = vsyncpa [#allocation12], 1
    %11690 = vsyncpa [#allocation7], 1

</llo_original>
